<compile_context>
chip_gen: v7x
topology: tpu7x:2x2x1
jax: 0.10.0
libtpu: 0.0.40
codegen_flags: <defaults>
</compile_context>

<pallas_src>
import jax
import jax.numpy as jnp
from jax.experimental import pallas as pl
from jax.experimental.pallas import tpu as pltpu


def _round_up(x, m):
    return ((x + m - 1) // m) * m


def autoencoder_mlp4_kernel(x_ref,
                            w1_ref, b1_ref,
                            w2_ref, b2_ref,
                            w3_ref, b3_ref,
                            w4_ref, b4_ref,
                            o_ref):
    """One batch tile: fully fused 4-layer forward pass (weights stay in VMEM)."""
    x = x_ref[...].astype(jnp.bfloat16)

    # encode: fc1 -> relu -> fc2 -> relu   (f32 MXU accumulation, f32 biases)
    h = jnp.dot(x, w1_ref[...], preferred_element_type=jnp.float32) + b1_ref[...]
    h = jnp.maximum(h, 0.0).astype(jnp.bfloat16)
    h = jnp.dot(h, w2_ref[...], preferred_element_type=jnp.float32) + b2_ref[...]
    h = jnp.maximum(h, 0.0).astype(jnp.bfloat16)

    # decode: fc3 -> relu -> fc4 -> sigmoid
    h = jnp.dot(h, w3_ref[...], preferred_element_type=jnp.float32) + b3_ref[...]
    h = jnp.maximum(h, 0.0).astype(jnp.bfloat16)
    z = jnp.dot(h, w4_ref[...], preferred_element_type=jnp.float32) + b4_ref[...]

    # Numerically-safe sigmoid: clip keeps exp finite; exp + approx reciprocal
    # both execute on the EUP slot (no VALU pressure).
    e = jnp.exp(-jnp.clip(z, -30.0, 30.0))
    o_ref[...] = pl.reciprocal(1.0 + e, approx=True).astype(o_ref.dtype)


def pad_and_cast_params(params, n_input=784, n_bottleneck=8, n_output=784):
    """Zero-pad *internal* dims only (hidden->512, bottleneck->128); bf16 weights,
    f32 biases.  Input (784) and output (784) dims are kept exact — no wrapper-side
    activation padding is ever needed."""
    n_hidden = n_input // 2
    p_h = _round_up(n_hidden, 128)       # 392 -> 512
    p_bn = _round_up(n_bottleneck, 128)  # 8   -> 128

    def pad2(a, rows, cols):
        return jnp.zeros((rows, cols), a.dtype).at[:a.shape[0], :a.shape[1]].set(a)

    return {
        "w1": pad2(params["w1"], n_input, p_h).astype(jnp.bfloat16),   # (784, 512)
        "b1": pad2(params["b1"], 1, p_h),                              # (1, 512)
        "w2": pad2(params["w2"], p_h, p_bn).astype(jnp.bfloat16),      # (512, 128)
        "b2": pad2(params["b2"], 1, p_bn),                             # (1, 128)
        "w3": pad2(params["w3"], p_bn, p_h).astype(jnp.bfloat16),      # (128, 512)
        "b3": pad2(params["b3"], 1, p_h),                              # (1, 512)
        "w4": pad2(params["w4"], p_h, n_output).astype(jnp.bfloat16),  # (512, 784)
        "b4": params["b4"],                                            # (1, 784)
    }


def _choose_tb(batch, block_batch, target_steps=8, min_tile=128):
    """Pick a batch tile that (a) gives ~target_steps grid steps so megacore/DMA
    pipelining has work, (b) never exceeds block_batch rows, (c) stays a multiple
    of 8 sublanes."""
    b8 = _round_up(batch, 8)
    tb = _round_up(max(1, -(-batch // target_steps)), 8)
    tb = max(tb, min_tile)
    tb = min(tb, block_batch, b8)
    return tb


def autoencoder_mlp4(x, padded_params, *, block_batch=512, out_dtype=jnp.bfloat16):
    """x: (B, 784) float32 or bfloat16.  padded_params: output of pad_and_cast_params.

    Returns (B, 784) in `out_dtype` (bf16 by default to halve writeback traffic)."""
    B, n_in = x.shape
    w1, b1 = padded_params["w1"], padded_params["b1"]
    w2, b2 = padded_params["w2"], padded_params["b2"]
    w3, b3 = padded_params["w3"], padded_params["b3"]
    w4, b4 = padded_params["w4"], padded_params["b4"]
    assert n_in == w1.shape[0], f"expected x with {w1.shape[0]} features, got {n_in}"
    n_out = w4.shape[1]

    tb = _choose_tb(B, block_batch)
    bp = _round_up(B, tb)
    # Only the ragged batch tail is padded (no feature-dim pad / no feature slice).
    xk = x if bp == B else jnp.pad(x, ((0, bp - B), (0, 0)))

    weight_args = (w1, b1, w2, b2, w3, b3, w4, b4)
    # Constant index_map -> each weight/bias block is DMA'd once and stays
    # VMEM-resident across all batch tiles.
    weight_specs = [pl.BlockSpec(a.shape, lambda i: (0, 0)) for a in weight_args]

    out = pl.pallas_call(
        autoencoder_mlp4_kernel,
        out_shape=jax.ShapeDtypeStruct((bp, n_out), out_dtype),
        grid=(bp // tb,),
        in_specs=[pl.BlockSpec((tb, n_in), lambda i: (i, 0))] + weight_specs,
        out_specs=pl.BlockSpec((tb, n_out), lambda i: (i, 0)),
        compiler_params=pltpu.CompilerParams(
            dimension_semantics=("parallel",)),
    )(xk, *weight_args)

    # Drop padded tail rows only when the batch was ragged.
    return out if bp == B else out[:B]


def init_params(key, n_input=28 * 28, n_bottleneck=8, n_output=784):
    """PyTorch-Linear-style init U(-1/sqrt(in), 1/sqrt(in)); weights stored (in, out)."""
    n2 = n_input // 2
    dims = [(n_input, n2), (n2, n_bottleneck), (n_bottleneck, n2), (n2, n_output)]
    params = {}
    keys = jax.random.split(key, 2 * len(dims))
    for i, (fan_in, fan_out) in enumerate(dims):
        bound = 1.0 / jnp.sqrt(jnp.float32(fan_in))
        w = jax.random.uniform(keys[2 * i], (fan_in, fan_out),
                               minval=-bound, maxval=bound, dtype=jnp.float32)
        b = jax.random.uniform(keys[2 * i + 1], (1, fan_out),
                               minval=-bound, maxval=bound, dtype=jnp.float32)
        params[f"w{i + 1}"] = w
        params[f"b{i + 1}"] = b
    return params


def reference_forward(x, p):
    """Pure-JAX reference mirroring the kernel math (bf16 matmul inputs, f32 accum)."""
    def lin(h, w, b):
        return jnp.dot(h.astype(jnp.bfloat16), w.astype(jnp.bfloat16),
                       preferred_element_type=jnp.float32) + b
    h = jnp.maximum(lin(x, p["w1"], p["b1"]), 0.0)
    h = jnp.maximum(lin(h, p["w2"], p["b2"]), 0.0)
    h = jnp.maximum(lin(h, p["w3"], p["b3"]), 0.0)
    return jax.nn.sigmoid(lin(h, p["w4"], p["b4"]))


if __name__ == "__main__":
    key = jax.random.PRNGKey(0)
    k_x, k_p = jax.random.split(key)

    N_INPUT, N_BOTTLENECK, N_OUTPUT = 28 * 28, 8, 784
    params = init_params(k_p, N_INPUT, N_BOTTLENECK, N_OUTPUT)
    padded = pad_and_cast_params(params, N_INPUT, N_BOTTLENECK, N_OUTPUT)

    # (1) f32 input, batch divisible by the chosen tile -> 2-step grid, no pad/slice.
    B1 = 256
    x1 = jax.random.uniform(k_x, (B1, N_INPUT), dtype=jnp.float32)
    out1 = jax.block_until_ready(autoencoder_mlp4(x1, padded))
    assert out1.shape == (B1, N_OUTPUT) and out1.dtype == jnp.bfloat16
    ref1 = reference_forward(x1, params)
    err1 = float(jnp.max(jnp.abs(out1.astype(jnp.float32) - ref1)))
    assert err1 < 1e-2, f"mismatch vs reference (f32 input): max abs err {err1}"

    # (2) bf16 input + ragged batch -> exercises the batch-tail pad / row-slice path.
    B2 = 37
    x2 = x1[:B2].astype(jnp.bfloat16)
    out2 = jax.block_until_ready(autoencoder_mlp4(x2, padded))
    assert out2.shape == (B2, N_OUTPUT) and out2.dtype == jnp.bfloat16
    ref2 = reference_forward(x2.astype(jnp.float32), params)
    err2 = float(jnp.max(jnp.abs(out2.astype(jnp.float32) - ref2)))
    assert err2 < 1e-2, f"mismatch vs reference (bf16 ragged input): max abs err {err2}"

    print("KERNEL_OK")
</pallas_src>

<mosaic_0001>
module attributes {stable_mosaic.version = 11 : i64} {
  func.func @autoencoder_mlp4_kernel(%arg0: i32, %arg1: memref<128x784xf32, #tpu.memory_space<vmem>>, %arg2: memref<784x512xbf16, #tpu.memory_space<vmem>>, %arg3: memref<1x512xf32, #tpu.memory_space<vmem>>, %arg4: memref<512x128xbf16, #tpu.memory_space<vmem>>, %arg5: memref<1x128xf32, #tpu.memory_space<vmem>>, %arg6: memref<128x512xbf16, #tpu.memory_space<vmem>>, %arg7: memref<1x512xf32, #tpu.memory_space<vmem>>, %arg8: memref<512x784xbf16, #tpu.memory_space<vmem>>, %arg9: memref<1x784xf32, #tpu.memory_space<vmem>>, %arg10: memref<128x784xbf16, #tpu.memory_space<vmem>>) attributes {dimension_semantics = [#tpu.dimension_semantics<parallel>], iteration_bounds = array<i64: 2>, scalar_prefetch = 0 : i64, scratch_operands = 0 : i64, tpu.core_type = #tpu.core_type<tc>, window_params = [{transform_indices = @transform_0, window_bounds = array<i64: 128, 784>}, {pipeline_mode = #tpu.pipeline_mode<synchronous>, transform_indices = @transform_1, window_bounds = array<i64: 784, 512>}, {pipeline_mode = #tpu.pipeline_mode<synchronous>, transform_indices = @transform_2, window_bounds = array<i64: 1, 512>}, {pipeline_mode = #tpu.pipeline_mode<synchronous>, transform_indices = @transform_3, window_bounds = array<i64: 512, 128>}, {pipeline_mode = #tpu.pipeline_mode<synchronous>, transform_indices = @transform_4, window_bounds = array<i64: 1, 128>}, {pipeline_mode = #tpu.pipeline_mode<synchronous>, transform_indices = @transform_5, window_bounds = array<i64: 128, 512>}, {pipeline_mode = #tpu.pipeline_mode<synchronous>, transform_indices = @transform_6, window_bounds = array<i64: 1, 512>}, {pipeline_mode = #tpu.pipeline_mode<synchronous>, transform_indices = @transform_7, window_bounds = array<i64: 512, 784>}, {pipeline_mode = #tpu.pipeline_mode<synchronous>, transform_indices = @transform_8, window_bounds = array<i64: 1, 784>}, {transform_indices = @transform_9, window_bounds = array<i64: 128, 784>}]} {
    %c0 = arith.constant 0 : index
    %c0_0 = arith.constant 0 : index
    %0 = vector.load %arg1[%c0, %c0_0] : memref<128x784xf32, #tpu.memory_space<vmem>>, vector<128x784xf32>
    %1 = arith.truncf %0 : vector<128x784xf32> to vector<128x784xbf16>
    %c0_1 = arith.constant 0 : index
    %c0_2 = arith.constant 0 : index
    %2 = vector.load %arg2[%c0_1, %c0_2] : memref<784x512xbf16, #tpu.memory_space<vmem>>, vector<784x512xbf16>
    %cst = arith.constant dense<0.000000e+00> : vector<128x512xf32>
    %3 = tpu.matmul %1, %2, %cst {dimension_numbers = #tpu.dot_dimension_numbers<[1], [0], [0], [1], [0, 0, 1, 1], [], []>} : vector<128x784xbf16>, vector<784x512xbf16>, vector<128x512xf32> -> vector<128x512xf32>
    %c0_3 = arith.constant 0 : index
    %c0_4 = arith.constant 0 : index
    %4 = vector.load %arg3[%c0_3, %c0_4] : memref<1x512xf32, #tpu.memory_space<vmem>>, vector<1x512xf32>
    %5 = vector.broadcast %4 : vector<1x512xf32> to vector<128x512xf32>
    %6 = arith.addf %3, %5 : vector<128x512xf32>
    %cst_5 = arith.constant 0.000000e+00 : f32
    %7 = vector.broadcast %cst_5 : f32 to vector<128x512xf32>
    %8 = arith.maximumf %6, %7 : vector<128x512xf32>
    %9 = arith.truncf %8 : vector<128x512xf32> to vector<128x512xbf16>
    %c0_6 = arith.constant 0 : index
    %c0_7 = arith.constant 0 : index
    %10 = vector.load %arg4[%c0_6, %c0_7] : memref<512x128xbf16, #tpu.memory_space<vmem>>, vector<512x128xbf16>
    %cst_8 = arith.constant dense<0.000000e+00> : vector<128x128xf32>
    %11 = tpu.matmul %9, %10, %cst_8 {dimension_numbers = #tpu.dot_dimension_numbers<[1], [0], [0], [1], [0, 0, 1, 1], [], []>} : vector<128x512xbf16>, vector<512x128xbf16>, vector<128x128xf32> -> vector<128x128xf32>
    %c0_9 = arith.constant 0 : index
    %c0_10 = arith.constant 0 : index
    %12 = vector.load %arg5[%c0_9, %c0_10] : memref<1x128xf32, #tpu.memory_space<vmem>>, vector<1x128xf32>
    %13 = vector.broadcast %12 : vector<1x128xf32> to vector<128x128xf32>
    %14 = arith.addf %11, %13 : vector<128x128xf32>
    %cst_11 = arith.constant 0.000000e+00 : f32
    %15 = vector.broadcast %cst_11 : f32 to vector<128x128xf32>
    %16 = arith.maximumf %14, %15 : vector<128x128xf32>
    %17 = arith.truncf %16 : vector<128x128xf32> to vector<128x128xbf16>
    %c0_12 = arith.constant 0 : index
    %c0_13 = arith.constant 0 : index
    %18 = vector.load %arg6[%c0_12, %c0_13] : memref<128x512xbf16, #tpu.memory_space<vmem>>, vector<128x512xbf16>
    %cst_14 = arith.constant dense<0.000000e+00> : vector<128x512xf32>
    %19 = tpu.matmul %17, %18, %cst_14 {dimension_numbers = #tpu.dot_dimension_numbers<[1], [0], [0], [1], [0, 0, 1, 1], [], []>} : vector<128x128xbf16>, vector<128x512xbf16>, vector<128x512xf32> -> vector<128x512xf32>
    %c0_15 = arith.constant 0 : index
    %c0_16 = arith.constant 0 : index
    %20 = vector.load %arg7[%c0_15, %c0_16] : memref<1x512xf32, #tpu.memory_space<vmem>>, vector<1x512xf32>
    %21 = vector.broadcast %20 : vector<1x512xf32> to vector<128x512xf32>
    %22 = arith.addf %19, %21 : vector<128x512xf32>
    %cst_17 = arith.constant 0.000000e+00 : f32
    %23 = vector.broadcast %cst_17 : f32 to vector<128x512xf32>
    %24 = arith.maximumf %22, %23 : vector<128x512xf32>
    %25 = arith.truncf %24 : vector<128x512xf32> to vector<128x512xbf16>
    %c0_18 = arith.constant 0 : index
    %c0_19 = arith.constant 0 : index
    %26 = vector.load %arg8[%c0_18, %c0_19] : memref<512x784xbf16, #tpu.memory_space<vmem>>, vector<512x784xbf16>
    %cst_20 = arith.constant dense<0.000000e+00> : vector<128x784xf32>
    %27 = tpu.matmul %25, %26, %cst_20 {dimension_numbers = #tpu.dot_dimension_numbers<[1], [0], [0], [1], [0, 0, 1, 1], [], []>} : vector<128x512xbf16>, vector<512x784xbf16>, vector<128x784xf32> -> vector<128x784xf32>
    %c0_21 = arith.constant 0 : index
    %c0_22 = arith.constant 0 : index
    %28 = vector.load %arg9[%c0_21, %c0_22] : memref<1x784xf32, #tpu.memory_space<vmem>>, vector<1x784xf32>
    %29 = vector.broadcast %28 : vector<1x784xf32> to vector<128x784xf32>
    %30 = arith.addf %27, %29 : vector<128x784xf32>
    %cst_23 = arith.constant -3.000000e+01 : f32
    %cst_24 = arith.constant 3.000000e+01 : f32
    %31 = vector.broadcast %cst_23 : f32 to vector<128x784xf32>
    %32 = arith.maximumf %31, %30 : vector<128x784xf32>
    %33 = vector.broadcast %cst_24 : f32 to vector<128x784xf32>
    %34 = arith.minimumf %33, %32 : vector<128x784xf32>
    %cst_25 = arith.constant 0.000000e+00 : f32
    %35 = vector.broadcast %cst_25 : f32 to vector<128x784xf32>
    %36 = arith.subf %35, %34 : vector<128x784xf32>
    %37 = math.exp %36 : vector<128x784xf32>
    %cst_26 = arith.constant 1.000000e+00 : f32
    %38 = vector.broadcast %cst_26 : f32 to vector<128x784xf32>
    %39 = arith.addf %38, %37 : vector<128x784xf32>
    %40 = tpu.reciprocal %39 {approx = true} : vector<128x784xf32> -> vector<128x784xf32>
    %41 = arith.truncf %40 : vector<128x784xf32> to vector<128x784xbf16>
    %c0_27 = arith.constant 0 : index
    %c0_28 = arith.constant 0 : index
    %42 = vector.load %arg10[%c0_27, %c0_28] : memref<128x784xbf16, #tpu.memory_space<vmem>>, vector<128x784xbf16>
    tpu.vector_store %arg10[%c0_27, %c0_28], %41 {strides = array<i32>} : memref<128x784xbf16, #tpu.memory_space<vmem>>, vector<128x784xbf16>,
    return
  }
  func.func @transform_0(%arg0: i32) -> (i32, i32) {
    %c0_i32 = arith.constant 0 : i32
    %c0_i32_0 = arith.constant 0 : i32
    return %arg0, %c0_i32 : i32, i32
  }
  func.func @transform_1(%arg0: i32) -> (i32, i32) {
    %c0_i32 = arith.constant 0 : i32
    %c0_i32_0 = arith.constant 0 : i32
    %c0_i32_1 = arith.constant 0 : i32
    return %c0_i32, %c0_i32_0 : i32, i32
  }
  func.func @transform_2(%arg0: i32) -> (i32, i32) {
    %c0_i32 = arith.constant 0 : i32
    %c0_i32_0 = arith.constant 0 : i32
    %c0_i32_1 = arith.constant 0 : i32
    return %c0_i32, %c0_i32_0 : i32, i32
  }
  func.func @transform_3(%arg0: i32) -> (i32, i32) {
    %c0_i32 = arith.constant 0 : i32
    %c0_i32_0 = arith.constant 0 : i32
    %c0_i32_1 = arith.constant 0 : i32
    return %c0_i32, %c0_i32_0 : i32, i32
  }
  func.func @transform_4(%arg0: i32) -> (i32, i32) {
    %c0_i32 = arith.constant 0 : i32
    %c0_i32_0 = arith.constant 0 : i32
    %c0_i32_1 = arith.constant 0 : i32
    return %c0_i32, %c0_i32_0 : i32, i32
  }
  func.func @transform_5(%arg0: i32) -> (i32, i32) {
    %c0_i32 = arith.constant 0 : i32
    %c0_i32_0 = arith.constant 0 : i32
    %c0_i32_1 = arith.constant 0 : i32
    return %c0_i32, %c0_i32_0 : i32, i32
  }
  func.func @transform_6(%arg0: i32) -> (i32, i32) {
    %c0_i32 = arith.constant 0 : i32
    %c0_i32_0 = arith.constant 0 : i32
    %c0_i32_1 = arith.constant 0 : i32
    return %c0_i32, %c0_i32_0 : i32, i32
  }
  func.func @transform_7(%arg0: i32) -> (i32, i32) {
    %c0_i32 = arith.constant 0 : i32
    %c0_i32_0 = arith.constant 0 : i32
    %c0_i32_1 = arith.constant 0 : i32
    return %c0_i32, %c0_i32_0 : i32, i32
  }
  func.func @transform_8(%arg0: i32) -> (i32, i32) {
    %c0_i32 = arith.constant 0 : i32
    %c0_i32_0 = arith.constant 0 : i32
    %c0_i32_1 = arith.constant 0 : i32
    return %c0_i32, %c0_i32_0 : i32, i32
  }
  func.func @transform_9(%arg0: i32) -> (i32, i32) {
    %c0_i32 = arith.constant 0 : i32
    %c0_i32_0 = arith.constant 0 : i32
    return %arg0, %c0_i32 : i32, i32
  }
}

</mosaic_0001>

<llo_original>
// kernel: tpu_custom_call.1
$region0: #{tpu_custom_call.1}
  #allocation0 [shape = 'u32[]', space=smem, size = 0x4, offset = 0x4, fixed_abs, tag = 'smem constant byte address 0x4 - core index']
  #allocation1 [shape = 'u32[144,128]{1,0:T(1,128)}', space=vmem, size = 0x12000, scoped, tag = 'internal scratch']
  %s0 = inlined_call_operand.vmem [shape: f32[256,784], index: 0, kind: input, shape index: {}]
  %s1 = inlined_call_operand.vmem [shape: bf16[784,512], index: 1, kind: input, shape index: {}]
  %s2 = inlined_call_operand.vmem [shape: f32[1,512], index: 2, kind: input, shape index: {}]
  %s3 = inlined_call_operand.vmem [shape: bf16[512,128], index: 3, kind: input, shape index: {}]
  %s4 = inlined_call_operand.vmem [shape: f32[1,128], index: 4, kind: input, shape index: {}]
  %s5 = inlined_call_operand.vmem [shape: bf16[128,512], index: 5, kind: input, shape index: {}]
  %s6 = inlined_call_operand.vmem [shape: f32[1,512], index: 6, kind: input, shape index: {}]
  %s7 = inlined_call_operand.vmem [shape: bf16[512,784], index: 7, kind: input, shape index: {}]
  %s8 = inlined_call_operand.vmem [shape: f32[1,784], index: 8, kind: input, shape index: {}]
  %s9 = inlined_call_operand.vmem [shape: bf16[256,784], index: 9, kind: output, shape index: {}]
  %s10 = sld [smem:[#allocation0]]
  $region69: #{tpu_custom_call.1} parent=0
    _
  %s12 = ssub.s32 1, %s10
  %s13 = scalar_select 0, %s12, %s10
  loop: start=0, step=1, limit=4
  $region2: #{tpu_custom_call.1} parent=0 // loop_pre_header
    _
  $region3: #{tpu_custom_call.1} parent=0 // loop_header
    %s15 = sphi 0, %s19
    %p16 = scmp.ge.s32.totalorder %s15, 4
    %s25 = sphi 0, %s27
    %s28 = sphi 0, %s25
    %s29 = sphi 0, %s28
    %s45 = sphi 0, %s29
    %s49 = sphi 0, %s49
    %s51 = sphi 0, %s49
    %s52 = sphi 0, %s51
    %s66 = sphi 0, %s52
    %s70 = sphi 0, %s70
    %s72 = sphi 0, %s70
    %s73 = sphi 0, %s72
    %s87 = sphi 0, %s73
    %s91 = sphi 0, %s91
    %s93 = sphi 0, %s91
    %s94 = sphi 0, %s93
    %s108 = sphi 0, %s94
    %s112 = sphi 0, %s112
    %s114 = sphi 0, %s112
    %s115 = sphi 0, %s114
    %s129 = sphi 0, %s115
    %s133 = sphi 0, %s133
    %s135 = sphi 0, %s133
    %s136 = sphi 0, %s135
    %s150 = sphi 0, %s136
    %s154 = sphi 0, %s154
    %s156 = sphi 0, %s154
    %s157 = sphi 0, %s156
    %s171 = sphi 0, %s157
    %s175 = sphi 0, %s175
    %s177 = sphi 0, %s175
    %s178 = sphi 0, %s177
    %s192 = sphi 0, %s178
    %s196 = sphi 0, %s196
    %s198 = sphi 0, %s196
    %s199 = sphi 0, %s198
    %s213 = sphi 0, %s199
    %s219 = sphi 0, %s221
    %s222 = sphi 0, %s219
    %s223 = sphi 0, %s222
    %s239 = sphi 0, %s223
  $region4: #{tpu_custom_call.1} parent=0 // loop_header_branch
    %18 = sbr.rel (%p16) target = $region8
  $region5: #{tpu_custom_call.1} parent=0 // loop_body
    %s20 = ssub.s32 %s15, 1
    %s21 = ssub.s32 %s15, 2
    %s22 = sadd.s32 %s15, 1
    %s23 = ssub.s32 %s15, %s22
    %p24 = scmp.eq.s32.totalorder %s23, 0
    %s26 = sadd.s32 %s25, 1
    %s27 = scalar_select %p24, %s25, %s26
    %p30 = pneg %p24
    %p31 = scmp.eq.s32.totalorder %s15, 1
    %p32 = por %p30, %p31
    %p33 = scmp.ne.s32.totalorder %s25, %s28
    %p34 = scmp.eq.s32.totalorder %s15, 0
    %p35 = por %p33, %p34
    %p36 = scmp.ne.s32.totalorder %s25, %s28
    %p37 = scmp.eq.s32.totalorder %s20, 1
    %p38 = por %p36, %p37
    %p39 = scmp.ne.s32.totalorder %s28, %s29
    %p40 = scmp.eq.s32.totalorder %s20, 0
    %p41 = por %p39, %p40
    %p42 = scmp.ne.s32.totalorder %s28, %s29
    %p43 = scmp.eq.s32.totalorder %s21, 1
    %p44 = por %p42, %p43
    %p46 = scmp.ne.s32.totalorder %s29, %s45
    %p47 = scmp.eq.s32.totalorder %s21, 0
    %p48 = por %p46, %p47
    %s50 = sadd.s32 %s49, 1
    %p53 = scmp.eq.s32.totalorder %s15, 1
    %p54 = scmp.ne.s32.totalorder %s49, %s51
    %p55 = scmp.eq.s32.totalorder %s15, 0
    %p56 = por %p54, %p55
    %p57 = scmp.ne.s32.totalorder %s49, %s51
    %p58 = scmp.eq.s32.totalorder %s20, 1
    %p59 = por %p57, %p58
    %p60 = scmp.ne.s32.totalorder %s51, %s52
    %p61 = scmp.eq.s32.totalorder %s20, 0
    %p62 = por %p60, %p61
    %p63 = scmp.ne.s32.totalorder %s51, %s52
    %p64 = scmp.eq.s32.totalorder %s21, 1
    %p65 = por %p63, %p64
    %p67 = scmp.ne.s32.totalorder %s52, %s66
    %p68 = scmp.eq.s32.totalorder %s21, 0
    %p69 = por %p67, %p68
    %s71 = sadd.s32 %s70, 1
    %p74 = scmp.eq.s32.totalorder %s15, 1
    %p75 = scmp.ne.s32.totalorder %s70, %s72
    %p76 = scmp.eq.s32.totalorder %s15, 0
    %p77 = por %p75, %p76
    %p78 = scmp.ne.s32.totalorder %s70, %s72
    %p79 = scmp.eq.s32.totalorder %s20, 1
    %p80 = por %p78, %p79
    %p81 = scmp.ne.s32.totalorder %s72, %s73
    %p82 = scmp.eq.s32.totalorder %s20, 0
    %p83 = por %p81, %p82
    %p84 = scmp.ne.s32.totalorder %s72, %s73
    %p85 = scmp.eq.s32.totalorder %s21, 1
    %p86 = por %p84, %p85
    %p88 = scmp.ne.s32.totalorder %s73, %s87
    %p89 = scmp.eq.s32.totalorder %s21, 0
    %p90 = por %p88, %p89
    %s92 = sadd.s32 %s91, 1
    %p95 = scmp.eq.s32.totalorder %s15, 1
    %p96 = scmp.ne.s32.totalorder %s91, %s93
    %p97 = scmp.eq.s32.totalorder %s15, 0
    %p98 = por %p96, %p97
    %p99 = scmp.ne.s32.totalorder %s91, %s93
    %p100 = scmp.eq.s32.totalorder %s20, 1
    %p101 = por %p99, %p100
    %p102 = scmp.ne.s32.totalorder %s93, %s94
    %p103 = scmp.eq.s32.totalorder %s20, 0
    %p104 = por %p102, %p103
    %p105 = scmp.ne.s32.totalorder %s93, %s94
    %p106 = scmp.eq.s32.totalorder %s21, 1
    %p107 = por %p105, %p106
    %p109 = scmp.ne.s32.totalorder %s94, %s108
    %p110 = scmp.eq.s32.totalorder %s21, 0
    %p111 = por %p109, %p110
    %s113 = sadd.s32 %s112, 1
    %p116 = scmp.eq.s32.totalorder %s15, 1
    %p117 = scmp.ne.s32.totalorder %s112, %s114
    %p118 = scmp.eq.s32.totalorder %s15, 0
    %p119 = por %p117, %p118
    %p120 = scmp.ne.s32.totalorder %s112, %s114
    %p121 = scmp.eq.s32.totalorder %s20, 1
    %p122 = por %p120, %p121
    %p123 = scmp.ne.s32.totalorder %s114, %s115
    %p124 = scmp.eq.s32.totalorder %s20, 0
    %p125 = por %p123, %p124
    %p126 = scmp.ne.s32.totalorder %s114, %s115
    %p127 = scmp.eq.s32.totalorder %s21, 1
    %p128 = por %p126, %p127
    %p130 = scmp.ne.s32.totalorder %s115, %s129
    %p131 = scmp.eq.s32.totalorder %s21, 0
    %p132 = por %p130, %p131
    %s134 = sadd.s32 %s133, 1
    %p137 = scmp.eq.s32.totalorder %s15, 1
    %p138 = scmp.ne.s32.totalorder %s133, %s135
    %p139 = scmp.eq.s32.totalorder %s15, 0
    %p140 = por %p138, %p139
    %p141 = scmp.ne.s32.totalorder %s133, %s135
    %p142 = scmp.eq.s32.totalorder %s20, 1
    %p143 = por %p141, %p142
    %p144 = scmp.ne.s32.totalorder %s135, %s136
    %p145 = scmp.eq.s32.totalorder %s20, 0
    %p146 = por %p144, %p145
    %p147 = scmp.ne.s32.totalorder %s135, %s136
    %p148 = scmp.eq.s32.totalorder %s21, 1
    %p149 = por %p147, %p148
    %p151 = scmp.ne.s32.totalorder %s136, %s150
    %p152 = scmp.eq.s32.totalorder %s21, 0
    %p153 = por %p151, %p152
    %s155 = sadd.s32 %s154, 1
    %p158 = scmp.eq.s32.totalorder %s15, 1
    %p159 = scmp.ne.s32.totalorder %s154, %s156
    %p160 = scmp.eq.s32.totalorder %s15, 0
    %p161 = por %p159, %p160
    %p162 = scmp.ne.s32.totalorder %s154, %s156
    %p163 = scmp.eq.s32.totalorder %s20, 1
    %p164 = por %p162, %p163
    %p165 = scmp.ne.s32.totalorder %s156, %s157
    %p166 = scmp.eq.s32.totalorder %s20, 0
    %p167 = por %p165, %p166
    %p168 = scmp.ne.s32.totalorder %s156, %s157
    %p169 = scmp.eq.s32.totalorder %s21, 1
    %p170 = por %p168, %p169
    %p172 = scmp.ne.s32.totalorder %s157, %s171
    %p173 = scmp.eq.s32.totalorder %s21, 0
    %p174 = por %p172, %p173
    %s176 = sadd.s32 %s175, 1
    %p179 = scmp.eq.s32.totalorder %s15, 1
    %p180 = scmp.ne.s32.totalorder %s175, %s177
    %p181 = scmp.eq.s32.totalorder %s15, 0
    %p182 = por %p180, %p181
    %p183 = scmp.ne.s32.totalorder %s175, %s177
    %p184 = scmp.eq.s32.totalorder %s20, 1
    %p185 = por %p183, %p184
    %p186 = scmp.ne.s32.totalorder %s177, %s178
    %p187 = scmp.eq.s32.totalorder %s20, 0
    %p188 = por %p186, %p187
    %p189 = scmp.ne.s32.totalorder %s177, %s178
    %p190 = scmp.eq.s32.totalorder %s21, 1
    %p191 = por %p189, %p190
    %p193 = scmp.ne.s32.totalorder %s178, %s192
    %p194 = scmp.eq.s32.totalorder %s21, 0
    %p195 = por %p193, %p194
    %s197 = sadd.s32 %s196, 1
    %p200 = scmp.eq.s32.totalorder %s15, 1
    %p201 = scmp.ne.s32.totalorder %s196, %s198
    %p202 = scmp.eq.s32.totalorder %s15, 0
    %p203 = por %p201, %p202
    %p204 = scmp.ne.s32.totalorder %s196, %s198
    %p205 = scmp.eq.s32.totalorder %s20, 1
    %p206 = por %p204, %p205
    %p207 = scmp.ne.s32.totalorder %s198, %s199
    %p208 = scmp.eq.s32.totalorder %s20, 0
    %p209 = por %p207, %p208
    %p210 = scmp.ne.s32.totalorder %s198, %s199
    %p211 = scmp.eq.s32.totalorder %s21, 1
    %p212 = por %p210, %p211
    %p214 = scmp.ne.s32.totalorder %s199, %s213
    %p215 = scmp.eq.s32.totalorder %s21, 0
    %p216 = por %p214, %p215
    %s217 = ssub.s32 %s15, %s22
    %p218 = scmp.eq.s32.totalorder %s217, 0
    %s220 = sadd.s32 %s219, 1
    %s221 = scalar_select %p218, %s219, %s220
    %p224 = pneg %p218
    %p225 = scmp.eq.s32.totalorder %s15, 1
    %p226 = por %p224, %p225
    %p227 = scmp.ne.s32.totalorder %s219, %s222
    %p228 = scmp.eq.s32.totalorder %s15, 0
    %p229 = por %p227, %p228
    %p230 = scmp.ne.s32.totalorder %s219, %s222
    %p231 = scmp.eq.s32.totalorder %s20, 1
    %p232 = por %p230, %p231
    %p233 = scmp.ne.s32.totalorder %s222, %s223
    %p234 = scmp.eq.s32.totalorder %s20, 0
    %p235 = por %p233, %p234
    %p236 = scmp.ne.s32.totalorder %s222, %s223
    %p237 = scmp.eq.s32.totalorder %s21, 1
    %p238 = por %p236, %p237
    %p240 = scmp.ne.s32.totalorder %s223, %s239
    %p241 = scmp.eq.s32.totalorder %s21, 0
    %p242 = por %p240, %p241
    %p243 = scmp.le.s32.totalorder 1, %s15
    %p244 = scmp.lt.s32.totalorder %s15, 3
    %p245 = pnand %p243, %p244
    %p246 = pneg %p245
    // Predicated region
    $region9: #{tpu_custom_call.1} parent=5 // pred_check
      _
    $region10: #{tpu_custom_call.1} parent=5 // pred_check_branch
      %248 = sbr.rel (%p245) target = $region12
    $region11: #{tpu_custom_call.1} parent=5 // pred_region
      %s249 = ssub.s32 %s15, 1
      // Predicated region
      $region13: #{tpu_custom_call.1} parent=11 // pred_check
        %p250 = pneg %p62
      $region14: #{tpu_custom_call.1} parent=11 // pred_check_branch
        %252 = sbr.rel (%p250) target = $region16
      $region15: #{tpu_custom_call.1} parent=11 // pred_region
        _
      $region16: #{tpu_custom_call.1} parent=11 // pred_fallthru
        _
      // Predicated region
      $region17: #{tpu_custom_call.1} parent=11 // pred_check
        %p253 = pneg %p83
      $region18: #{tpu_custom_call.1} parent=11 // pred_check_branch
        %255 = sbr.rel (%p253) target = $region20
      $region19: #{tpu_custom_call.1} parent=11 // pred_region
        _
      $region20: #{tpu_custom_call.1} parent=11 // pred_fallthru
        _
      // Predicated region
      $region21: #{tpu_custom_call.1} parent=11 // pred_check
        %p256 = pneg %p104
      $region22: #{tpu_custom_call.1} parent=11 // pred_check_branch
        %258 = sbr.rel (%p256) target = $region24
      $region23: #{tpu_custom_call.1} parent=11 // pred_region
        _
      $region24: #{tpu_custom_call.1} parent=11 // pred_fallthru
        _
      // Predicated region
      $region25: #{tpu_custom_call.1} parent=11 // pred_check
        %p259 = pneg %p125
      $region26: #{tpu_custom_call.1} parent=11 // pred_check_branch
        %261 = sbr.rel (%p259) target = $region28
      $region27: #{tpu_custom_call.1} parent=11 // pred_region
        _
      $region28: #{tpu_custom_call.1} parent=11 // pred_fallthru
        _
      // Predicated region
      $region29: #{tpu_custom_call.1} parent=11 // pred_check
        %p262 = pneg %p146
      $region30: #{tpu_custom_call.1} parent=11 // pred_check_branch
        %264 = sbr.rel (%p262) target = $region32
      $region31: #{tpu_custom_call.1} parent=11 // pred_region
        _
      $region32: #{tpu_custom_call.1} parent=11 // pred_fallthru
        _
      // Predicated region
      $region33: #{tpu_custom_call.1} parent=11 // pred_check
        %p265 = pneg %p167
      $region34: #{tpu_custom_call.1} parent=11 // pred_check_branch
        %267 = sbr.rel (%p265) target = $region36
      $region35: #{tpu_custom_call.1} parent=11 // pred_region
        _
      $region36: #{tpu_custom_call.1} parent=11 // pred_fallthru
        _
      // Predicated region
      $region37: #{tpu_custom_call.1} parent=11 // pred_check
        %p268 = pneg %p188
      $region38: #{tpu_custom_call.1} parent=11 // pred_check_branch
        %270 = sbr.rel (%p268) target = $region40
      $region39: #{tpu_custom_call.1} parent=11 // pred_region
        _
      $region40: #{tpu_custom_call.1} parent=11 // pred_fallthru
        _
      // Predicated region
      $region41: #{tpu_custom_call.1} parent=11 // pred_check
        %p271 = pneg %p209
      $region42: #{tpu_custom_call.1} parent=11 // pred_check_branch
        %273 = sbr.rel (%p271) target = $region44
      $region43: #{tpu_custom_call.1} parent=11 // pred_region
        _
      $region44: #{tpu_custom_call.1} parent=11 // pred_fallthru
        _
    $region12: #{tpu_custom_call.1} parent=5 // pred_fallthru
      _
    %p274 = scmp.lt.s32.totalorder %s15, 2
    // Predicated region
    $region45: #{tpu_custom_call.1} parent=5 // pred_check
      %p275 = pneg %p274
    $region46: #{tpu_custom_call.1} parent=5 // pred_check_branch
      %277 = sbr.rel (%p275) target = $region48
    $region47: #{tpu_custom_call.1} parent=5 // pred_region
      // Predicated region
      $region49: #{tpu_custom_call.1} parent=47 // pred_check
        %p278 = pneg %p35
      $region50: #{tpu_custom_call.1} parent=47 // pred_check_branch
        %280 = sbr.rel (%p278) target = $region52
      $region51: #{tpu_custom_call.1} parent=47 // pred_region
        %s281 = smul.u32 16, %s15
        %p282 = scmp.lt.s32.totalorder %s281, 31
        %s283 = scalar_select %p282, %s281, 31
        %s284 = smul.addr %s283, 7
        %s285 = smul.addr %s284, 8
        %s286 = scalar_lea.vmem %s0, %s285
        %s287 = smul.u32 16, %s15
      $region52: #{tpu_custom_call.1} parent=47 // pred_fallthru
        _
    $region48: #{tpu_custom_call.1} parent=5 // pred_fallthru
      _
    %p288 = scmp.le.s32.totalorder 1, %s15
    %p289 = scmp.lt.s32.totalorder %s15, 3
    %p290 = pnand %p288, %p289
    %p291 = pneg %p290
    // Predicated region
    $region53: #{tpu_custom_call.1} parent=5 // pred_check
      _
    $region54: #{tpu_custom_call.1} parent=5 // pred_check_branch
      %293 = sbr.rel (%p290) target = $region56
    $region55: #{tpu_custom_call.1} parent=5 // pred_region
      %s294 = ssub.s32 %s15, 1
      %s295 = smul.u32 16, %s20
      %p296 = scmp.lt.s32.totalorder %s295, 31
      %s297 = scalar_select %p296, %s295, 31
      %s298 = smul.addr %s297, 7
      %s299 = smul.addr %s298, 8
      %s300 = scalar_lea.vmem %s0, %s299
      %p301 = pneg %p41
      %p302 = pneg %p38
      %p303 = pneg %p62
      %p304 = pneg %p59
      %p305 = pneg %p83
      %p306 = pneg %p80
      %p307 = pneg %p104
      %p308 = pneg %p101
      %p309 = pneg %p125
      %p310 = pneg %p122
      %p311 = pneg %p146
      %p312 = pneg %p143
      %p313 = pneg %p167
      %p314 = pneg %p164
      %p315 = pneg %p188
      %p316 = pneg %p185
      %p317 = pneg %p209
      %p318 = pneg %p206
      %p319 = pneg %p235
      %p320 = pneg %p232
      %s321 = smul.u32 16, %s20
      %p322 = scmp.lt.s32.totalorder %s321, 31
      %s323 = scalar_select %p322, %s321, 31
      %s324 = smul.addr %s323, 7
      %s325 = smul.addr %s324, 4
      %s326 = scalar_lea.vmem %s9, %s325
      %s327 = smul.u32 16, %s20
      %p328 = scmp.lt.s32.totalorder %s327, 31
      %s329 = scalar_select %p328, %s327, 31
      %s330 = smul.addr %s329, 7
      %s331 = smul.addr %s330, 8
      %s332 = scalar_lea.vmem %s0, %s331
      %s333 = smul.u32 16, %s20
      %s334 = smul.u32 16, %s20
      %p335 = scmp.lt.s32.totalorder %s334, 31
      %s336 = scalar_select %p335, %s334, 31
      %s337 = smul.addr %s336, 7
      %s338 = smul.addr %s337, 4
      %s339 = scalar_lea.vmem %s9, %s338
      %s340 = smul.u32 16, %s20
      %v342 = vld [vmem:[%s332] sm:$0xff]
      %v343 = vld [vmem:[%s332 + $0x8] sm:$0xff]
      %v344 = vld [vmem:[%s332 + $0x10] sm:$0xff]
      %v345 = vld [vmem:[%s332 + $0x18] sm:$0xff]
      %v346 = vld [vmem:[%s332 + $0x20] sm:$0xff]
      %v347 = vld [vmem:[%s332 + $0x28] sm:$0xff]
      %v348 = vld [vmem:[%s332 + $0x30] sm:$0xff]
      %v349 = vld [vmem:[%s332 + $0x38] sm:$0xff]
      %v350 = vld [vmem:[%s332 + $0x40] sm:$0xff]
      %v351 = vld [vmem:[%s332 + $0x48] sm:$0xff]
      %v352 = vld [vmem:[%s332 + $0x50] sm:$0xff]
      %v353 = vld [vmem:[%s332 + $0x58] sm:$0xff]
      %v354 = vld [vmem:[%s332 + $0x60] sm:$0xff]
      %v355 = vld [vmem:[%s332 + $0x68] sm:$0xff]
      %v356 = vld [vmem:[%s332 + $0x70] sm:$0xff]
      %v357 = vld [vmem:[%s332 + $0x78] sm:$0xff]
      %v358 = vld [vmem:[%s332 + $0x80] sm:$0xff]
      %v359 = vld [vmem:[%s332 + $0x88] sm:$0xff]
      %v360 = vld [vmem:[%s332 + $0x90] sm:$0xff]
      %v361 = vld [vmem:[%s332 + $0x98] sm:$0xff]
      %v362 = vld [vmem:[%s332 + $0xa0] sm:$0xff]
      %v363 = vld [vmem:[%s332 + $0xa8] sm:$0xff]
      %v364 = vld [vmem:[%s332 + $0xb0] sm:$0xff]
      %v365 = vld [vmem:[%s332 + $0xb8] sm:$0xff]
      %v366 = vld [vmem:[%s332 + $0xc0] sm:$0xff]
      %v367 = vld [vmem:[%s332 + $0xc8] sm:$0xff]
      %v368 = vld [vmem:[%s332 + $0xd0] sm:$0xff]
      %v369 = vld [vmem:[%s332 + $0xd8] sm:$0xff]
      %v370 = vld [vmem:[%s332 + $0xe0] sm:$0xff]
      %v371 = vld [vmem:[%s332 + $0xe8] sm:$0xff]
      %v372 = vld [vmem:[%s332 + $0xf0] sm:$0xff]
      %v373 = vld [vmem:[%s332 + $0xf8] sm:$0xff]
      %v374 = vld [vmem:[%s332 + $0x100] sm:$0xff]
      %v375 = vld [vmem:[%s332 + $0x108] sm:$0xff]
      %v376 = vld [vmem:[%s332 + $0x110] sm:$0xff]
      %v377 = vld [vmem:[%s332 + $0x118] sm:$0xff]
      %v378 = vld [vmem:[%s332 + $0x120] sm:$0xff]
      %v379 = vld [vmem:[%s332 + $0x128] sm:$0xff]
      %v380 = vld [vmem:[%s332 + $0x130] sm:$0xff]
      %v381 = vld [vmem:[%s332 + $0x138] sm:$0xff]
      %v382 = vld [vmem:[%s332 + $0x140] sm:$0xff]
      %v383 = vld [vmem:[%s332 + $0x148] sm:$0xff]
      %v384 = vld [vmem:[%s332 + $0x150] sm:$0xff]
      %v385 = vld [vmem:[%s332 + $0x158] sm:$0xff]
      %v386 = vld [vmem:[%s332 + $0x160] sm:$0xff]
      %v387 = vld [vmem:[%s332 + $0x168] sm:$0xff]
      %v388 = vld [vmem:[%s332 + $0x170] sm:$0xff]
      %v389 = vld [vmem:[%s332 + $0x178] sm:$0xff]
      %v390 = vld [vmem:[%s332 + $0x180] sm:$0xff]
      %v391 = vld [vmem:[%s332 + $0x188] sm:$0xff]
      %v392 = vld [vmem:[%s332 + $0x190] sm:$0xff]
      %v393 = vld [vmem:[%s332 + $0x198] sm:$0xff]
      %v394 = vld [vmem:[%s332 + $0x1a0] sm:$0xff]
      %v395 = vld [vmem:[%s332 + $0x1a8] sm:$0xff]
      %v396 = vld [vmem:[%s332 + $0x1b0] sm:$0xff]
      %v397 = vld [vmem:[%s332 + $0x1b8] sm:$0xff]
      %v398 = vld [vmem:[%s332 + $0x1c0] sm:$0xff]
      %v399 = vld [vmem:[%s332 + $0x1c8] sm:$0xff]
      %v400 = vld [vmem:[%s332 + $0x1d0] sm:$0xff]
      %v401 = vld [vmem:[%s332 + $0x1d8] sm:$0xff]
      %v402 = vld [vmem:[%s332 + $0x1e0] sm:$0xff]
      %v403 = vld [vmem:[%s332 + $0x1e8] sm:$0xff]
      %v404 = vld [vmem:[%s332 + $0x1f0] sm:$0xff]
      %v405 = vld [vmem:[%s332 + $0x1f8] sm:$0xff]
      %v406 = vld [vmem:[%s332 + $0x200] sm:$0xff]
      %v407 = vld [vmem:[%s332 + $0x208] sm:$0xff]
      %v408 = vld [vmem:[%s332 + $0x210] sm:$0xff]
      %v409 = vld [vmem:[%s332 + $0x218] sm:$0xff]
      %v410 = vld [vmem:[%s332 + $0x220] sm:$0xff]
      %v411 = vld [vmem:[%s332 + $0x228] sm:$0xff]
      %v412 = vld [vmem:[%s332 + $0x230] sm:$0xff]
      %v413 = vld [vmem:[%s332 + $0x238] sm:$0xff]
      %v414 = vld [vmem:[%s332 + $0x240] sm:$0xff]
      %v415 = vld [vmem:[%s332 + $0x248] sm:$0xff]
      %v416 = vld [vmem:[%s332 + $0x250] sm:$0xff]
      %v417 = vld [vmem:[%s332 + $0x258] sm:$0xff]
      %v418 = vld [vmem:[%s332 + $0x260] sm:$0xff]
      %v419 = vld [vmem:[%s332 + $0x268] sm:$0xff]
      %v420 = vld [vmem:[%s332 + $0x270] sm:$0xff]
      %v421 = vld [vmem:[%s332 + $0x278] sm:$0xff]
      %v422 = vld [vmem:[%s332 + $0x280] sm:$0xff]
      %v423 = vld [vmem:[%s332 + $0x288] sm:$0xff]
      %v424 = vld [vmem:[%s332 + $0x290] sm:$0xff]
      %v425 = vld [vmem:[%s332 + $0x298] sm:$0xff]
      %v426 = vld [vmem:[%s332 + $0x2a0] sm:$0xff]
      %v427 = vld [vmem:[%s332 + $0x2a8] sm:$0xff]
      %v428 = vld [vmem:[%s332 + $0x2b0] sm:$0xff]
      %v429 = vld [vmem:[%s332 + $0x2b8] sm:$0xff]
      %v430 = vld [vmem:[%s332 + $0x2c0] sm:$0xff]
      %v431 = vld [vmem:[%s332 + $0x2c8] sm:$0xff]
      %v432 = vld [vmem:[%s332 + $0x2d0] sm:$0xff]
      %v433 = vld [vmem:[%s332 + $0x2d8] sm:$0xff]
      %v434 = vld [vmem:[%s332 + $0x2e0] sm:$0xff]
      %v435 = vld [vmem:[%s332 + $0x2e8] sm:$0xff]
      %v436 = vld [vmem:[%s332 + $0x2f0] sm:$0xff]
      %v437 = vld [vmem:[%s332 + $0x2f8] sm:$0xff]
      %v438 = vld [vmem:[%s332 + $0x300] sm:$0xff]
      %v439 = vld [vmem:[%s332 + $0x308] sm:$0xff]
      %v440 = vld [vmem:[%s332 + $0x310] sm:$0xff]
      %v441 = vld [vmem:[%s332 + $0x318] sm:$0xff]
      %v442 = vld [vmem:[%s332 + $0x320] sm:$0xff]
      %v443 = vld [vmem:[%s332 + $0x328] sm:$0xff]
      %v444 = vld [vmem:[%s332 + $0x330] sm:$0xff]
      %v445 = vld [vmem:[%s332 + $0x338] sm:$0xff]
      %v446 = vld [vmem:[%s332 + $0x340] sm:$0xff]
      %v447 = vld [vmem:[%s332 + $0x348] sm:$0xff]
      %v448 = vld [vmem:[%s332 + $0x350] sm:$0xff]
      %v449 = vld [vmem:[%s332 + $0x358] sm:$0xff]
      %v450 = vld [vmem:[%s332 + $0x360] sm:$0xff]
      %v451 = vld [vmem:[%s332 + $0x368] sm:$0xff]
      %v452 = vld [vmem:[%s332 + $0x370] sm:$0xff]
      %v453 = vld [vmem:[%s332 + $0x378] sm:$0xff]
      %v454 = vpack.c.bf16 %v349, %v342
      %v455 = vpack.c.bf16 %v350, %v343
      %v456 = vpack.c.bf16 %v351, %v344
      %v457 = vpack.c.bf16 %v352, %v345
      %v458 = vpack.c.bf16 %v353, %v346
      %v459 = vpack.c.bf16 %v354, %v347
      %v460 = vpack.c.bf16 %v355, %v348
      %v461 = vpack.c.bf16 %v363, %v356
      %v462 = vpack.c.bf16 %v364, %v357
      %v463 = vpack.c.bf16 %v365, %v358
      %v464 = vpack.c.bf16 %v366, %v359
      %v465 = vpack.c.bf16 %v367, %v360
      %v466 = vpack.c.bf16 %v368, %v361
      %v467 = vpack.c.bf16 %v369, %v362
      %v468 = vpack.c.bf16 %v377, %v370
      %v469 = vpack.c.bf16 %v378, %v371
      %v470 = vpack.c.bf16 %v379, %v372
      %v471 = vpack.c.bf16 %v380, %v373
      %v472 = vpack.c.bf16 %v381, %v374
      %v473 = vpack.c.bf16 %v382, %v375
      %v474 = vpack.c.bf16 %v383, %v376
      %v475 = vpack.c.bf16 %v391, %v384
      %v476 = vpack.c.bf16 %v392, %v385
      %v477 = vpack.c.bf16 %v393, %v386
      %v478 = vpack.c.bf16 %v394, %v387
      %v479 = vpack.c.bf16 %v395, %v388
      %v480 = vpack.c.bf16 %v396, %v389
      %v481 = vpack.c.bf16 %v397, %v390
      %v482 = vpack.c.bf16 %v405, %v398
      %v483 = vpack.c.bf16 %v406, %v399
      %v484 = vpack.c.bf16 %v407, %v400
      %v485 = vpack.c.bf16 %v408, %v401
      %v486 = vpack.c.bf16 %v409, %v402
      %v487 = vpack.c.bf16 %v410, %v403
      %v488 = vpack.c.bf16 %v411, %v404
      %v489 = vpack.c.bf16 %v419, %v412
      %v490 = vpack.c.bf16 %v420, %v413
      %v491 = vpack.c.bf16 %v421, %v414
      %v492 = vpack.c.bf16 %v422, %v415
      %v493 = vpack.c.bf16 %v423, %v416
      %v494 = vpack.c.bf16 %v424, %v417
      %v495 = vpack.c.bf16 %v425, %v418
      %v496 = vpack.c.bf16 %v433, %v426
      %v497 = vpack.c.bf16 %v434, %v427
      %v498 = vpack.c.bf16 %v435, %v428
      %v499 = vpack.c.bf16 %v436, %v429
      %v500 = vpack.c.bf16 %v437, %v430
      %v501 = vpack.c.bf16 %v438, %v431
      %v502 = vpack.c.bf16 %v439, %v432
      %v503 = vpack.c.bf16 %v447, %v440
      %v504 = vpack.c.bf16 %v448, %v441
      %v505 = vpack.c.bf16 %v449, %v442
      %v506 = vpack.c.bf16 %v450, %v443
      %v507 = vpack.c.bf16 %v451, %v444
      %v508 = vpack.c.bf16 %v452, %v445
      %v509 = vpack.c.bf16 %v453, %v446
      %v510 = vld [vmem:[%s1] sm:$0xff]
      %v511 = vld [vmem:[%s1 + $0x8] sm:$0xff]
      %v512 = vld [vmem:[%s1 + $0x10] sm:$0xff]
      %v513 = vld [vmem:[%s1 + $0x18] sm:$0xff]
      %v514 = vld [vmem:[%s1 + $0x20] sm:$0xff]
      %v515 = vld [vmem:[%s1 + $0x28] sm:$0xff]
      %v516 = vld [vmem:[%s1 + $0x30] sm:$0xff]
      %v517 = vld [vmem:[%s1 + $0x38] sm:$0xff]
      %v518 = vld [vmem:[%s1 + $0x40] sm:$0xff]
      %v519 = vld [vmem:[%s1 + $0x48] sm:$0xff]
      %v520 = vld [vmem:[%s1 + $0x50] sm:$0xff]
      %v521 = vld [vmem:[%s1 + $0x58] sm:$0xff]
      %v522 = vld [vmem:[%s1 + $0x60] sm:$0xff]
      %v523 = vld [vmem:[%s1 + $0x68] sm:$0xff]
      %v524 = vld [vmem:[%s1 + $0x70] sm:$0xff]
      %v525 = vld [vmem:[%s1 + $0x78] sm:$0xff]
      %v526 = vld [vmem:[%s1 + $0x80] sm:$0xff]
      %v527 = vld [vmem:[%s1 + $0x88] sm:$0xff]
      %v528 = vld [vmem:[%s1 + $0x90] sm:$0xff]
      %v529 = vld [vmem:[%s1 + $0x98] sm:$0xff]
      %v530 = vld [vmem:[%s1 + $0xa0] sm:$0xff]
      %v531 = vld [vmem:[%s1 + $0xa8] sm:$0xff]
      %v532 = vld [vmem:[%s1 + $0xb0] sm:$0xff]
      %v533 = vld [vmem:[%s1 + $0xb8] sm:$0xff]
      %v534 = vld [vmem:[%s1 + $0xc0] sm:$0xff]
      %v535 = vld [vmem:[%s1 + $0xc8] sm:$0xff]
      %v536 = vld [vmem:[%s1 + $0xd0] sm:$0xff]
      %v537 = vld [vmem:[%s1 + $0xd8] sm:$0xff]
      %v538 = vld [vmem:[%s1 + $0xe0] sm:$0xff]
      %v539 = vld [vmem:[%s1 + $0xe8] sm:$0xff]
      %v540 = vld [vmem:[%s1 + $0xf0] sm:$0xff]
      %v541 = vld [vmem:[%s1 + $0xf8] sm:$0xff]
      %v542 = vld [vmem:[%s1 + $0x100] sm:$0xff]
      %v543 = vld [vmem:[%s1 + $0x108] sm:$0xff]
      %v544 = vld [vmem:[%s1 + $0x110] sm:$0xff]
      %v545 = vld [vmem:[%s1 + $0x118] sm:$0xff]
      %v546 = vld [vmem:[%s1 + $0x120] sm:$0xff]
      %v547 = vld [vmem:[%s1 + $0x128] sm:$0xff]
      %v548 = vld [vmem:[%s1 + $0x130] sm:$0xff]
      %v549 = vld [vmem:[%s1 + $0x138] sm:$0xff]
      %v550 = vld [vmem:[%s1 + $0x140] sm:$0xff]
      %v551 = vld [vmem:[%s1 + $0x148] sm:$0xff]
      %v552 = vld [vmem:[%s1 + $0x150] sm:$0xff]
      %v553 = vld [vmem:[%s1 + $0x158] sm:$0xff]
      %v554 = vld [vmem:[%s1 + $0x160] sm:$0xff]
      %v555 = vld [vmem:[%s1 + $0x168] sm:$0xff]
      %v556 = vld [vmem:[%s1 + $0x170] sm:$0xff]
      %v557 = vld [vmem:[%s1 + $0x178] sm:$0xff]
      %v558 = vld [vmem:[%s1 + $0x180] sm:$0xff]
      %v559 = vld [vmem:[%s1 + $0x188] sm:$0xff]
      %v560 = vld [vmem:[%s1 + $0x190] sm:$0xff]
      %v561 = vld [vmem:[%s1 + $0x198] sm:$0xff]
      %v562 = vld [vmem:[%s1 + $0x1a0] sm:$0xff]
      %v563 = vld [vmem:[%s1 + $0x1a8] sm:$0xff]
      %v564 = vld [vmem:[%s1 + $0x1b0] sm:$0xff]
      %v565 = vld [vmem:[%s1 + $0x1b8] sm:$0xff]
      %v566 = vld [vmem:[%s1 + $0x1c0] sm:$0xff]
      %v567 = vld [vmem:[%s1 + $0x1c8] sm:$0xff]
      %v568 = vld [vmem:[%s1 + $0x1d0] sm:$0xff]
      %v569 = vld [vmem:[%s1 + $0x1d8] sm:$0xff]
      %v570 = vld [vmem:[%s1 + $0x1e0] sm:$0xff]
      %v571 = vld [vmem:[%s1 + $0x1e8] sm:$0xff]
      %v572 = vld [vmem:[%s1 + $0x1f0] sm:$0xff]
      %v573 = vld [vmem:[%s1 + $0x1f8] sm:$0xff]
      %v574 = vld [vmem:[%s1 + $0x200] sm:$0xff]
      %v575 = vld [vmem:[%s1 + $0x208] sm:$0xff]
      %v576 = vld [vmem:[%s1 + $0x210] sm:$0xff]
      %v577 = vld [vmem:[%s1 + $0x218] sm:$0xff]
      %v578 = vld [vmem:[%s1 + $0x220] sm:$0xff]
      %v579 = vld [vmem:[%s1 + $0x228] sm:$0xff]
      %v580 = vld [vmem:[%s1 + $0x230] sm:$0xff]
      %v581 = vld [vmem:[%s1 + $0x238] sm:$0xff]
      %v582 = vld [vmem:[%s1 + $0x240] sm:$0xff]
      %v583 = vld [vmem:[%s1 + $0x248] sm:$0xff]
      %v584 = vld [vmem:[%s1 + $0x250] sm:$0xff]
      %v585 = vld [vmem:[%s1 + $0x258] sm:$0xff]
      %v586 = vld [vmem:[%s1 + $0x260] sm:$0xff]
      %v587 = vld [vmem:[%s1 + $0x268] sm:$0xff]
      %v588 = vld [vmem:[%s1 + $0x270] sm:$0xff]
      %v589 = vld [vmem:[%s1 + $0x278] sm:$0xff]
      %v590 = vld [vmem:[%s1 + $0x280] sm:$0xff]
      %v591 = vld [vmem:[%s1 + $0x288] sm:$0xff]
      %v592 = vld [vmem:[%s1 + $0x290] sm:$0xff]
      %v593 = vld [vmem:[%s1 + $0x298] sm:$0xff]
      %v594 = vld [vmem:[%s1 + $0x2a0] sm:$0xff]
      %v595 = vld [vmem:[%s1 + $0x2a8] sm:$0xff]
      %v596 = vld [vmem:[%s1 + $0x2b0] sm:$0xff]
      %v597 = vld [vmem:[%s1 + $0x2b8] sm:$0xff]
      %v598 = vld [vmem:[%s1 + $0x2c0] sm:$0xff]
      %v599 = vld [vmem:[%s1 + $0x2c8] sm:$0xff]
      %v600 = vld [vmem:[%s1 + $0x2d0] sm:$0xff]
      %v601 = vld [vmem:[%s1 + $0x2d8] sm:$0xff]
      %v602 = vld [vmem:[%s1 + $0x2e0] sm:$0xff]
      %v603 = vld [vmem:[%s1 + $0x2e8] sm:$0xff]
      %v604 = vld [vmem:[%s1 + $0x2f0] sm:$0xff]
      %v605 = vld [vmem:[%s1 + $0x2f8] sm:$0xff]
      %v606 = vld [vmem:[%s1 + $0x300] sm:$0xff]
      %v607 = vld [vmem:[%s1 + $0x308] sm:$0xff]
      %v608 = vld [vmem:[%s1 + $0x310] sm:$0xff]
      %v609 = vld [vmem:[%s1 + $0x318] sm:$0xff]
      %v610 = vld [vmem:[%s1 + $0x320] sm:$0xff]
      %v611 = vld [vmem:[%s1 + $0x328] sm:$0xff]
      %v612 = vld [vmem:[%s1 + $0x330] sm:$0xff]
      %v613 = vld [vmem:[%s1 + $0x338] sm:$0xff]
      %v614 = vld [vmem:[%s1 + $0x340] sm:$0xff]
      %v615 = vld [vmem:[%s1 + $0x348] sm:$0xff]
      %v616 = vld [vmem:[%s1 + $0x350] sm:$0xff]
      %v617 = vld [vmem:[%s1 + $0x358] sm:$0xff]
      %v618 = vld [vmem:[%s1 + $0x360] sm:$0xff]
      %v619 = vld [vmem:[%s1 + $0x368] sm:$0xff]
      %v620 = vld [vmem:[%s1 + $0x370] sm:$0xff]
      %v621 = vld [vmem:[%s1 + $0x378] sm:$0xff]
      %v622 = vld [vmem:[%s1 + $0x380] sm:$0xff]
      %v623 = vld [vmem:[%s1 + $0x388] sm:$0xff]
      %v624 = vld [vmem:[%s1 + $0x390] sm:$0xff]
      %v625 = vld [vmem:[%s1 + $0x398] sm:$0xff]
      %v626 = vld [vmem:[%s1 + $0x3a0] sm:$0xff]
      %v627 = vld [vmem:[%s1 + $0x3a8] sm:$0xff]
      %v628 = vld [vmem:[%s1 + $0x3b0] sm:$0xff]
      %v629 = vld [vmem:[%s1 + $0x3b8] sm:$0xff]
      %v630 = vld [vmem:[%s1 + $0x3c0] sm:$0xff]
      %v631 = vld [vmem:[%s1 + $0x3c8] sm:$0xff]
      %v632 = vld [vmem:[%s1 + $0x3d0] sm:$0xff]
      %v633 = vld [vmem:[%s1 + $0x3d8] sm:$0xff]
      %v634 = vld [vmem:[%s1 + $0x3e0] sm:$0xff]
      %v635 = vld [vmem:[%s1 + $0x3e8] sm:$0xff]
      %v636 = vld [vmem:[%s1 + $0x3f0] sm:$0xff]
      %v637 = vld [vmem:[%s1 + $0x3f8] sm:$0xff]
      %v638 = vld [vmem:[%s1 + $0x400] sm:$0xff]
      %v639 = vld [vmem:[%s1 + $0x408] sm:$0xff]
      %v640 = vld [vmem:[%s1 + $0x410] sm:$0xff]
      %v641 = vld [vmem:[%s1 + $0x418] sm:$0xff]
      %v642 = vld [vmem:[%s1 + $0x420] sm:$0xff]
      %v643 = vld [vmem:[%s1 + $0x428] sm:$0xff]
      %v644 = vld [vmem:[%s1 + $0x430] sm:$0xff]
      %v645 = vld [vmem:[%s1 + $0x438] sm:$0xff]
      %v646 = vld [vmem:[%s1 + $0x440] sm:$0xff]
      %v647 = vld [vmem:[%s1 + $0x448] sm:$0xff]
      %v648 = vld [vmem:[%s1 + $0x450] sm:$0xff]
      %v649 = vld [vmem:[%s1 + $0x458] sm:$0xff]
      %v650 = vld [vmem:[%s1 + $0x460] sm:$0xff]
      %v651 = vld [vmem:[%s1 + $0x468] sm:$0xff]
      %v652 = vld [vmem:[%s1 + $0x470] sm:$0xff]
      %v653 = vld [vmem:[%s1 + $0x478] sm:$0xff]
      %v654 = vld [vmem:[%s1 + $0x480] sm:$0xff]
      %v655 = vld [vmem:[%s1 + $0x488] sm:$0xff]
      %v656 = vld [vmem:[%s1 + $0x490] sm:$0xff]
      %v657 = vld [vmem:[%s1 + $0x498] sm:$0xff]
      %v658 = vld [vmem:[%s1 + $0x4a0] sm:$0xff]
      %v659 = vld [vmem:[%s1 + $0x4a8] sm:$0xff]
      %v660 = vld [vmem:[%s1 + $0x4b0] sm:$0xff]
      %v661 = vld [vmem:[%s1 + $0x4b8] sm:$0xff]
      %v662 = vld [vmem:[%s1 + $0x4c0] sm:$0xff]
      %v663 = vld [vmem:[%s1 + $0x4c8] sm:$0xff]
      %v664 = vld [vmem:[%s1 + $0x4d0] sm:$0xff]
      %v665 = vld [vmem:[%s1 + $0x4d8] sm:$0xff]
      %v666 = vld [vmem:[%s1 + $0x4e0] sm:$0xff]
      %v667 = vld [vmem:[%s1 + $0x4e8] sm:$0xff]
      %v668 = vld [vmem:[%s1 + $0x4f0] sm:$0xff]
      %v669 = vld [vmem:[%s1 + $0x4f8] sm:$0xff]
      %v670 = vld [vmem:[%s1 + $0x500] sm:$0xff]
      %v671 = vld [vmem:[%s1 + $0x508] sm:$0xff]
      %v672 = vld [vmem:[%s1 + $0x510] sm:$0xff]
      %v673 = vld [vmem:[%s1 + $0x518] sm:$0xff]
      %v674 = vld [vmem:[%s1 + $0x520] sm:$0xff]
      %v675 = vld [vmem:[%s1 + $0x528] sm:$0xff]
      %v676 = vld [vmem:[%s1 + $0x530] sm:$0xff]
      %v677 = vld [vmem:[%s1 + $0x538] sm:$0xff]
      %v678 = vld [vmem:[%s1 + $0x540] sm:$0xff]
      %v679 = vld [vmem:[%s1 + $0x548] sm:$0xff]
      %v680 = vld [vmem:[%s1 + $0x550] sm:$0xff]
      %v681 = vld [vmem:[%s1 + $0x558] sm:$0xff]
      %v682 = vld [vmem:[%s1 + $0x560] sm:$0xff]
      %v683 = vld [vmem:[%s1 + $0x568] sm:$0xff]
      %v684 = vld [vmem:[%s1 + $0x570] sm:$0xff]
      %v685 = vld [vmem:[%s1 + $0x578] sm:$0xff]
      %v686 = vld [vmem:[%s1 + $0x580] sm:$0xff]
      %v687 = vld [vmem:[%s1 + $0x588] sm:$0xff]
      %v688 = vld [vmem:[%s1 + $0x590] sm:$0xff]
      %v689 = vld [vmem:[%s1 + $0x598] sm:$0xff]
      %v690 = vld [vmem:[%s1 + $0x5a0] sm:$0xff]
      %v691 = vld [vmem:[%s1 + $0x5a8] sm:$0xff]
      %v692 = vld [vmem:[%s1 + $0x5b0] sm:$0xff]
      %v693 = vld [vmem:[%s1 + $0x5b8] sm:$0xff]
      %v694 = vld [vmem:[%s1 + $0x5c0] sm:$0xff]
      %v695 = vld [vmem:[%s1 + $0x5c8] sm:$0xff]
      %v696 = vld [vmem:[%s1 + $0x5d0] sm:$0xff]
      %v697 = vld [vmem:[%s1 + $0x5d8] sm:$0xff]
      %v698 = vld [vmem:[%s1 + $0x5e0] sm:$0xff]
      %v699 = vld [vmem:[%s1 + $0x5e8] sm:$0xff]
      %v700 = vld [vmem:[%s1 + $0x5f0] sm:$0xff]
      %v701 = vld [vmem:[%s1 + $0x5f8] sm:$0xff]
      %v702 = vld [vmem:[%s1 + $0x600] sm:$0xff]
      %v703 = vld [vmem:[%s1 + $0x608] sm:$0xff]
      %v704 = vld [vmem:[%s1 + $0x610] sm:$0xff]
      %v705 = vld [vmem:[%s1 + $0x618] sm:$0xff]
      %v706 = vld [vmem:[%s2] sm:$0xf]
      %v708 = vlaneseq
      %v709 = vshrl.u32 %v708, 7
      %v710 = vsub.s32 0, %v709
      %v711 = vrot.slane %v706, %v710
      %v712 = vlaneseq
      %v713 = vshrl.u32 %v712, 7
      %v714 = vsub.s32 1, %v713
      %v715 = vrot.slane %v706, %v714
      %v716 = vlaneseq
      %v717 = vshrl.u32 %v716, 7
      %v718 = vsub.s32 2, %v717
      %v719 = vrot.slane %v706, %v718
      %v720 = vlaneseq
      %v721 = vshrl.u32 %v720, 7
      %v722 = vsub.s32 3, %v721
      %v723 = vrot.slane %v706, %v722
      %v924 = vunpack.c.l.b16 %v510
      %v925 = vunpack.c.h.b16 %v510
      %v926 = vunpack.c.l.b16 %v511
      %v927 = vunpack.c.h.b16 %v511
      %v928 = vunpack.c.l.b16 %v512
      %v929 = vunpack.c.h.b16 %v512
      %v930 = vunpack.c.l.b16 %v513
      %v931 = vunpack.c.h.b16 %v513
      %v932 = vunpack.c.l.b16 %v514
      %v933 = vunpack.c.h.b16 %v514
      %v934 = vunpack.c.l.b16 %v515
      %v935 = vunpack.c.h.b16 %v515
      %v936 = vunpack.c.l.b16 %v516
      %v937 = vunpack.c.h.b16 %v516
      %v938 = vunpack.c.l.b16 %v517
      %v939 = vunpack.c.h.b16 %v517
      %v940 = vunpack.c.l.b16 %v518
      %v941 = vunpack.c.h.b16 %v518
      %v942 = vunpack.c.l.b16 %v519
      %v943 = vunpack.c.h.b16 %v519
      %v944 = vunpack.c.l.b16 %v520
      %v945 = vunpack.c.h.b16 %v520
      %v946 = vunpack.c.l.b16 %v521
      %v947 = vunpack.c.h.b16 %v521
      %v948 = vunpack.c.l.b16 %v522
      %v949 = vunpack.c.h.b16 %v522
      %v950 = vunpack.c.l.b16 %v523
      %v951 = vunpack.c.h.b16 %v523
      %v952 = vunpack.c.l.b16 %v524
      %v953 = vunpack.c.h.b16 %v524
      %v954 = vunpack.c.l.b16 %v525
      %v955 = vunpack.c.h.b16 %v525
      %v956 = vunpack.c.l.b16 %v526
      %v957 = vunpack.c.h.b16 %v526
      %v958 = vunpack.c.l.b16 %v527
      %v959 = vunpack.c.h.b16 %v527
      %v960 = vunpack.c.l.b16 %v528
      %v961 = vunpack.c.h.b16 %v528
      %v962 = vunpack.c.l.b16 %v529
      %v963 = vunpack.c.h.b16 %v529
      %v964 = vunpack.c.l.b16 %v530
      %v965 = vunpack.c.h.b16 %v530
      %v966 = vunpack.c.l.b16 %v531
      %v967 = vunpack.c.h.b16 %v531
      %v968 = vunpack.c.l.b16 %v532
      %v969 = vunpack.c.h.b16 %v532
      %v970 = vunpack.c.l.b16 %v533
      %v971 = vunpack.c.h.b16 %v533
      %v972 = vunpack.c.l.b16 %v534
      %v973 = vunpack.c.h.b16 %v534
      %v974 = vunpack.c.l.b16 %v535
      %v975 = vunpack.c.h.b16 %v535
      %v976 = vunpack.c.l.b16 %v536
      %v977 = vunpack.c.h.b16 %v536
      %v978 = vunpack.c.l.b16 %v537
      %v979 = vunpack.c.h.b16 %v537
      %v980 = vunpack.c.l.b16 %v538
      %v981 = vunpack.c.h.b16 %v538
      %v982 = vunpack.c.l.b16 %v539
      %v983 = vunpack.c.h.b16 %v539
      %v984 = vunpack.c.l.b16 %v540
      %v985 = vunpack.c.h.b16 %v540
      %v986 = vunpack.c.l.b16 %v541
      %v987 = vunpack.c.h.b16 %v541
      %v988 = vunpack.c.l.b16 %v542
      %v989 = vunpack.c.h.b16 %v542
      %v990 = vunpack.c.l.b16 %v543
      %v991 = vunpack.c.h.b16 %v543
      %v992 = vunpack.c.l.b16 %v544
      %v993 = vunpack.c.h.b16 %v544
      %v994 = vunpack.c.l.b16 %v545
      %v995 = vunpack.c.h.b16 %v545
      %v996 = vunpack.c.l.b16 %v546
      %v997 = vunpack.c.h.b16 %v546
      %v998 = vunpack.c.l.b16 %v547
      %v999 = vunpack.c.h.b16 %v547
      %v1000 = vunpack.c.l.b16 %v548
      %v1001 = vunpack.c.h.b16 %v548
      %v1002 = vunpack.c.l.b16 %v549
      %v1003 = vunpack.c.h.b16 %v549
      %v1004 = vunpack.c.l.b16 %v550
      %v1005 = vunpack.c.h.b16 %v550
      %v1006 = vunpack.c.l.b16 %v551
      %v1007 = vunpack.c.h.b16 %v551
      %v1008 = vunpack.c.l.b16 %v552
      %v1009 = vunpack.c.h.b16 %v552
      %v1010 = vunpack.c.l.b16 %v553
      %v1011 = vunpack.c.h.b16 %v553
      %v1012 = vunpack.c.l.b16 %v554
      %v1013 = vunpack.c.h.b16 %v554
      %v1014 = vunpack.c.l.b16 %v555
      %v1015 = vunpack.c.h.b16 %v555
      %v1016 = vunpack.c.l.b16 %v556
      %v1017 = vunpack.c.h.b16 %v556
      %v1018 = vunpack.c.l.b16 %v557
      %v1019 = vunpack.c.h.b16 %v557
      %v1020 = vunpack.c.l.b16 %v558
      %v1021 = vunpack.c.h.b16 %v558
      %v1022 = vunpack.c.l.b16 %v559
      %v1023 = vunpack.c.h.b16 %v559
      %v1024 = vunpack.c.l.b16 %v560
      %v1025 = vunpack.c.h.b16 %v560
      %v1026 = vunpack.c.l.b16 %v561
      %v1027 = vunpack.c.h.b16 %v561
      %v1028 = vunpack.c.l.b16 %v562
      %v1029 = vunpack.c.h.b16 %v562
      %v1030 = vunpack.c.l.b16 %v563
      %v1031 = vunpack.c.h.b16 %v563
      %v1032 = vunpack.c.l.b16 %v564
      %v1033 = vunpack.c.h.b16 %v564
      %v1034 = vunpack.c.l.b16 %v565
      %v1035 = vunpack.c.h.b16 %v565
      %v1036 = vunpack.c.l.b16 %v566
      %v1037 = vunpack.c.h.b16 %v566
      %v1038 = vunpack.c.l.b16 %v567
      %v1039 = vunpack.c.h.b16 %v567
      %v1040 = vunpack.c.l.b16 %v568
      %v1041 = vunpack.c.h.b16 %v568
      %v1042 = vunpack.c.l.b16 %v569
      %v1043 = vunpack.c.h.b16 %v569
      %v1044 = vunpack.c.l.b16 %v570
      %v1045 = vunpack.c.h.b16 %v570
      %v1046 = vunpack.c.l.b16 %v571
      %v1047 = vunpack.c.h.b16 %v571
      %v1048 = vunpack.c.l.b16 %v572
      %v1049 = vunpack.c.h.b16 %v572
      %v1050 = vunpack.c.l.b16 %v573
      %v1051 = vunpack.c.h.b16 %v573
      %v1052 = vunpack.c.l.b16 %v574
      %v1053 = vunpack.c.h.b16 %v574
      %v1054 = vunpack.c.l.b16 %v575
      %v1055 = vunpack.c.h.b16 %v575
      %v1056 = vunpack.c.l.b16 %v576
      %v1057 = vunpack.c.h.b16 %v576
      %v1058 = vunpack.c.l.b16 %v577
      %v1059 = vunpack.c.h.b16 %v577
      %v1060 = vunpack.c.l.b16 %v578
      %v1061 = vunpack.c.h.b16 %v578
      %v1062 = vunpack.c.l.b16 %v579
      %v1063 = vunpack.c.h.b16 %v579
      %v1064 = vunpack.c.l.b16 %v580
      %v1065 = vunpack.c.h.b16 %v580
      %v1066 = vunpack.c.l.b16 %v581
      %v1067 = vunpack.c.h.b16 %v581
      %v1068 = vunpack.c.l.b16 %v582
      %v1069 = vunpack.c.h.b16 %v582
      %v1070 = vunpack.c.l.b16 %v583
      %v1071 = vunpack.c.h.b16 %v583
      %v1072 = vunpack.c.l.b16 %v584
      %v1073 = vunpack.c.h.b16 %v584
      %v1074 = vunpack.c.l.b16 %v585
      %v1075 = vunpack.c.h.b16 %v585
      %v1076 = vunpack.c.l.b16 %v586
      %v1077 = vunpack.c.h.b16 %v586
      %v1078 = vunpack.c.l.b16 %v587
      %v1079 = vunpack.c.h.b16 %v587
      %v1080 = vunpack.c.l.b16 %v588
      %v1081 = vunpack.c.h.b16 %v588
      %v1082 = vunpack.c.l.b16 %v589
      %v1083 = vunpack.c.h.b16 %v589
      %v1084 = vunpack.c.l.b16 %v590
      %v1085 = vunpack.c.h.b16 %v590
      %v1086 = vunpack.c.l.b16 %v591
      %v1087 = vunpack.c.h.b16 %v591
      %v1088 = vunpack.c.l.b16 %v592
      %v1089 = vunpack.c.h.b16 %v592
      %v1090 = vunpack.c.l.b16 %v593
      %v1091 = vunpack.c.h.b16 %v593
      %v1092 = vunpack.c.l.b16 %v594
      %v1093 = vunpack.c.h.b16 %v594
      %v1094 = vunpack.c.l.b16 %v595
      %v1095 = vunpack.c.h.b16 %v595
      %v1096 = vunpack.c.l.b16 %v596
      %v1097 = vunpack.c.h.b16 %v596
      %v1098 = vunpack.c.l.b16 %v597
      %v1099 = vunpack.c.h.b16 %v597
      %v1100 = vunpack.c.l.b16 %v598
      %v1101 = vunpack.c.h.b16 %v598
      %v1102 = vunpack.c.l.b16 %v599
      %v1103 = vunpack.c.h.b16 %v599
      %v1104 = vunpack.c.l.b16 %v600
      %v1105 = vunpack.c.h.b16 %v600
      %v1106 = vunpack.c.l.b16 %v601
      %v1107 = vunpack.c.h.b16 %v601
      %v1108 = vunpack.c.l.b16 %v602
      %v1109 = vunpack.c.h.b16 %v602
      %v1110 = vunpack.c.l.b16 %v603
      %v1111 = vunpack.c.h.b16 %v603
      %v1112 = vunpack.c.l.b16 %v604
      %v1113 = vunpack.c.h.b16 %v604
      %v1114 = vunpack.c.l.b16 %v605
      %v1115 = vunpack.c.h.b16 %v605
      %v1116 = vunpack.c.l.b16 %v606
      %v1117 = vunpack.c.h.b16 %v606
      %v1118 = vunpack.c.l.b16 %v607
      %v1119 = vunpack.c.h.b16 %v607
      %v1120 = vunpack.c.l.b16 %v608
      %v1121 = vunpack.c.h.b16 %v608
      %v1122 = vunpack.c.l.b16 %v609
      %v1123 = vunpack.c.h.b16 %v609
      %v1124 = vunpack.c.l.b16 %v610
      %v1125 = vunpack.c.h.b16 %v610
      %v1126 = vunpack.c.l.b16 %v611
      %v1127 = vunpack.c.h.b16 %v611
      %v1128 = vunpack.c.l.b16 %v612
      %v1129 = vunpack.c.h.b16 %v612
      %v1130 = vunpack.c.l.b16 %v613
      %v1131 = vunpack.c.h.b16 %v613
      %v1132 = vunpack.c.l.b16 %v614
      %v1133 = vunpack.c.h.b16 %v614
      %v1134 = vunpack.c.l.b16 %v615
      %v1135 = vunpack.c.h.b16 %v615
      %v1136 = vunpack.c.l.b16 %v616
      %v1137 = vunpack.c.h.b16 %v616
      %v1138 = vunpack.c.l.b16 %v617
      %v1139 = vunpack.c.h.b16 %v617
      %v1140 = vunpack.c.l.b16 %v618
      %v1141 = vunpack.c.h.b16 %v618
      %v1142 = vunpack.c.l.b16 %v619
      %v1143 = vunpack.c.h.b16 %v619
      %v1144 = vunpack.c.l.b16 %v620
      %v1145 = vunpack.c.h.b16 %v620
      %v1146 = vunpack.c.l.b16 %v621
      %v1147 = vunpack.c.h.b16 %v621
      %v1148 = vunpack.c.l.b16 %v622
      %v1149 = vunpack.c.h.b16 %v622
      %v1150 = vunpack.c.l.b16 %v623
      %v1151 = vunpack.c.h.b16 %v623
      %v1152 = vunpack.c.l.b16 %v624
      %v1153 = vunpack.c.h.b16 %v624
      %v1154 = vunpack.c.l.b16 %v625
      %v1155 = vunpack.c.h.b16 %v625
      %v1156 = vunpack.c.l.b16 %v626
      %v1157 = vunpack.c.h.b16 %v626
      %v1158 = vunpack.c.l.b16 %v627
      %v1159 = vunpack.c.h.b16 %v627
      %v1160 = vunpack.c.l.b16 %v628
      %v1161 = vunpack.c.h.b16 %v628
      %v1162 = vunpack.c.l.b16 %v629
      %v1163 = vunpack.c.h.b16 %v629
      %v1164 = vunpack.c.l.b16 %v630
      %v1165 = vunpack.c.h.b16 %v630
      %v1166 = vunpack.c.l.b16 %v631
      %v1167 = vunpack.c.h.b16 %v631
      %v1168 = vunpack.c.l.b16 %v632
      %v1169 = vunpack.c.h.b16 %v632
      %v1170 = vunpack.c.l.b16 %v633
      %v1171 = vunpack.c.h.b16 %v633
      %v1172 = vunpack.c.l.b16 %v634
      %v1173 = vunpack.c.h.b16 %v634
      %v1174 = vunpack.c.l.b16 %v635
      %v1175 = vunpack.c.h.b16 %v635
      %v1176 = vunpack.c.l.b16 %v636
      %v1177 = vunpack.c.h.b16 %v636
      %v1178 = vunpack.c.l.b16 %v637
      %v1179 = vunpack.c.h.b16 %v637
      %v1180 = vunpack.c.l.b16 %v638
      %v1181 = vunpack.c.h.b16 %v638
      %v1182 = vunpack.c.l.b16 %v639
      %v1183 = vunpack.c.h.b16 %v639
      %v1184 = vunpack.c.l.b16 %v640
      %v1185 = vunpack.c.h.b16 %v640
      %v1186 = vunpack.c.l.b16 %v641
      %v1187 = vunpack.c.h.b16 %v641
      %v1188 = vunpack.c.l.b16 %v642
      %v1189 = vunpack.c.h.b16 %v642
      %v1190 = vunpack.c.l.b16 %v643
      %v1191 = vunpack.c.h.b16 %v643
      %v1192 = vunpack.c.l.b16 %v644
      %v1193 = vunpack.c.h.b16 %v644
      %v1194 = vunpack.c.l.b16 %v645
      %v1195 = vunpack.c.h.b16 %v645
      %v1196 = vunpack.c.l.b16 %v646
      %v1197 = vunpack.c.h.b16 %v646
      %v1198 = vunpack.c.l.b16 %v647
      %v1199 = vunpack.c.h.b16 %v647
      %v1200 = vunpack.c.l.b16 %v648
      %v1201 = vunpack.c.h.b16 %v648
      %v1202 = vunpack.c.l.b16 %v649
      %v1203 = vunpack.c.h.b16 %v649
      %v1204 = vunpack.c.l.b16 %v650
      %v1205 = vunpack.c.h.b16 %v650
      %v1206 = vunpack.c.l.b16 %v651
      %v1207 = vunpack.c.h.b16 %v651
      %v1208 = vunpack.c.l.b16 %v652
      %v1209 = vunpack.c.h.b16 %v652
      %v1210 = vunpack.c.l.b16 %v653
      %v1211 = vunpack.c.h.b16 %v653
      %v1212 = vunpack.c.l.b16 %v654
      %v1213 = vunpack.c.h.b16 %v654
      %v1214 = vunpack.c.l.b16 %v655
      %v1215 = vunpack.c.h.b16 %v655
      %v1216 = vunpack.c.l.b16 %v656
      %v1217 = vunpack.c.h.b16 %v656
      %v1218 = vunpack.c.l.b16 %v657
      %v1219 = vunpack.c.h.b16 %v657
      %v1220 = vunpack.c.l.b16 %v658
      %v1221 = vunpack.c.h.b16 %v658
      %v1222 = vunpack.c.l.b16 %v659
      %v1223 = vunpack.c.h.b16 %v659
      %v1224 = vunpack.c.l.b16 %v660
      %v1225 = vunpack.c.h.b16 %v660
      %v1226 = vunpack.c.l.b16 %v661
      %v1227 = vunpack.c.h.b16 %v661
      %v1228 = vunpack.c.l.b16 %v662
      %v1229 = vunpack.c.h.b16 %v662
      %v1230 = vunpack.c.l.b16 %v663
      %v1231 = vunpack.c.h.b16 %v663
      %v1232 = vunpack.c.l.b16 %v664
      %v1233 = vunpack.c.h.b16 %v664
      %v1234 = vunpack.c.l.b16 %v665
      %v1235 = vunpack.c.h.b16 %v665
      %v1236 = vunpack.c.l.b16 %v666
      %v1237 = vunpack.c.h.b16 %v666
      %v1238 = vunpack.c.l.b16 %v667
      %v1239 = vunpack.c.h.b16 %v667
      %v1240 = vunpack.c.l.b16 %v668
      %v1241 = vunpack.c.h.b16 %v668
      %v1242 = vunpack.c.l.b16 %v669
      %v1243 = vunpack.c.h.b16 %v669
      %v1244 = vunpack.c.l.b16 %v670
      %v1245 = vunpack.c.h.b16 %v670
      %v1246 = vunpack.c.l.b16 %v671
      %v1247 = vunpack.c.h.b16 %v671
      %v1248 = vunpack.c.l.b16 %v672
      %v1249 = vunpack.c.h.b16 %v672
      %v1250 = vunpack.c.l.b16 %v673
      %v1251 = vunpack.c.h.b16 %v673
      %v1252 = vunpack.c.l.b16 %v674
      %v1253 = vunpack.c.h.b16 %v674
      %v1254 = vunpack.c.l.b16 %v675
      %v1255 = vunpack.c.h.b16 %v675
      %v1256 = vunpack.c.l.b16 %v676
      %v1257 = vunpack.c.h.b16 %v676
      %v1258 = vunpack.c.l.b16 %v677
      %v1259 = vunpack.c.h.b16 %v677
      %v1260 = vunpack.c.l.b16 %v678
      %v1261 = vunpack.c.h.b16 %v678
      %v1262 = vunpack.c.l.b16 %v679
      %v1263 = vunpack.c.h.b16 %v679
      %v1264 = vunpack.c.l.b16 %v680
      %v1265 = vunpack.c.h.b16 %v680
      %v1266 = vunpack.c.l.b16 %v681
      %v1267 = vunpack.c.h.b16 %v681
      %v1268 = vunpack.c.l.b16 %v682
      %v1269 = vunpack.c.h.b16 %v682
      %v1270 = vunpack.c.l.b16 %v683
      %v1271 = vunpack.c.h.b16 %v683
      %v1272 = vunpack.c.l.b16 %v684
      %v1273 = vunpack.c.h.b16 %v684
      %v1274 = vunpack.c.l.b16 %v685
      %v1275 = vunpack.c.h.b16 %v685
      %v1276 = vunpack.c.l.b16 %v686
      %v1277 = vunpack.c.h.b16 %v686
      %v1278 = vunpack.c.l.b16 %v687
      %v1279 = vunpack.c.h.b16 %v687
      %v1280 = vunpack.c.l.b16 %v688
      %v1281 = vunpack.c.h.b16 %v688
      %v1282 = vunpack.c.l.b16 %v689
      %v1283 = vunpack.c.h.b16 %v689
      %v1284 = vunpack.c.l.b16 %v690
      %v1285 = vunpack.c.h.b16 %v690
      %v1286 = vunpack.c.l.b16 %v691
      %v1287 = vunpack.c.h.b16 %v691
      %v1288 = vunpack.c.l.b16 %v692
      %v1289 = vunpack.c.h.b16 %v692
      %v1290 = vunpack.c.l.b16 %v693
      %v1291 = vunpack.c.h.b16 %v693
      %v1292 = vunpack.c.l.b16 %v694
      %v1293 = vunpack.c.h.b16 %v694
      %v1294 = vunpack.c.l.b16 %v695
      %v1295 = vunpack.c.h.b16 %v695
      %v1296 = vunpack.c.l.b16 %v696
      %v1297 = vunpack.c.h.b16 %v696
      %v1298 = vunpack.c.l.b16 %v697
      %v1299 = vunpack.c.h.b16 %v697
      %v1300 = vunpack.c.l.b16 %v698
      %v1301 = vunpack.c.h.b16 %v698
      %v1302 = vunpack.c.l.b16 %v699
      %v1303 = vunpack.c.h.b16 %v699
      %v1304 = vunpack.c.l.b16 %v700
      %v1305 = vunpack.c.h.b16 %v700
      %v1306 = vunpack.c.l.b16 %v701
      %v1307 = vunpack.c.h.b16 %v701
      %v1308 = vunpack.c.l.b16 %v702
      %v1309 = vunpack.c.h.b16 %v702
      %v1310 = vunpack.c.l.b16 %v703
      %v1311 = vunpack.c.h.b16 %v703
      %v1312 = vunpack.c.l.b16 %v704
      %v1313 = vunpack.c.h.b16 %v704
      %v1314 = vunpack.c.l.b16 %v705
      %v1315 = vunpack.c.h.b16 %v705
      %v1316 = vpack.c.b16 %v928, %v924
      %v1317 = vpack.c.b16 %v929, %v925
      %v1318 = vpack.c.b16 %v930, %v926
      %v1319 = vpack.c.b16 %v931, %v927
      %v1320 = vpack.c.b16 %v936, %v932
      %v1321 = vpack.c.b16 %v937, %v933
      %v1322 = vpack.c.b16 %v938, %v934
      %v1323 = vpack.c.b16 %v939, %v935
      %v1324 = vpack.c.b16 %v944, %v940
      %v1325 = vpack.c.b16 %v945, %v941
      %v1326 = vpack.c.b16 %v946, %v942
      %v1327 = vpack.c.b16 %v947, %v943
      %v1328 = vpack.c.b16 %v952, %v948
      %v1329 = vpack.c.b16 %v953, %v949
      %v1330 = vpack.c.b16 %v954, %v950
      %v1331 = vpack.c.b16 %v955, %v951
      %v1332 = vpack.c.b16 %v960, %v956
      %v1333 = vpack.c.b16 %v961, %v957
      %v1334 = vpack.c.b16 %v962, %v958
      %v1335 = vpack.c.b16 %v963, %v959
      %v1336 = vpack.c.b16 %v968, %v964
      %v1337 = vpack.c.b16 %v969, %v965
      %v1338 = vpack.c.b16 %v970, %v966
      %v1339 = vpack.c.b16 %v971, %v967
      %v1340 = vpack.c.b16 %v976, %v972
      %v1341 = vpack.c.b16 %v977, %v973
      %v1342 = vpack.c.b16 %v978, %v974
      %v1343 = vpack.c.b16 %v979, %v975
      %v1344 = vpack.c.b16 %v984, %v980
      %v1345 = vpack.c.b16 %v985, %v981
      %v1346 = vpack.c.b16 %v986, %v982
      %v1347 = vpack.c.b16 %v987, %v983
      %v1348 = vpack.c.b16 %v992, %v988
      %v1349 = vpack.c.b16 %v993, %v989
      %v1350 = vpack.c.b16 %v994, %v990
      %v1351 = vpack.c.b16 %v995, %v991
      %v1352 = vpack.c.b16 %v1000, %v996
      %v1353 = vpack.c.b16 %v1001, %v997
      %v1354 = vpack.c.b16 %v1002, %v998
      %v1355 = vpack.c.b16 %v1003, %v999
      %v1356 = vpack.c.b16 %v1008, %v1004
      %v1357 = vpack.c.b16 %v1009, %v1005
      %v1358 = vpack.c.b16 %v1010, %v1006
      %v1359 = vpack.c.b16 %v1011, %v1007
      %v1360 = vpack.c.b16 %v1016, %v1012
      %v1361 = vpack.c.b16 %v1017, %v1013
      %v1362 = vpack.c.b16 %v1018, %v1014
      %v1363 = vpack.c.b16 %v1019, %v1015
      %v1364 = vpack.c.b16 %v1024, %v1020
      %v1365 = vpack.c.b16 %v1025, %v1021
      %v1366 = vpack.c.b16 %v1026, %v1022
      %v1367 = vpack.c.b16 %v1027, %v1023
      %v1368 = vpack.c.b16 %v1032, %v1028
      %v1369 = vpack.c.b16 %v1033, %v1029
      %v1370 = vpack.c.b16 %v1034, %v1030
      %v1371 = vpack.c.b16 %v1035, %v1031
      %v1372 = vpack.c.b16 %v1040, %v1036
      %v1373 = vpack.c.b16 %v1041, %v1037
      %v1374 = vpack.c.b16 %v1042, %v1038
      %v1375 = vpack.c.b16 %v1043, %v1039
      %v1376 = vpack.c.b16 %v1048, %v1044
      %v1377 = vpack.c.b16 %v1049, %v1045
      %v1378 = vpack.c.b16 %v1050, %v1046
      %v1379 = vpack.c.b16 %v1051, %v1047
      %v1380 = vpack.c.b16 %v1056, %v1052
      %v1381 = vpack.c.b16 %v1057, %v1053
      %v1382 = vpack.c.b16 %v1058, %v1054
      %v1383 = vpack.c.b16 %v1059, %v1055
      %v1384 = vpack.c.b16 %v1064, %v1060
      %v1385 = vpack.c.b16 %v1065, %v1061
      %v1386 = vpack.c.b16 %v1066, %v1062
      %v1387 = vpack.c.b16 %v1067, %v1063
      %v1388 = vpack.c.b16 %v1072, %v1068
      %v1389 = vpack.c.b16 %v1073, %v1069
      %v1390 = vpack.c.b16 %v1074, %v1070
      %v1391 = vpack.c.b16 %v1075, %v1071
      %v1392 = vpack.c.b16 %v1080, %v1076
      %v1393 = vpack.c.b16 %v1081, %v1077
      %v1394 = vpack.c.b16 %v1082, %v1078
      %v1395 = vpack.c.b16 %v1083, %v1079
      %v1396 = vpack.c.b16 %v1088, %v1084
      %v1397 = vpack.c.b16 %v1089, %v1085
      %v1398 = vpack.c.b16 %v1090, %v1086
      %v1399 = vpack.c.b16 %v1091, %v1087
      %v1400 = vpack.c.b16 %v1096, %v1092
      %v1401 = vpack.c.b16 %v1097, %v1093
      %v1402 = vpack.c.b16 %v1098, %v1094
      %v1403 = vpack.c.b16 %v1099, %v1095
      %v1404 = vpack.c.b16 %v1104, %v1100
      %v1405 = vpack.c.b16 %v1105, %v1101
      %v1406 = vpack.c.b16 %v1106, %v1102
      %v1407 = vpack.c.b16 %v1107, %v1103
      %v1408 = vpack.c.b16 %v1112, %v1108
      %v1409 = vpack.c.b16 %v1113, %v1109
      %v1410 = vpack.c.b16 %v1114, %v1110
      %v1411 = vpack.c.b16 %v1115, %v1111
      %v1412 = vpack.c.b16 %v1120, %v1116
      %v1413 = vpack.c.b16 %v1121, %v1117
      %v1414 = vpack.c.b16 %v1122, %v1118
      %v1415 = vpack.c.b16 %v1123, %v1119
      %v1416 = vpack.c.b16 %v1128, %v1124
      %v1417 = vpack.c.b16 %v1129, %v1125
      %v1418 = vpack.c.b16 %v1130, %v1126
      %v1419 = vpack.c.b16 %v1131, %v1127
      %v1420 = vpack.c.b16 %v1136, %v1132
      %v1421 = vpack.c.b16 %v1137, %v1133
      %v1422 = vpack.c.b16 %v1138, %v1134
      %v1423 = vpack.c.b16 %v1139, %v1135
      %v1424 = vpack.c.b16 %v1144, %v1140
      %v1425 = vpack.c.b16 %v1145, %v1141
      %v1426 = vpack.c.b16 %v1146, %v1142
      %v1427 = vpack.c.b16 %v1147, %v1143
      %v1428 = vpack.c.b16 %v1152, %v1148
      %v1429 = vpack.c.b16 %v1153, %v1149
      %v1430 = vpack.c.b16 %v1154, %v1150
      %v1431 = vpack.c.b16 %v1155, %v1151
      %v1432 = vpack.c.b16 %v1160, %v1156
      %v1433 = vpack.c.b16 %v1161, %v1157
      %v1434 = vpack.c.b16 %v1162, %v1158
      %v1435 = vpack.c.b16 %v1163, %v1159
      %v1436 = vpack.c.b16 %v1168, %v1164
      %v1437 = vpack.c.b16 %v1169, %v1165
      %v1438 = vpack.c.b16 %v1170, %v1166
      %v1439 = vpack.c.b16 %v1171, %v1167
      %v1440 = vpack.c.b16 %v1176, %v1172
      %v1441 = vpack.c.b16 %v1177, %v1173
      %v1442 = vpack.c.b16 %v1178, %v1174
      %v1443 = vpack.c.b16 %v1179, %v1175
      %v1444 = vpack.c.b16 %v1184, %v1180
      %v1445 = vpack.c.b16 %v1185, %v1181
      %v1446 = vpack.c.b16 %v1186, %v1182
      %v1447 = vpack.c.b16 %v1187, %v1183
      %v1448 = vpack.c.b16 %v1192, %v1188
      %v1449 = vpack.c.b16 %v1193, %v1189
      %v1450 = vpack.c.b16 %v1194, %v1190
      %v1451 = vpack.c.b16 %v1195, %v1191
      %v1452 = vpack.c.b16 %v1200, %v1196
      %v1453 = vpack.c.b16 %v1201, %v1197
      %v1454 = vpack.c.b16 %v1202, %v1198
      %v1455 = vpack.c.b16 %v1203, %v1199
      %v1456 = vpack.c.b16 %v1208, %v1204
      %v1457 = vpack.c.b16 %v1209, %v1205
      %v1458 = vpack.c.b16 %v1210, %v1206
      %v1459 = vpack.c.b16 %v1211, %v1207
      %v1460 = vpack.c.b16 %v1216, %v1212
      %v1461 = vpack.c.b16 %v1217, %v1213
      %v1462 = vpack.c.b16 %v1218, %v1214
      %v1463 = vpack.c.b16 %v1219, %v1215
      %v1464 = vpack.c.b16 %v1224, %v1220
      %v1465 = vpack.c.b16 %v1225, %v1221
      %v1466 = vpack.c.b16 %v1226, %v1222
      %v1467 = vpack.c.b16 %v1227, %v1223
      %v1468 = vpack.c.b16 %v1232, %v1228
      %v1469 = vpack.c.b16 %v1233, %v1229
      %v1470 = vpack.c.b16 %v1234, %v1230
      %v1471 = vpack.c.b16 %v1235, %v1231
      %v1472 = vpack.c.b16 %v1240, %v1236
      %v1473 = vpack.c.b16 %v1241, %v1237
      %v1474 = vpack.c.b16 %v1242, %v1238
      %v1475 = vpack.c.b16 %v1243, %v1239
      %v1476 = vpack.c.b16 %v1248, %v1244
      %v1477 = vpack.c.b16 %v1249, %v1245
      %v1478 = vpack.c.b16 %v1250, %v1246
      %v1479 = vpack.c.b16 %v1251, %v1247
      %v1480 = vpack.c.b16 %v1256, %v1252
      %v1481 = vpack.c.b16 %v1257, %v1253
      %v1482 = vpack.c.b16 %v1258, %v1254
      %v1483 = vpack.c.b16 %v1259, %v1255
      %v1484 = vpack.c.b16 %v1264, %v1260
      %v1485 = vpack.c.b16 %v1265, %v1261
      %v1486 = vpack.c.b16 %v1266, %v1262
      %v1487 = vpack.c.b16 %v1267, %v1263
      %v1488 = vpack.c.b16 %v1272, %v1268
      %v1489 = vpack.c.b16 %v1273, %v1269
      %v1490 = vpack.c.b16 %v1274, %v1270
      %v1491 = vpack.c.b16 %v1275, %v1271
      %v1492 = vpack.c.b16 %v1280, %v1276
      %v1493 = vpack.c.b16 %v1281, %v1277
      %v1494 = vpack.c.b16 %v1282, %v1278
      %v1495 = vpack.c.b16 %v1283, %v1279
      %v1496 = vpack.c.b16 %v1288, %v1284
      %v1497 = vpack.c.b16 %v1289, %v1285
      %v1498 = vpack.c.b16 %v1290, %v1286
      %v1499 = vpack.c.b16 %v1291, %v1287
      %v1500 = vpack.c.b16 %v1296, %v1292
      %v1501 = vpack.c.b16 %v1297, %v1293
      %v1502 = vpack.c.b16 %v1298, %v1294
      %v1503 = vpack.c.b16 %v1299, %v1295
      %v1504 = vpack.c.b16 %v1304, %v1300
      %v1505 = vpack.c.b16 %v1305, %v1301
      %v1506 = vpack.c.b16 %v1306, %v1302
      %v1507 = vpack.c.b16 %v1307, %v1303
      %v1508 = vpack.c.b16 %v1312, %v1308
      %v1509 = vpack.c.b16 %v1313, %v1309
      %v1510 = vpack.c.b16 %v1314, %v1310
      %v1511 = vpack.c.b16 %v1315, %v1311
      %vm1708 = vcmask 130048
      %v1710 = vsel %vm1708, %v460, 0
      %v1713 = vsel %vm1708, %v467, 0
      %v1716 = vsel %vm1708, %v474, 0
      %v1719 = vsel %vm1708, %v481, 0
      %v1722 = vsel %vm1708, %v488, 0
      %v1725 = vsel %vm1708, %v495, 0
      %v1728 = vsel %vm1708, %v502, 0
      %v1731 = vsel %vm1708, %v509, 0
      %1733 = vmatprep.subr.bf16.mxu0 %v1317
      %1734 = vmatpush1.bf16.msra.mxu0 %v1316
      %1735 = vmatprep.subr.bf16.mxu0 %v1321
      %1736 = vmatpush1.bf16.msra.mxu0 %v1320
      %1737 = vmatprep.subr.bf16.mxu0 %v1325
      %1738 = vmatpush1.bf16.msra.mxu0 %v1324
      %1739 = vmatprep.subr.bf16.mxu0 %v1329
      %1740 = vmatpush1.bf16.msra.mxu0 %v1328
      %1741 = vmatprep.subr.bf16.mxu0 %v1333
      %1742 = vmatpush1.bf16.msra.mxu0 %v1332
      %1743 = vmatprep.subr.bf16.mxu0 %v1337
      %1744 = vmatpush1.bf16.msra.mxu0 %v1336
      %1745 = vmatprep.subr.bf16.mxu0 %v1341
      %1746 = vmatpush1.bf16.msra.mxu0 %v1340
      %1747 = vmatprep.subr.bf16.mxu0 %v1345
      %1748 = vmatpush1.bf16.msra.mxu0 %v1344
      %1749 = vmatprep.subr.bf16.mxu0 %v1349
      %1750 = vmatpush1.bf16.msra.mxu0 %v1348
      %1751 = vmatprep.subr.bf16.mxu0 %v1353
      %1752 = vmatpush1.bf16.msra.mxu0 %v1352
      %1753 = vmatprep.subr.bf16.mxu0 %v1357
      %1754 = vmatpush1.bf16.msra.mxu0 %v1356
      %1755 = vmatprep.subr.bf16.mxu0 %v1361
      %1756 = vmatpush1.bf16.msra.mxu0 %v1360
      %1757 = vmatprep.subr.bf16.mxu0 %v1365
      %1758 = vmatpush1.bf16.msra.mxu0 %v1364
      %1759 = vmatprep.subr.bf16.mxu0 %v1369
      %1760 = vmatpush1.bf16.msra.mxu0 %v1368
      %1761 = vmatprep.subr.bf16.mxu0 %v1373
      %1762 = vmatpush1.bf16.msra.mxu0 %v1372
      %1763 = vmatprep.subr.bf16.mxu0 %v1377
      %1764 = vmatpush1.bf16.msra.mxu0 %v1376
      %1765 = vmatprep.mubr.bf16.mxu0 %v455
      %1766 = vmatmul.mubr.bf16.gmra.mrb[0].mxu0 %v454
      %v1767 = vpop.f32.mrb[0].mxu0
      %v1768 = vadd.f32 %v711, %v1767
      %v1769 = vpop.f32.mrb[0].mxu0
      %v1770 = vadd.f32 %v715, %v1769
      %v1771 = vpop.f32.mrb[0].mxu0
      %v1772 = vadd.f32 %v711, %v1771
      %v1773 = vpop.f32.mrb[0].mxu0
      %v1774 = vadd.f32 %v715, %v1773
      %1775 = vmatprep.mubr.bf16.mxu0 %v462
      %1776 = vmatmul.mubr.bf16.gmra.mrb[0].mxu0 %v461
      %v1777 = vpop.f32.mrb[0].mxu0
      %v1778 = vadd.f32 %v711, %v1777
      %v1779 = vpop.f32.mrb[0].mxu0
      %v1780 = vadd.f32 %v715, %v1779
      %v1781 = vpop.f32.mrb[0].mxu0
      %v1782 = vadd.f32 %v711, %v1781
      %v1783 = vpop.f32.mrb[0].mxu0
      %v1784 = vadd.f32 %v715, %v1783
      %1785 = vmatprep.mubr.bf16.mxu0 %v469
      %1786 = vmatmul.mubr.bf16.gmra.mrb[0].mxu0 %v468
      %v1787 = vpop.f32.mrb[0].mxu0
      %v1788 = vadd.f32 %v711, %v1787
      %v1789 = vpop.f32.mrb[0].mxu0
      %v1790 = vadd.f32 %v715, %v1789
      %v1791 = vpop.f32.mrb[0].mxu0
      %v1792 = vadd.f32 %v711, %v1791
      %v1793 = vpop.f32.mrb[0].mxu0
      %v1794 = vadd.f32 %v715, %v1793
      %1795 = vmatprep.mubr.bf16.mxu0 %v476
      %1796 = vmatmul.mubr.bf16.gmra.mrb[0].mxu0 %v475
      %v1797 = vpop.f32.mrb[0].mxu0
      %v1798 = vadd.f32 %v711, %v1797
      %v1799 = vpop.f32.mrb[0].mxu0
      %v1800 = vadd.f32 %v715, %v1799
      %v1801 = vpop.f32.mrb[0].mxu0
      %v1802 = vadd.f32 %v711, %v1801
      %v1803 = vpop.f32.mrb[0].mxu0
      %v1804 = vadd.f32 %v715, %v1803
      %1805 = vmatprep.mubr.bf16.mxu0 %v483
      %1806 = vmatmul.mubr.bf16.gmra.mrb[0].mxu0 %v482
      %v1807 = vpop.f32.mrb[0].mxu0
      %v1808 = vadd.f32 %v711, %v1807
      %v1809 = vpop.f32.mrb[0].mxu0
      %v1810 = vadd.f32 %v715, %v1809
      %v1811 = vpop.f32.mrb[0].mxu0
      %v1812 = vadd.f32 %v711, %v1811
      %v1813 = vpop.f32.mrb[0].mxu0
      %v1814 = vadd.f32 %v715, %v1813
      %1815 = vmatprep.mubr.bf16.mxu0 %v490
      %1816 = vmatmul.mubr.bf16.gmra.mrb[0].mxu0 %v489
      %v1817 = vpop.f32.mrb[0].mxu0
      %v1818 = vadd.f32 %v711, %v1817
      %v1819 = vpop.f32.mrb[0].mxu0
      %v1820 = vadd.f32 %v715, %v1819
      %v1821 = vpop.f32.mrb[0].mxu0
      %v1822 = vadd.f32 %v711, %v1821
      %v1823 = vpop.f32.mrb[0].mxu0
      %v1824 = vadd.f32 %v715, %v1823
      %1825 = vmatprep.mubr.bf16.mxu0 %v497
      %1826 = vmatmul.mubr.bf16.gmra.mrb[0].mxu0 %v496
      %v1827 = vpop.f32.mrb[0].mxu0
      %v1828 = vadd.f32 %v711, %v1827
      %v1829 = vpop.f32.mrb[0].mxu0
      %v1830 = vadd.f32 %v715, %v1829
      %v1831 = vpop.f32.mrb[0].mxu0
      %v1832 = vadd.f32 %v711, %v1831
      %v1833 = vpop.f32.mrb[0].mxu0
      %v1834 = vadd.f32 %v715, %v1833
      %1835 = vmatprep.mubr.bf16.mxu0 %v504
      %1836 = vmatmul.mubr.bf16.gmra.mrb[0].mxu0 %v503
      %v1837 = vpop.f32.mrb[0].mxu0
      %v1838 = vadd.f32 %v711, %v1837
      %v1839 = vpop.f32.mrb[0].mxu0
      %v1840 = vadd.f32 %v715, %v1839
      %v1841 = vpop.f32.mrb[0].mxu0
      %v1842 = vadd.f32 %v711, %v1841
      %v1843 = vpop.f32.mrb[0].mxu0
      %v1844 = vadd.f32 %v715, %v1843
      %1845 = vdwg.mxu0
      %1846 = vmatprep.subr.bf16.mxu0 %v1381
      %1847 = vmatpush1.bf16.msra.mxu0 %v1380
      %1848 = vmatprep.subr.bf16.mxu0 %v1385
      %1849 = vmatpush1.bf16.msra.mxu0 %v1384
      %1850 = vmatprep.subr.bf16.mxu0 %v1389
      %1851 = vmatpush1.bf16.msra.mxu0 %v1388
      %1852 = vmatprep.subr.bf16.mxu0 %v1393
      %1853 = vmatpush1.bf16.msra.mxu0 %v1392
      %1854 = vmatprep.subr.bf16.mxu0 %v1397
      %1855 = vmatpush1.bf16.msra.mxu0 %v1396
      %1856 = vmatprep.subr.bf16.mxu0 %v1401
      %1857 = vmatpush1.bf16.msra.mxu0 %v1400
      %1858 = vmatprep.subr.bf16.mxu0 %v1405
      %1859 = vmatpush1.bf16.msra.mxu0 %v1404
      %1860 = vmatprep.subr.bf16.mxu0 %v1409
      %1861 = vmatpush1.bf16.msra.mxu0 %v1408
      %1862 = vmatprep.subr.bf16.mxu0 %v1413
      %1863 = vmatpush1.bf16.msra.mxu0 %v1412
      %1864 = vmatprep.subr.bf16.mxu0 %v1417
      %1865 = vmatpush1.bf16.msra.mxu0 %v1416
      %1866 = vmatprep.subr.bf16.mxu0 %v1421
      %1867 = vmatpush1.bf16.msra.mxu0 %v1420
      %1868 = vmatprep.subr.bf16.mxu0 %v1425
      %1869 = vmatpush1.bf16.msra.mxu0 %v1424
      %1870 = vmatprep.subr.bf16.mxu0 %v1429
      %1871 = vmatpush1.bf16.msra.mxu0 %v1428
      %1872 = vmatprep.subr.bf16.mxu0 %v1433
      %1873 = vmatpush1.bf16.msra.mxu0 %v1432
      %1874 = vmatprep.subr.bf16.mxu0 %v1437
      %1875 = vmatpush1.bf16.msra.mxu0 %v1436
      %1876 = vmatprep.subr.bf16.mxu0 %v1441
      %1877 = vmatpush1.bf16.msra.mxu0 %v1440
      %1878 = vmatprep.mubr.bf16.mxu0 %v457
      %1879 = vmatmul.mubr.bf16.gmra.mrb[0].mxu0 %v456
      %v1880 = vpop.f32.mrb[0].mxu0
      %v1881 = vadd.f32 %v1768, %v1880
      %v1882 = vpop.f32.mrb[0].mxu0
      %v1883 = vadd.f32 %v1770, %v1882
      %v1884 = vpop.f32.mrb[0].mxu0
      %v1885 = vadd.f32 %v1772, %v1884
      %v1886 = vpop.f32.mrb[0].mxu0
      %v1887 = vadd.f32 %v1774, %v1886
      %1888 = vmatprep.mubr.bf16.mxu0 %v464
      %1889 = vmatmul.mubr.bf16.gmra.mrb[0].mxu0 %v463
      %v1890 = vpop.f32.mrb[0].mxu0
      %v1891 = vadd.f32 %v1778, %v1890
      %v1892 = vpop.f32.mrb[0].mxu0
      %v1893 = vadd.f32 %v1780, %v1892
      %v1894 = vpop.f32.mrb[0].mxu0
      %v1895 = vadd.f32 %v1782, %v1894
      %v1896 = vpop.f32.mrb[0].mxu0
      %v1897 = vadd.f32 %v1784, %v1896
      %1898 = vmatprep.mubr.bf16.mxu0 %v471
      %1899 = vmatmul.mubr.bf16.gmra.mrb[0].mxu0 %v470
      %v1900 = vpop.f32.mrb[0].mxu0
      %v1901 = vadd.f32 %v1788, %v1900
      %v1902 = vpop.f32.mrb[0].mxu0
      %v1903 = vadd.f32 %v1790, %v1902
      %v1904 = vpop.f32.mrb[0].mxu0
      %v1905 = vadd.f32 %v1792, %v1904
      %v1906 = vpop.f32.mrb[0].mxu0
      %v1907 = vadd.f32 %v1794, %v1906
      %1908 = vmatprep.mubr.bf16.mxu0 %v478
      %1909 = vmatmul.mubr.bf16.gmra.mrb[0].mxu0 %v477
      %v1910 = vpop.f32.mrb[0].mxu0
      %v1911 = vadd.f32 %v1798, %v1910
      %v1912 = vpop.f32.mrb[0].mxu0
      %v1913 = vadd.f32 %v1800, %v1912
      %v1914 = vpop.f32.mrb[0].mxu0
      %v1915 = vadd.f32 %v1802, %v1914
      %v1916 = vpop.f32.mrb[0].mxu0
      %v1917 = vadd.f32 %v1804, %v1916
      %1918 = vmatprep.mubr.bf16.mxu0 %v485
      %1919 = vmatmul.mubr.bf16.gmra.mrb[0].mxu0 %v484
      %v1920 = vpop.f32.mrb[0].mxu0
      %v1921 = vadd.f32 %v1808, %v1920
      %v1922 = vpop.f32.mrb[0].mxu0
      %v1923 = vadd.f32 %v1810, %v1922
      %v1924 = vpop.f32.mrb[0].mxu0
      %v1925 = vadd.f32 %v1812, %v1924
      %v1926 = vpop.f32.mrb[0].mxu0
      %v1927 = vadd.f32 %v1814, %v1926
      %1928 = vmatprep.mubr.bf16.mxu0 %v492
      %1929 = vmatmul.mubr.bf16.gmra.mrb[0].mxu0 %v491
      %v1930 = vpop.f32.mrb[0].mxu0
      %v1931 = vadd.f32 %v1818, %v1930
      %v1932 = vpop.f32.mrb[0].mxu0
      %v1933 = vadd.f32 %v1820, %v1932
      %v1934 = vpop.f32.mrb[0].mxu0
      %v1935 = vadd.f32 %v1822, %v1934
      %v1936 = vpop.f32.mrb[0].mxu0
      %v1937 = vadd.f32 %v1824, %v1936
      %1938 = vmatprep.mubr.bf16.mxu0 %v499
      %1939 = vmatmul.mubr.bf16.gmra.mrb[0].mxu0 %v498
      %v1940 = vpop.f32.mrb[0].mxu0
      %v1941 = vadd.f32 %v1828, %v1940
      %v1942 = vpop.f32.mrb[0].mxu0
      %v1943 = vadd.f32 %v1830, %v1942
      %v1944 = vpop.f32.mrb[0].mxu0
      %v1945 = vadd.f32 %v1832, %v1944
      %v1946 = vpop.f32.mrb[0].mxu0
      %v1947 = vadd.f32 %v1834, %v1946
      %1948 = vmatprep.mubr.bf16.mxu0 %v506
      %1949 = vmatmul.mubr.bf16.gmra.mrb[0].mxu0 %v505
      %v1950 = vpop.f32.mrb[0].mxu0
      %v1951 = vadd.f32 %v1838, %v1950
      %v1952 = vpop.f32.mrb[0].mxu0
      %v1953 = vadd.f32 %v1840, %v1952
      %v1954 = vpop.f32.mrb[0].mxu0
      %v1955 = vadd.f32 %v1842, %v1954
      %v1956 = vpop.f32.mrb[0].mxu0
      %v1957 = vadd.f32 %v1844, %v1956
      %1958 = vdwg.mxu0
      %1959 = vmatprep.subr.bf16.mxu0 %v1445
      %1960 = vmatpush1.bf16.msra.mxu0 %v1444
      %1961 = vmatprep.subr.bf16.mxu0 %v1449
      %1962 = vmatpush1.bf16.msra.mxu0 %v1448
      %1963 = vmatprep.subr.bf16.mxu0 %v1453
      %1964 = vmatpush1.bf16.msra.mxu0 %v1452
      %1965 = vmatprep.subr.bf16.mxu0 %v1457
      %1966 = vmatpush1.bf16.msra.mxu0 %v1456
      %1967 = vmatprep.subr.bf16.mxu0 %v1461
      %1968 = vmatpush1.bf16.msra.mxu0 %v1460
      %1969 = vmatprep.subr.bf16.mxu0 %v1465
      %1970 = vmatpush1.bf16.msra.mxu0 %v1464
      %1971 = vmatprep.subr.bf16.mxu0 %v1469
      %1972 = vmatpush1.bf16.msra.mxu0 %v1468
      %1973 = vmatprep.subr.bf16.mxu0 %v1473
      %1974 = vmatpush1.bf16.msra.mxu0 %v1472
      %1975 = vmatprep.subr.bf16.mxu0 %v1477
      %1976 = vmatpush1.bf16.msra.mxu0 %v1476
      %1977 = vmatprep.subr.bf16.mxu0 %v1481
      %1978 = vmatpush1.bf16.msra.mxu0 %v1480
      %1979 = vmatprep.subr.bf16.mxu0 %v1485
      %1980 = vmatpush1.bf16.msra.mxu0 %v1484
      %1981 = vmatprep.subr.bf16.mxu0 %v1489
      %1982 = vmatpush1.bf16.msra.mxu0 %v1488
      %1983 = vmatprep.subr.bf16.mxu0 %v1493
      %1984 = vmatpush1.bf16.msra.mxu0 %v1492
      %1985 = vmatprep.subr.bf16.mxu0 %v1497
      %1986 = vmatpush1.bf16.msra.mxu0 %v1496
      %1987 = vmatprep.subr.bf16.mxu0 %v1501
      %1988 = vmatpush1.bf16.msra.mxu0 %v1500
      %1989 = vmatprep.subr.bf16.mxu0 %v1505
      %1990 = vmatpush1.bf16.msra.mxu0 %v1504
      %1991 = vmatprep.mubr.bf16.mxu0 %v459
      %1992 = vmatmul.mubr.bf16.gmra.mrb[0].mxu0 %v458
      %v1993 = vpop.f32.mrb[0].mxu0
      %v1994 = vadd.f32 %v1881, %v1993
      %v1995 = vpop.f32.mrb[0].mxu0
      %v1996 = vadd.f32 %v1883, %v1995
      %v1997 = vpop.f32.mrb[0].mxu0
      %v1998 = vadd.f32 %v1885, %v1997
      %v1999 = vpop.f32.mrb[0].mxu0
      %v2000 = vadd.f32 %v1887, %v1999
      %2001 = vmatprep.mubr.bf16.mxu0 %v466
      %2002 = vmatmul.mubr.bf16.gmra.mrb[0].mxu0 %v465
      %v2003 = vpop.f32.mrb[0].mxu0
      %v2004 = vadd.f32 %v1891, %v2003
      %v2005 = vpop.f32.mrb[0].mxu0
      %v2006 = vadd.f32 %v1893, %v2005
      %v2007 = vpop.f32.mrb[0].mxu0
      %v2008 = vadd.f32 %v1895, %v2007
      %v2009 = vpop.f32.mrb[0].mxu0
      %v2010 = vadd.f32 %v1897, %v2009
      %2011 = vmatprep.mubr.bf16.mxu0 %v473
      %2012 = vmatmul.mubr.bf16.gmra.mrb[0].mxu0 %v472
      %v2013 = vpop.f32.mrb[0].mxu0
      %v2014 = vadd.f32 %v1901, %v2013
      %v2015 = vpop.f32.mrb[0].mxu0
      %v2016 = vadd.f32 %v1903, %v2015
      %v2017 = vpop.f32.mrb[0].mxu0
      %v2018 = vadd.f32 %v1905, %v2017
      %v2019 = vpop.f32.mrb[0].mxu0
      %v2020 = vadd.f32 %v1907, %v2019
      %2021 = vmatprep.mubr.bf16.mxu0 %v480
      %2022 = vmatmul.mubr.bf16.gmra.mrb[0].mxu0 %v479
      %v2023 = vpop.f32.mrb[0].mxu0
      %v2024 = vadd.f32 %v1911, %v2023
      %v2025 = vpop.f32.mrb[0].mxu0
      %v2026 = vadd.f32 %v1913, %v2025
      %v2027 = vpop.f32.mrb[0].mxu0
      %v2028 = vadd.f32 %v1915, %v2027
      %v2029 = vpop.f32.mrb[0].mxu0
      %v2030 = vadd.f32 %v1917, %v2029
      %2031 = vmatprep.mubr.bf16.mxu0 %v487
      %2032 = vmatmul.mubr.bf16.gmra.mrb[0].mxu0 %v486
      %v2033 = vpop.f32.mrb[0].mxu0
      %v2034 = vadd.f32 %v1921, %v2033
      %v2035 = vpop.f32.mrb[0].mxu0
      %v2036 = vadd.f32 %v1923, %v2035
      %v2037 = vpop.f32.mrb[0].mxu0
      %v2038 = vadd.f32 %v1925, %v2037
      %v2039 = vpop.f32.mrb[0].mxu0
      %v2040 = vadd.f32 %v1927, %v2039
      %2041 = vmatprep.mubr.bf16.mxu0 %v494
      %2042 = vmatmul.mubr.bf16.gmra.mrb[0].mxu0 %v493
      %v2043 = vpop.f32.mrb[0].mxu0
      %v2044 = vadd.f32 %v1931, %v2043
      %v2045 = vpop.f32.mrb[0].mxu0
      %v2046 = vadd.f32 %v1933, %v2045
      %v2047 = vpop.f32.mrb[0].mxu0
      %v2048 = vadd.f32 %v1935, %v2047
      %v2049 = vpop.f32.mrb[0].mxu0
      %v2050 = vadd.f32 %v1937, %v2049
      %2051 = vmatprep.mubr.bf16.mxu0 %v501
      %2052 = vmatmul.mubr.bf16.gmra.mrb[0].mxu0 %v500
      %v2053 = vpop.f32.mrb[0].mxu0
      %v2054 = vadd.f32 %v1941, %v2053
      %v2055 = vpop.f32.mrb[0].mxu0
      %v2056 = vadd.f32 %v1943, %v2055
      %v2057 = vpop.f32.mrb[0].mxu0
      %v2058 = vadd.f32 %v1945, %v2057
      %v2059 = vpop.f32.mrb[0].mxu0
      %v2060 = vadd.f32 %v1947, %v2059
      %2061 = vmatprep.mubr.bf16.mxu0 %v508
      %2062 = vmatmul.mubr.bf16.gmra.mrb[0].mxu0 %v507
      %v2063 = vpop.f32.mrb[0].mxu0
      %v2064 = vadd.f32 %v1951, %v2063
      %v2065 = vpop.f32.mrb[0].mxu0
      %v2066 = vadd.f32 %v1953, %v2065
      %v2067 = vpop.f32.mrb[0].mxu0
      %v2068 = vadd.f32 %v1955, %v2067
      %v2069 = vpop.f32.mrb[0].mxu0
      %v2070 = vadd.f32 %v1957, %v2069
      %2071 = vdwg.mxu0
      %2072 = vmatprep.subr.bf16.mxu0 %v1509
      %2073 = vmatpush1.bf16.msra.mxu0 %v1508
      %2074 = vmatprep.subr.bf16.mxu0 0
      %2075 = vmatpush1.bf16.msra.mxu0 0
      %2076 = vmatprep.subr.bf16.mxu0 0
      %2077 = vmatpush1.bf16.msra.mxu0 0
      %2078 = vmatprep.subr.bf16.mxu0 0
      %2079 = vmatpush1.bf16.msra.mxu0 0
      %2080 = vmatprep.subr.bf16.mxu0 0
      %2081 = vmatpush1.bf16.msra.mxu0 0
      %2082 = vmatprep.subr.bf16.mxu0 0
      %2083 = vmatpush1.bf16.msra.mxu0 0
      %2084 = vmatprep.subr.bf16.mxu0 0
      %2085 = vmatpush1.bf16.msra.mxu0 0
      %2086 = vmatprep.subr.bf16.mxu0 0
      %2087 = vmatpush1.bf16.msra.mxu0 0
      %2088 = vmatprep.subr.bf16.mxu0 0
      %2089 = vmatpush1.bf16.msra.mxu0 0
      %2090 = vmatprep.subr.bf16.mxu0 0
      %2091 = vmatpush1.bf16.msra.mxu0 0
      %2092 = vmatprep.subr.bf16.mxu0 0
      %2093 = vmatpush1.bf16.msra.mxu0 0
      %2094 = vmatprep.subr.bf16.mxu0 0
      %2095 = vmatpush1.bf16.msra.mxu0 0
      %2096 = vmatprep.subr.bf16.mxu0 0
      %2097 = vmatpush1.bf16.msra.mxu0 0
      %2098 = vmatprep.subr.bf16.mxu0 0
      %2099 = vmatpush1.bf16.msra.mxu0 0
      %2100 = vmatprep.subr.bf16.mxu0 0
      %2101 = vmatpush1.bf16.msra.mxu0 0
      %2102 = vmatprep.subr.bf16.mxu0 0
      %2103 = vmatpush1.bf16.msra.mxu0 0
      %2104 = vmatprep.mubr.bf16.mxu0 0
      %2105 = vmatmul.mubr.bf16.gmra.mrb[0].mxu0 %v1710
      %v2106 = vpop.f32.mrb[0].mxu0
      %v2107 = vadd.f32 %v1994, %v2106
      %v2108 = vpop.f32.mrb[0].mxu0
      %v2109 = vadd.f32 %v1996, %v2108
      %v2110 = vpop.f32.mrb[0].mxu0
      %v2111 = vadd.f32 %v1998, %v2110
      %v2112 = vpop.f32.mrb[0].mxu0
      %v2113 = vadd.f32 %v2000, %v2112
      %2114 = vmatprep.mubr.bf16.mxu0 0
      %2115 = vmatmul.mubr.bf16.gmra.mrb[0].mxu0 %v1713
      %v2116 = vpop.f32.mrb[0].mxu0
      %v2117 = vadd.f32 %v2004, %v2116
      %v2118 = vpop.f32.mrb[0].mxu0
      %v2119 = vadd.f32 %v2006, %v2118
      %v2120 = vpop.f32.mrb[0].mxu0
      %v2121 = vadd.f32 %v2008, %v2120
      %v2122 = vpop.f32.mrb[0].mxu0
      %v2123 = vadd.f32 %v2010, %v2122
      %2124 = vmatprep.mubr.bf16.mxu0 0
      %2125 = vmatmul.mubr.bf16.gmra.mrb[0].mxu0 %v1716
      %v2126 = vpop.f32.mrb[0].mxu0
      %v2127 = vadd.f32 %v2014, %v2126
      %v2128 = vpop.f32.mrb[0].mxu0
      %v2129 = vadd.f32 %v2016, %v2128
      %v2130 = vpop.f32.mrb[0].mxu0
      %v2131 = vadd.f32 %v2018, %v2130
      %v2132 = vpop.f32.mrb[0].mxu0
      %v2133 = vadd.f32 %v2020, %v2132
      %2134 = vmatprep.mubr.bf16.mxu0 0
      %2135 = vmatmul.mubr.bf16.gmra.mrb[0].mxu0 %v1719
      %v2136 = vpop.f32.mrb[0].mxu0
      %v2137 = vadd.f32 %v2024, %v2136
      %v2138 = vpop.f32.mrb[0].mxu0
      %v2139 = vadd.f32 %v2026, %v2138
      %v2140 = vpop.f32.mrb[0].mxu0
      %v2141 = vadd.f32 %v2028, %v2140
      %v2142 = vpop.f32.mrb[0].mxu0
      %v2143 = vadd.f32 %v2030, %v2142
      %2144 = vmatprep.mubr.bf16.mxu0 0
      %2145 = vmatmul.mubr.bf16.gmra.mrb[0].mxu0 %v1722
      %v2146 = vpop.f32.mrb[0].mxu0
      %v2147 = vadd.f32 %v2034, %v2146
      %v2148 = vpop.f32.mrb[0].mxu0
      %v2149 = vadd.f32 %v2036, %v2148
      %v2150 = vpop.f32.mrb[0].mxu0
      %v2151 = vadd.f32 %v2038, %v2150
      %v2152 = vpop.f32.mrb[0].mxu0
      %v2153 = vadd.f32 %v2040, %v2152
      %2154 = vmatprep.mubr.bf16.mxu0 0
      %2155 = vmatmul.mubr.bf16.gmra.mrb[0].mxu0 %v1725
      %v2156 = vpop.f32.mrb[0].mxu0
      %v2157 = vadd.f32 %v2044, %v2156
      %v2158 = vpop.f32.mrb[0].mxu0
      %v2159 = vadd.f32 %v2046, %v2158
      %v2160 = vpop.f32.mrb[0].mxu0
      %v2161 = vadd.f32 %v2048, %v2160
      %v2162 = vpop.f32.mrb[0].mxu0
      %v2163 = vadd.f32 %v2050, %v2162
      %2164 = vmatprep.mubr.bf16.mxu0 0
      %2165 = vmatmul.mubr.bf16.gmra.mrb[0].mxu0 %v1728
      %v2166 = vpop.f32.mrb[0].mxu0
      %v2167 = vadd.f32 %v2054, %v2166
      %v2168 = vpop.f32.mrb[0].mxu0
      %v2169 = vadd.f32 %v2056, %v2168
      %v2170 = vpop.f32.mrb[0].mxu0
      %v2171 = vadd.f32 %v2058, %v2170
      %v2172 = vpop.f32.mrb[0].mxu0
      %v2173 = vadd.f32 %v2060, %v2172
      %2174 = vmatprep.mubr.bf16.mxu0 0
      %2175 = vmatmul.mubr.bf16.gmra.mrb[0].mxu0 %v1731
      %v2176 = vpop.f32.mrb[0].mxu0
      %v2177 = vadd.f32 %v2064, %v2176
      %v2178 = vpop.f32.mrb[0].mxu0
      %v2179 = vadd.f32 %v2066, %v2178
      %v2180 = vpop.f32.mrb[0].mxu0
      %v2181 = vadd.f32 %v2068, %v2180
      %v2182 = vpop.f32.mrb[0].mxu0
      %v2183 = vadd.f32 %v2070, %v2182
      %2184 = vdwg.mxu0
      %2185 = vmatprep.subr.bf16.mxu0 %v1319
      %2186 = vmatpush1.bf16.msra.mxu0 %v1318
      %2187 = vmatprep.subr.bf16.mxu0 %v1323
      %2188 = vmatpush1.bf16.msra.mxu0 %v1322
      %2189 = vmatprep.subr.bf16.mxu0 %v1327
      %2190 = vmatpush1.bf16.msra.mxu0 %v1326
      %2191 = vmatprep.subr.bf16.mxu0 %v1331
      %2192 = vmatpush1.bf16.msra.mxu0 %v1330
      %2193 = vmatprep.subr.bf16.mxu0 %v1335
      %2194 = vmatpush1.bf16.msra.mxu0 %v1334
      %2195 = vmatprep.subr.bf16.mxu0 %v1339
      %2196 = vmatpush1.bf16.msra.mxu0 %v1338
      %2197 = vmatprep.subr.bf16.mxu0 %v1343
      %2198 = vmatpush1.bf16.msra.mxu0 %v1342
      %2199 = vmatprep.subr.bf16.mxu0 %v1347
      %2200 = vmatpush1.bf16.msra.mxu0 %v1346
      %2201 = vmatprep.subr.bf16.mxu0 %v1351
      %2202 = vmatpush1.bf16.msra.mxu0 %v1350
      %2203 = vmatprep.subr.bf16.mxu0 %v1355
      %2204 = vmatpush1.bf16.msra.mxu0 %v1354
      %2205 = vmatprep.subr.bf16.mxu0 %v1359
      %2206 = vmatpush1.bf16.msra.mxu0 %v1358
      %2207 = vmatprep.subr.bf16.mxu0 %v1363
      %2208 = vmatpush1.bf16.msra.mxu0 %v1362
      %2209 = vmatprep.subr.bf16.mxu0 %v1367
      %2210 = vmatpush1.bf16.msra.mxu0 %v1366
      %2211 = vmatprep.subr.bf16.mxu0 %v1371
      %2212 = vmatpush1.bf16.msra.mxu0 %v1370
      %2213 = vmatprep.subr.bf16.mxu0 %v1375
      %2214 = vmatpush1.bf16.msra.mxu0 %v1374
      %2215 = vmatprep.subr.bf16.mxu0 %v1379
      %2216 = vmatpush1.bf16.msra.mxu0 %v1378
      %2217 = vmatprep.mubr.bf16.mxu0 %v455
      %2218 = vmatmul.mubr.bf16.gmra.mrb[0].mxu0 %v454
      %v2219 = vpop.f32.mrb[0].mxu0
      %v2220 = vadd.f32 %v719, %v2219
      %v2221 = vpop.f32.mrb[0].mxu0
      %v2222 = vadd.f32 %v723, %v2221
      %v2223 = vpop.f32.mrb[0].mxu0
      %v2224 = vadd.f32 %v719, %v2223
      %v2225 = vpop.f32.mrb[0].mxu0
      %v2226 = vadd.f32 %v723, %v2225
      %2227 = vmatprep.mubr.bf16.mxu0 %v462
      %2228 = vmatmul.mubr.bf16.gmra.mrb[0].mxu0 %v461
      %v2229 = vpop.f32.mrb[0].mxu0
      %v2230 = vadd.f32 %v719, %v2229
      %v2231 = vpop.f32.mrb[0].mxu0
      %v2232 = vadd.f32 %v723, %v2231
      %v2233 = vpop.f32.mrb[0].mxu0
      %v2234 = vadd.f32 %v719, %v2233
      %v2235 = vpop.f32.mrb[0].mxu0
      %v2236 = vadd.f32 %v723, %v2235
      %2237 = vmatprep.mubr.bf16.mxu0 %v469
      %2238 = vmatmul.mubr.bf16.gmra.mrb[0].mxu0 %v468
      %v2239 = vpop.f32.mrb[0].mxu0
      %v2240 = vadd.f32 %v719, %v2239
      %v2241 = vpop.f32.mrb[0].mxu0
      %v2242 = vadd.f32 %v723, %v2241
      %v2243 = vpop.f32.mrb[0].mxu0
      %v2244 = vadd.f32 %v719, %v2243
      %v2245 = vpop.f32.mrb[0].mxu0
      %v2246 = vadd.f32 %v723, %v2245
      %2247 = vmatprep.mubr.bf16.mxu0 %v476
      %2248 = vmatmul.mubr.bf16.gmra.mrb[0].mxu0 %v475
      %v2249 = vpop.f32.mrb[0].mxu0
      %v2250 = vadd.f32 %v719, %v2249
      %v2251 = vpop.f32.mrb[0].mxu0
      %v2252 = vadd.f32 %v723, %v2251
      %v2253 = vpop.f32.mrb[0].mxu0
      %v2254 = vadd.f32 %v719, %v2253
      %v2255 = vpop.f32.mrb[0].mxu0
      %v2256 = vadd.f32 %v723, %v2255
      %2257 = vmatprep.mubr.bf16.mxu0 %v483
      %2258 = vmatmul.mubr.bf16.gmra.mrb[0].mxu0 %v482
      %v2259 = vpop.f32.mrb[0].mxu0
      %v2260 = vadd.f32 %v719, %v2259
      %v2261 = vpop.f32.mrb[0].mxu0
      %v2262 = vadd.f32 %v723, %v2261
      %v2263 = vpop.f32.mrb[0].mxu0
      %v2264 = vadd.f32 %v719, %v2263
      %v2265 = vpop.f32.mrb[0].mxu0
      %v2266 = vadd.f32 %v723, %v2265
      %2267 = vmatprep.mubr.bf16.mxu0 %v490
      %2268 = vmatmul.mubr.bf16.gmra.mrb[0].mxu0 %v489
      %v2269 = vpop.f32.mrb[0].mxu0
      %v2270 = vadd.f32 %v719, %v2269
      %v2271 = vpop.f32.mrb[0].mxu0
      %v2272 = vadd.f32 %v723, %v2271
      %v2273 = vpop.f32.mrb[0].mxu0
      %v2274 = vadd.f32 %v719, %v2273
      %v2275 = vpop.f32.mrb[0].mxu0
      %v2276 = vadd.f32 %v723, %v2275
      %2277 = vmatprep.mubr.bf16.mxu0 %v497
      %2278 = vmatmul.mubr.bf16.gmra.mrb[0].mxu0 %v496
      %v2279 = vpop.f32.mrb[0].mxu0
      %v2280 = vadd.f32 %v719, %v2279
      %v2281 = vpop.f32.mrb[0].mxu0
      %v2282 = vadd.f32 %v723, %v2281
      %v2283 = vpop.f32.mrb[0].mxu0
      %v2284 = vadd.f32 %v719, %v2283
      %v2285 = vpop.f32.mrb[0].mxu0
      %v2286 = vadd.f32 %v723, %v2285
      %2287 = vmatprep.mubr.bf16.mxu0 %v504
      %2288 = vmatmul.mubr.bf16.gmra.mrb[0].mxu0 %v503
      %v2289 = vpop.f32.mrb[0].mxu0
      %v2290 = vadd.f32 %v719, %v2289
      %v2291 = vpop.f32.mrb[0].mxu0
      %v2292 = vadd.f32 %v723, %v2291
      %v2293 = vpop.f32.mrb[0].mxu0
      %v2294 = vadd.f32 %v719, %v2293
      %v2295 = vpop.f32.mrb[0].mxu0
      %v2296 = vadd.f32 %v723, %v2295
      %2297 = vdwg.mxu0
      %2298 = vmatprep.subr.bf16.mxu0 %v1383
      %2299 = vmatpush1.bf16.msra.mxu0 %v1382
      %2300 = vmatprep.subr.bf16.mxu0 %v1387
      %2301 = vmatpush1.bf16.msra.mxu0 %v1386
      %2302 = vmatprep.subr.bf16.mxu0 %v1391
      %2303 = vmatpush1.bf16.msra.mxu0 %v1390
      %2304 = vmatprep.subr.bf16.mxu0 %v1395
      %2305 = vmatpush1.bf16.msra.mxu0 %v1394
      %2306 = vmatprep.subr.bf16.mxu0 %v1399
      %2307 = vmatpush1.bf16.msra.mxu0 %v1398
      %2308 = vmatprep.subr.bf16.mxu0 %v1403
      %2309 = vmatpush1.bf16.msra.mxu0 %v1402
      %2310 = vmatprep.subr.bf16.mxu0 %v1407
      %2311 = vmatpush1.bf16.msra.mxu0 %v1406
      %2312 = vmatprep.subr.bf16.mxu0 %v1411
      %2313 = vmatpush1.bf16.msra.mxu0 %v1410
      %2314 = vmatprep.subr.bf16.mxu0 %v1415
      %2315 = vmatpush1.bf16.msra.mxu0 %v1414
      %2316 = vmatprep.subr.bf16.mxu0 %v1419
      %2317 = vmatpush1.bf16.msra.mxu0 %v1418
      %2318 = vmatprep.subr.bf16.mxu0 %v1423
      %2319 = vmatpush1.bf16.msra.mxu0 %v1422
      %2320 = vmatprep.subr.bf16.mxu0 %v1427
      %2321 = vmatpush1.bf16.msra.mxu0 %v1426
      %2322 = vmatprep.subr.bf16.mxu0 %v1431
      %2323 = vmatpush1.bf16.msra.mxu0 %v1430
      %2324 = vmatprep.subr.bf16.mxu0 %v1435
      %2325 = vmatpush1.bf16.msra.mxu0 %v1434
      %2326 = vmatprep.subr.bf16.mxu0 %v1439
      %2327 = vmatpush1.bf16.msra.mxu0 %v1438
      %2328 = vmatprep.subr.bf16.mxu0 %v1443
      %2329 = vmatpush1.bf16.msra.mxu0 %v1442
      %2330 = vmatprep.mubr.bf16.mxu0 %v457
      %2331 = vmatmul.mubr.bf16.gmra.mrb[0].mxu0 %v456
      %v2332 = vpop.f32.mrb[0].mxu0
      %v2333 = vadd.f32 %v2220, %v2332
      %v2334 = vpop.f32.mrb[0].mxu0
      %v2335 = vadd.f32 %v2222, %v2334
      %v2336 = vpop.f32.mrb[0].mxu0
      %v2337 = vadd.f32 %v2224, %v2336
      %v2338 = vpop.f32.mrb[0].mxu0
      %v2339 = vadd.f32 %v2226, %v2338
      %2340 = vmatprep.mubr.bf16.mxu0 %v464
      %2341 = vmatmul.mubr.bf16.gmra.mrb[0].mxu0 %v463
      %v2342 = vpop.f32.mrb[0].mxu0
      %v2343 = vadd.f32 %v2230, %v2342
      %v2344 = vpop.f32.mrb[0].mxu0
      %v2345 = vadd.f32 %v2232, %v2344
      %v2346 = vpop.f32.mrb[0].mxu0
      %v2347 = vadd.f32 %v2234, %v2346
      %v2348 = vpop.f32.mrb[0].mxu0
      %v2349 = vadd.f32 %v2236, %v2348
      %2350 = vmatprep.mubr.bf16.mxu0 %v471
      %2351 = vmatmul.mubr.bf16.gmra.mrb[0].mxu0 %v470
      %v2352 = vpop.f32.mrb[0].mxu0
      %v2353 = vadd.f32 %v2240, %v2352
      %v2354 = vpop.f32.mrb[0].mxu0
      %v2355 = vadd.f32 %v2242, %v2354
      %v2356 = vpop.f32.mrb[0].mxu0
      %v2357 = vadd.f32 %v2244, %v2356
      %v2358 = vpop.f32.mrb[0].mxu0
      %v2359 = vadd.f32 %v2246, %v2358
      %2360 = vmatprep.mubr.bf16.mxu0 %v478
      %2361 = vmatmul.mubr.bf16.gmra.mrb[0].mxu0 %v477
      %v2362 = vpop.f32.mrb[0].mxu0
      %v2363 = vadd.f32 %v2250, %v2362
      %v2364 = vpop.f32.mrb[0].mxu0
      %v2365 = vadd.f32 %v2252, %v2364
      %v2366 = vpop.f32.mrb[0].mxu0
      %v2367 = vadd.f32 %v2254, %v2366
      %v2368 = vpop.f32.mrb[0].mxu0
      %v2369 = vadd.f32 %v2256, %v2368
      %2370 = vmatprep.mubr.bf16.mxu0 %v485
      %2371 = vmatmul.mubr.bf16.gmra.mrb[0].mxu0 %v484
      %v2372 = vpop.f32.mrb[0].mxu0
      %v2373 = vadd.f32 %v2260, %v2372
      %v2374 = vpop.f32.mrb[0].mxu0
      %v2375 = vadd.f32 %v2262, %v2374
      %v2376 = vpop.f32.mrb[0].mxu0
      %v2377 = vadd.f32 %v2264, %v2376
      %v2378 = vpop.f32.mrb[0].mxu0
      %v2379 = vadd.f32 %v2266, %v2378
      %2380 = vmatprep.mubr.bf16.mxu0 %v492
      %2381 = vmatmul.mubr.bf16.gmra.mrb[0].mxu0 %v491
      %v2382 = vpop.f32.mrb[0].mxu0
      %v2383 = vadd.f32 %v2270, %v2382
      %v2384 = vpop.f32.mrb[0].mxu0
      %v2385 = vadd.f32 %v2272, %v2384
      %v2386 = vpop.f32.mrb[0].mxu0
      %v2387 = vadd.f32 %v2274, %v2386
      %v2388 = vpop.f32.mrb[0].mxu0
      %v2389 = vadd.f32 %v2276, %v2388
      %2390 = vmatprep.mubr.bf16.mxu0 %v499
      %2391 = vmatmul.mubr.bf16.gmra.mrb[0].mxu0 %v498
      %v2392 = vpop.f32.mrb[0].mxu0
      %v2393 = vadd.f32 %v2280, %v2392
      %v2394 = vpop.f32.mrb[0].mxu0
      %v2395 = vadd.f32 %v2282, %v2394
      %v2396 = vpop.f32.mrb[0].mxu0
      %v2397 = vadd.f32 %v2284, %v2396
      %v2398 = vpop.f32.mrb[0].mxu0
      %v2399 = vadd.f32 %v2286, %v2398
      %2400 = vmatprep.mubr.bf16.mxu0 %v506
      %2401 = vmatmul.mubr.bf16.gmra.mrb[0].mxu0 %v505
      %v2402 = vpop.f32.mrb[0].mxu0
      %v2403 = vadd.f32 %v2290, %v2402
      %v2404 = vpop.f32.mrb[0].mxu0
      %v2405 = vadd.f32 %v2292, %v2404
      %v2406 = vpop.f32.mrb[0].mxu0
      %v2407 = vadd.f32 %v2294, %v2406
      %v2408 = vpop.f32.mrb[0].mxu0
      %v2409 = vadd.f32 %v2296, %v2408
      %2410 = vdwg.mxu0
      %2411 = vmatprep.subr.bf16.mxu0 %v1447
      %2412 = vmatpush1.bf16.msra.mxu0 %v1446
      %2413 = vmatprep.subr.bf16.mxu0 %v1451
      %2414 = vmatpush1.bf16.msra.mxu0 %v1450
      %2415 = vmatprep.subr.bf16.mxu0 %v1455
      %2416 = vmatpush1.bf16.msra.mxu0 %v1454
      %2417 = vmatprep.subr.bf16.mxu0 %v1459
      %2418 = vmatpush1.bf16.msra.mxu0 %v1458
      %2419 = vmatprep.subr.bf16.mxu0 %v1463
      %2420 = vmatpush1.bf16.msra.mxu0 %v1462
      %2421 = vmatprep.subr.bf16.mxu0 %v1467
      %2422 = vmatpush1.bf16.msra.mxu0 %v1466
      %2423 = vmatprep.subr.bf16.mxu0 %v1471
      %2424 = vmatpush1.bf16.msra.mxu0 %v1470
      %2425 = vmatprep.subr.bf16.mxu0 %v1475
      %2426 = vmatpush1.bf16.msra.mxu0 %v1474
      %2427 = vmatprep.subr.bf16.mxu0 %v1479
      %2428 = vmatpush1.bf16.msra.mxu0 %v1478
      %2429 = vmatprep.subr.bf16.mxu0 %v1483
      %2430 = vmatpush1.bf16.msra.mxu0 %v1482
      %2431 = vmatprep.subr.bf16.mxu0 %v1487
      %2432 = vmatpush1.bf16.msra.mxu0 %v1486
      %2433 = vmatprep.subr.bf16.mxu0 %v1491
      %2434 = vmatpush1.bf16.msra.mxu0 %v1490
      %2435 = vmatprep.subr.bf16.mxu0 %v1495
      %2436 = vmatpush1.bf16.msra.mxu0 %v1494
      %2437 = vmatprep.subr.bf16.mxu0 %v1499
      %2438 = vmatpush1.bf16.msra.mxu0 %v1498
      %2439 = vmatprep.subr.bf16.mxu0 %v1503
      %2440 = vmatpush1.bf16.msra.mxu0 %v1502
      %2441 = vmatprep.subr.bf16.mxu0 %v1507
      %2442 = vmatpush1.bf16.msra.mxu0 %v1506
      %2443 = vmatprep.mubr.bf16.mxu0 %v459
      %2444 = vmatmul.mubr.bf16.gmra.mrb[0].mxu0 %v458
      %v2445 = vpop.f32.mrb[0].mxu0
      %v2446 = vadd.f32 %v2333, %v2445
      %v2447 = vpop.f32.mrb[0].mxu0
      %v2448 = vadd.f32 %v2335, %v2447
      %v2449 = vpop.f32.mrb[0].mxu0
      %v2450 = vadd.f32 %v2337, %v2449
      %v2451 = vpop.f32.mrb[0].mxu0
      %v2452 = vadd.f32 %v2339, %v2451
      %2453 = vmatprep.mubr.bf16.mxu0 %v466
      %2454 = vmatmul.mubr.bf16.gmra.mrb[0].mxu0 %v465
      %v2455 = vpop.f32.mrb[0].mxu0
      %v2456 = vadd.f32 %v2343, %v2455
      %v2457 = vpop.f32.mrb[0].mxu0
      %v2458 = vadd.f32 %v2345, %v2457
      %v2459 = vpop.f32.mrb[0].mxu0
      %v2460 = vadd.f32 %v2347, %v2459
      %v2461 = vpop.f32.mrb[0].mxu0
      %v2462 = vadd.f32 %v2349, %v2461
      %2463 = vmatprep.mubr.bf16.mxu0 %v473
      %2464 = vmatmul.mubr.bf16.gmra.mrb[0].mxu0 %v472
      %v2465 = vpop.f32.mrb[0].mxu0
      %v2466 = vadd.f32 %v2353, %v2465
      %v2467 = vpop.f32.mrb[0].mxu0
      %v2468 = vadd.f32 %v2355, %v2467
      %v2469 = vpop.f32.mrb[0].mxu0
      %v2470 = vadd.f32 %v2357, %v2469
      %v2471 = vpop.f32.mrb[0].mxu0
      %v2472 = vadd.f32 %v2359, %v2471
      %2473 = vmatprep.mubr.bf16.mxu0 %v480
      %2474 = vmatmul.mubr.bf16.gmra.mrb[0].mxu0 %v479
      %v2475 = vpop.f32.mrb[0].mxu0
      %v2476 = vadd.f32 %v2363, %v2475
      %v2477 = vpop.f32.mrb[0].mxu0
      %v2478 = vadd.f32 %v2365, %v2477
      %v2479 = vpop.f32.mrb[0].mxu0
      %v2480 = vadd.f32 %v2367, %v2479
      %v2481 = vpop.f32.mrb[0].mxu0
      %v2482 = vadd.f32 %v2369, %v2481
      %2483 = vmatprep.mubr.bf16.mxu0 %v487
      %2484 = vmatmul.mubr.bf16.gmra.mrb[0].mxu0 %v486
      %v2485 = vpop.f32.mrb[0].mxu0
      %v2486 = vadd.f32 %v2373, %v2485
      %v2487 = vpop.f32.mrb[0].mxu0
      %v2488 = vadd.f32 %v2375, %v2487
      %v2489 = vpop.f32.mrb[0].mxu0
      %v2490 = vadd.f32 %v2377, %v2489
      %v2491 = vpop.f32.mrb[0].mxu0
      %v2492 = vadd.f32 %v2379, %v2491
      %2493 = vmatprep.mubr.bf16.mxu0 %v494
      %2494 = vmatmul.mubr.bf16.gmra.mrb[0].mxu0 %v493
      %v2495 = vpop.f32.mrb[0].mxu0
      %v2496 = vadd.f32 %v2383, %v2495
      %v2497 = vpop.f32.mrb[0].mxu0
      %v2498 = vadd.f32 %v2385, %v2497
      %v2499 = vpop.f32.mrb[0].mxu0
      %v2500 = vadd.f32 %v2387, %v2499
      %v2501 = vpop.f32.mrb[0].mxu0
      %v2502 = vadd.f32 %v2389, %v2501
      %2503 = vmatprep.mubr.bf16.mxu0 %v501
      %2504 = vmatmul.mubr.bf16.gmra.mrb[0].mxu0 %v500
      %v2505 = vpop.f32.mrb[0].mxu0
      %v2506 = vadd.f32 %v2393, %v2505
      %v2507 = vpop.f32.mrb[0].mxu0
      %v2508 = vadd.f32 %v2395, %v2507
      %v2509 = vpop.f32.mrb[0].mxu0
      %v2510 = vadd.f32 %v2397, %v2509
      %v2511 = vpop.f32.mrb[0].mxu0
      %v2512 = vadd.f32 %v2399, %v2511
      %2513 = vmatprep.mubr.bf16.mxu0 %v508
      %2514 = vmatmul.mubr.bf16.gmra.mrb[0].mxu0 %v507
      %v2515 = vpop.f32.mrb[0].mxu0
      %v2516 = vadd.f32 %v2403, %v2515
      %v2517 = vpop.f32.mrb[0].mxu0
      %v2518 = vadd.f32 %v2405, %v2517
      %v2519 = vpop.f32.mrb[0].mxu0
      %v2520 = vadd.f32 %v2407, %v2519
      %v2521 = vpop.f32.mrb[0].mxu0
      %v2522 = vadd.f32 %v2409, %v2521
      %2523 = vdwg.mxu0
      %2524 = vmatprep.subr.bf16.mxu0 %v1511
      %2525 = vmatpush1.bf16.msra.mxu0 %v1510
      %2526 = vmatprep.subr.bf16.mxu0 0
      %2527 = vmatpush1.bf16.msra.mxu0 0
      %2528 = vmatprep.subr.bf16.mxu0 0
      %2529 = vmatpush1.bf16.msra.mxu0 0
      %2530 = vmatprep.subr.bf16.mxu0 0
      %2531 = vmatpush1.bf16.msra.mxu0 0
      %2532 = vmatprep.subr.bf16.mxu0 0
      %2533 = vmatpush1.bf16.msra.mxu0 0
      %2534 = vmatprep.subr.bf16.mxu0 0
      %2535 = vmatpush1.bf16.msra.mxu0 0
      %2536 = vmatprep.subr.bf16.mxu0 0
      %2537 = vmatpush1.bf16.msra.mxu0 0
      %2538 = vmatprep.subr.bf16.mxu0 0
      %2539 = vmatpush1.bf16.msra.mxu0 0
      %2540 = vmatprep.subr.bf16.mxu0 0
      %2541 = vmatpush1.bf16.msra.mxu0 0
      %2542 = vmatprep.subr.bf16.mxu0 0
      %2543 = vmatpush1.bf16.msra.mxu0 0
      %2544 = vmatprep.subr.bf16.mxu0 0
      %2545 = vmatpush1.bf16.msra.mxu0 0
      %2546 = vmatprep.subr.bf16.mxu0 0
      %2547 = vmatpush1.bf16.msra.mxu0 0
      %2548 = vmatprep.subr.bf16.mxu0 0
      %2549 = vmatpush1.bf16.msra.mxu0 0
      %2550 = vmatprep.subr.bf16.mxu0 0
      %2551 = vmatpush1.bf16.msra.mxu0 0
      %2552 = vmatprep.subr.bf16.mxu0 0
      %2553 = vmatpush1.bf16.msra.mxu0 0
      %2554 = vmatprep.subr.bf16.mxu0 0
      %2555 = vmatpush1.bf16.msra.mxu0 0
      %2556 = vmatprep.mubr.bf16.mxu0 0
      %2557 = vmatmul.mubr.bf16.gmra.mrb[0].mxu0 %v1710
      %v2558 = vpop.f32.mrb[0].mxu0
      %v2559 = vadd.f32 %v2446, %v2558
      %v2560 = vpop.f32.mrb[0].mxu0
      %v2561 = vadd.f32 %v2448, %v2560
      %v2562 = vpop.f32.mrb[0].mxu0
      %v2563 = vadd.f32 %v2450, %v2562
      %v2564 = vpop.f32.mrb[0].mxu0
      %v2565 = vadd.f32 %v2452, %v2564
      %2566 = vmatprep.mubr.bf16.mxu0 0
      %2567 = vmatmul.mubr.bf16.gmra.mrb[0].mxu0 %v1713
      %v2568 = vpop.f32.mrb[0].mxu0
      %v2569 = vadd.f32 %v2456, %v2568
      %v2570 = vpop.f32.mrb[0].mxu0
      %v2571 = vadd.f32 %v2458, %v2570
      %v2572 = vpop.f32.mrb[0].mxu0
      %v2573 = vadd.f32 %v2460, %v2572
      %v2574 = vpop.f32.mrb[0].mxu0
      %v2575 = vadd.f32 %v2462, %v2574
      %2576 = vmatprep.mubr.bf16.mxu0 0
      %2577 = vmatmul.mubr.bf16.gmra.mrb[0].mxu0 %v1716
      %v2578 = vpop.f32.mrb[0].mxu0
      %v2579 = vadd.f32 %v2466, %v2578
      %v2580 = vpop.f32.mrb[0].mxu0
      %v2581 = vadd.f32 %v2468, %v2580
      %v2582 = vpop.f32.mrb[0].mxu0
      %v2583 = vadd.f32 %v2470, %v2582
      %v2584 = vpop.f32.mrb[0].mxu0
      %v2585 = vadd.f32 %v2472, %v2584
      %2586 = vmatprep.mubr.bf16.mxu0 0
      %2587 = vmatmul.mubr.bf16.gmra.mrb[0].mxu0 %v1719
      %v2588 = vpop.f32.mrb[0].mxu0
      %v2589 = vadd.f32 %v2476, %v2588
      %v2590 = vpop.f32.mrb[0].mxu0
      %v2591 = vadd.f32 %v2478, %v2590
      %v2592 = vpop.f32.mrb[0].mxu0
      %v2593 = vadd.f32 %v2480, %v2592
      %v2594 = vpop.f32.mrb[0].mxu0
      %v2595 = vadd.f32 %v2482, %v2594
      %2596 = vmatprep.mubr.bf16.mxu0 0
      %2597 = vmatmul.mubr.bf16.gmra.mrb[0].mxu0 %v1722
      %v2598 = vpop.f32.mrb[0].mxu0
      %v2599 = vadd.f32 %v2486, %v2598
      %v2600 = vpop.f32.mrb[0].mxu0
      %v2601 = vadd.f32 %v2488, %v2600
      %v2602 = vpop.f32.mrb[0].mxu0
      %v2603 = vadd.f32 %v2490, %v2602
      %v2604 = vpop.f32.mrb[0].mxu0
      %v2605 = vadd.f32 %v2492, %v2604
      %2606 = vmatprep.mubr.bf16.mxu0 0
      %2607 = vmatmul.mubr.bf16.gmra.mrb[0].mxu0 %v1725
      %v2608 = vpop.f32.mrb[0].mxu0
      %v2609 = vadd.f32 %v2496, %v2608
      %v2610 = vpop.f32.mrb[0].mxu0
      %v2611 = vadd.f32 %v2498, %v2610
      %v2612 = vpop.f32.mrb[0].mxu0
      %v2613 = vadd.f32 %v2500, %v2612
      %v2614 = vpop.f32.mrb[0].mxu0
      %v2615 = vadd.f32 %v2502, %v2614
      %2616 = vmatprep.mubr.bf16.mxu0 0
      %2617 = vmatmul.mubr.bf16.gmra.mrb[0].mxu0 %v1728
      %v2618 = vpop.f32.mrb[0].mxu0
      %v2619 = vadd.f32 %v2506, %v2618
      %v2620 = vpop.f32.mrb[0].mxu0
      %v2621 = vadd.f32 %v2508, %v2620
      %v2622 = vpop.f32.mrb[0].mxu0
      %v2623 = vadd.f32 %v2510, %v2622
      %v2624 = vpop.f32.mrb[0].mxu0
      %v2625 = vadd.f32 %v2512, %v2624
      %2626 = vmatprep.mubr.bf16.mxu0 0
      %2627 = vmatmul.mubr.bf16.gmra.mrb[0].mxu0 %v1731
      %v2628 = vpop.f32.mrb[0].mxu0
      %v2629 = vadd.f32 %v2516, %v2628
      %v2630 = vpop.f32.mrb[0].mxu0
      %v2631 = vadd.f32 %v2518, %v2630
      %v2632 = vpop.f32.mrb[0].mxu0
      %v2633 = vadd.f32 %v2520, %v2632
      %v2634 = vpop.f32.mrb[0].mxu0
      %v2635 = vadd.f32 %v2522, %v2634
      %2636 = vdwg.mxu0
      %v2637 = vmax.f32 %v2107, 0.0
      %v2638 = vmax.f32 %v2109, 0.0
      %v2639 = vmax.f32 %v2559, 0.0
      %v2640 = vmax.f32 %v2561, 0.0
      %v2641 = vmax.f32 %v2111, 0.0
      %v2642 = vmax.f32 %v2113, 0.0
      %v2643 = vmax.f32 %v2563, 0.0
      %v2644 = vmax.f32 %v2565, 0.0
      %v2645 = vmax.f32 %v2117, 0.0
      %v2646 = vmax.f32 %v2119, 0.0
      %v2647 = vmax.f32 %v2569, 0.0
      %v2648 = vmax.f32 %v2571, 0.0
      %v2649 = vmax.f32 %v2121, 0.0
      %v2650 = vmax.f32 %v2123, 0.0
      %v2651 = vmax.f32 %v2573, 0.0
      %v2652 = vmax.f32 %v2575, 0.0
      %v2653 = vmax.f32 %v2127, 0.0
      %v2654 = vmax.f32 %v2129, 0.0
      %v2655 = vmax.f32 %v2579, 0.0
      %v2656 = vmax.f32 %v2581, 0.0
      %v2657 = vmax.f32 %v2131, 0.0
      %v2658 = vmax.f32 %v2133, 0.0
      %v2659 = vmax.f32 %v2583, 0.0
      %v2660 = vmax.f32 %v2585, 0.0
      %v2661 = vmax.f32 %v2137, 0.0
      %v2662 = vmax.f32 %v2139, 0.0
      %v2663 = vmax.f32 %v2589, 0.0
      %v2664 = vmax.f32 %v2591, 0.0
      %v2665 = vmax.f32 %v2141, 0.0
      %v2666 = vmax.f32 %v2143, 0.0
      %v2667 = vmax.f32 %v2593, 0.0
      %v2668 = vmax.f32 %v2595, 0.0
      %v2669 = vmax.f32 %v2147, 0.0
      %v2670 = vmax.f32 %v2149, 0.0
      %v2671 = vmax.f32 %v2599, 0.0
      %v2672 = vmax.f32 %v2601, 0.0
      %v2673 = vmax.f32 %v2151, 0.0
      %v2674 = vmax.f32 %v2153, 0.0
      %v2675 = vmax.f32 %v2603, 0.0
      %v2676 = vmax.f32 %v2605, 0.0
      %v2677 = vmax.f32 %v2157, 0.0
      %v2678 = vmax.f32 %v2159, 0.0
      %v2679 = vmax.f32 %v2609, 0.0
      %v2680 = vmax.f32 %v2611, 0.0
      %v2681 = vmax.f32 %v2161, 0.0
      %v2682 = vmax.f32 %v2163, 0.0
      %v2683 = vmax.f32 %v2613, 0.0
      %v2684 = vmax.f32 %v2615, 0.0
      %v2685 = vmax.f32 %v2167, 0.0
      %v2686 = vmax.f32 %v2169, 0.0
      %v2687 = vmax.f32 %v2619, 0.0
      %v2688 = vmax.f32 %v2621, 0.0
      %v2689 = vmax.f32 %v2171, 0.0
      %v2690 = vmax.f32 %v2173, 0.0
      %v2691 = vmax.f32 %v2623, 0.0
      %v2692 = vmax.f32 %v2625, 0.0
      %v2693 = vmax.f32 %v2177, 0.0
      %v2694 = vmax.f32 %v2179, 0.0
      %v2695 = vmax.f32 %v2629, 0.0
      %v2696 = vmax.f32 %v2631, 0.0
      %v2697 = vmax.f32 %v2181, 0.0
      %v2698 = vmax.f32 %v2183, 0.0
      %v2699 = vmax.f32 %v2633, 0.0
      %v2700 = vmax.f32 %v2635, 0.0
      %v2701 = vpack.c.bf16 %v2641, %v2637
      %v2702 = vpack.c.bf16 %v2642, %v2638
      %v2703 = vpack.c.bf16 %v2643, %v2639
      %v2704 = vpack.c.bf16 %v2644, %v2640
      %v2705 = vpack.c.bf16 %v2649, %v2645
      %v2706 = vpack.c.bf16 %v2650, %v2646
      %v2707 = vpack.c.bf16 %v2651, %v2647
      %v2708 = vpack.c.bf16 %v2652, %v2648
      %v2709 = vpack.c.bf16 %v2657, %v2653
      %v2710 = vpack.c.bf16 %v2658, %v2654
      %v2711 = vpack.c.bf16 %v2659, %v2655
      %v2712 = vpack.c.bf16 %v2660, %v2656
      %v2713 = vpack.c.bf16 %v2665, %v2661
      %v2714 = vpack.c.bf16 %v2666, %v2662
      %v2715 = vpack.c.bf16 %v2667, %v2663
      %v2716 = vpack.c.bf16 %v2668, %v2664
      %v2717 = vpack.c.bf16 %v2673, %v2669
      %v2718 = vpack.c.bf16 %v2674, %v2670
      %v2719 = vpack.c.bf16 %v2675, %v2671
      %v2720 = vpack.c.bf16 %v2676, %v2672
      %v2721 = vpack.c.bf16 %v2681, %v2677
      %v2722 = vpack.c.bf16 %v2682, %v2678
      %v2723 = vpack.c.bf16 %v2683, %v2679
      %v2724 = vpack.c.bf16 %v2684, %v2680
      %v2725 = vpack.c.bf16 %v2689, %v2685
      %v2726 = vpack.c.bf16 %v2690, %v2686
      %v2727 = vpack.c.bf16 %v2691, %v2687
      %v2728 = vpack.c.bf16 %v2692, %v2688
      %v2729 = vpack.c.bf16 %v2697, %v2693
      %v2730 = vpack.c.bf16 %v2698, %v2694
      %v2731 = vpack.c.bf16 %v2699, %v2695
      %v2732 = vpack.c.bf16 %v2700, %v2696
      %v2733 = vld [vmem:[%s3] sm:$0xf]
      %v2734 = vld [vmem:[%s3 + $0x4] sm:$0xf]
      %v2735 = vld [vmem:[%s3 + $0x8] sm:$0xf]
      %v2736 = vld [vmem:[%s3 + $0xc] sm:$0xf]
      %v2737 = vld [vmem:[%s3 + $0x10] sm:$0xf]
      %v2738 = vld [vmem:[%s3 + $0x14] sm:$0xf]
      %v2739 = vld [vmem:[%s3 + $0x18] sm:$0xf]
      %v2740 = vld [vmem:[%s3 + $0x1c] sm:$0xf]
      %v2741 = vld [vmem:[%s3 + $0x20] sm:$0xf]
      %v2742 = vld [vmem:[%s3 + $0x24] sm:$0xf]
      %v2743 = vld [vmem:[%s3 + $0x28] sm:$0xf]
      %v2744 = vld [vmem:[%s3 + $0x2c] sm:$0xf]
      %v2745 = vld [vmem:[%s3 + $0x30] sm:$0xf]
      %v2746 = vld [vmem:[%s3 + $0x34] sm:$0xf]
      %v2747 = vld [vmem:[%s3 + $0x38] sm:$0xf]
      %v2748 = vld [vmem:[%s3 + $0x3c] sm:$0xf]
      %v2749 = vld [vmem:[%s3 + $0x40] sm:$0xf]
      %v2750 = vld [vmem:[%s3 + $0x44] sm:$0xf]
      %v2751 = vld [vmem:[%s3 + $0x48] sm:$0xf]
      %v2752 = vld [vmem:[%s3 + $0x4c] sm:$0xf]
      %v2753 = vld [vmem:[%s3 + $0x50] sm:$0xf]
      %v2754 = vld [vmem:[%s3 + $0x54] sm:$0xf]
      %v2755 = vld [vmem:[%s3 + $0x58] sm:$0xf]
      %v2756 = vld [vmem:[%s3 + $0x5c] sm:$0xf]
      %v2757 = vld [vmem:[%s3 + $0x60] sm:$0xf]
      %v2758 = vld [vmem:[%s3 + $0x64] sm:$0xf]
      %v2759 = vld [vmem:[%s3 + $0x68] sm:$0xf]
      %v2760 = vld [vmem:[%s3 + $0x6c] sm:$0xf]
      %v2761 = vld [vmem:[%s3 + $0x70] sm:$0xf]
      %v2762 = vld [vmem:[%s3 + $0x74] sm:$0xf]
      %v2763 = vld [vmem:[%s3 + $0x78] sm:$0xf]
      %v2764 = vld [vmem:[%s3 + $0x7c] sm:$0xf]
      %v2765 = vld [vmem:[%s3 + $0x80] sm:$0xf]
      %v2766 = vld [vmem:[%s3 + $0x84] sm:$0xf]
      %v2767 = vld [vmem:[%s3 + $0x88] sm:$0xf]
      %v2768 = vld [vmem:[%s3 + $0x8c] sm:$0xf]
      %v2769 = vld [vmem:[%s3 + $0x90] sm:$0xf]
      %v2770 = vld [vmem:[%s3 + $0x94] sm:$0xf]
      %v2771 = vld [vmem:[%s3 + $0x98] sm:$0xf]
      %v2772 = vld [vmem:[%s3 + $0x9c] sm:$0xf]
      %v2773 = vld [vmem:[%s3 + $0xa0] sm:$0xf]
      %v2774 = vld [vmem:[%s3 + $0xa4] sm:$0xf]
      %v2775 = vld [vmem:[%s3 + $0xa8] sm:$0xf]
      %v2776 = vld [vmem:[%s3 + $0xac] sm:$0xf]
      %v2777 = vld [vmem:[%s3 + $0xb0] sm:$0xf]
      %v2778 = vld [vmem:[%s3 + $0xb4] sm:$0xf]
      %v2779 = vld [vmem:[%s3 + $0xb8] sm:$0xf]
      %v2780 = vld [vmem:[%s3 + $0xbc] sm:$0xf]
      %v2781 = vld [vmem:[%s3 + $0xc0] sm:$0xf]
      %v2782 = vld [vmem:[%s3 + $0xc4] sm:$0xf]
      %v2783 = vld [vmem:[%s3 + $0xc8] sm:$0xf]
      %v2784 = vld [vmem:[%s3 + $0xcc] sm:$0xf]
      %v2785 = vld [vmem:[%s3 + $0xd0] sm:$0xf]
      %v2786 = vld [vmem:[%s3 + $0xd4] sm:$0xf]
      %v2787 = vld [vmem:[%s3 + $0xd8] sm:$0xf]
      %v2788 = vld [vmem:[%s3 + $0xdc] sm:$0xf]
      %v2789 = vld [vmem:[%s3 + $0xe0] sm:$0xf]
      %v2790 = vld [vmem:[%s3 + $0xe4] sm:$0xf]
      %v2791 = vld [vmem:[%s3 + $0xe8] sm:$0xf]
      %v2792 = vld [vmem:[%s3 + $0xec] sm:$0xf]
      %v2793 = vld [vmem:[%s3 + $0xf0] sm:$0xf]
      %v2794 = vld [vmem:[%s3 + $0xf4] sm:$0xf]
      %v2795 = vld [vmem:[%s3 + $0xf8] sm:$0xf]
      %v2796 = vld [vmem:[%s3 + $0xfc] sm:$0xf]
      %v2797 = vld [vmem:[%s4] sm:$0x1]
      %v2799 = vlaneseq
      %v2800 = vshrl.u32 %v2799, 7
      %v2801 = vsub.s32 0, %v2800
      %v2802 = vrot.slane %v2797, %v2801
      %v2868 = vunpack.c.l.b16 %v2733
      %v2869 = vunpack.c.l.b16 %v2734
      %v2870 = vunpack.c.l.b16 %v2735
      %v2871 = vunpack.c.l.b16 %v2736
      %v2872 = vunpack.c.l.b16 %v2737
      %v2873 = vunpack.c.l.b16 %v2738
      %v2874 = vunpack.c.l.b16 %v2739
      %v2875 = vunpack.c.l.b16 %v2740
      %v2876 = vunpack.c.l.b16 %v2741
      %v2877 = vunpack.c.l.b16 %v2742
      %v2878 = vunpack.c.l.b16 %v2743
      %v2879 = vunpack.c.l.b16 %v2744
      %v2880 = vunpack.c.l.b16 %v2745
      %v2881 = vunpack.c.l.b16 %v2746
      %v2882 = vunpack.c.l.b16 %v2747
      %v2883 = vunpack.c.l.b16 %v2748
      %v2884 = vunpack.c.l.b16 %v2749
      %v2885 = vunpack.c.l.b16 %v2750
      %v2886 = vunpack.c.l.b16 %v2751
      %v2887 = vunpack.c.l.b16 %v2752
      %v2888 = vunpack.c.l.b16 %v2753
      %v2889 = vunpack.c.l.b16 %v2754
      %v2890 = vunpack.c.l.b16 %v2755
      %v2891 = vunpack.c.l.b16 %v2756
      %v2892 = vunpack.c.l.b16 %v2757
      %v2893 = vunpack.c.l.b16 %v2758
      %v2894 = vunpack.c.l.b16 %v2759
      %v2895 = vunpack.c.l.b16 %v2760
      %v2896 = vunpack.c.l.b16 %v2761
      %v2897 = vunpack.c.l.b16 %v2762
      %v2898 = vunpack.c.l.b16 %v2763
      %v2899 = vunpack.c.l.b16 %v2764
      %v2900 = vunpack.c.l.b16 %v2765
      %v2901 = vunpack.c.l.b16 %v2766
      %v2902 = vunpack.c.l.b16 %v2767
      %v2903 = vunpack.c.l.b16 %v2768
      %v2904 = vunpack.c.l.b16 %v2769
      %v2905 = vunpack.c.l.b16 %v2770
      %v2906 = vunpack.c.l.b16 %v2771
      %v2907 = vunpack.c.l.b16 %v2772
      %v2908 = vunpack.c.l.b16 %v2773
      %v2909 = vunpack.c.l.b16 %v2774
      %v2910 = vunpack.c.l.b16 %v2775
      %v2911 = vunpack.c.l.b16 %v2776
      %v2912 = vunpack.c.l.b16 %v2777
      %v2913 = vunpack.c.l.b16 %v2778
      %v2914 = vunpack.c.l.b16 %v2779
      %v2915 = vunpack.c.l.b16 %v2780
      %v2916 = vunpack.c.l.b16 %v2781
      %v2917 = vunpack.c.l.b16 %v2782
      %v2918 = vunpack.c.l.b16 %v2783
      %v2919 = vunpack.c.l.b16 %v2784
      %v2920 = vunpack.c.l.b16 %v2785
      %v2921 = vunpack.c.l.b16 %v2786
      %v2922 = vunpack.c.l.b16 %v2787
      %v2923 = vunpack.c.l.b16 %v2788
      %v2924 = vunpack.c.l.b16 %v2789
      %v2925 = vunpack.c.l.b16 %v2790
      %v2926 = vunpack.c.l.b16 %v2791
      %v2927 = vunpack.c.l.b16 %v2792
      %v2928 = vunpack.c.l.b16 %v2793
      %v2929 = vunpack.c.l.b16 %v2794
      %v2930 = vunpack.c.l.b16 %v2795
      %v2931 = vunpack.c.l.b16 %v2796
      %v2932 = vpack.c.b16 %v2869, %v2868
      %v2933 = vpack.c.b16 %v2871, %v2870
      %v2934 = vpack.c.b16 %v2873, %v2872
      %v2935 = vpack.c.b16 %v2875, %v2874
      %v2936 = vpack.c.b16 %v2877, %v2876
      %v2937 = vpack.c.b16 %v2879, %v2878
      %v2938 = vpack.c.b16 %v2881, %v2880
      %v2939 = vpack.c.b16 %v2883, %v2882
      %v2940 = vpack.c.b16 %v2885, %v2884
      %v2941 = vpack.c.b16 %v2887, %v2886
      %v2942 = vpack.c.b16 %v2889, %v2888
      %v2943 = vpack.c.b16 %v2891, %v2890
      %v2944 = vpack.c.b16 %v2893, %v2892
      %v2945 = vpack.c.b16 %v2895, %v2894
      %v2946 = vpack.c.b16 %v2897, %v2896
      %v2947 = vpack.c.b16 %v2899, %v2898
      %v2948 = vpack.c.b16 %v2901, %v2900
      %v2949 = vpack.c.b16 %v2903, %v2902
      %v2950 = vpack.c.b16 %v2905, %v2904
      %v2951 = vpack.c.b16 %v2907, %v2906
      %v2952 = vpack.c.b16 %v2909, %v2908
      %v2953 = vpack.c.b16 %v2911, %v2910
      %v2954 = vpack.c.b16 %v2913, %v2912
      %v2955 = vpack.c.b16 %v2915, %v2914
      %v2956 = vpack.c.b16 %v2917, %v2916
      %v2957 = vpack.c.b16 %v2919, %v2918
      %v2958 = vpack.c.b16 %v2921, %v2920
      %v2959 = vpack.c.b16 %v2923, %v2922
      %v2960 = vpack.c.b16 %v2925, %v2924
      %v2961 = vpack.c.b16 %v2927, %v2926
      %v2962 = vpack.c.b16 %v2929, %v2928
      %v2963 = vpack.c.b16 %v2931, %v2930
      %2996 = vmatprep.subr.bf16.mxu0 0
      %2997 = vmatpush1.bf16.msra.mxu0 %v2932
      %2998 = vmatprep.subr.bf16.mxu0 0
      %2999 = vmatpush1.bf16.msra.mxu0 %v2933
      %3000 = vmatprep.subr.bf16.mxu0 0
      %3001 = vmatpush1.bf16.msra.mxu0 %v2934
      %3002 = vmatprep.subr.bf16.mxu0 0
      %3003 = vmatpush1.bf16.msra.mxu0 %v2935
      %3004 = vmatprep.subr.bf16.mxu0 0
      %3005 = vmatpush1.bf16.msra.mxu0 %v2936
      %3006 = vmatprep.subr.bf16.mxu0 0
      %3007 = vmatpush1.bf16.msra.mxu0 %v2937
      %3008 = vmatprep.subr.bf16.mxu0 0
      %3009 = vmatpush1.bf16.msra.mxu0 %v2938
      %3010 = vmatprep.subr.bf16.mxu0 0
      %3011 = vmatpush1.bf16.msra.mxu0 %v2939
      %3012 = vmatprep.subr.bf16.mxu0 0
      %3013 = vmatpush1.bf16.msra.mxu0 %v2940
      %3014 = vmatprep.subr.bf16.mxu0 0
      %3015 = vmatpush1.bf16.msra.mxu0 %v2941
      %3016 = vmatprep.subr.bf16.mxu0 0
      %3017 = vmatpush1.bf16.msra.mxu0 %v2942
      %3018 = vmatprep.subr.bf16.mxu0 0
      %3019 = vmatpush1.bf16.msra.mxu0 %v2943
      %3020 = vmatprep.subr.bf16.mxu0 0
      %3021 = vmatpush1.bf16.msra.mxu0 %v2944
      %3022 = vmatprep.subr.bf16.mxu0 0
      %3023 = vmatpush1.bf16.msra.mxu0 %v2945
      %3024 = vmatprep.subr.bf16.mxu0 0
      %3025 = vmatpush1.bf16.msra.mxu0 %v2946
      %3026 = vmatprep.subr.bf16.mxu0 0
      %3027 = vmatpush1.bf16.msra.mxu0 %v2947
      %3028 = vmatprep.mubr.bf16.mxu0 %v2702
      %3029 = vmatmul.mubr.bf16.gmra.mrb[0].mxu0 %v2701
      %v3030 = vpop.f32.mrb[0].mxu0
      %v3031 = vadd.f32 %v2802, %v3030
      %v3032 = vpop.f32.mrb[0].mxu0
      %v3033 = vpop.f32.mrb[0].mxu0
      %v3034 = vadd.f32 %v2802, %v3033
      %v3035 = vpop.f32.mrb[0].mxu0
      %3036 = vmatprep.mubr.bf16.mxu0 %v2706
      %3037 = vmatmul.mubr.bf16.gmra.mrb[0].mxu0 %v2705
      %v3038 = vpop.f32.mrb[0].mxu0
      %v3039 = vadd.f32 %v2802, %v3038
      %v3040 = vpop.f32.mrb[0].mxu0
      %v3041 = vpop.f32.mrb[0].mxu0
      %v3042 = vadd.f32 %v2802, %v3041
      %v3043 = vpop.f32.mrb[0].mxu0
      %3044 = vmatprep.mubr.bf16.mxu0 %v2710
      %3045 = vmatmul.mubr.bf16.gmra.mrb[0].mxu0 %v2709
      %v3046 = vpop.f32.mrb[0].mxu0
      %v3047 = vadd.f32 %v2802, %v3046
      %v3048 = vpop.f32.mrb[0].mxu0
      %v3049 = vpop.f32.mrb[0].mxu0
      %v3050 = vadd.f32 %v2802, %v3049
      %v3051 = vpop.f32.mrb[0].mxu0
      %3052 = vmatprep.mubr.bf16.mxu0 %v2714
      %3053 = vmatmul.mubr.bf16.gmra.mrb[0].mxu0 %v2713
      %v3054 = vpop.f32.mrb[0].mxu0
      %v3055 = vadd.f32 %v2802, %v3054
      %v3056 = vpop.f32.mrb[0].mxu0
      %v3057 = vpop.f32.mrb[0].mxu0
      %v3058 = vadd.f32 %v2802, %v3057
      %v3059 = vpop.f32.mrb[0].mxu0
      %3060 = vmatprep.mubr.bf16.mxu0 %v2718
      %3061 = vmatmul.mubr.bf16.gmra.mrb[0].mxu0 %v2717
      %v3062 = vpop.f32.mrb[0].mxu0
      %v3063 = vadd.f32 %v2802, %v3062
      %v3064 = vpop.f32.mrb[0].mxu0
      %v3065 = vpop.f32.mrb[0].mxu0
      %v3066 = vadd.f32 %v2802, %v3065
      %v3067 = vpop.f32.mrb[0].mxu0
      %3068 = vmatprep.mubr.bf16.mxu0 %v2722
      %3069 = vmatmul.mubr.bf16.gmra.mrb[0].mxu0 %v2721
      %v3070 = vpop.f32.mrb[0].mxu0
      %v3071 = vadd.f32 %v2802, %v3070
      %v3072 = vpop.f32.mrb[0].mxu0
      %v3073 = vpop.f32.mrb[0].mxu0
      %v3074 = vadd.f32 %v2802, %v3073
      %v3075 = vpop.f32.mrb[0].mxu0
      %3076 = vmatprep.mubr.bf16.mxu0 %v2726
      %3077 = vmatmul.mubr.bf16.gmra.mrb[0].mxu0 %v2725
      %v3078 = vpop.f32.mrb[0].mxu0
      %v3079 = vadd.f32 %v2802, %v3078
      %v3080 = vpop.f32.mrb[0].mxu0
      %v3081 = vpop.f32.mrb[0].mxu0
      %v3082 = vadd.f32 %v2802, %v3081
      %v3083 = vpop.f32.mrb[0].mxu0
      %3084 = vmatprep.mubr.bf16.mxu0 %v2730
      %3085 = vmatmul.mubr.bf16.gmra.mrb[0].mxu0 %v2729
      %v3086 = vpop.f32.mrb[0].mxu0
      %v3087 = vadd.f32 %v2802, %v3086
      %v3088 = vpop.f32.mrb[0].mxu0
      %v3089 = vpop.f32.mrb[0].mxu0
      %v3090 = vadd.f32 %v2802, %v3089
      %v3091 = vpop.f32.mrb[0].mxu0
      %3092 = vdwg.mxu0
      %3093 = vmatprep.subr.bf16.mxu0 0
      %3094 = vmatpush1.bf16.msra.mxu0 %v2948
      %3095 = vmatprep.subr.bf16.mxu0 0
      %3096 = vmatpush1.bf16.msra.mxu0 %v2949
      %3097 = vmatprep.subr.bf16.mxu0 0
      %3098 = vmatpush1.bf16.msra.mxu0 %v2950
      %3099 = vmatprep.subr.bf16.mxu0 0
      %3100 = vmatpush1.bf16.msra.mxu0 %v2951
      %3101 = vmatprep.subr.bf16.mxu0 0
      %3102 = vmatpush1.bf16.msra.mxu0 %v2952
      %3103 = vmatprep.subr.bf16.mxu0 0
      %3104 = vmatpush1.bf16.msra.mxu0 %v2953
      %3105 = vmatprep.subr.bf16.mxu0 0
      %3106 = vmatpush1.bf16.msra.mxu0 %v2954
      %3107 = vmatprep.subr.bf16.mxu0 0
      %3108 = vmatpush1.bf16.msra.mxu0 %v2955
      %3109 = vmatprep.subr.bf16.mxu0 0
      %3110 = vmatpush1.bf16.msra.mxu0 %v2956
      %3111 = vmatprep.subr.bf16.mxu0 0
      %3112 = vmatpush1.bf16.msra.mxu0 %v2957
      %3113 = vmatprep.subr.bf16.mxu0 0
      %3114 = vmatpush1.bf16.msra.mxu0 %v2958
      %3115 = vmatprep.subr.bf16.mxu0 0
      %3116 = vmatpush1.bf16.msra.mxu0 %v2959
      %3117 = vmatprep.subr.bf16.mxu0 0
      %3118 = vmatpush1.bf16.msra.mxu0 %v2960
      %3119 = vmatprep.subr.bf16.mxu0 0
      %3120 = vmatpush1.bf16.msra.mxu0 %v2961
      %3121 = vmatprep.subr.bf16.mxu0 0
      %3122 = vmatpush1.bf16.msra.mxu0 %v2962
      %3123 = vmatprep.subr.bf16.mxu0 0
      %3124 = vmatpush1.bf16.msra.mxu0 %v2963
      %3125 = vmatprep.mubr.bf16.mxu0 %v2704
      %3126 = vmatmul.mubr.bf16.gmra.mrb[0].mxu0 %v2703
      %v3127 = vpop.f32.mrb[0].mxu0
      %v3128 = vadd.f32 %v3031, %v3127
      %v3129 = vpop.f32.mrb[0].mxu0
      %v3130 = vpop.f32.mrb[0].mxu0
      %v3131 = vadd.f32 %v3034, %v3130
      %v3132 = vpop.f32.mrb[0].mxu0
      %3133 = vmatprep.mubr.bf16.mxu0 %v2708
      %3134 = vmatmul.mubr.bf16.gmra.mrb[0].mxu0 %v2707
      %v3135 = vpop.f32.mrb[0].mxu0
      %v3136 = vadd.f32 %v3039, %v3135
      %v3137 = vpop.f32.mrb[0].mxu0
      %v3138 = vpop.f32.mrb[0].mxu0
      %v3139 = vadd.f32 %v3042, %v3138
      %v3140 = vpop.f32.mrb[0].mxu0
      %3141 = vmatprep.mubr.bf16.mxu0 %v2712
      %3142 = vmatmul.mubr.bf16.gmra.mrb[0].mxu0 %v2711
      %v3143 = vpop.f32.mrb[0].mxu0
      %v3144 = vadd.f32 %v3047, %v3143
      %v3145 = vpop.f32.mrb[0].mxu0
      %v3146 = vpop.f32.mrb[0].mxu0
      %v3147 = vadd.f32 %v3050, %v3146
      %v3148 = vpop.f32.mrb[0].mxu0
      %3149 = vmatprep.mubr.bf16.mxu0 %v2716
      %3150 = vmatmul.mubr.bf16.gmra.mrb[0].mxu0 %v2715
      %v3151 = vpop.f32.mrb[0].mxu0
      %v3152 = vadd.f32 %v3055, %v3151
      %v3153 = vpop.f32.mrb[0].mxu0
      %v3154 = vpop.f32.mrb[0].mxu0
      %v3155 = vadd.f32 %v3058, %v3154
      %v3156 = vpop.f32.mrb[0].mxu0
      %3157 = vmatprep.mubr.bf16.mxu0 %v2720
      %3158 = vmatmul.mubr.bf16.gmra.mrb[0].mxu0 %v2719
      %v3159 = vpop.f32.mrb[0].mxu0
      %v3160 = vadd.f32 %v3063, %v3159
      %v3161 = vpop.f32.mrb[0].mxu0
      %v3162 = vpop.f32.mrb[0].mxu0
      %v3163 = vadd.f32 %v3066, %v3162
      %v3164 = vpop.f32.mrb[0].mxu0
      %3165 = vmatprep.mubr.bf16.mxu0 %v2724
      %3166 = vmatmul.mubr.bf16.gmra.mrb[0].mxu0 %v2723
      %v3167 = vpop.f32.mrb[0].mxu0
      %v3168 = vadd.f32 %v3071, %v3167
      %v3169 = vpop.f32.mrb[0].mxu0
      %v3170 = vpop.f32.mrb[0].mxu0
      %v3171 = vadd.f32 %v3074, %v3170
      %v3172 = vpop.f32.mrb[0].mxu0
      %3173 = vmatprep.mubr.bf16.mxu0 %v2728
      %3174 = vmatmul.mubr.bf16.gmra.mrb[0].mxu0 %v2727
      %v3175 = vpop.f32.mrb[0].mxu0
      %v3176 = vadd.f32 %v3079, %v3175
      %v3177 = vpop.f32.mrb[0].mxu0
      %v3178 = vpop.f32.mrb[0].mxu0
      %v3179 = vadd.f32 %v3082, %v3178
      %v3180 = vpop.f32.mrb[0].mxu0
      %3181 = vmatprep.mubr.bf16.mxu0 %v2732
      %3182 = vmatmul.mubr.bf16.gmra.mrb[0].mxu0 %v2731
      %v3183 = vpop.f32.mrb[0].mxu0
      %v3184 = vadd.f32 %v3087, %v3183
      %v3185 = vpop.f32.mrb[0].mxu0
      %v3186 = vpop.f32.mrb[0].mxu0
      %v3187 = vadd.f32 %v3090, %v3186
      %v3188 = vpop.f32.mrb[0].mxu0
      %3189 = vdwg.mxu0
      %v3190 = vmax.f32 %v3128, 0.0
      %v3191 = vmax.f32 %v3131, 0.0
      %v3192 = vmax.f32 %v3136, 0.0
      %v3193 = vmax.f32 %v3139, 0.0
      %v3194 = vmax.f32 %v3144, 0.0
      %v3195 = vmax.f32 %v3147, 0.0
      %v3196 = vmax.f32 %v3152, 0.0
      %v3197 = vmax.f32 %v3155, 0.0
      %v3198 = vmax.f32 %v3160, 0.0
      %v3199 = vmax.f32 %v3163, 0.0
      %v3200 = vmax.f32 %v3168, 0.0
      %v3201 = vmax.f32 %v3171, 0.0
      %v3202 = vmax.f32 %v3176, 0.0
      %v3203 = vmax.f32 %v3179, 0.0
      %v3204 = vmax.f32 %v3184, 0.0
      %v3205 = vmax.f32 %v3187, 0.0
      %v3206 = vpack.c.bf16 %v3191, %v3190
      %v3207 = vpack.c.bf16 %v3193, %v3192
      %v3208 = vpack.c.bf16 %v3195, %v3194
      %v3209 = vpack.c.bf16 %v3197, %v3196
      %v3210 = vpack.c.bf16 %v3199, %v3198
      %v3211 = vpack.c.bf16 %v3201, %v3200
      %v3212 = vpack.c.bf16 %v3203, %v3202
      %v3213 = vpack.c.bf16 %v3205, %v3204
      %v3214 = vld [vmem:[%s5] sm:$0xff]
      %v3215 = vld [vmem:[%s5 + $0x8] sm:$0xff]
      %v3216 = vld [vmem:[%s5 + $0x10] sm:$0xff]
      %v3217 = vld [vmem:[%s5 + $0x18] sm:$0xff]
      %v3218 = vld [vmem:[%s5 + $0x20] sm:$0xff]
      %v3219 = vld [vmem:[%s5 + $0x28] sm:$0xff]
      %v3220 = vld [vmem:[%s5 + $0x30] sm:$0xff]
      %v3221 = vld [vmem:[%s5 + $0x38] sm:$0xff]
      %v3222 = vld [vmem:[%s5 + $0x40] sm:$0xff]
      %v3223 = vld [vmem:[%s5 + $0x48] sm:$0xff]
      %v3224 = vld [vmem:[%s5 + $0x50] sm:$0xff]
      %v3225 = vld [vmem:[%s5 + $0x58] sm:$0xff]
      %v3226 = vld [vmem:[%s5 + $0x60] sm:$0xff]
      %v3227 = vld [vmem:[%s5 + $0x68] sm:$0xff]
      %v3228 = vld [vmem:[%s5 + $0x70] sm:$0xff]
      %v3229 = vld [vmem:[%s5 + $0x78] sm:$0xff]
      %v3230 = vld [vmem:[%s5 + $0x80] sm:$0xff]
      %v3231 = vld [vmem:[%s5 + $0x88] sm:$0xff]
      %v3232 = vld [vmem:[%s5 + $0x90] sm:$0xff]
      %v3233 = vld [vmem:[%s5 + $0x98] sm:$0xff]
      %v3234 = vld [vmem:[%s5 + $0xa0] sm:$0xff]
      %v3235 = vld [vmem:[%s5 + $0xa8] sm:$0xff]
      %v3236 = vld [vmem:[%s5 + $0xb0] sm:$0xff]
      %v3237 = vld [vmem:[%s5 + $0xb8] sm:$0xff]
      %v3238 = vld [vmem:[%s5 + $0xc0] sm:$0xff]
      %v3239 = vld [vmem:[%s5 + $0xc8] sm:$0xff]
      %v3240 = vld [vmem:[%s5 + $0xd0] sm:$0xff]
      %v3241 = vld [vmem:[%s5 + $0xd8] sm:$0xff]
      %v3242 = vld [vmem:[%s5 + $0xe0] sm:$0xff]
      %v3243 = vld [vmem:[%s5 + $0xe8] sm:$0xff]
      %v3244 = vld [vmem:[%s5 + $0xf0] sm:$0xff]
      %v3245 = vld [vmem:[%s5 + $0xf8] sm:$0xff]
      %v3246 = vld [vmem:[%s6] sm:$0xf]
      %v3248 = vlaneseq
      %v3249 = vshrl.u32 %v3248, 7
      %v3250 = vsub.s32 0, %v3249
      %v3251 = vrot.slane %v3246, %v3250
      %v3252 = vlaneseq
      %v3253 = vshrl.u32 %v3252, 7
      %v3254 = vsub.s32 1, %v3253
      %v3255 = vrot.slane %v3246, %v3254
      %v3256 = vlaneseq
      %v3257 = vshrl.u32 %v3256, 7
      %v3258 = vsub.s32 2, %v3257
      %v3259 = vrot.slane %v3246, %v3258
      %v3260 = vlaneseq
      %v3261 = vshrl.u32 %v3260, 7
      %v3262 = vsub.s32 3, %v3261
      %v3263 = vrot.slane %v3246, %v3262
      %v3300 = vunpack.c.l.b16 %v3214
      %v3301 = vunpack.c.h.b16 %v3214
      %v3302 = vunpack.c.l.b16 %v3215
      %v3303 = vunpack.c.h.b16 %v3215
      %v3304 = vunpack.c.l.b16 %v3216
      %v3305 = vunpack.c.h.b16 %v3216
      %v3306 = vunpack.c.l.b16 %v3217
      %v3307 = vunpack.c.h.b16 %v3217
      %v3308 = vunpack.c.l.b16 %v3218
      %v3309 = vunpack.c.h.b16 %v3218
      %v3310 = vunpack.c.l.b16 %v3219
      %v3311 = vunpack.c.h.b16 %v3219
      %v3312 = vunpack.c.l.b16 %v3220
      %v3313 = vunpack.c.h.b16 %v3220
      %v3314 = vunpack.c.l.b16 %v3221
      %v3315 = vunpack.c.h.b16 %v3221
      %v3316 = vunpack.c.l.b16 %v3222
      %v3317 = vunpack.c.h.b16 %v3222
      %v3318 = vunpack.c.l.b16 %v3223
      %v3319 = vunpack.c.h.b16 %v3223
      %v3320 = vunpack.c.l.b16 %v3224
      %v3321 = vunpack.c.h.b16 %v3224
      %v3322 = vunpack.c.l.b16 %v3225
      %v3323 = vunpack.c.h.b16 %v3225
      %v3324 = vunpack.c.l.b16 %v3226
      %v3325 = vunpack.c.h.b16 %v3226
      %v3326 = vunpack.c.l.b16 %v3227
      %v3327 = vunpack.c.h.b16 %v3227
      %v3328 = vunpack.c.l.b16 %v3228
      %v3329 = vunpack.c.h.b16 %v3228
      %v3330 = vunpack.c.l.b16 %v3229
      %v3331 = vunpack.c.h.b16 %v3229
      %v3332 = vunpack.c.l.b16 %v3230
      %v3333 = vunpack.c.h.b16 %v3230
      %v3334 = vunpack.c.l.b16 %v3231
      %v3335 = vunpack.c.h.b16 %v3231
      %v3336 = vunpack.c.l.b16 %v3232
      %v3337 = vunpack.c.h.b16 %v3232
      %v3338 = vunpack.c.l.b16 %v3233
      %v3339 = vunpack.c.h.b16 %v3233
      %v3340 = vunpack.c.l.b16 %v3234
      %v3341 = vunpack.c.h.b16 %v3234
      %v3342 = vunpack.c.l.b16 %v3235
      %v3343 = vunpack.c.h.b16 %v3235
      %v3344 = vunpack.c.l.b16 %v3236
      %v3345 = vunpack.c.h.b16 %v3236
      %v3346 = vunpack.c.l.b16 %v3237
      %v3347 = vunpack.c.h.b16 %v3237
      %v3348 = vunpack.c.l.b16 %v3238
      %v3349 = vunpack.c.h.b16 %v3238
      %v3350 = vunpack.c.l.b16 %v3239
      %v3351 = vunpack.c.h.b16 %v3239
      %v3352 = vunpack.c.l.b16 %v3240
      %v3353 = vunpack.c.h.b16 %v3240
      %v3354 = vunpack.c.l.b16 %v3241
      %v3355 = vunpack.c.h.b16 %v3241
      %v3356 = vunpack.c.l.b16 %v3242
      %v3357 = vunpack.c.h.b16 %v3242
      %v3358 = vunpack.c.l.b16 %v3243
      %v3359 = vunpack.c.h.b16 %v3243
      %v3360 = vunpack.c.l.b16 %v3244
      %v3361 = vunpack.c.h.b16 %v3244
      %v3362 = vunpack.c.l.b16 %v3245
      %v3363 = vunpack.c.h.b16 %v3245
      %v3364 = vpack.c.b16 %v3304, %v3300
      %v3365 = vpack.c.b16 %v3305, %v3301
      %v3366 = vpack.c.b16 %v3306, %v3302
      %v3367 = vpack.c.b16 %v3307, %v3303
      %v3368 = vpack.c.b16 %v3312, %v3308
      %v3369 = vpack.c.b16 %v3313, %v3309
      %v3370 = vpack.c.b16 %v3314, %v3310
      %v3371 = vpack.c.b16 %v3315, %v3311
      %v3372 = vpack.c.b16 %v3320, %v3316
      %v3373 = vpack.c.b16 %v3321, %v3317
      %v3374 = vpack.c.b16 %v3322, %v3318
      %v3375 = vpack.c.b16 %v3323, %v3319
      %v3376 = vpack.c.b16 %v3328, %v3324
      %v3377 = vpack.c.b16 %v3329, %v3325
      %v3378 = vpack.c.b16 %v3330, %v3326
      %v3379 = vpack.c.b16 %v3331, %v3327
      %v3380 = vpack.c.b16 %v3336, %v3332
      %v3381 = vpack.c.b16 %v3337, %v3333
      %v3382 = vpack.c.b16 %v3338, %v3334
      %v3383 = vpack.c.b16 %v3339, %v3335
      %v3384 = vpack.c.b16 %v3344, %v3340
      %v3385 = vpack.c.b16 %v3345, %v3341
      %v3386 = vpack.c.b16 %v3346, %v3342
      %v3387 = vpack.c.b16 %v3347, %v3343
      %v3388 = vpack.c.b16 %v3352, %v3348
      %v3389 = vpack.c.b16 %v3353, %v3349
      %v3390 = vpack.c.b16 %v3354, %v3350
      %v3391 = vpack.c.b16 %v3355, %v3351
      %v3392 = vpack.c.b16 %v3360, %v3356
      %v3393 = vpack.c.b16 %v3361, %v3357
      %v3394 = vpack.c.b16 %v3362, %v3358
      %v3395 = vpack.c.b16 %v3363, %v3359
      %3428 = vmatprep.subr.bf16.mxu0 %v3365
      %3429 = vmatpush1.bf16.msra.mxu0 %v3364
      %3430 = vmatprep.subr.bf16.mxu0 %v3369
      %3431 = vmatpush1.bf16.msra.mxu0 %v3368
      %3432 = vmatprep.subr.bf16.mxu0 %v3373
      %3433 = vmatpush1.bf16.msra.mxu0 %v3372
      %3434 = vmatprep.subr.bf16.mxu0 %v3377
      %3435 = vmatpush1.bf16.msra.mxu0 %v3376
      %3436 = vmatprep.subr.bf16.mxu0 %v3381
      %3437 = vmatpush1.bf16.msra.mxu0 %v3380
      %3438 = vmatprep.subr.bf16.mxu0 %v3385
      %3439 = vmatpush1.bf16.msra.mxu0 %v3384
      %3440 = vmatprep.subr.bf16.mxu0 %v3389
      %3441 = vmatpush1.bf16.msra.mxu0 %v3388
      %3442 = vmatprep.subr.bf16.mxu0 %v3393
      %3443 = vmatpush1.bf16.msra.mxu0 %v3392
      %3444 = vmatprep.subr.bf16.mxu0 0
      %3445 = vmatpush1.bf16.msra.mxu0 0
      %3446 = vmatprep.subr.bf16.mxu0 0
      %3447 = vmatpush1.bf16.msra.mxu0 0
      %3448 = vmatprep.subr.bf16.mxu0 0
      %3449 = vmatpush1.bf16.msra.mxu0 0
      %3450 = vmatprep.subr.bf16.mxu0 0
      %3451 = vmatpush1.bf16.msra.mxu0 0
      %3452 = vmatprep.subr.bf16.mxu0 0
      %3453 = vmatpush1.bf16.msra.mxu0 0
      %3454 = vmatprep.subr.bf16.mxu0 0
      %3455 = vmatpush1.bf16.msra.mxu0 0
      %3456 = vmatprep.subr.bf16.mxu0 0
      %3457 = vmatpush1.bf16.msra.mxu0 0
      %3458 = vmatprep.subr.bf16.mxu0 0
      %3459 = vmatpush1.bf16.msra.mxu0 0
      %3460 = vmatprep.mubr.bf16.mxu0 0
      %3461 = vmatmul.mubr.bf16.gmra.mrb[0].mxu0 %v3206
      %v3462 = vpop.f32.mrb[0].mxu0
      %v3463 = vadd.f32 %v3251, %v3462
      %v3464 = vpop.f32.mrb[0].mxu0
      %v3465 = vadd.f32 %v3255, %v3464
      %v3466 = vpop.f32.mrb[0].mxu0
      %v3467 = vadd.f32 %v3251, %v3466
      %v3468 = vpop.f32.mrb[0].mxu0
      %v3469 = vadd.f32 %v3255, %v3468
      %3470 = vmatprep.mubr.bf16.mxu0 0
      %3471 = vmatmul.mubr.bf16.gmra.mrb[0].mxu0 %v3207
      %v3472 = vpop.f32.mrb[0].mxu0
      %v3473 = vadd.f32 %v3251, %v3472
      %v3474 = vpop.f32.mrb[0].mxu0
      %v3475 = vadd.f32 %v3255, %v3474
      %v3476 = vpop.f32.mrb[0].mxu0
      %v3477 = vadd.f32 %v3251, %v3476
      %v3478 = vpop.f32.mrb[0].mxu0
      %v3479 = vadd.f32 %v3255, %v3478
      %3480 = vmatprep.mubr.bf16.mxu0 0
      %3481 = vmatmul.mubr.bf16.gmra.mrb[0].mxu0 %v3208
      %v3482 = vpop.f32.mrb[0].mxu0
      %v3483 = vadd.f32 %v3251, %v3482
      %v3484 = vpop.f32.mrb[0].mxu0
      %v3485 = vadd.f32 %v3255, %v3484
      %v3486 = vpop.f32.mrb[0].mxu0
      %v3487 = vadd.f32 %v3251, %v3486
      %v3488 = vpop.f32.mrb[0].mxu0
      %v3489 = vadd.f32 %v3255, %v3488
      %3490 = vmatprep.mubr.bf16.mxu0 0
      %3491 = vmatmul.mubr.bf16.gmra.mrb[0].mxu0 %v3209
      %v3492 = vpop.f32.mrb[0].mxu0
      %v3493 = vadd.f32 %v3251, %v3492
      %v3494 = vpop.f32.mrb[0].mxu0
      %v3495 = vadd.f32 %v3255, %v3494
      %v3496 = vpop.f32.mrb[0].mxu0
      %v3497 = vadd.f32 %v3251, %v3496
      %v3498 = vpop.f32.mrb[0].mxu0
      %v3499 = vadd.f32 %v3255, %v3498
      %3500 = vmatprep.mubr.bf16.mxu0 0
      %3501 = vmatmul.mubr.bf16.gmra.mrb[0].mxu0 %v3210
      %v3502 = vpop.f32.mrb[0].mxu0
      %v3503 = vadd.f32 %v3251, %v3502
      %v3504 = vpop.f32.mrb[0].mxu0
      %v3505 = vadd.f32 %v3255, %v3504
      %v3506 = vpop.f32.mrb[0].mxu0
      %v3507 = vadd.f32 %v3251, %v3506
      %v3508 = vpop.f32.mrb[0].mxu0
      %v3509 = vadd.f32 %v3255, %v3508
      %3510 = vmatprep.mubr.bf16.mxu0 0
      %3511 = vmatmul.mubr.bf16.gmra.mrb[0].mxu0 %v3211
      %v3512 = vpop.f32.mrb[0].mxu0
      %v3513 = vadd.f32 %v3251, %v3512
      %v3514 = vpop.f32.mrb[0].mxu0
      %v3515 = vadd.f32 %v3255, %v3514
      %v3516 = vpop.f32.mrb[0].mxu0
      %v3517 = vadd.f32 %v3251, %v3516
      %v3518 = vpop.f32.mrb[0].mxu0
      %v3519 = vadd.f32 %v3255, %v3518
      %3520 = vmatprep.mubr.bf16.mxu0 0
      %3521 = vmatmul.mubr.bf16.gmra.mrb[0].mxu0 %v3212
      %v3522 = vpop.f32.mrb[0].mxu0
      %v3523 = vadd.f32 %v3251, %v3522
      %v3524 = vpop.f32.mrb[0].mxu0
      %v3525 = vadd.f32 %v3255, %v3524
      %v3526 = vpop.f32.mrb[0].mxu0
      %v3527 = vadd.f32 %v3251, %v3526
      %v3528 = vpop.f32.mrb[0].mxu0
      %v3529 = vadd.f32 %v3255, %v3528
      %3530 = vmatprep.mubr.bf16.mxu0 0
      %3531 = vmatmul.mubr.bf16.gmra.mrb[0].mxu0 %v3213
      %v3532 = vpop.f32.mrb[0].mxu0
      %v3533 = vadd.f32 %v3251, %v3532
      %v3534 = vpop.f32.mrb[0].mxu0
      %v3535 = vadd.f32 %v3255, %v3534
      %v3536 = vpop.f32.mrb[0].mxu0
      %v3537 = vadd.f32 %v3251, %v3536
      %v3538 = vpop.f32.mrb[0].mxu0
      %v3539 = vadd.f32 %v3255, %v3538
      %3540 = vdwg.mxu0
      %3541 = vmatprep.subr.bf16.mxu0 %v3367
      %3542 = vmatpush1.bf16.msra.mxu0 %v3366
      %3543 = vmatprep.subr.bf16.mxu0 %v3371
      %3544 = vmatpush1.bf16.msra.mxu0 %v3370
      %3545 = vmatprep.subr.bf16.mxu0 %v3375
      %3546 = vmatpush1.bf16.msra.mxu0 %v3374
      %3547 = vmatprep.subr.bf16.mxu0 %v3379
      %3548 = vmatpush1.bf16.msra.mxu0 %v3378
      %3549 = vmatprep.subr.bf16.mxu0 %v3383
      %3550 = vmatpush1.bf16.msra.mxu0 %v3382
      %3551 = vmatprep.subr.bf16.mxu0 %v3387
      %3552 = vmatpush1.bf16.msra.mxu0 %v3386
      %3553 = vmatprep.subr.bf16.mxu0 %v3391
      %3554 = vmatpush1.bf16.msra.mxu0 %v3390
      %3555 = vmatprep.subr.bf16.mxu0 %v3395
      %3556 = vmatpush1.bf16.msra.mxu0 %v3394
      %3557 = vmatprep.subr.bf16.mxu0 0
      %3558 = vmatpush1.bf16.msra.mxu0 0
      %3559 = vmatprep.subr.bf16.mxu0 0
      %3560 = vmatpush1.bf16.msra.mxu0 0
      %3561 = vmatprep.subr.bf16.mxu0 0
      %3562 = vmatpush1.bf16.msra.mxu0 0
      %3563 = vmatprep.subr.bf16.mxu0 0
      %3564 = vmatpush1.bf16.msra.mxu0 0
      %3565 = vmatprep.subr.bf16.mxu0 0
      %3566 = vmatpush1.bf16.msra.mxu0 0
      %3567 = vmatprep.subr.bf16.mxu0 0
      %3568 = vmatpush1.bf16.msra.mxu0 0
      %3569 = vmatprep.subr.bf16.mxu0 0
      %3570 = vmatpush1.bf16.msra.mxu0 0
      %3571 = vmatprep.subr.bf16.mxu0 0
      %3572 = vmatpush1.bf16.msra.mxu0 0
      %3573 = vmatprep.mubr.bf16.mxu0 0
      %3574 = vmatmul.mubr.bf16.gmra.mrb[0].mxu0 %v3206
      %v3575 = vpop.f32.mrb[0].mxu0
      %v3576 = vadd.f32 %v3259, %v3575
      %v3577 = vpop.f32.mrb[0].mxu0
      %v3578 = vadd.f32 %v3263, %v3577
      %v3579 = vpop.f32.mrb[0].mxu0
      %v3580 = vadd.f32 %v3259, %v3579
      %v3581 = vpop.f32.mrb[0].mxu0
      %v3582 = vadd.f32 %v3263, %v3581
      %3583 = vmatprep.mubr.bf16.mxu0 0
      %3584 = vmatmul.mubr.bf16.gmra.mrb[0].mxu0 %v3207
      %v3585 = vpop.f32.mrb[0].mxu0
      %v3586 = vadd.f32 %v3259, %v3585
      %v3587 = vpop.f32.mrb[0].mxu0
      %v3588 = vadd.f32 %v3263, %v3587
      %v3589 = vpop.f32.mrb[0].mxu0
      %v3590 = vadd.f32 %v3259, %v3589
      %v3591 = vpop.f32.mrb[0].mxu0
      %v3592 = vadd.f32 %v3263, %v3591
      %3593 = vmatprep.mubr.bf16.mxu0 0
      %3594 = vmatmul.mubr.bf16.gmra.mrb[0].mxu0 %v3208
      %v3595 = vpop.f32.mrb[0].mxu0
      %v3596 = vadd.f32 %v3259, %v3595
      %v3597 = vpop.f32.mrb[0].mxu0
      %v3598 = vadd.f32 %v3263, %v3597
      %v3599 = vpop.f32.mrb[0].mxu0
      %v3600 = vadd.f32 %v3259, %v3599
      %v3601 = vpop.f32.mrb[0].mxu0
      %v3602 = vadd.f32 %v3263, %v3601
      %3603 = vmatprep.mubr.bf16.mxu0 0
      %3604 = vmatmul.mubr.bf16.gmra.mrb[0].mxu0 %v3209
      %v3605 = vpop.f32.mrb[0].mxu0
      %v3606 = vadd.f32 %v3259, %v3605
      %v3607 = vpop.f32.mrb[0].mxu0
      %v3608 = vadd.f32 %v3263, %v3607
      %v3609 = vpop.f32.mrb[0].mxu0
      %v3610 = vadd.f32 %v3259, %v3609
      %v3611 = vpop.f32.mrb[0].mxu0
      %v3612 = vadd.f32 %v3263, %v3611
      %3613 = vmatprep.mubr.bf16.mxu0 0
      %3614 = vmatmul.mubr.bf16.gmra.mrb[0].mxu0 %v3210
      %v3615 = vpop.f32.mrb[0].mxu0
      %v3616 = vadd.f32 %v3259, %v3615
      %v3617 = vpop.f32.mrb[0].mxu0
      %v3618 = vadd.f32 %v3263, %v3617
      %v3619 = vpop.f32.mrb[0].mxu0
      %v3620 = vadd.f32 %v3259, %v3619
      %v3621 = vpop.f32.mrb[0].mxu0
      %v3622 = vadd.f32 %v3263, %v3621
      %3623 = vmatprep.mubr.bf16.mxu0 0
      %3624 = vmatmul.mubr.bf16.gmra.mrb[0].mxu0 %v3211
      %v3625 = vpop.f32.mrb[0].mxu0
      %v3626 = vadd.f32 %v3259, %v3625
      %v3627 = vpop.f32.mrb[0].mxu0
      %v3628 = vadd.f32 %v3263, %v3627
      %v3629 = vpop.f32.mrb[0].mxu0
      %v3630 = vadd.f32 %v3259, %v3629
      %v3631 = vpop.f32.mrb[0].mxu0
      %v3632 = vadd.f32 %v3263, %v3631
      %3633 = vmatprep.mubr.bf16.mxu0 0
      %3634 = vmatmul.mubr.bf16.gmra.mrb[0].mxu0 %v3212
      %v3635 = vpop.f32.mrb[0].mxu0
      %v3636 = vadd.f32 %v3259, %v3635
      %v3637 = vpop.f32.mrb[0].mxu0
      %v3638 = vadd.f32 %v3263, %v3637
      %v3639 = vpop.f32.mrb[0].mxu0
      %v3640 = vadd.f32 %v3259, %v3639
      %v3641 = vpop.f32.mrb[0].mxu0
      %v3642 = vadd.f32 %v3263, %v3641
      %3643 = vmatprep.mubr.bf16.mxu0 0
      %3644 = vmatmul.mubr.bf16.gmra.mrb[0].mxu0 %v3213
      %v3645 = vpop.f32.mrb[0].mxu0
      %v3646 = vadd.f32 %v3259, %v3645
      %v3647 = vpop.f32.mrb[0].mxu0
      %v3648 = vadd.f32 %v3263, %v3647
      %v3649 = vpop.f32.mrb[0].mxu0
      %v3650 = vadd.f32 %v3259, %v3649
      %v3651 = vpop.f32.mrb[0].mxu0
      %v3652 = vadd.f32 %v3263, %v3651
      %3653 = vdwg.mxu0
      %v3654 = vmax.f32 %v3463, 0.0
      %v3655 = vmax.f32 %v3465, 0.0
      %v3656 = vmax.f32 %v3576, 0.0
      %v3657 = vmax.f32 %v3578, 0.0
      %v3658 = vmax.f32 %v3467, 0.0
      %v3659 = vmax.f32 %v3469, 0.0
      %v3660 = vmax.f32 %v3580, 0.0
      %v3661 = vmax.f32 %v3582, 0.0
      %v3662 = vmax.f32 %v3473, 0.0
      %v3663 = vmax.f32 %v3475, 0.0
      %v3664 = vmax.f32 %v3586, 0.0
      %v3665 = vmax.f32 %v3588, 0.0
      %v3666 = vmax.f32 %v3477, 0.0
      %v3667 = vmax.f32 %v3479, 0.0
      %v3668 = vmax.f32 %v3590, 0.0
      %v3669 = vmax.f32 %v3592, 0.0
      %v3670 = vmax.f32 %v3483, 0.0
      %v3671 = vmax.f32 %v3485, 0.0
      %v3672 = vmax.f32 %v3596, 0.0
      %v3673 = vmax.f32 %v3598, 0.0
      %v3674 = vmax.f32 %v3487, 0.0
      %v3675 = vmax.f32 %v3489, 0.0
      %v3676 = vmax.f32 %v3600, 0.0
      %v3677 = vmax.f32 %v3602, 0.0
      %v3678 = vmax.f32 %v3493, 0.0
      %v3679 = vmax.f32 %v3495, 0.0
      %v3680 = vmax.f32 %v3606, 0.0
      %v3681 = vmax.f32 %v3608, 0.0
      %v3682 = vmax.f32 %v3497, 0.0
      %v3683 = vmax.f32 %v3499, 0.0
      %v3684 = vmax.f32 %v3610, 0.0
      %v3685 = vmax.f32 %v3612, 0.0
      %v3686 = vmax.f32 %v3503, 0.0
      %v3687 = vmax.f32 %v3505, 0.0
      %v3688 = vmax.f32 %v3616, 0.0
      %v3689 = vmax.f32 %v3618, 0.0
      %v3690 = vmax.f32 %v3507, 0.0
      %v3691 = vmax.f32 %v3509, 0.0
      %v3692 = vmax.f32 %v3620, 0.0
      %v3693 = vmax.f32 %v3622, 0.0
      %v3694 = vmax.f32 %v3513, 0.0
      %v3695 = vmax.f32 %v3515, 0.0
      %v3696 = vmax.f32 %v3626, 0.0
      %v3697 = vmax.f32 %v3628, 0.0
      %v3698 = vmax.f32 %v3517, 0.0
      %v3699 = vmax.f32 %v3519, 0.0
      %v3700 = vmax.f32 %v3630, 0.0
      %v3701 = vmax.f32 %v3632, 0.0
      %v3702 = vmax.f32 %v3523, 0.0
      %v3703 = vmax.f32 %v3525, 0.0
      %v3704 = vmax.f32 %v3636, 0.0
      %v3705 = vmax.f32 %v3638, 0.0
      %v3706 = vmax.f32 %v3527, 0.0
      %v3707 = vmax.f32 %v3529, 0.0
      %v3708 = vmax.f32 %v3640, 0.0
      %v3709 = vmax.f32 %v3642, 0.0
      %v3710 = vmax.f32 %v3533, 0.0
      %v3711 = vmax.f32 %v3535, 0.0
      %v3712 = vmax.f32 %v3646, 0.0
      %v3713 = vmax.f32 %v3648, 0.0
      %v3714 = vmax.f32 %v3537, 0.0
      %v3715 = vmax.f32 %v3539, 0.0
      %v3716 = vmax.f32 %v3650, 0.0
      %v3717 = vmax.f32 %v3652, 0.0
      %v3718 = vpack.c.bf16 %v3658, %v3654
      %v3719 = vpack.c.bf16 %v3659, %v3655
      %v3720 = vpack.c.bf16 %v3660, %v3656
      %v3721 = vpack.c.bf16 %v3661, %v3657
      %v3722 = vpack.c.bf16 %v3666, %v3662
      %v3723 = vpack.c.bf16 %v3667, %v3663
      %v3724 = vpack.c.bf16 %v3668, %v3664
      %v3725 = vpack.c.bf16 %v3669, %v3665
      %v3726 = vpack.c.bf16 %v3674, %v3670
      %v3727 = vpack.c.bf16 %v3675, %v3671
      %v3728 = vpack.c.bf16 %v3676, %v3672
      %v3729 = vpack.c.bf16 %v3677, %v3673
      %v3730 = vpack.c.bf16 %v3682, %v3678
      %v3731 = vpack.c.bf16 %v3683, %v3679
      %v3732 = vpack.c.bf16 %v3684, %v3680
      %v3733 = vpack.c.bf16 %v3685, %v3681
      %v3734 = vpack.c.bf16 %v3690, %v3686
      %v3735 = vpack.c.bf16 %v3691, %v3687
      %v3736 = vpack.c.bf16 %v3692, %v3688
      %v3737 = vpack.c.bf16 %v3693, %v3689
      %v3738 = vpack.c.bf16 %v3698, %v3694
      %v3739 = vpack.c.bf16 %v3699, %v3695
      %v3740 = vpack.c.bf16 %v3700, %v3696
      %v3741 = vpack.c.bf16 %v3701, %v3697
      %v3742 = vpack.c.bf16 %v3706, %v3702
      %v3743 = vpack.c.bf16 %v3707, %v3703
      %v3744 = vpack.c.bf16 %v3708, %v3704
      %v3745 = vpack.c.bf16 %v3709, %v3705
      %v3746 = vpack.c.bf16 %v3714, %v3710
      %v3747 = vpack.c.bf16 %v3715, %v3711
      %v3748 = vpack.c.bf16 %v3716, %v3712
      %v3749 = vpack.c.bf16 %v3717, %v3713
      %v3750 = vld [vmem:[%s7] sm:$0xff]
      %v3751 = vld [vmem:[%s7 + $0x8] sm:$0xff]
      %v3752 = vld [vmem:[%s7 + $0x10] sm:$0xff]
      %v3753 = vld [vmem:[%s7 + $0x18] sm:$0xf]
      %v3754 = vld [vmem:[%s7 + $0x1c] sm:$0xff]
      %v3755 = vld [vmem:[%s7 + $0x24] sm:$0xff]
      %v3756 = vld [vmem:[%s7 + $0x2c] sm:$0xff]
      %v3757 = vld [vmem:[%s7 + $0x34] sm:$0xf]
      %v3758 = vld [vmem:[%s7 + $0x38] sm:$0xff]
      %v3759 = vld [vmem:[%s7 + $0x40] sm:$0xff]
      %v3760 = vld [vmem:[%s7 + $0x48] sm:$0xff]
      %v3761 = vld [vmem:[%s7 + $0x50] sm:$0xf]
      %v3762 = vld [vmem:[%s7 + $0x54] sm:$0xff]
      %v3763 = vld [vmem:[%s7 + $0x5c] sm:$0xff]
      %v3764 = vld [vmem:[%s7 + $0x64] sm:$0xff]
      %v3765 = vld [vmem:[%s7 + $0x6c] sm:$0xf]
      %v3766 = vld [vmem:[%s7 + $0x70] sm:$0xff]
      %v3767 = vld [vmem:[%s7 + $0x78] sm:$0xff]
      %v3768 = vld [vmem:[%s7 + $0x80] sm:$0xff]
      %v3769 = vld [vmem:[%s7 + $0x88] sm:$0xf]
      %v3770 = vld [vmem:[%s7 + $0x8c] sm:$0xff]
      %v3771 = vld [vmem:[%s7 + $0x94] sm:$0xff]
      %v3772 = vld [vmem:[%s7 + $0x9c] sm:$0xff]
      %v3773 = vld [vmem:[%s7 + $0xa4] sm:$0xf]
      %v3774 = vld [vmem:[%s7 + $0xa8] sm:$0xff]
      %v3775 = vld [vmem:[%s7 + $0xb0] sm:$0xff]
      %v3776 = vld [vmem:[%s7 + $0xb8] sm:$0xff]
      %v3777 = vld [vmem:[%s7 + $0xc0] sm:$0xf]
      %v3778 = vld [vmem:[%s7 + $0xc4] sm:$0xff]
      %v3779 = vld [vmem:[%s7 + $0xcc] sm:$0xff]
      %v3780 = vld [vmem:[%s7 + $0xd4] sm:$0xff]
      %v3781 = vld [vmem:[%s7 + $0xdc] sm:$0xf]
      %v3782 = vld [vmem:[%s7 + $0xe0] sm:$0xff]
      %v3783 = vld [vmem:[%s7 + $0xe8] sm:$0xff]
      %v3784 = vld [vmem:[%s7 + $0xf0] sm:$0xff]
      %v3785 = vld [vmem:[%s7 + $0xf8] sm:$0xf]
      %v3786 = vld [vmem:[%s7 + $0xfc] sm:$0xff]
      %v3787 = vld [vmem:[%s7 + $0x104] sm:$0xff]
      %v3788 = vld [vmem:[%s7 + $0x10c] sm:$0xff]
      %v3789 = vld [vmem:[%s7 + $0x114] sm:$0xf]
      %v3790 = vld [vmem:[%s7 + $0x118] sm:$0xff]
      %v3791 = vld [vmem:[%s7 + $0x120] sm:$0xff]
      %v3792 = vld [vmem:[%s7 + $0x128] sm:$0xff]
      %v3793 = vld [vmem:[%s7 + $0x130] sm:$0xf]
      %v3794 = vld [vmem:[%s7 + $0x134] sm:$0xff]
      %v3795 = vld [vmem:[%s7 + $0x13c] sm:$0xff]
      %v3796 = vld [vmem:[%s7 + $0x144] sm:$0xff]
      %v3797 = vld [vmem:[%s7 + $0x14c] sm:$0xf]
      %v3798 = vld [vmem:[%s7 + $0x150] sm:$0xff]
      %v3799 = vld [vmem:[%s7 + $0x158] sm:$0xff]
      %v3800 = vld [vmem:[%s7 + $0x160] sm:$0xff]
      %v3801 = vld [vmem:[%s7 + $0x168] sm:$0xf]
      %v3802 = vld [vmem:[%s7 + $0x16c] sm:$0xff]
      %v3803 = vld [vmem:[%s7 + $0x174] sm:$0xff]
      %v3804 = vld [vmem:[%s7 + $0x17c] sm:$0xff]
      %v3805 = vld [vmem:[%s7 + $0x184] sm:$0xf]
      %v3806 = vld [vmem:[%s7 + $0x188] sm:$0xff]
      %v3807 = vld [vmem:[%s7 + $0x190] sm:$0xff]
      %v3808 = vld [vmem:[%s7 + $0x198] sm:$0xff]
      %v3809 = vld [vmem:[%s7 + $0x1a0] sm:$0xf]
      %v3810 = vld [vmem:[%s7 + $0x1a4] sm:$0xff]
      %v3811 = vld [vmem:[%s7 + $0x1ac] sm:$0xff]
      %v3812 = vld [vmem:[%s7 + $0x1b4] sm:$0xff]
      %v3813 = vld [vmem:[%s7 + $0x1bc] sm:$0xf]
      %v3814 = vld [vmem:[%s7 + $0x1c0] sm:$0xff]
      %v3815 = vld [vmem:[%s7 + $0x1c8] sm:$0xff]
      %v3816 = vld [vmem:[%s7 + $0x1d0] sm:$0xff]
      %v3817 = vld [vmem:[%s7 + $0x1d8] sm:$0xf]
      %v3818 = vld [vmem:[%s7 + $0x1dc] sm:$0xff]
      %v3819 = vld [vmem:[%s7 + $0x1e4] sm:$0xff]
      %v3820 = vld [vmem:[%s7 + $0x1ec] sm:$0xff]
      %v3821 = vld [vmem:[%s7 + $0x1f4] sm:$0xf]
      %v3822 = vld [vmem:[%s7 + $0x1f8] sm:$0xff]
      %v3823 = vld [vmem:[%s7 + $0x200] sm:$0xff]
      %v3824 = vld [vmem:[%s7 + $0x208] sm:$0xff]
      %v3825 = vld [vmem:[%s7 + $0x210] sm:$0xf]
      %v3826 = vld [vmem:[%s7 + $0x214] sm:$0xff]
      %v3827 = vld [vmem:[%s7 + $0x21c] sm:$0xff]
      %v3828 = vld [vmem:[%s7 + $0x224] sm:$0xff]
      %v3829 = vld [vmem:[%s7 + $0x22c] sm:$0xf]
      %v3830 = vld [vmem:[%s7 + $0x230] sm:$0xff]
      %v3831 = vld [vmem:[%s7 + $0x238] sm:$0xff]
      %v3832 = vld [vmem:[%s7 + $0x240] sm:$0xff]
      %v3833 = vld [vmem:[%s7 + $0x248] sm:$0xf]
      %v3834 = vld [vmem:[%s7 + $0x24c] sm:$0xff]
      %v3835 = vld [vmem:[%s7 + $0x254] sm:$0xff]
      %v3836 = vld [vmem:[%s7 + $0x25c] sm:$0xff]
      %v3837 = vld [vmem:[%s7 + $0x264] sm:$0xf]
      %v3838 = vld [vmem:[%s7 + $0x268] sm:$0xff]
      %v3839 = vld [vmem:[%s7 + $0x270] sm:$0xff]
      %v3840 = vld [vmem:[%s7 + $0x278] sm:$0xff]
      %v3841 = vld [vmem:[%s7 + $0x280] sm:$0xf]
      %v3842 = vld [vmem:[%s7 + $0x284] sm:$0xff]
      %v3843 = vld [vmem:[%s7 + $0x28c] sm:$0xff]
      %v3844 = vld [vmem:[%s7 + $0x294] sm:$0xff]
      %v3845 = vld [vmem:[%s7 + $0x29c] sm:$0xf]
      %v3846 = vld [vmem:[%s7 + $0x2a0] sm:$0xff]
      %v3847 = vld [vmem:[%s7 + $0x2a8] sm:$0xff]
      %v3848 = vld [vmem:[%s7 + $0x2b0] sm:$0xff]
      %v3849 = vld [vmem:[%s7 + $0x2b8] sm:$0xf]
      %v3850 = vld [vmem:[%s7 + $0x2bc] sm:$0xff]
      %v3851 = vld [vmem:[%s7 + $0x2c4] sm:$0xff]
      %v3852 = vld [vmem:[%s7 + $0x2cc] sm:$0xff]
      %v3853 = vld [vmem:[%s7 + $0x2d4] sm:$0xf]
      %v3854 = vld [vmem:[%s7 + $0x2d8] sm:$0xff]
      %v3855 = vld [vmem:[%s7 + $0x2e0] sm:$0xff]
      %v3856 = vld [vmem:[%s7 + $0x2e8] sm:$0xff]
      %v3857 = vld [vmem:[%s7 + $0x2f0] sm:$0xf]
      %v3858 = vld [vmem:[%s7 + $0x2f4] sm:$0xff]
      %v3859 = vld [vmem:[%s7 + $0x2fc] sm:$0xff]
      %v3860 = vld [vmem:[%s7 + $0x304] sm:$0xff]
      %v3861 = vld [vmem:[%s7 + $0x30c] sm:$0xf]
      %v3862 = vld [vmem:[%s7 + $0x310] sm:$0xff]
      %v3863 = vld [vmem:[%s7 + $0x318] sm:$0xff]
      %v3864 = vld [vmem:[%s7 + $0x320] sm:$0xff]
      %v3865 = vld [vmem:[%s7 + $0x328] sm:$0xf]
      %v3866 = vld [vmem:[%s7 + $0x32c] sm:$0xff]
      %v3867 = vld [vmem:[%s7 + $0x334] sm:$0xff]
      %v3868 = vld [vmem:[%s7 + $0x33c] sm:$0xff]
      %v3869 = vld [vmem:[%s7 + $0x344] sm:$0xf]
      %v3870 = vld [vmem:[%s7 + $0x348] sm:$0xff]
      %v3871 = vld [vmem:[%s7 + $0x350] sm:$0xff]
      %v3872 = vld [vmem:[%s7 + $0x358] sm:$0xff]
      %v3873 = vld [vmem:[%s7 + $0x360] sm:$0xf]
      %v3874 = vld [vmem:[%s7 + $0x364] sm:$0xff]
      %v3875 = vld [vmem:[%s7 + $0x36c] sm:$0xff]
      %v3876 = vld [vmem:[%s7 + $0x374] sm:$0xff]
      %v3877 = vld [vmem:[%s7 + $0x37c] sm:$0xf]
      %v3878 = vld [vmem:[%s7 + $0x380] sm:$0xff]
      %v3879 = vld [vmem:[%s7 + $0x388] sm:$0xff]
      %v3880 = vld [vmem:[%s7 + $0x390] sm:$0xff]
      %v3881 = vld [vmem:[%s7 + $0x398] sm:$0xf]
      %v3882 = vld [vmem:[%s7 + $0x39c] sm:$0xff]
      %v3883 = vld [vmem:[%s7 + $0x3a4] sm:$0xff]
      %v3884 = vld [vmem:[%s7 + $0x3ac] sm:$0xff]
      %v3885 = vld [vmem:[%s7 + $0x3b4] sm:$0xf]
      %v3886 = vld [vmem:[%s7 + $0x3b8] sm:$0xff]
      %v3887 = vld [vmem:[%s7 + $0x3c0] sm:$0xff]
      %v3888 = vld [vmem:[%s7 + $0x3c8] sm:$0xff]
      %v3889 = vld [vmem:[%s7 + $0x3d0] sm:$0xf]
      %v3890 = vld [vmem:[%s7 + $0x3d4] sm:$0xff]
      %v3891 = vld [vmem:[%s7 + $0x3dc] sm:$0xff]
      %v3892 = vld [vmem:[%s7 + $0x3e4] sm:$0xff]
      %v3893 = vld [vmem:[%s7 + $0x3ec] sm:$0xf]
      %v3894 = vld [vmem:[%s7 + $0x3f0] sm:$0xff]
      %v3895 = vld [vmem:[%s7 + $0x3f8] sm:$0xff]
      %v3896 = vld [vmem:[%s7 + $0x400] sm:$0xff]
      %v3897 = vld [vmem:[%s7 + $0x408] sm:$0xf]
      %v3898 = vld [vmem:[%s7 + $0x40c] sm:$0xff]
      %v3899 = vld [vmem:[%s7 + $0x414] sm:$0xff]
      %v3900 = vld [vmem:[%s7 + $0x41c] sm:$0xff]
      %v3901 = vld [vmem:[%s7 + $0x424] sm:$0xf]
      %v3902 = vld [vmem:[%s7 + $0x428] sm:$0xff]
      %v3903 = vld [vmem:[%s7 + $0x430] sm:$0xff]
      %v3904 = vld [vmem:[%s7 + $0x438] sm:$0xff]
      %v3905 = vld [vmem:[%s7 + $0x440] sm:$0xf]
      %v3906 = vld [vmem:[%s7 + $0x444] sm:$0xff]
      %v3907 = vld [vmem:[%s7 + $0x44c] sm:$0xff]
      %v3908 = vld [vmem:[%s7 + $0x454] sm:$0xff]
      %v3909 = vld [vmem:[%s7 + $0x45c] sm:$0xf]
      %v3910 = vld [vmem:[%s7 + $0x460] sm:$0xff]
      %v3911 = vld [vmem:[%s7 + $0x468] sm:$0xff]
      %v3912 = vld [vmem:[%s7 + $0x470] sm:$0xff]
      %v3913 = vld [vmem:[%s7 + $0x478] sm:$0xf]
      %v3914 = vld [vmem:[%s7 + $0x47c] sm:$0xff]
      %v3915 = vld [vmem:[%s7 + $0x484] sm:$0xff]
      %v3916 = vld [vmem:[%s7 + $0x48c] sm:$0xff]
      %v3917 = vld [vmem:[%s7 + $0x494] sm:$0xf]
      %v3918 = vld [vmem:[%s7 + $0x498] sm:$0xff]
      %v3919 = vld [vmem:[%s7 + $0x4a0] sm:$0xff]
      %v3920 = vld [vmem:[%s7 + $0x4a8] sm:$0xff]
      %v3921 = vld [vmem:[%s7 + $0x4b0] sm:$0xf]
      %v3922 = vld [vmem:[%s7 + $0x4b4] sm:$0xff]
      %v3923 = vld [vmem:[%s7 + $0x4bc] sm:$0xff]
      %v3924 = vld [vmem:[%s7 + $0x4c4] sm:$0xff]
      %v3925 = vld [vmem:[%s7 + $0x4cc] sm:$0xf]
      %v3926 = vld [vmem:[%s7 + $0x4d0] sm:$0xff]
      %v3927 = vld [vmem:[%s7 + $0x4d8] sm:$0xff]
      %v3928 = vld [vmem:[%s7 + $0x4e0] sm:$0xff]
      %v3929 = vld [vmem:[%s7 + $0x4e8] sm:$0xf]
      %v3930 = vld [vmem:[%s7 + $0x4ec] sm:$0xff]
      %v3931 = vld [vmem:[%s7 + $0x4f4] sm:$0xff]
      %v3932 = vld [vmem:[%s7 + $0x4fc] sm:$0xff]
      %v3933 = vld [vmem:[%s7 + $0x504] sm:$0xf]
      %v3934 = vld [vmem:[%s7 + $0x508] sm:$0xff]
      %v3935 = vld [vmem:[%s7 + $0x510] sm:$0xff]
      %v3936 = vld [vmem:[%s7 + $0x518] sm:$0xff]
      %v3937 = vld [vmem:[%s7 + $0x520] sm:$0xf]
      %v3938 = vld [vmem:[%s7 + $0x524] sm:$0xff]
      %v3939 = vld [vmem:[%s7 + $0x52c] sm:$0xff]
      %v3940 = vld [vmem:[%s7 + $0x534] sm:$0xff]
      %v3941 = vld [vmem:[%s7 + $0x53c] sm:$0xf]
      %v3942 = vld [vmem:[%s7 + $0x540] sm:$0xff]
      %v3943 = vld [vmem:[%s7 + $0x548] sm:$0xff]
      %v3944 = vld [vmem:[%s7 + $0x550] sm:$0xff]
      %v3945 = vld [vmem:[%s7 + $0x558] sm:$0xf]
      %v3946 = vld [vmem:[%s7 + $0x55c] sm:$0xff]
      %v3947 = vld [vmem:[%s7 + $0x564] sm:$0xff]
      %v3948 = vld [vmem:[%s7 + $0x56c] sm:$0xff]
      %v3949 = vld [vmem:[%s7 + $0x574] sm:$0xf]
      %v3950 = vld [vmem:[%s7 + $0x578] sm:$0xff]
      %v3951 = vld [vmem:[%s7 + $0x580] sm:$0xff]
      %v3952 = vld [vmem:[%s7 + $0x588] sm:$0xff]
      %v3953 = vld [vmem:[%s7 + $0x590] sm:$0xf]
      %v3954 = vld [vmem:[%s7 + $0x594] sm:$0xff]
      %v3955 = vld [vmem:[%s7 + $0x59c] sm:$0xff]
      %v3956 = vld [vmem:[%s7 + $0x5a4] sm:$0xff]
      %v3957 = vld [vmem:[%s7 + $0x5ac] sm:$0xf]
      %v3958 = vld [vmem:[%s7 + $0x5b0] sm:$0xff]
      %v3959 = vld [vmem:[%s7 + $0x5b8] sm:$0xff]
      %v3960 = vld [vmem:[%s7 + $0x5c0] sm:$0xff]
      %v3961 = vld [vmem:[%s7 + $0x5c8] sm:$0xf]
      %v3962 = vld [vmem:[%s7 + $0x5cc] sm:$0xff]
      %v3963 = vld [vmem:[%s7 + $0x5d4] sm:$0xff]
      %v3964 = vld [vmem:[%s7 + $0x5dc] sm:$0xff]
      %v3965 = vld [vmem:[%s7 + $0x5e4] sm:$0xf]
      %v3966 = vld [vmem:[%s7 + $0x5e8] sm:$0xff]
      %v3967 = vld [vmem:[%s7 + $0x5f0] sm:$0xff]
      %v3968 = vld [vmem:[%s7 + $0x5f8] sm:$0xff]
      %v3969 = vld [vmem:[%s7 + $0x600] sm:$0xf]
      %v3970 = vld [vmem:[%s7 + $0x604] sm:$0xff]
      %v3971 = vld [vmem:[%s7 + $0x60c] sm:$0xff]
      %v3972 = vld [vmem:[%s7 + $0x614] sm:$0xff]
      %v3973 = vld [vmem:[%s7 + $0x61c] sm:$0xf]
      %v3974 = vld [vmem:[%s7 + $0x620] sm:$0xff]
      %v3975 = vld [vmem:[%s7 + $0x628] sm:$0xff]
      %v3976 = vld [vmem:[%s7 + $0x630] sm:$0xff]
      %v3977 = vld [vmem:[%s7 + $0x638] sm:$0xf]
      %v3978 = vld [vmem:[%s7 + $0x63c] sm:$0xff]
      %v3979 = vld [vmem:[%s7 + $0x644] sm:$0xff]
      %v3980 = vld [vmem:[%s7 + $0x64c] sm:$0xff]
      %v3981 = vld [vmem:[%s7 + $0x654] sm:$0xf]
      %v3982 = vld [vmem:[%s7 + $0x658] sm:$0xff]
      %v3983 = vld [vmem:[%s7 + $0x660] sm:$0xff]
      %v3984 = vld [vmem:[%s7 + $0x668] sm:$0xff]
      %v3985 = vld [vmem:[%s7 + $0x670] sm:$0xf]
      %v3986 = vld [vmem:[%s7 + $0x674] sm:$0xff]
      %v3987 = vld [vmem:[%s7 + $0x67c] sm:$0xff]
      %v3988 = vld [vmem:[%s7 + $0x684] sm:$0xff]
      %v3989 = vld [vmem:[%s7 + $0x68c] sm:$0xf]
      %v3990 = vld [vmem:[%s7 + $0x690] sm:$0xff]
      %v3991 = vld [vmem:[%s7 + $0x698] sm:$0xff]
      %v3992 = vld [vmem:[%s7 + $0x6a0] sm:$0xff]
      %v3993 = vld [vmem:[%s7 + $0x6a8] sm:$0xf]
      %v3994 = vld [vmem:[%s7 + $0x6ac] sm:$0xff]
      %v3995 = vld [vmem:[%s7 + $0x6b4] sm:$0xff]
      %v3996 = vld [vmem:[%s7 + $0x6bc] sm:$0xff]
      %v3997 = vld [vmem:[%s7 + $0x6c4] sm:$0xf]
      %v3998 = vld [vmem:[%s7 + $0x6c8] sm:$0xff]
      %v3999 = vld [vmem:[%s7 + $0x6d0] sm:$0xff]
      %v4000 = vld [vmem:[%s7 + $0x6d8] sm:$0xff]
      %v4001 = vld [vmem:[%s7 + $0x6e0] sm:$0xf]
      %v4002 = vld [vmem:[%s7 + $0x6e4] sm:$0xff]
      %v4003 = vld [vmem:[%s7 + $0x6ec] sm:$0xff]
      %v4004 = vld [vmem:[%s7 + $0x6f4] sm:$0xff]
      %v4005 = vld [vmem:[%s7 + $0x6fc] sm:$0xf]
      %v4006 = vld [vmem:[%s8] sm:$0x7f]
      %v4008 = vlaneseq
      %v4009 = vshrl.u32 %v4008, 7
      %v4010 = vsub.s32 0, %v4009
      %v4011 = vrot.slane %v4006, %v4010
      %v4012 = vlaneseq
      %v4013 = vshrl.u32 %v4012, 7
      %v4014 = vsub.s32 1, %v4013
      %v4015 = vrot.slane %v4006, %v4014
      %v4016 = vlaneseq
      %v4017 = vshrl.u32 %v4016, 7
      %v4018 = vsub.s32 2, %v4017
      %v4019 = vrot.slane %v4006, %v4018
      %v4020 = vlaneseq
      %v4021 = vshrl.u32 %v4020, 7
      %v4022 = vsub.s32 3, %v4021
      %v4023 = vrot.slane %v4006, %v4022
      %v4024 = vlaneseq
      %v4025 = vshrl.u32 %v4024, 7
      %v4026 = vsub.s32 4, %v4025
      %v4027 = vrot.slane %v4006, %v4026
      %v4028 = vlaneseq
      %v4029 = vshrl.u32 %v4028, 7
      %v4030 = vsub.s32 5, %v4029
      %v4031 = vrot.slane %v4006, %v4030
      %v4032 = vlaneseq
      %v4033 = vshrl.u32 %v4032, 7
      %v4034 = vsub.s32 6, %v4033
      %v4035 = vrot.slane %v4006, %v4034
      %v4299 = vunpack.c.l.b16 %v3750
      %v4300 = vunpack.c.h.b16 %v3750
      %v4301 = vunpack.c.l.b16 %v3751
      %v4302 = vunpack.c.h.b16 %v3751
      %v4303 = vunpack.c.l.b16 %v3752
      %v4304 = vunpack.c.h.b16 %v3752
      %v4305 = vunpack.c.l.b16 %v3753
      %v4306 = vunpack.c.l.b16 %v3754
      %v4307 = vunpack.c.h.b16 %v3754
      %v4308 = vunpack.c.l.b16 %v3755
      %v4309 = vunpack.c.h.b16 %v3755
      %v4310 = vunpack.c.l.b16 %v3756
      %v4311 = vunpack.c.h.b16 %v3756
      %v4312 = vunpack.c.l.b16 %v3757
      %v4313 = vunpack.c.l.b16 %v3758
      %v4314 = vunpack.c.h.b16 %v3758
      %v4315 = vunpack.c.l.b16 %v3759
      %v4316 = vunpack.c.h.b16 %v3759
      %v4317 = vunpack.c.l.b16 %v3760
      %v4318 = vunpack.c.h.b16 %v3760
      %v4319 = vunpack.c.l.b16 %v3761
      %v4320 = vunpack.c.l.b16 %v3762
      %v4321 = vunpack.c.h.b16 %v3762
      %v4322 = vunpack.c.l.b16 %v3763
      %v4323 = vunpack.c.h.b16 %v3763
      %v4324 = vunpack.c.l.b16 %v3764
      %v4325 = vunpack.c.h.b16 %v3764
      %v4326 = vunpack.c.l.b16 %v3765
      %v4327 = vunpack.c.l.b16 %v3766
      %v4328 = vunpack.c.h.b16 %v3766
      %v4329 = vunpack.c.l.b16 %v3767
      %v4330 = vunpack.c.h.b16 %v3767
      %v4331 = vunpack.c.l.b16 %v3768
      %v4332 = vunpack.c.h.b16 %v3768
      %v4333 = vunpack.c.l.b16 %v3769
      %v4334 = vunpack.c.l.b16 %v3770
      %v4335 = vunpack.c.h.b16 %v3770
      %v4336 = vunpack.c.l.b16 %v3771
      %v4337 = vunpack.c.h.b16 %v3771
      %v4338 = vunpack.c.l.b16 %v3772
      %v4339 = vunpack.c.h.b16 %v3772
      %v4340 = vunpack.c.l.b16 %v3773
      %v4341 = vunpack.c.l.b16 %v3774
      %v4342 = vunpack.c.h.b16 %v3774
      %v4343 = vunpack.c.l.b16 %v3775
      %v4344 = vunpack.c.h.b16 %v3775
      %v4345 = vunpack.c.l.b16 %v3776
      %v4346 = vunpack.c.h.b16 %v3776
      %v4347 = vunpack.c.l.b16 %v3777
      %v4348 = vunpack.c.l.b16 %v3778
      %v4349 = vunpack.c.h.b16 %v3778
      %v4350 = vunpack.c.l.b16 %v3779
      %v4351 = vunpack.c.h.b16 %v3779
      %v4352 = vunpack.c.l.b16 %v3780
      %v4353 = vunpack.c.h.b16 %v3780
      %v4354 = vunpack.c.l.b16 %v3781
      %v4355 = vunpack.c.l.b16 %v3782
      %v4356 = vunpack.c.h.b16 %v3782
      %v4357 = vunpack.c.l.b16 %v3783
      %v4358 = vunpack.c.h.b16 %v3783
      %v4359 = vunpack.c.l.b16 %v3784
      %v4360 = vunpack.c.h.b16 %v3784
      %v4361 = vunpack.c.l.b16 %v3785
      %v4362 = vunpack.c.l.b16 %v3786
      %v4363 = vunpack.c.h.b16 %v3786
      %v4364 = vunpack.c.l.b16 %v3787
      %v4365 = vunpack.c.h.b16 %v3787
      %v4366 = vunpack.c.l.b16 %v3788
      %v4367 = vunpack.c.h.b16 %v3788
      %v4368 = vunpack.c.l.b16 %v3789
      %v4369 = vunpack.c.l.b16 %v3790
      %v4370 = vunpack.c.h.b16 %v3790
      %v4371 = vunpack.c.l.b16 %v3791
      %v4372 = vunpack.c.h.b16 %v3791
      %v4373 = vunpack.c.l.b16 %v3792
      %v4374 = vunpack.c.h.b16 %v3792
      %v4375 = vunpack.c.l.b16 %v3793
      %v4376 = vunpack.c.l.b16 %v3794
      %v4377 = vunpack.c.h.b16 %v3794
      %v4378 = vunpack.c.l.b16 %v3795
      %v4379 = vunpack.c.h.b16 %v3795
      %v4380 = vunpack.c.l.b16 %v3796
      %v4381 = vunpack.c.h.b16 %v3796
      %v4382 = vunpack.c.l.b16 %v3797
      %v4383 = vunpack.c.l.b16 %v3798
      %v4384 = vunpack.c.h.b16 %v3798
      %v4385 = vunpack.c.l.b16 %v3799
      %v4386 = vunpack.c.h.b16 %v3799
      %v4387 = vunpack.c.l.b16 %v3800
      %v4388 = vunpack.c.h.b16 %v3800
      %v4389 = vunpack.c.l.b16 %v3801
      %v4390 = vunpack.c.l.b16 %v3802
      %v4391 = vunpack.c.h.b16 %v3802
      %v4392 = vunpack.c.l.b16 %v3803
      %v4393 = vunpack.c.h.b16 %v3803
      %v4394 = vunpack.c.l.b16 %v3804
      %v4395 = vunpack.c.h.b16 %v3804
      %v4396 = vunpack.c.l.b16 %v3805
      %v4397 = vunpack.c.l.b16 %v3806
      %v4398 = vunpack.c.h.b16 %v3806
      %v4399 = vunpack.c.l.b16 %v3807
      %v4400 = vunpack.c.h.b16 %v3807
      %v4401 = vunpack.c.l.b16 %v3808
      %v4402 = vunpack.c.h.b16 %v3808
      %v4403 = vunpack.c.l.b16 %v3809
      %v4404 = vunpack.c.l.b16 %v3810
      %v4405 = vunpack.c.h.b16 %v3810
      %v4406 = vunpack.c.l.b16 %v3811
      %v4407 = vunpack.c.h.b16 %v3811
      %v4408 = vunpack.c.l.b16 %v3812
      %v4409 = vunpack.c.h.b16 %v3812
      %v4410 = vunpack.c.l.b16 %v3813
      %v4411 = vunpack.c.l.b16 %v3814
      %v4412 = vunpack.c.h.b16 %v3814
      %v4413 = vunpack.c.l.b16 %v3815
      %v4414 = vunpack.c.h.b16 %v3815
      %v4415 = vunpack.c.l.b16 %v3816
      %v4416 = vunpack.c.h.b16 %v3816
      %v4417 = vunpack.c.l.b16 %v3817
      %v4418 = vunpack.c.l.b16 %v3818
      %v4419 = vunpack.c.h.b16 %v3818
      %v4420 = vunpack.c.l.b16 %v3819
      %v4421 = vunpack.c.h.b16 %v3819
      %v4422 = vunpack.c.l.b16 %v3820
      %v4423 = vunpack.c.h.b16 %v3820
      %v4424 = vunpack.c.l.b16 %v3821
      %v4425 = vunpack.c.l.b16 %v3822
      %v4426 = vunpack.c.h.b16 %v3822
      %v4427 = vunpack.c.l.b16 %v3823
      %v4428 = vunpack.c.h.b16 %v3823
      %v4429 = vunpack.c.l.b16 %v3824
      %v4430 = vunpack.c.h.b16 %v3824
      %v4431 = vunpack.c.l.b16 %v3825
      %v4432 = vunpack.c.l.b16 %v3826
      %v4433 = vunpack.c.h.b16 %v3826
      %v4434 = vunpack.c.l.b16 %v3827
      %v4435 = vunpack.c.h.b16 %v3827
      %v4436 = vunpack.c.l.b16 %v3828
      %v4437 = vunpack.c.h.b16 %v3828
      %v4438 = vunpack.c.l.b16 %v3829
      %v4439 = vunpack.c.l.b16 %v3830
      %v4440 = vunpack.c.h.b16 %v3830
      %v4441 = vunpack.c.l.b16 %v3831
      %v4442 = vunpack.c.h.b16 %v3831
      %v4443 = vunpack.c.l.b16 %v3832
      %v4444 = vunpack.c.h.b16 %v3832
      %v4445 = vunpack.c.l.b16 %v3833
      %v4446 = vunpack.c.l.b16 %v3834
      %v4447 = vunpack.c.h.b16 %v3834
      %v4448 = vunpack.c.l.b16 %v3835
      %v4449 = vunpack.c.h.b16 %v3835
      %v4450 = vunpack.c.l.b16 %v3836
      %v4451 = vunpack.c.h.b16 %v3836
      %v4452 = vunpack.c.l.b16 %v3837
      %v4453 = vunpack.c.l.b16 %v3838
      %v4454 = vunpack.c.h.b16 %v3838
      %v4455 = vunpack.c.l.b16 %v3839
      %v4456 = vunpack.c.h.b16 %v3839
      %v4457 = vunpack.c.l.b16 %v3840
      %v4458 = vunpack.c.h.b16 %v3840
      %v4459 = vunpack.c.l.b16 %v3841
      %v4460 = vunpack.c.l.b16 %v3842
      %v4461 = vunpack.c.h.b16 %v3842
      %v4462 = vunpack.c.l.b16 %v3843
      %v4463 = vunpack.c.h.b16 %v3843
      %v4464 = vunpack.c.l.b16 %v3844
      %v4465 = vunpack.c.h.b16 %v3844
      %v4466 = vunpack.c.l.b16 %v3845
      %v4467 = vunpack.c.l.b16 %v3846
      %v4468 = vunpack.c.h.b16 %v3846
      %v4469 = vunpack.c.l.b16 %v3847
      %v4470 = vunpack.c.h.b16 %v3847
      %v4471 = vunpack.c.l.b16 %v3848
      %v4472 = vunpack.c.h.b16 %v3848
      %v4473 = vunpack.c.l.b16 %v3849
      %v4474 = vunpack.c.l.b16 %v3850
      %v4475 = vunpack.c.h.b16 %v3850
      %v4476 = vunpack.c.l.b16 %v3851
      %v4477 = vunpack.c.h.b16 %v3851
      %v4478 = vunpack.c.l.b16 %v3852
      %v4479 = vunpack.c.h.b16 %v3852
      %v4480 = vunpack.c.l.b16 %v3853
      %v4481 = vunpack.c.l.b16 %v3854
      %v4482 = vunpack.c.h.b16 %v3854
      %v4483 = vunpack.c.l.b16 %v3855
      %v4484 = vunpack.c.h.b16 %v3855
      %v4485 = vunpack.c.l.b16 %v3856
      %v4486 = vunpack.c.h.b16 %v3856
      %v4487 = vunpack.c.l.b16 %v3857
      %v4488 = vunpack.c.l.b16 %v3858
      %v4489 = vunpack.c.h.b16 %v3858
      %v4490 = vunpack.c.l.b16 %v3859
      %v4491 = vunpack.c.h.b16 %v3859
      %v4492 = vunpack.c.l.b16 %v3860
      %v4493 = vunpack.c.h.b16 %v3860
      %v4494 = vunpack.c.l.b16 %v3861
      %v4495 = vunpack.c.l.b16 %v3862
      %v4496 = vunpack.c.h.b16 %v3862
      %v4497 = vunpack.c.l.b16 %v3863
      %v4498 = vunpack.c.h.b16 %v3863
      %v4499 = vunpack.c.l.b16 %v3864
      %v4500 = vunpack.c.h.b16 %v3864
      %v4501 = vunpack.c.l.b16 %v3865
      %v4502 = vunpack.c.l.b16 %v3866
      %v4503 = vunpack.c.h.b16 %v3866
      %v4504 = vunpack.c.l.b16 %v3867
      %v4505 = vunpack.c.h.b16 %v3867
      %v4506 = vunpack.c.l.b16 %v3868
      %v4507 = vunpack.c.h.b16 %v3868
      %v4508 = vunpack.c.l.b16 %v3869
      %v4509 = vunpack.c.l.b16 %v3870
      %v4510 = vunpack.c.h.b16 %v3870
      %v4511 = vunpack.c.l.b16 %v3871
      %v4512 = vunpack.c.h.b16 %v3871
      %v4513 = vunpack.c.l.b16 %v3872
      %v4514 = vunpack.c.h.b16 %v3872
      %v4515 = vunpack.c.l.b16 %v3873
      %v4516 = vunpack.c.l.b16 %v3874
      %v4517 = vunpack.c.h.b16 %v3874
      %v4518 = vunpack.c.l.b16 %v3875
      %v4519 = vunpack.c.h.b16 %v3875
      %v4520 = vunpack.c.l.b16 %v3876
      %v4521 = vunpack.c.h.b16 %v3876
      %v4522 = vunpack.c.l.b16 %v3877
      %v4523 = vunpack.c.l.b16 %v3878
      %v4524 = vunpack.c.h.b16 %v3878
      %v4525 = vunpack.c.l.b16 %v3879
      %v4526 = vunpack.c.h.b16 %v3879
      %v4527 = vunpack.c.l.b16 %v3880
      %v4528 = vunpack.c.h.b16 %v3880
      %v4529 = vunpack.c.l.b16 %v3881
      %v4530 = vunpack.c.l.b16 %v3882
      %v4531 = vunpack.c.h.b16 %v3882
      %v4532 = vunpack.c.l.b16 %v3883
      %v4533 = vunpack.c.h.b16 %v3883
      %v4534 = vunpack.c.l.b16 %v3884
      %v4535 = vunpack.c.h.b16 %v3884
      %v4536 = vunpack.c.l.b16 %v3885
      %v4537 = vunpack.c.l.b16 %v3886
      %v4538 = vunpack.c.h.b16 %v3886
      %v4539 = vunpack.c.l.b16 %v3887
      %v4540 = vunpack.c.h.b16 %v3887
      %v4541 = vunpack.c.l.b16 %v3888
      %v4542 = vunpack.c.h.b16 %v3888
      %v4543 = vunpack.c.l.b16 %v3889
      %v4544 = vunpack.c.l.b16 %v3890
      %v4545 = vunpack.c.h.b16 %v3890
      %v4546 = vunpack.c.l.b16 %v3891
      %v4547 = vunpack.c.h.b16 %v3891
      %v4548 = vunpack.c.l.b16 %v3892
      %v4549 = vunpack.c.h.b16 %v3892
      %v4550 = vunpack.c.l.b16 %v3893
      %v4551 = vunpack.c.l.b16 %v3894
      %v4552 = vunpack.c.h.b16 %v3894
      %v4553 = vunpack.c.l.b16 %v3895
      %v4554 = vunpack.c.h.b16 %v3895
      %v4555 = vunpack.c.l.b16 %v3896
      %v4556 = vunpack.c.h.b16 %v3896
      %v4557 = vunpack.c.l.b16 %v3897
      %v4558 = vunpack.c.l.b16 %v3898
      %v4559 = vunpack.c.h.b16 %v3898
      %v4560 = vunpack.c.l.b16 %v3899
      %v4561 = vunpack.c.h.b16 %v3899
      %v4562 = vunpack.c.l.b16 %v3900
      %v4563 = vunpack.c.h.b16 %v3900
      %v4564 = vunpack.c.l.b16 %v3901
      %v4565 = vunpack.c.l.b16 %v3902
      %v4566 = vunpack.c.h.b16 %v3902
      %v4567 = vunpack.c.l.b16 %v3903
      %v4568 = vunpack.c.h.b16 %v3903
      %v4569 = vunpack.c.l.b16 %v3904
      %v4570 = vunpack.c.h.b16 %v3904
      %v4571 = vunpack.c.l.b16 %v3905
      %v4572 = vunpack.c.l.b16 %v3906
      %v4573 = vunpack.c.h.b16 %v3906
      %v4574 = vunpack.c.l.b16 %v3907
      %v4575 = vunpack.c.h.b16 %v3907
      %v4576 = vunpack.c.l.b16 %v3908
      %v4577 = vunpack.c.h.b16 %v3908
      %v4578 = vunpack.c.l.b16 %v3909
      %v4579 = vunpack.c.l.b16 %v3910
      %v4580 = vunpack.c.h.b16 %v3910
      %v4581 = vunpack.c.l.b16 %v3911
      %v4582 = vunpack.c.h.b16 %v3911
      %v4583 = vunpack.c.l.b16 %v3912
      %v4584 = vunpack.c.h.b16 %v3912
      %v4585 = vunpack.c.l.b16 %v3913
      %v4586 = vunpack.c.l.b16 %v3914
      %v4587 = vunpack.c.h.b16 %v3914
      %v4588 = vunpack.c.l.b16 %v3915
      %v4589 = vunpack.c.h.b16 %v3915
      %v4590 = vunpack.c.l.b16 %v3916
      %v4591 = vunpack.c.h.b16 %v3916
      %v4592 = vunpack.c.l.b16 %v3917
      %v4593 = vunpack.c.l.b16 %v3918
      %v4594 = vunpack.c.h.b16 %v3918
      %v4595 = vunpack.c.l.b16 %v3919
      %v4596 = vunpack.c.h.b16 %v3919
      %v4597 = vunpack.c.l.b16 %v3920
      %v4598 = vunpack.c.h.b16 %v3920
      %v4599 = vunpack.c.l.b16 %v3921
      %v4600 = vunpack.c.l.b16 %v3922
      %v4601 = vunpack.c.h.b16 %v3922
      %v4602 = vunpack.c.l.b16 %v3923
      %v4603 = vunpack.c.h.b16 %v3923
      %v4604 = vunpack.c.l.b16 %v3924
      %v4605 = vunpack.c.h.b16 %v3924
      %v4606 = vunpack.c.l.b16 %v3925
      %v4607 = vunpack.c.l.b16 %v3926
      %v4608 = vunpack.c.h.b16 %v3926
      %v4609 = vunpack.c.l.b16 %v3927
      %v4610 = vunpack.c.h.b16 %v3927
      %v4611 = vunpack.c.l.b16 %v3928
      %v4612 = vunpack.c.h.b16 %v3928
      %v4613 = vunpack.c.l.b16 %v3929
      %v4614 = vunpack.c.l.b16 %v3930
      %v4615 = vunpack.c.h.b16 %v3930
      %v4616 = vunpack.c.l.b16 %v3931
      %v4617 = vunpack.c.h.b16 %v3931
      %v4618 = vunpack.c.l.b16 %v3932
      %v4619 = vunpack.c.h.b16 %v3932
      %v4620 = vunpack.c.l.b16 %v3933
      %v4621 = vunpack.c.l.b16 %v3934
      %v4622 = vunpack.c.h.b16 %v3934
      %v4623 = vunpack.c.l.b16 %v3935
      %v4624 = vunpack.c.h.b16 %v3935
      %v4625 = vunpack.c.l.b16 %v3936
      %v4626 = vunpack.c.h.b16 %v3936
      %v4627 = vunpack.c.l.b16 %v3937
      %v4628 = vunpack.c.l.b16 %v3938
      %v4629 = vunpack.c.h.b16 %v3938
      %v4630 = vunpack.c.l.b16 %v3939
      %v4631 = vunpack.c.h.b16 %v3939
      %v4632 = vunpack.c.l.b16 %v3940
      %v4633 = vunpack.c.h.b16 %v3940
      %v4634 = vunpack.c.l.b16 %v3941
      %v4635 = vunpack.c.l.b16 %v3942
      %v4636 = vunpack.c.h.b16 %v3942
      %v4637 = vunpack.c.l.b16 %v3943
      %v4638 = vunpack.c.h.b16 %v3943
      %v4639 = vunpack.c.l.b16 %v3944
      %v4640 = vunpack.c.h.b16 %v3944
      %v4641 = vunpack.c.l.b16 %v3945
      %v4642 = vunpack.c.l.b16 %v3946
      %v4643 = vunpack.c.h.b16 %v3946
      %v4644 = vunpack.c.l.b16 %v3947
      %v4645 = vunpack.c.h.b16 %v3947
      %v4646 = vunpack.c.l.b16 %v3948
      %v4647 = vunpack.c.h.b16 %v3948
      %v4648 = vunpack.c.l.b16 %v3949
      %v4649 = vunpack.c.l.b16 %v3950
      %v4650 = vunpack.c.h.b16 %v3950
      %v4651 = vunpack.c.l.b16 %v3951
      %v4652 = vunpack.c.h.b16 %v3951
      %v4653 = vunpack.c.l.b16 %v3952
      %v4654 = vunpack.c.h.b16 %v3952
      %v4655 = vunpack.c.l.b16 %v3953
      %v4656 = vunpack.c.l.b16 %v3954
      %v4657 = vunpack.c.h.b16 %v3954
      %v4658 = vunpack.c.l.b16 %v3955
      %v4659 = vunpack.c.h.b16 %v3955
      %v4660 = vunpack.c.l.b16 %v3956
      %v4661 = vunpack.c.h.b16 %v3956
      %v4662 = vunpack.c.l.b16 %v3957
      %v4663 = vunpack.c.l.b16 %v3958
      %v4664 = vunpack.c.h.b16 %v3958
      %v4665 = vunpack.c.l.b16 %v3959
      %v4666 = vunpack.c.h.b16 %v3959
      %v4667 = vunpack.c.l.b16 %v3960
      %v4668 = vunpack.c.h.b16 %v3960
      %v4669 = vunpack.c.l.b16 %v3961
      %v4670 = vunpack.c.l.b16 %v3962
      %v4671 = vunpack.c.h.b16 %v3962
      %v4672 = vunpack.c.l.b16 %v3963
      %v4673 = vunpack.c.h.b16 %v3963
      %v4674 = vunpack.c.l.b16 %v3964
      %v4675 = vunpack.c.h.b16 %v3964
      %v4676 = vunpack.c.l.b16 %v3965
      %v4677 = vunpack.c.l.b16 %v3966
      %v4678 = vunpack.c.h.b16 %v3966
      %v4679 = vunpack.c.l.b16 %v3967
      %v4680 = vunpack.c.h.b16 %v3967
      %v4681 = vunpack.c.l.b16 %v3968
      %v4682 = vunpack.c.h.b16 %v3968
      %v4683 = vunpack.c.l.b16 %v3969
      %v4684 = vunpack.c.l.b16 %v3970
      %v4685 = vunpack.c.h.b16 %v3970
      %v4686 = vunpack.c.l.b16 %v3971
      %v4687 = vunpack.c.h.b16 %v3971
      %v4688 = vunpack.c.l.b16 %v3972
      %v4689 = vunpack.c.h.b16 %v3972
      %v4690 = vunpack.c.l.b16 %v3973
      %v4691 = vunpack.c.l.b16 %v3974
      %v4692 = vunpack.c.h.b16 %v3974
      %v4693 = vunpack.c.l.b16 %v3975
      %v4694 = vunpack.c.h.b16 %v3975
      %v4695 = vunpack.c.l.b16 %v3976
      %v4696 = vunpack.c.h.b16 %v3976
      %v4697 = vunpack.c.l.b16 %v3977
      %v4698 = vunpack.c.l.b16 %v3978
      %v4699 = vunpack.c.h.b16 %v3978
      %v4700 = vunpack.c.l.b16 %v3979
      %v4701 = vunpack.c.h.b16 %v3979
      %v4702 = vunpack.c.l.b16 %v3980
      %v4703 = vunpack.c.h.b16 %v3980
      %v4704 = vunpack.c.l.b16 %v3981
      %v4705 = vunpack.c.l.b16 %v3982
      %v4706 = vunpack.c.h.b16 %v3982
      %v4707 = vunpack.c.l.b16 %v3983
      %v4708 = vunpack.c.h.b16 %v3983
      %v4709 = vunpack.c.l.b16 %v3984
      %v4710 = vunpack.c.h.b16 %v3984
      %v4711 = vunpack.c.l.b16 %v3985
      %v4712 = vunpack.c.l.b16 %v3986
      %v4713 = vunpack.c.h.b16 %v3986
      %v4714 = vunpack.c.l.b16 %v3987
      %v4715 = vunpack.c.h.b16 %v3987
      %v4716 = vunpack.c.l.b16 %v3988
      %v4717 = vunpack.c.h.b16 %v3988
      %v4718 = vunpack.c.l.b16 %v3989
      %v4719 = vunpack.c.l.b16 %v3990
      %v4720 = vunpack.c.h.b16 %v3990
      %v4721 = vunpack.c.l.b16 %v3991
      %v4722 = vunpack.c.h.b16 %v3991
      %v4723 = vunpack.c.l.b16 %v3992
      %v4724 = vunpack.c.h.b16 %v3992
      %v4725 = vunpack.c.l.b16 %v3993
      %v4726 = vunpack.c.l.b16 %v3994
      %v4727 = vunpack.c.h.b16 %v3994
      %v4728 = vunpack.c.l.b16 %v3995
      %v4729 = vunpack.c.h.b16 %v3995
      %v4730 = vunpack.c.l.b16 %v3996
      %v4731 = vunpack.c.h.b16 %v3996
      %v4732 = vunpack.c.l.b16 %v3997
      %v4733 = vunpack.c.l.b16 %v3998
      %v4734 = vunpack.c.h.b16 %v3998
      %v4735 = vunpack.c.l.b16 %v3999
      %v4736 = vunpack.c.h.b16 %v3999
      %v4737 = vunpack.c.l.b16 %v4000
      %v4738 = vunpack.c.h.b16 %v4000
      %v4739 = vunpack.c.l.b16 %v4001
      %v4740 = vunpack.c.l.b16 %v4002
      %v4741 = vunpack.c.h.b16 %v4002
      %v4742 = vunpack.c.l.b16 %v4003
      %v4743 = vunpack.c.h.b16 %v4003
      %v4744 = vunpack.c.l.b16 %v4004
      %v4745 = vunpack.c.h.b16 %v4004
      %v4746 = vunpack.c.l.b16 %v4005
      %v4747 = vpack.c.b16 %v4306, %v4299
      %v4748 = vpack.c.b16 %v4307, %v4300
      %v4749 = vpack.c.b16 %v4308, %v4301
      %v4750 = vpack.c.b16 %v4309, %v4302
      %v4751 = vpack.c.b16 %v4310, %v4303
      %v4752 = vpack.c.b16 %v4311, %v4304
      %v4753 = vpack.c.b16 %v4312, %v4305
      %v4754 = vpack.c.b16 %v4320, %v4313
      %v4755 = vpack.c.b16 %v4321, %v4314
      %v4756 = vpack.c.b16 %v4322, %v4315
      %v4757 = vpack.c.b16 %v4323, %v4316
      %v4758 = vpack.c.b16 %v4324, %v4317
      %v4759 = vpack.c.b16 %v4325, %v4318
      %v4760 = vpack.c.b16 %v4326, %v4319
      %v4761 = vpack.c.b16 %v4334, %v4327
      %v4762 = vpack.c.b16 %v4335, %v4328
      %v4763 = vpack.c.b16 %v4336, %v4329
      %v4764 = vpack.c.b16 %v4337, %v4330
      %v4765 = vpack.c.b16 %v4338, %v4331
      %v4766 = vpack.c.b16 %v4339, %v4332
      %v4767 = vpack.c.b16 %v4340, %v4333
      %v4768 = vpack.c.b16 %v4348, %v4341
      %v4769 = vpack.c.b16 %v4349, %v4342
      %v4770 = vpack.c.b16 %v4350, %v4343
      %v4771 = vpack.c.b16 %v4351, %v4344
      %v4772 = vpack.c.b16 %v4352, %v4345
      %v4773 = vpack.c.b16 %v4353, %v4346
      %v4774 = vpack.c.b16 %v4354, %v4347
      %v4775 = vpack.c.b16 %v4362, %v4355
      %v4776 = vpack.c.b16 %v4363, %v4356
      %v4777 = vpack.c.b16 %v4364, %v4357
      %v4778 = vpack.c.b16 %v4365, %v4358
      %v4779 = vpack.c.b16 %v4366, %v4359
      %v4780 = vpack.c.b16 %v4367, %v4360
      %v4781 = vpack.c.b16 %v4368, %v4361
      %v4782 = vpack.c.b16 %v4376, %v4369
      %v4783 = vpack.c.b16 %v4377, %v4370
      %v4784 = vpack.c.b16 %v4378, %v4371
      %v4785 = vpack.c.b16 %v4379, %v4372
      %v4786 = vpack.c.b16 %v4380, %v4373
      %v4787 = vpack.c.b16 %v4381, %v4374
      %v4788 = vpack.c.b16 %v4382, %v4375
      %v4789 = vpack.c.b16 %v4390, %v4383
      %v4790 = vpack.c.b16 %v4391, %v4384
      %v4791 = vpack.c.b16 %v4392, %v4385
      %v4792 = vpack.c.b16 %v4393, %v4386
      %v4793 = vpack.c.b16 %v4394, %v4387
      %v4794 = vpack.c.b16 %v4395, %v4388
      %v4795 = vpack.c.b16 %v4396, %v4389
      %v4796 = vpack.c.b16 %v4404, %v4397
      %v4797 = vpack.c.b16 %v4405, %v4398
      %v4798 = vpack.c.b16 %v4406, %v4399
      %v4799 = vpack.c.b16 %v4407, %v4400
      %v4800 = vpack.c.b16 %v4408, %v4401
      %v4801 = vpack.c.b16 %v4409, %v4402
      %v4802 = vpack.c.b16 %v4410, %v4403
      %v4803 = vpack.c.b16 %v4418, %v4411
      %v4804 = vpack.c.b16 %v4419, %v4412
      %v4805 = vpack.c.b16 %v4420, %v4413
      %v4806 = vpack.c.b16 %v4421, %v4414
      %v4807 = vpack.c.b16 %v4422, %v4415
      %v4808 = vpack.c.b16 %v4423, %v4416
      %v4809 = vpack.c.b16 %v4424, %v4417
      %v4810 = vpack.c.b16 %v4432, %v4425
      %v4811 = vpack.c.b16 %v4433, %v4426
      %v4812 = vpack.c.b16 %v4434, %v4427
      %v4813 = vpack.c.b16 %v4435, %v4428
      %v4814 = vpack.c.b16 %v4436, %v4429
      %v4815 = vpack.c.b16 %v4437, %v4430
      %v4816 = vpack.c.b16 %v4438, %v4431
      %v4817 = vpack.c.b16 %v4446, %v4439
      %v4818 = vpack.c.b16 %v4447, %v4440
      %v4819 = vpack.c.b16 %v4448, %v4441
      %v4820 = vpack.c.b16 %v4449, %v4442
      %v4821 = vpack.c.b16 %v4450, %v4443
      %v4822 = vpack.c.b16 %v4451, %v4444
      %v4823 = vpack.c.b16 %v4452, %v4445
      %v4824 = vpack.c.b16 %v4460, %v4453
      %v4825 = vpack.c.b16 %v4461, %v4454
      %v4826 = vpack.c.b16 %v4462, %v4455
      %v4827 = vpack.c.b16 %v4463, %v4456
      %v4828 = vpack.c.b16 %v4464, %v4457
      %v4829 = vpack.c.b16 %v4465, %v4458
      %v4830 = vpack.c.b16 %v4466, %v4459
      %v4831 = vpack.c.b16 %v4474, %v4467
      %v4832 = vpack.c.b16 %v4475, %v4468
      %v4833 = vpack.c.b16 %v4476, %v4469
      %v4834 = vpack.c.b16 %v4477, %v4470
      %v4835 = vpack.c.b16 %v4478, %v4471
      %v4836 = vpack.c.b16 %v4479, %v4472
      %v4837 = vpack.c.b16 %v4480, %v4473
      %v4838 = vpack.c.b16 %v4488, %v4481
      %v4839 = vpack.c.b16 %v4489, %v4482
      %v4840 = vpack.c.b16 %v4490, %v4483
      %v4841 = vpack.c.b16 %v4491, %v4484
      %v4842 = vpack.c.b16 %v4492, %v4485
      %v4843 = vpack.c.b16 %v4493, %v4486
      %v4844 = vpack.c.b16 %v4494, %v4487
      %v4845 = vpack.c.b16 %v4502, %v4495
      %v4846 = vpack.c.b16 %v4503, %v4496
      %v4847 = vpack.c.b16 %v4504, %v4497
      %v4848 = vpack.c.b16 %v4505, %v4498
      %v4849 = vpack.c.b16 %v4506, %v4499
      %v4850 = vpack.c.b16 %v4507, %v4500
      %v4851 = vpack.c.b16 %v4508, %v4501
      %v4852 = vpack.c.b16 %v4516, %v4509
      %v4853 = vpack.c.b16 %v4517, %v4510
      %v4854 = vpack.c.b16 %v4518, %v4511
      %v4855 = vpack.c.b16 %v4519, %v4512
      %v4856 = vpack.c.b16 %v4520, %v4513
      %v4857 = vpack.c.b16 %v4521, %v4514
      %v4858 = vpack.c.b16 %v4522, %v4515
      %v4859 = vpack.c.b16 %v4530, %v4523
      %v4860 = vpack.c.b16 %v4531, %v4524
      %v4861 = vpack.c.b16 %v4532, %v4525
      %v4862 = vpack.c.b16 %v4533, %v4526
      %v4863 = vpack.c.b16 %v4534, %v4527
      %v4864 = vpack.c.b16 %v4535, %v4528
      %v4865 = vpack.c.b16 %v4536, %v4529
      %v4866 = vpack.c.b16 %v4544, %v4537
      %v4867 = vpack.c.b16 %v4545, %v4538
      %v4868 = vpack.c.b16 %v4546, %v4539
      %v4869 = vpack.c.b16 %v4547, %v4540
      %v4870 = vpack.c.b16 %v4548, %v4541
      %v4871 = vpack.c.b16 %v4549, %v4542
      %v4872 = vpack.c.b16 %v4550, %v4543
      %v4873 = vpack.c.b16 %v4558, %v4551
      %v4874 = vpack.c.b16 %v4559, %v4552
      %v4875 = vpack.c.b16 %v4560, %v4553
      %v4876 = vpack.c.b16 %v4561, %v4554
      %v4877 = vpack.c.b16 %v4562, %v4555
      %v4878 = vpack.c.b16 %v4563, %v4556
      %v4879 = vpack.c.b16 %v4564, %v4557
      %v4880 = vpack.c.b16 %v4572, %v4565
      %v4881 = vpack.c.b16 %v4573, %v4566
      %v4882 = vpack.c.b16 %v4574, %v4567
      %v4883 = vpack.c.b16 %v4575, %v4568
      %v4884 = vpack.c.b16 %v4576, %v4569
      %v4885 = vpack.c.b16 %v4577, %v4570
      %v4886 = vpack.c.b16 %v4578, %v4571
      %v4887 = vpack.c.b16 %v4586, %v4579
      %v4888 = vpack.c.b16 %v4587, %v4580
      %v4889 = vpack.c.b16 %v4588, %v4581
      %v4890 = vpack.c.b16 %v4589, %v4582
      %v4891 = vpack.c.b16 %v4590, %v4583
      %v4892 = vpack.c.b16 %v4591, %v4584
      %v4893 = vpack.c.b16 %v4592, %v4585
      %v4894 = vpack.c.b16 %v4600, %v4593
      %v4895 = vpack.c.b16 %v4601, %v4594
      %v4896 = vpack.c.b16 %v4602, %v4595
      %v4897 = vpack.c.b16 %v4603, %v4596
      %v4898 = vpack.c.b16 %v4604, %v4597
      %v4899 = vpack.c.b16 %v4605, %v4598
      %v4900 = vpack.c.b16 %v4606, %v4599
      %v4901 = vpack.c.b16 %v4614, %v4607
      %v4902 = vpack.c.b16 %v4615, %v4608
      %v4903 = vpack.c.b16 %v4616, %v4609
      %v4904 = vpack.c.b16 %v4617, %v4610
      %v4905 = vpack.c.b16 %v4618, %v4611
      %v4906 = vpack.c.b16 %v4619, %v4612
      %v4907 = vpack.c.b16 %v4620, %v4613
      %v4908 = vpack.c.b16 %v4628, %v4621
      %v4909 = vpack.c.b16 %v4629, %v4622
      %v4910 = vpack.c.b16 %v4630, %v4623
      %v4911 = vpack.c.b16 %v4631, %v4624
      %v4912 = vpack.c.b16 %v4632, %v4625
      %v4913 = vpack.c.b16 %v4633, %v4626
      %v4914 = vpack.c.b16 %v4634, %v4627
      %v4915 = vpack.c.b16 %v4642, %v4635
      %v4916 = vpack.c.b16 %v4643, %v4636
      %v4917 = vpack.c.b16 %v4644, %v4637
      %v4918 = vpack.c.b16 %v4645, %v4638
      %v4919 = vpack.c.b16 %v4646, %v4639
      %v4920 = vpack.c.b16 %v4647, %v4640
      %v4921 = vpack.c.b16 %v4648, %v4641
      %v4922 = vpack.c.b16 %v4656, %v4649
      %v4923 = vpack.c.b16 %v4657, %v4650
      %v4924 = vpack.c.b16 %v4658, %v4651
      %v4925 = vpack.c.b16 %v4659, %v4652
      %v4926 = vpack.c.b16 %v4660, %v4653
      %v4927 = vpack.c.b16 %v4661, %v4654
      %v4928 = vpack.c.b16 %v4662, %v4655
      %v4929 = vpack.c.b16 %v4670, %v4663
      %v4930 = vpack.c.b16 %v4671, %v4664
      %v4931 = vpack.c.b16 %v4672, %v4665
      %v4932 = vpack.c.b16 %v4673, %v4666
      %v4933 = vpack.c.b16 %v4674, %v4667
      %v4934 = vpack.c.b16 %v4675, %v4668
      %v4935 = vpack.c.b16 %v4676, %v4669
      %v4936 = vpack.c.b16 %v4684, %v4677
      %v4937 = vpack.c.b16 %v4685, %v4678
      %v4938 = vpack.c.b16 %v4686, %v4679
      %v4939 = vpack.c.b16 %v4687, %v4680
      %v4940 = vpack.c.b16 %v4688, %v4681
      %v4941 = vpack.c.b16 %v4689, %v4682
      %v4942 = vpack.c.b16 %v4690, %v4683
      %v4943 = vpack.c.b16 %v4698, %v4691
      %v4944 = vpack.c.b16 %v4699, %v4692
      %v4945 = vpack.c.b16 %v4700, %v4693
      %v4946 = vpack.c.b16 %v4701, %v4694
      %v4947 = vpack.c.b16 %v4702, %v4695
      %v4948 = vpack.c.b16 %v4703, %v4696
      %v4949 = vpack.c.b16 %v4704, %v4697
      %v4950 = vpack.c.b16 %v4712, %v4705
      %v4951 = vpack.c.b16 %v4713, %v4706
      %v4952 = vpack.c.b16 %v4714, %v4707
      %v4953 = vpack.c.b16 %v4715, %v4708
      %v4954 = vpack.c.b16 %v4716, %v4709
      %v4955 = vpack.c.b16 %v4717, %v4710
      %v4956 = vpack.c.b16 %v4718, %v4711
      %v4957 = vpack.c.b16 %v4726, %v4719
      %v4958 = vpack.c.b16 %v4727, %v4720
      %v4959 = vpack.c.b16 %v4728, %v4721
      %v4960 = vpack.c.b16 %v4729, %v4722
      %v4961 = vpack.c.b16 %v4730, %v4723
      %v4962 = vpack.c.b16 %v4731, %v4724
      %v4963 = vpack.c.b16 %v4732, %v4725
      %v4964 = vpack.c.b16 %v4740, %v4733
      %v4965 = vpack.c.b16 %v4741, %v4734
      %v4966 = vpack.c.b16 %v4742, %v4735
      %v4967 = vpack.c.b16 %v4743, %v4736
      %v4968 = vpack.c.b16 %v4744, %v4737
      %v4969 = vpack.c.b16 %v4745, %v4738
      %v4970 = vpack.c.b16 %v4746, %v4739
      %5195 = vmatprep.subr.bf16.mxu0 %v4748
      %5196 = vmatpush1.bf16.msra.mxu0 %v4747
      %5197 = vmatprep.subr.bf16.mxu0 %v4755
      %5198 = vmatpush1.bf16.msra.mxu0 %v4754
      %5199 = vmatprep.subr.bf16.mxu0 %v4762
      %5200 = vmatpush1.bf16.msra.mxu0 %v4761
      %5201 = vmatprep.subr.bf16.mxu0 %v4769
      %5202 = vmatpush1.bf16.msra.mxu0 %v4768
      %5203 = vmatprep.subr.bf16.mxu0 %v4776
      %5204 = vmatpush1.bf16.msra.mxu0 %v4775
      %5205 = vmatprep.subr.bf16.mxu0 %v4783
      %5206 = vmatpush1.bf16.msra.mxu0 %v4782
      %5207 = vmatprep.subr.bf16.mxu0 %v4790
      %5208 = vmatpush1.bf16.msra.mxu0 %v4789
      %5209 = vmatprep.subr.bf16.mxu0 %v4797
      %5210 = vmatpush1.bf16.msra.mxu0 %v4796
      %5211 = vmatprep.subr.bf16.mxu0 %v4804
      %5212 = vmatpush1.bf16.msra.mxu0 %v4803
      %5213 = vmatprep.subr.bf16.mxu0 %v4811
      %5214 = vmatpush1.bf16.msra.mxu0 %v4810
      %5215 = vmatprep.subr.bf16.mxu0 %v4818
      %5216 = vmatpush1.bf16.msra.mxu0 %v4817
      %5217 = vmatprep.subr.bf16.mxu0 %v4825
      %5218 = vmatpush1.bf16.msra.mxu0 %v4824
      %5219 = vmatprep.subr.bf16.mxu0 %v4832
      %5220 = vmatpush1.bf16.msra.mxu0 %v4831
      %5221 = vmatprep.subr.bf16.mxu0 %v4839
      %5222 = vmatpush1.bf16.msra.mxu0 %v4838
      %5223 = vmatprep.subr.bf16.mxu0 %v4846
      %5224 = vmatpush1.bf16.msra.mxu0 %v4845
      %5225 = vmatprep.subr.bf16.mxu0 %v4853
      %5226 = vmatpush1.bf16.msra.mxu0 %v4852
      %5227 = vmatprep.mubr.bf16.mxu0 %v3719
      %5228 = vmatmul.mubr.bf16.gmra.mrb[0].mxu0 %v3718
      %v5229 = vpop.f32.mrb[0].mxu0
      %v5230 = vadd.f32 %v4011, %v5229
      %v5231 = vpop.f32.mrb[0].mxu0
      %v5232 = vadd.f32 %v4015, %v5231
      %v5233 = vpop.f32.mrb[0].mxu0
      %v5234 = vadd.f32 %v4011, %v5233
      %v5235 = vpop.f32.mrb[0].mxu0
      %v5236 = vadd.f32 %v4015, %v5235
      %5237 = vmatprep.mubr.bf16.mxu0 %v3723
      %5238 = vmatmul.mubr.bf16.gmra.mrb[0].mxu0 %v3722
      %v5239 = vpop.f32.mrb[0].mxu0
      %v5240 = vadd.f32 %v4011, %v5239
      %v5241 = vpop.f32.mrb[0].mxu0
      %v5242 = vadd.f32 %v4015, %v5241
      %v5243 = vpop.f32.mrb[0].mxu0
      %v5244 = vadd.f32 %v4011, %v5243
      %v5245 = vpop.f32.mrb[0].mxu0
      %v5246 = vadd.f32 %v4015, %v5245
      %5247 = vmatprep.mubr.bf16.mxu0 %v3727
      %5248 = vmatmul.mubr.bf16.gmra.mrb[0].mxu0 %v3726
      %v5249 = vpop.f32.mrb[0].mxu0
      %v5250 = vadd.f32 %v4011, %v5249
      %v5251 = vpop.f32.mrb[0].mxu0
      %v5252 = vadd.f32 %v4015, %v5251
      %v5253 = vpop.f32.mrb[0].mxu0
      %v5254 = vadd.f32 %v4011, %v5253
      %v5255 = vpop.f32.mrb[0].mxu0
      %v5256 = vadd.f32 %v4015, %v5255
      %5257 = vmatprep.mubr.bf16.mxu0 %v3731
      %5258 = vmatmul.mubr.bf16.gmra.mrb[0].mxu0 %v3730
      %v5259 = vpop.f32.mrb[0].mxu0
      %v5260 = vadd.f32 %v4011, %v5259
      %v5261 = vpop.f32.mrb[0].mxu0
      %v5262 = vadd.f32 %v4015, %v5261
      %v5263 = vpop.f32.mrb[0].mxu0
      %v5264 = vadd.f32 %v4011, %v5263
      %v5265 = vpop.f32.mrb[0].mxu0
      %v5266 = vadd.f32 %v4015, %v5265
      %5267 = vmatprep.mubr.bf16.mxu0 %v3735
      %5268 = vmatmul.mubr.bf16.gmra.mrb[0].mxu0 %v3734
      %v5269 = vpop.f32.mrb[0].mxu0
      %v5270 = vadd.f32 %v4011, %v5269
      %v5271 = vpop.f32.mrb[0].mxu0
      %v5272 = vadd.f32 %v4015, %v5271
      %v5273 = vpop.f32.mrb[0].mxu0
      %v5274 = vadd.f32 %v4011, %v5273
      %v5275 = vpop.f32.mrb[0].mxu0
      %v5276 = vadd.f32 %v4015, %v5275
      %5277 = vmatprep.mubr.bf16.mxu0 %v3739
      %5278 = vmatmul.mubr.bf16.gmra.mrb[0].mxu0 %v3738
      %v5279 = vpop.f32.mrb[0].mxu0
      %v5280 = vadd.f32 %v4011, %v5279
      %v5281 = vpop.f32.mrb[0].mxu0
      %v5282 = vadd.f32 %v4015, %v5281
      %v5283 = vpop.f32.mrb[0].mxu0
      %v5284 = vadd.f32 %v4011, %v5283
      %v5285 = vpop.f32.mrb[0].mxu0
      %v5286 = vadd.f32 %v4015, %v5285
      %5287 = vmatprep.mubr.bf16.mxu0 %v3743
      %5288 = vmatmul.mubr.bf16.gmra.mrb[0].mxu0 %v3742
      %v5289 = vpop.f32.mrb[0].mxu0
      %v5290 = vadd.f32 %v4011, %v5289
      %v5291 = vpop.f32.mrb[0].mxu0
      %v5292 = vadd.f32 %v4015, %v5291
      %v5293 = vpop.f32.mrb[0].mxu0
      %v5294 = vadd.f32 %v4011, %v5293
      %v5295 = vpop.f32.mrb[0].mxu0
      %v5296 = vadd.f32 %v4015, %v5295
      %5297 = vmatprep.mubr.bf16.mxu0 %v3747
      %5298 = vmatmul.mubr.bf16.gmra.mrb[0].mxu0 %v3746
      %v5299 = vpop.f32.mrb[0].mxu0
      %v5300 = vadd.f32 %v4011, %v5299
      %v5301 = vpop.f32.mrb[0].mxu0
      %v5302 = vadd.f32 %v4015, %v5301
      %v5303 = vpop.f32.mrb[0].mxu0
      %v5304 = vadd.f32 %v4011, %v5303
      %v5305 = vpop.f32.mrb[0].mxu0
      %v5306 = vadd.f32 %v4015, %v5305
      %5307 = vdwg.mxu0
      %5308 = vmatprep.subr.bf16.mxu0 %v4860
      %5309 = vmatpush1.bf16.msra.mxu0 %v4859
      %5310 = vmatprep.subr.bf16.mxu0 %v4867
      %5311 = vmatpush1.bf16.msra.mxu0 %v4866
      %5312 = vmatprep.subr.bf16.mxu0 %v4874
      %5313 = vmatpush1.bf16.msra.mxu0 %v4873
      %5314 = vmatprep.subr.bf16.mxu0 %v4881
      %5315 = vmatpush1.bf16.msra.mxu0 %v4880
      %5316 = vmatprep.subr.bf16.mxu0 %v4888
      %5317 = vmatpush1.bf16.msra.mxu0 %v4887
      %5318 = vmatprep.subr.bf16.mxu0 %v4895
      %5319 = vmatpush1.bf16.msra.mxu0 %v4894
      %5320 = vmatprep.subr.bf16.mxu0 %v4902
      %5321 = vmatpush1.bf16.msra.mxu0 %v4901
      %5322 = vmatprep.subr.bf16.mxu0 %v4909
      %5323 = vmatpush1.bf16.msra.mxu0 %v4908
      %5324 = vmatprep.subr.bf16.mxu0 %v4916
      %5325 = vmatpush1.bf16.msra.mxu0 %v4915
      %5326 = vmatprep.subr.bf16.mxu0 %v4923
      %5327 = vmatpush1.bf16.msra.mxu0 %v4922
      %5328 = vmatprep.subr.bf16.mxu0 %v4930
      %5329 = vmatpush1.bf16.msra.mxu0 %v4929
      %5330 = vmatprep.subr.bf16.mxu0 %v4937
      %5331 = vmatpush1.bf16.msra.mxu0 %v4936
      %5332 = vmatprep.subr.bf16.mxu0 %v4944
      %5333 = vmatpush1.bf16.msra.mxu0 %v4943
      %5334 = vmatprep.subr.bf16.mxu0 %v4951
      %5335 = vmatpush1.bf16.msra.mxu0 %v4950
      %5336 = vmatprep.subr.bf16.mxu0 %v4958
      %5337 = vmatpush1.bf16.msra.mxu0 %v4957
      %5338 = vmatprep.subr.bf16.mxu0 %v4965
      %5339 = vmatpush1.bf16.msra.mxu0 %v4964
      %5340 = vmatprep.mubr.bf16.mxu0 %v3721
      %5341 = vmatmul.mubr.bf16.gmra.mrb[0].mxu0 %v3720
      %v5342 = vpop.f32.mrb[0].mxu0
      %v5343 = vadd.f32 %v5230, %v5342
      %v5344 = vpop.f32.mrb[0].mxu0
      %v5345 = vadd.f32 %v5232, %v5344
      %v5346 = vpop.f32.mrb[0].mxu0
      %v5347 = vadd.f32 %v5234, %v5346
      %v5348 = vpop.f32.mrb[0].mxu0
      %v5349 = vadd.f32 %v5236, %v5348
      %5350 = vmatprep.mubr.bf16.mxu0 %v3725
      %5351 = vmatmul.mubr.bf16.gmra.mrb[0].mxu0 %v3724
      %v5352 = vpop.f32.mrb[0].mxu0
      %v5353 = vadd.f32 %v5240, %v5352
      %v5354 = vpop.f32.mrb[0].mxu0
      %v5355 = vadd.f32 %v5242, %v5354
      %v5356 = vpop.f32.mrb[0].mxu0
      %v5357 = vadd.f32 %v5244, %v5356
      %v5358 = vpop.f32.mrb[0].mxu0
      %v5359 = vadd.f32 %v5246, %v5358
      %5360 = vmatprep.mubr.bf16.mxu0 %v3729
      %5361 = vmatmul.mubr.bf16.gmra.mrb[0].mxu0 %v3728
      %v5362 = vpop.f32.mrb[0].mxu0
      %v5363 = vadd.f32 %v5250, %v5362
      %v5364 = vpop.f32.mrb[0].mxu0
      %v5365 = vadd.f32 %v5252, %v5364
      %v5366 = vpop.f32.mrb[0].mxu0
      %v5367 = vadd.f32 %v5254, %v5366
      %v5368 = vpop.f32.mrb[0].mxu0
      %v5369 = vadd.f32 %v5256, %v5368
      %5370 = vmatprep.mubr.bf16.mxu0 %v3733
      %5371 = vmatmul.mubr.bf16.gmra.mrb[0].mxu0 %v3732
      %v5372 = vpop.f32.mrb[0].mxu0
      %v5373 = vadd.f32 %v5260, %v5372
      %v5374 = vpop.f32.mrb[0].mxu0
      %v5375 = vadd.f32 %v5262, %v5374
      %v5376 = vpop.f32.mrb[0].mxu0
      %v5377 = vadd.f32 %v5264, %v5376
      %v5378 = vpop.f32.mrb[0].mxu0
      %v5379 = vadd.f32 %v5266, %v5378
      %5380 = vmatprep.mubr.bf16.mxu0 %v3737
      %5381 = vmatmul.mubr.bf16.gmra.mrb[0].mxu0 %v3736
      %v5382 = vpop.f32.mrb[0].mxu0
      %v5383 = vadd.f32 %v5270, %v5382
      %v5384 = vpop.f32.mrb[0].mxu0
      %v5385 = vadd.f32 %v5272, %v5384
      %v5386 = vpop.f32.mrb[0].mxu0
      %v5387 = vadd.f32 %v5274, %v5386
      %v5388 = vpop.f32.mrb[0].mxu0
      %v5389 = vadd.f32 %v5276, %v5388
      %5390 = vmatprep.mubr.bf16.mxu0 %v3741
      %5391 = vmatmul.mubr.bf16.gmra.mrb[0].mxu0 %v3740
      %v5392 = vpop.f32.mrb[0].mxu0
      %v5393 = vadd.f32 %v5280, %v5392
      %v5394 = vpop.f32.mrb[0].mxu0
      %v5395 = vadd.f32 %v5282, %v5394
      %v5396 = vpop.f32.mrb[0].mxu0
      %v5397 = vadd.f32 %v5284, %v5396
      %v5398 = vpop.f32.mrb[0].mxu0
      %v5399 = vadd.f32 %v5286, %v5398
      %5400 = vmatprep.mubr.bf16.mxu0 %v3745
      %5401 = vmatmul.mubr.bf16.gmra.mrb[0].mxu0 %v3744
      %v5402 = vpop.f32.mrb[0].mxu0
      %v5403 = vadd.f32 %v5290, %v5402
      %v5404 = vpop.f32.mrb[0].mxu0
      %v5405 = vadd.f32 %v5292, %v5404
      %v5406 = vpop.f32.mrb[0].mxu0
      %v5407 = vadd.f32 %v5294, %v5406
      %v5408 = vpop.f32.mrb[0].mxu0
      %v5409 = vadd.f32 %v5296, %v5408
      %5410 = vmatprep.mubr.bf16.mxu0 %v3749
      %5411 = vmatmul.mubr.bf16.gmra.mrb[0].mxu0 %v3748
      %v5412 = vpop.f32.mrb[0].mxu0
      %v5413 = vadd.f32 %v5300, %v5412
      %v5414 = vpop.f32.mrb[0].mxu0
      %v5415 = vadd.f32 %v5302, %v5414
      %v5416 = vpop.f32.mrb[0].mxu0
      %v5417 = vadd.f32 %v5304, %v5416
      %v5418 = vpop.f32.mrb[0].mxu0
      %v5419 = vadd.f32 %v5306, %v5418
      %5420 = vdwg.mxu0
      %5421 = vmatprep.subr.bf16.mxu0 %v4750
      %5422 = vmatpush1.bf16.msra.mxu0 %v4749
      %5423 = vmatprep.subr.bf16.mxu0 %v4757
      %5424 = vmatpush1.bf16.msra.mxu0 %v4756
      %5425 = vmatprep.subr.bf16.mxu0 %v4764
      %5426 = vmatpush1.bf16.msra.mxu0 %v4763
      %5427 = vmatprep.subr.bf16.mxu0 %v4771
      %5428 = vmatpush1.bf16.msra.mxu0 %v4770
      %5429 = vmatprep.subr.bf16.mxu0 %v4778
      %5430 = vmatpush1.bf16.msra.mxu0 %v4777
      %5431 = vmatprep.subr.bf16.mxu0 %v4785
      %5432 = vmatpush1.bf16.msra.mxu0 %v4784
      %5433 = vmatprep.subr.bf16.mxu0 %v4792
      %5434 = vmatpush1.bf16.msra.mxu0 %v4791
      %5435 = vmatprep.subr.bf16.mxu0 %v4799
      %5436 = vmatpush1.bf16.msra.mxu0 %v4798
      %5437 = vmatprep.subr.bf16.mxu0 %v4806
      %5438 = vmatpush1.bf16.msra.mxu0 %v4805
      %5439 = vmatprep.subr.bf16.mxu0 %v4813
      %5440 = vmatpush1.bf16.msra.mxu0 %v4812
      %5441 = vmatprep.subr.bf16.mxu0 %v4820
      %5442 = vmatpush1.bf16.msra.mxu0 %v4819
      %5443 = vmatprep.subr.bf16.mxu0 %v4827
      %5444 = vmatpush1.bf16.msra.mxu0 %v4826
      %5445 = vmatprep.subr.bf16.mxu0 %v4834
      %5446 = vmatpush1.bf16.msra.mxu0 %v4833
      %5447 = vmatprep.subr.bf16.mxu0 %v4841
      %5448 = vmatpush1.bf16.msra.mxu0 %v4840
      %5449 = vmatprep.subr.bf16.mxu0 %v4848
      %5450 = vmatpush1.bf16.msra.mxu0 %v4847
      %5451 = vmatprep.subr.bf16.mxu0 %v4855
      %5452 = vmatpush1.bf16.msra.mxu0 %v4854
      %5453 = vmatprep.mubr.bf16.mxu0 %v3719
      %5454 = vmatmul.mubr.bf16.gmra.mrb[0].mxu0 %v3718
      %v5455 = vpop.f32.mrb[0].mxu0
      %v5456 = vadd.f32 %v4019, %v5455
      %v5457 = vpop.f32.mrb[0].mxu0
      %v5458 = vadd.f32 %v4023, %v5457
      %v5459 = vpop.f32.mrb[0].mxu0
      %v5460 = vadd.f32 %v4019, %v5459
      %v5461 = vpop.f32.mrb[0].mxu0
      %v5462 = vadd.f32 %v4023, %v5461
      %5463 = vmatprep.mubr.bf16.mxu0 %v3723
      %5464 = vmatmul.mubr.bf16.gmra.mrb[0].mxu0 %v3722
      %v5465 = vpop.f32.mrb[0].mxu0
      %v5466 = vadd.f32 %v4019, %v5465
      %v5467 = vpop.f32.mrb[0].mxu0
      %v5468 = vadd.f32 %v4023, %v5467
      %v5469 = vpop.f32.mrb[0].mxu0
      %v5470 = vadd.f32 %v4019, %v5469
      %v5471 = vpop.f32.mrb[0].mxu0
      %v5472 = vadd.f32 %v4023, %v5471
      %5473 = vmatprep.mubr.bf16.mxu0 %v3727
      %5474 = vmatmul.mubr.bf16.gmra.mrb[0].mxu0 %v3726
      %v5475 = vpop.f32.mrb[0].mxu0
      %v5476 = vadd.f32 %v4019, %v5475
      %v5477 = vpop.f32.mrb[0].mxu0
      %v5478 = vadd.f32 %v4023, %v5477
      %v5479 = vpop.f32.mrb[0].mxu0
      %v5480 = vadd.f32 %v4019, %v5479
      %v5481 = vpop.f32.mrb[0].mxu0
      %v5482 = vadd.f32 %v4023, %v5481
      %5483 = vmatprep.mubr.bf16.mxu0 %v3731
      %5484 = vmatmul.mubr.bf16.gmra.mrb[0].mxu0 %v3730
      %v5485 = vpop.f32.mrb[0].mxu0
      %v5486 = vadd.f32 %v4019, %v5485
      %v5487 = vpop.f32.mrb[0].mxu0
      %v5488 = vadd.f32 %v4023, %v5487
      %v5489 = vpop.f32.mrb[0].mxu0
      %v5490 = vadd.f32 %v4019, %v5489
      %v5491 = vpop.f32.mrb[0].mxu0
      %v5492 = vadd.f32 %v4023, %v5491
      %5493 = vmatprep.mubr.bf16.mxu0 %v3735
      %5494 = vmatmul.mubr.bf16.gmra.mrb[0].mxu0 %v3734
      %v5495 = vpop.f32.mrb[0].mxu0
      %v5496 = vadd.f32 %v4019, %v5495
      %v5497 = vpop.f32.mrb[0].mxu0
      %v5498 = vadd.f32 %v4023, %v5497
      %v5499 = vpop.f32.mrb[0].mxu0
      %v5500 = vadd.f32 %v4019, %v5499
      %v5501 = vpop.f32.mrb[0].mxu0
      %v5502 = vadd.f32 %v4023, %v5501
      %5503 = vmatprep.mubr.bf16.mxu0 %v3739
      %5504 = vmatmul.mubr.bf16.gmra.mrb[0].mxu0 %v3738
      %v5505 = vpop.f32.mrb[0].mxu0
      %v5506 = vadd.f32 %v4019, %v5505
      %v5507 = vpop.f32.mrb[0].mxu0
      %v5508 = vadd.f32 %v4023, %v5507
      %v5509 = vpop.f32.mrb[0].mxu0
      %v5510 = vadd.f32 %v4019, %v5509
      %v5511 = vpop.f32.mrb[0].mxu0
      %v5512 = vadd.f32 %v4023, %v5511
      %5513 = vmatprep.mubr.bf16.mxu0 %v3743
      %5514 = vmatmul.mubr.bf16.gmra.mrb[0].mxu0 %v3742
      %v5515 = vpop.f32.mrb[0].mxu0
      %v5516 = vadd.f32 %v4019, %v5515
      %v5517 = vpop.f32.mrb[0].mxu0
      %v5518 = vadd.f32 %v4023, %v5517
      %v5519 = vpop.f32.mrb[0].mxu0
      %v5520 = vadd.f32 %v4019, %v5519
      %v5521 = vpop.f32.mrb[0].mxu0
      %v5522 = vadd.f32 %v4023, %v5521
      %5523 = vmatprep.mubr.bf16.mxu0 %v3747
      %5524 = vmatmul.mubr.bf16.gmra.mrb[0].mxu0 %v3746
      %v5525 = vpop.f32.mrb[0].mxu0
      %v5526 = vadd.f32 %v4019, %v5525
      %v5527 = vpop.f32.mrb[0].mxu0
      %v5528 = vadd.f32 %v4023, %v5527
      %v5529 = vpop.f32.mrb[0].mxu0
      %v5530 = vadd.f32 %v4019, %v5529
      %v5531 = vpop.f32.mrb[0].mxu0
      %v5532 = vadd.f32 %v4023, %v5531
      %5533 = vdwg.mxu0
      %5534 = vmatprep.subr.bf16.mxu0 %v4862
      %5535 = vmatpush1.bf16.msra.mxu0 %v4861
      %5536 = vmatprep.subr.bf16.mxu0 %v4869
      %5537 = vmatpush1.bf16.msra.mxu0 %v4868
      %5538 = vmatprep.subr.bf16.mxu0 %v4876
      %5539 = vmatpush1.bf16.msra.mxu0 %v4875
      %5540 = vmatprep.subr.bf16.mxu0 %v4883
      %5541 = vmatpush1.bf16.msra.mxu0 %v4882
      %5542 = vmatprep.subr.bf16.mxu0 %v4890
      %5543 = vmatpush1.bf16.msra.mxu0 %v4889
      %5544 = vmatprep.subr.bf16.mxu0 %v4897
      %5545 = vmatpush1.bf16.msra.mxu0 %v4896
      %5546 = vmatprep.subr.bf16.mxu0 %v4904
      %5547 = vmatpush1.bf16.msra.mxu0 %v4903
      %5548 = vmatprep.subr.bf16.mxu0 %v4911
      %5549 = vmatpush1.bf16.msra.mxu0 %v4910
      %5550 = vmatprep.subr.bf16.mxu0 %v4918
      %5551 = vmatpush1.bf16.msra.mxu0 %v4917
      %5552 = vmatprep.subr.bf16.mxu0 %v4925
      %5553 = vmatpush1.bf16.msra.mxu0 %v4924
      %5554 = vmatprep.subr.bf16.mxu0 %v4932
      %5555 = vmatpush1.bf16.msra.mxu0 %v4931
      %5556 = vmatprep.subr.bf16.mxu0 %v4939
      %5557 = vmatpush1.bf16.msra.mxu0 %v4938
      %5558 = vmatprep.subr.bf16.mxu0 %v4946
      %5559 = vmatpush1.bf16.msra.mxu0 %v4945
      %5560 = vmatprep.subr.bf16.mxu0 %v4953
      %5561 = vmatpush1.bf16.msra.mxu0 %v4952
      %5562 = vmatprep.subr.bf16.mxu0 %v4960
      %5563 = vmatpush1.bf16.msra.mxu0 %v4959
      %5564 = vmatprep.subr.bf16.mxu0 %v4967
      %5565 = vmatpush1.bf16.msra.mxu0 %v4966
      %5566 = vmatprep.mubr.bf16.mxu0 %v3721
      %5567 = vmatmul.mubr.bf16.gmra.mrb[0].mxu0 %v3720
      %v5568 = vpop.f32.mrb[0].mxu0
      %v5569 = vadd.f32 %v5456, %v5568
      %v5570 = vpop.f32.mrb[0].mxu0
      %v5571 = vadd.f32 %v5458, %v5570
      %v5572 = vpop.f32.mrb[0].mxu0
      %v5573 = vadd.f32 %v5460, %v5572
      %v5574 = vpop.f32.mrb[0].mxu0
      %v5575 = vadd.f32 %v5462, %v5574
      %5576 = vmatprep.mubr.bf16.mxu0 %v3725
      %5577 = vmatmul.mubr.bf16.gmra.mrb[0].mxu0 %v3724
      %v5578 = vpop.f32.mrb[0].mxu0
      %v5579 = vadd.f32 %v5466, %v5578
      %v5580 = vpop.f32.mrb[0].mxu0
      %v5581 = vadd.f32 %v5468, %v5580
      %v5582 = vpop.f32.mrb[0].mxu0
      %v5583 = vadd.f32 %v5470, %v5582
      %v5584 = vpop.f32.mrb[0].mxu0
      %v5585 = vadd.f32 %v5472, %v5584
      %5586 = vmatprep.mubr.bf16.mxu0 %v3729
      %5587 = vmatmul.mubr.bf16.gmra.mrb[0].mxu0 %v3728
      %v5588 = vpop.f32.mrb[0].mxu0
      %v5589 = vadd.f32 %v5476, %v5588
      %v5590 = vpop.f32.mrb[0].mxu0
      %v5591 = vadd.f32 %v5478, %v5590
      %v5592 = vpop.f32.mrb[0].mxu0
      %v5593 = vadd.f32 %v5480, %v5592
      %v5594 = vpop.f32.mrb[0].mxu0
      %v5595 = vadd.f32 %v5482, %v5594
      %5596 = vmatprep.mubr.bf16.mxu0 %v3733
      %5597 = vmatmul.mubr.bf16.gmra.mrb[0].mxu0 %v3732
      %v5598 = vpop.f32.mrb[0].mxu0
      %v5599 = vadd.f32 %v5486, %v5598
      %v5600 = vpop.f32.mrb[0].mxu0
      %v5601 = vadd.f32 %v5488, %v5600
      %v5602 = vpop.f32.mrb[0].mxu0
      %v5603 = vadd.f32 %v5490, %v5602
      %v5604 = vpop.f32.mrb[0].mxu0
      %v5605 = vadd.f32 %v5492, %v5604
      %5606 = vmatprep.mubr.bf16.mxu0 %v3737
      %5607 = vmatmul.mubr.bf16.gmra.mrb[0].mxu0 %v3736
      %v5608 = vpop.f32.mrb[0].mxu0
      %v5609 = vadd.f32 %v5496, %v5608
      %v5610 = vpop.f32.mrb[0].mxu0
      %v5611 = vadd.f32 %v5498, %v5610
      %v5612 = vpop.f32.mrb[0].mxu0
      %v5613 = vadd.f32 %v5500, %v5612
      %v5614 = vpop.f32.mrb[0].mxu0
      %v5615 = vadd.f32 %v5502, %v5614
      %5616 = vmatprep.mubr.bf16.mxu0 %v3741
      %5617 = vmatmul.mubr.bf16.gmra.mrb[0].mxu0 %v3740
      %v5618 = vpop.f32.mrb[0].mxu0
      %v5619 = vadd.f32 %v5506, %v5618
      %v5620 = vpop.f32.mrb[0].mxu0
      %v5621 = vadd.f32 %v5508, %v5620
      %v5622 = vpop.f32.mrb[0].mxu0
      %v5623 = vadd.f32 %v5510, %v5622
      %v5624 = vpop.f32.mrb[0].mxu0
      %v5625 = vadd.f32 %v5512, %v5624
      %5626 = vmatprep.mubr.bf16.mxu0 %v3745
      %5627 = vmatmul.mubr.bf16.gmra.mrb[0].mxu0 %v3744
      %v5628 = vpop.f32.mrb[0].mxu0
      %v5629 = vadd.f32 %v5516, %v5628
      %v5630 = vpop.f32.mrb[0].mxu0
      %v5631 = vadd.f32 %v5518, %v5630
      %v5632 = vpop.f32.mrb[0].mxu0
      %v5633 = vadd.f32 %v5520, %v5632
      %v5634 = vpop.f32.mrb[0].mxu0
      %v5635 = vadd.f32 %v5522, %v5634
      %5636 = vmatprep.mubr.bf16.mxu0 %v3749
      %5637 = vmatmul.mubr.bf16.gmra.mrb[0].mxu0 %v3748
      %v5638 = vpop.f32.mrb[0].mxu0
      %v5639 = vadd.f32 %v5526, %v5638
      %v5640 = vpop.f32.mrb[0].mxu0
      %v5641 = vadd.f32 %v5528, %v5640
      %v5642 = vpop.f32.mrb[0].mxu0
      %v5643 = vadd.f32 %v5530, %v5642
      %v5644 = vpop.f32.mrb[0].mxu0
      %v5645 = vadd.f32 %v5532, %v5644
      %5646 = vdwg.mxu0
      %5647 = vmatprep.subr.bf16.mxu0 %v4752
      %5648 = vmatpush1.bf16.msra.mxu0 %v4751
      %5649 = vmatprep.subr.bf16.mxu0 %v4759
      %5650 = vmatpush1.bf16.msra.mxu0 %v4758
      %5651 = vmatprep.subr.bf16.mxu0 %v4766
      %5652 = vmatpush1.bf16.msra.mxu0 %v4765
      %5653 = vmatprep.subr.bf16.mxu0 %v4773
      %5654 = vmatpush1.bf16.msra.mxu0 %v4772
      %5655 = vmatprep.subr.bf16.mxu0 %v4780
      %5656 = vmatpush1.bf16.msra.mxu0 %v4779
      %5657 = vmatprep.subr.bf16.mxu0 %v4787
      %5658 = vmatpush1.bf16.msra.mxu0 %v4786
      %5659 = vmatprep.subr.bf16.mxu0 %v4794
      %5660 = vmatpush1.bf16.msra.mxu0 %v4793
      %5661 = vmatprep.subr.bf16.mxu0 %v4801
      %5662 = vmatpush1.bf16.msra.mxu0 %v4800
      %5663 = vmatprep.subr.bf16.mxu0 %v4808
      %5664 = vmatpush1.bf16.msra.mxu0 %v4807
      %5665 = vmatprep.subr.bf16.mxu0 %v4815
      %5666 = vmatpush1.bf16.msra.mxu0 %v4814
      %5667 = vmatprep.subr.bf16.mxu0 %v4822
      %5668 = vmatpush1.bf16.msra.mxu0 %v4821
      %5669 = vmatprep.subr.bf16.mxu0 %v4829
      %5670 = vmatpush1.bf16.msra.mxu0 %v4828
      %5671 = vmatprep.subr.bf16.mxu0 %v4836
      %5672 = vmatpush1.bf16.msra.mxu0 %v4835
      %5673 = vmatprep.subr.bf16.mxu0 %v4843
      %5674 = vmatpush1.bf16.msra.mxu0 %v4842
      %5675 = vmatprep.subr.bf16.mxu0 %v4850
      %5676 = vmatpush1.bf16.msra.mxu0 %v4849
      %5677 = vmatprep.subr.bf16.mxu0 %v4857
      %5678 = vmatpush1.bf16.msra.mxu0 %v4856
      %5679 = vmatprep.mubr.bf16.mxu0 %v3719
      %5680 = vmatmul.mubr.bf16.gmra.mrb[0].mxu0 %v3718
      %v5681 = vpop.f32.mrb[0].mxu0
      %v5682 = vadd.f32 %v4027, %v5681
      %v5683 = vpop.f32.mrb[0].mxu0
      %v5684 = vadd.f32 %v4031, %v5683
      %v5685 = vpop.f32.mrb[0].mxu0
      %v5686 = vadd.f32 %v4027, %v5685
      %v5687 = vpop.f32.mrb[0].mxu0
      %v5688 = vadd.f32 %v4031, %v5687
      %5689 = vmatprep.mubr.bf16.mxu0 %v3723
      %5690 = vmatmul.mubr.bf16.gmra.mrb[0].mxu0 %v3722
      %v5691 = vpop.f32.mrb[0].mxu0
      %v5692 = vadd.f32 %v4027, %v5691
      %v5693 = vpop.f32.mrb[0].mxu0
      %v5694 = vadd.f32 %v4031, %v5693
      %v5695 = vpop.f32.mrb[0].mxu0
      %v5696 = vadd.f32 %v4027, %v5695
      %v5697 = vpop.f32.mrb[0].mxu0
      %v5698 = vadd.f32 %v4031, %v5697
      %5699 = vmatprep.mubr.bf16.mxu0 %v3727
      %5700 = vmatmul.mubr.bf16.gmra.mrb[0].mxu0 %v3726
      %v5701 = vpop.f32.mrb[0].mxu0
      %v5702 = vadd.f32 %v4027, %v5701
      %v5703 = vpop.f32.mrb[0].mxu0
      %v5704 = vadd.f32 %v4031, %v5703
      %v5705 = vpop.f32.mrb[0].mxu0
      %v5706 = vadd.f32 %v4027, %v5705
      %v5707 = vpop.f32.mrb[0].mxu0
      %v5708 = vadd.f32 %v4031, %v5707
      %5709 = vmatprep.mubr.bf16.mxu0 %v3731
      %5710 = vmatmul.mubr.bf16.gmra.mrb[0].mxu0 %v3730
      %v5711 = vpop.f32.mrb[0].mxu0
      %v5712 = vadd.f32 %v4027, %v5711
      %v5713 = vpop.f32.mrb[0].mxu0
      %v5714 = vadd.f32 %v4031, %v5713
      %v5715 = vpop.f32.mrb[0].mxu0
      %v5716 = vadd.f32 %v4027, %v5715
      %v5717 = vpop.f32.mrb[0].mxu0
      %v5718 = vadd.f32 %v4031, %v5717
      %5719 = vmatprep.mubr.bf16.mxu0 %v3735
      %5720 = vmatmul.mubr.bf16.gmra.mrb[0].mxu0 %v3734
      %v5721 = vpop.f32.mrb[0].mxu0
      %v5722 = vadd.f32 %v4027, %v5721
      %v5723 = vpop.f32.mrb[0].mxu0
      %v5724 = vadd.f32 %v4031, %v5723
      %v5725 = vpop.f32.mrb[0].mxu0
      %v5726 = vadd.f32 %v4027, %v5725
      %v5727 = vpop.f32.mrb[0].mxu0
      %v5728 = vadd.f32 %v4031, %v5727
      %5729 = vmatprep.mubr.bf16.mxu0 %v3739
      %5730 = vmatmul.mubr.bf16.gmra.mrb[0].mxu0 %v3738
      %v5731 = vpop.f32.mrb[0].mxu0
      %v5732 = vadd.f32 %v4027, %v5731
      %v5733 = vpop.f32.mrb[0].mxu0
      %v5734 = vadd.f32 %v4031, %v5733
      %v5735 = vpop.f32.mrb[0].mxu0
      %v5736 = vadd.f32 %v4027, %v5735
      %v5737 = vpop.f32.mrb[0].mxu0
      %v5738 = vadd.f32 %v4031, %v5737
      %5739 = vmatprep.mubr.bf16.mxu0 %v3743
      %5740 = vmatmul.mubr.bf16.gmra.mrb[0].mxu0 %v3742
      %v5741 = vpop.f32.mrb[0].mxu0
      %v5742 = vadd.f32 %v4027, %v5741
      %v5743 = vpop.f32.mrb[0].mxu0
      %v5744 = vadd.f32 %v4031, %v5743
      %v5745 = vpop.f32.mrb[0].mxu0
      %v5746 = vadd.f32 %v4027, %v5745
      %v5747 = vpop.f32.mrb[0].mxu0
      %v5748 = vadd.f32 %v4031, %v5747
      %5749 = vmatprep.mubr.bf16.mxu0 %v3747
      %5750 = vmatmul.mubr.bf16.gmra.mrb[0].mxu0 %v3746
      %v5751 = vpop.f32.mrb[0].mxu0
      %v5752 = vadd.f32 %v4027, %v5751
      %v5753 = vpop.f32.mrb[0].mxu0
      %v5754 = vadd.f32 %v4031, %v5753
      %v5755 = vpop.f32.mrb[0].mxu0
      %v5756 = vadd.f32 %v4027, %v5755
      %v5757 = vpop.f32.mrb[0].mxu0
      %v5758 = vadd.f32 %v4031, %v5757
      %5759 = vdwg.mxu0
      %5760 = vmatprep.subr.bf16.mxu0 %v4864
      %5761 = vmatpush1.bf16.msra.mxu0 %v4863
      %5762 = vmatprep.subr.bf16.mxu0 %v4871
      %5763 = vmatpush1.bf16.msra.mxu0 %v4870
      %5764 = vmatprep.subr.bf16.mxu0 %v4878
      %5765 = vmatpush1.bf16.msra.mxu0 %v4877
      %5766 = vmatprep.subr.bf16.mxu0 %v4885
      %5767 = vmatpush1.bf16.msra.mxu0 %v4884
      %5768 = vmatprep.subr.bf16.mxu0 %v4892
      %5769 = vmatpush1.bf16.msra.mxu0 %v4891
      %5770 = vmatprep.subr.bf16.mxu0 %v4899
      %5771 = vmatpush1.bf16.msra.mxu0 %v4898
      %5772 = vmatprep.subr.bf16.mxu0 %v4906
      %5773 = vmatpush1.bf16.msra.mxu0 %v4905
      %5774 = vmatprep.subr.bf16.mxu0 %v4913
      %5775 = vmatpush1.bf16.msra.mxu0 %v4912
      %5776 = vmatprep.subr.bf16.mxu0 %v4920
      %5777 = vmatpush1.bf16.msra.mxu0 %v4919
      %5778 = vmatprep.subr.bf16.mxu0 %v4927
      %5779 = vmatpush1.bf16.msra.mxu0 %v4926
      %5780 = vmatprep.subr.bf16.mxu0 %v4934
      %5781 = vmatpush1.bf16.msra.mxu0 %v4933
      %5782 = vmatprep.subr.bf16.mxu0 %v4941
      %5783 = vmatpush1.bf16.msra.mxu0 %v4940
      %5784 = vmatprep.subr.bf16.mxu0 %v4948
      %5785 = vmatpush1.bf16.msra.mxu0 %v4947
      %5786 = vmatprep.subr.bf16.mxu0 %v4955
      %5787 = vmatpush1.bf16.msra.mxu0 %v4954
      %5788 = vmatprep.subr.bf16.mxu0 %v4962
      %5789 = vmatpush1.bf16.msra.mxu0 %v4961
      %5790 = vmatprep.subr.bf16.mxu0 %v4969
      %5791 = vmatpush1.bf16.msra.mxu0 %v4968
      %5792 = vmatprep.mubr.bf16.mxu0 %v3721
      %5793 = vmatmul.mubr.bf16.gmra.mrb[0].mxu0 %v3720
      %v5794 = vpop.f32.mrb[0].mxu0
      %v5795 = vadd.f32 %v5682, %v5794
      %v5796 = vpop.f32.mrb[0].mxu0
      %v5797 = vadd.f32 %v5684, %v5796
      %v5798 = vpop.f32.mrb[0].mxu0
      %v5799 = vadd.f32 %v5686, %v5798
      %v5800 = vpop.f32.mrb[0].mxu0
      %v5801 = vadd.f32 %v5688, %v5800
      %5802 = vmatprep.mubr.bf16.mxu0 %v3725
      %5803 = vmatmul.mubr.bf16.gmra.mrb[0].mxu0 %v3724
      %v5804 = vpop.f32.mrb[0].mxu0
      %v5805 = vadd.f32 %v5692, %v5804
      %v5806 = vpop.f32.mrb[0].mxu0
      %v5807 = vadd.f32 %v5694, %v5806
      %v5808 = vpop.f32.mrb[0].mxu0
      %v5809 = vadd.f32 %v5696, %v5808
      %v5810 = vpop.f32.mrb[0].mxu0
      %v5811 = vadd.f32 %v5698, %v5810
      %5812 = vmatprep.mubr.bf16.mxu0 %v3729
      %5813 = vmatmul.mubr.bf16.gmra.mrb[0].mxu0 %v3728
      %v5814 = vpop.f32.mrb[0].mxu0
      %v5815 = vadd.f32 %v5702, %v5814
      %v5816 = vpop.f32.mrb[0].mxu0
      %v5817 = vadd.f32 %v5704, %v5816
      %v5818 = vpop.f32.mrb[0].mxu0
      %v5819 = vadd.f32 %v5706, %v5818
      %v5820 = vpop.f32.mrb[0].mxu0
      %v5821 = vadd.f32 %v5708, %v5820
      %5822 = vmatprep.mubr.bf16.mxu0 %v3733
      %5823 = vmatmul.mubr.bf16.gmra.mrb[0].mxu0 %v3732
      %v5824 = vpop.f32.mrb[0].mxu0
      %v5825 = vadd.f32 %v5712, %v5824
      %v5826 = vpop.f32.mrb[0].mxu0
      %v5827 = vadd.f32 %v5714, %v5826
      %v5828 = vpop.f32.mrb[0].mxu0
      %v5829 = vadd.f32 %v5716, %v5828
      %v5830 = vpop.f32.mrb[0].mxu0
      %v5831 = vadd.f32 %v5718, %v5830
      %5832 = vmatprep.mubr.bf16.mxu0 %v3737
      %5833 = vmatmul.mubr.bf16.gmra.mrb[0].mxu0 %v3736
      %v5834 = vpop.f32.mrb[0].mxu0
      %v5835 = vadd.f32 %v5722, %v5834
      %v5836 = vpop.f32.mrb[0].mxu0
      %v5837 = vadd.f32 %v5724, %v5836
      %v5838 = vpop.f32.mrb[0].mxu0
      %v5839 = vadd.f32 %v5726, %v5838
      %v5840 = vpop.f32.mrb[0].mxu0
      %v5841 = vadd.f32 %v5728, %v5840
      %5842 = vmatprep.mubr.bf16.mxu0 %v3741
      %5843 = vmatmul.mubr.bf16.gmra.mrb[0].mxu0 %v3740
      %v5844 = vpop.f32.mrb[0].mxu0
      %v5845 = vadd.f32 %v5732, %v5844
      %v5846 = vpop.f32.mrb[0].mxu0
      %v5847 = vadd.f32 %v5734, %v5846
      %v5848 = vpop.f32.mrb[0].mxu0
      %v5849 = vadd.f32 %v5736, %v5848
      %v5850 = vpop.f32.mrb[0].mxu0
      %v5851 = vadd.f32 %v5738, %v5850
      %5852 = vmatprep.mubr.bf16.mxu0 %v3745
      %5853 = vmatmul.mubr.bf16.gmra.mrb[0].mxu0 %v3744
      %v5854 = vpop.f32.mrb[0].mxu0
      %v5855 = vadd.f32 %v5742, %v5854
      %v5856 = vpop.f32.mrb[0].mxu0
      %v5857 = vadd.f32 %v5744, %v5856
      %v5858 = vpop.f32.mrb[0].mxu0
      %v5859 = vadd.f32 %v5746, %v5858
      %v5860 = vpop.f32.mrb[0].mxu0
      %v5861 = vadd.f32 %v5748, %v5860
      %5862 = vmatprep.mubr.bf16.mxu0 %v3749
      %5863 = vmatmul.mubr.bf16.gmra.mrb[0].mxu0 %v3748
      %v5864 = vpop.f32.mrb[0].mxu0
      %v5865 = vadd.f32 %v5752, %v5864
      %v5866 = vpop.f32.mrb[0].mxu0
      %v5867 = vadd.f32 %v5754, %v5866
      %v5868 = vpop.f32.mrb[0].mxu0
      %v5869 = vadd.f32 %v5756, %v5868
      %v5870 = vpop.f32.mrb[0].mxu0
      %v5871 = vadd.f32 %v5758, %v5870
      %5872 = vdwg.mxu0
      %5873 = vmatprep.subr.bf16.mxu0 0
      %5874 = vmatpush1.bf16.msra.mxu0 %v4753
      %5875 = vmatprep.subr.bf16.mxu0 0
      %5876 = vmatpush1.bf16.msra.mxu0 %v4760
      %5877 = vmatprep.subr.bf16.mxu0 0
      %5878 = vmatpush1.bf16.msra.mxu0 %v4767
      %5879 = vmatprep.subr.bf16.mxu0 0
      %5880 = vmatpush1.bf16.msra.mxu0 %v4774
      %5881 = vmatprep.subr.bf16.mxu0 0
      %5882 = vmatpush1.bf16.msra.mxu0 %v4781
      %5883 = vmatprep.subr.bf16.mxu0 0
      %5884 = vmatpush1.bf16.msra.mxu0 %v4788
      %5885 = vmatprep.subr.bf16.mxu0 0
      %5886 = vmatpush1.bf16.msra.mxu0 %v4795
      %5887 = vmatprep.subr.bf16.mxu0 0
      %5888 = vmatpush1.bf16.msra.mxu0 %v4802
      %5889 = vmatprep.subr.bf16.mxu0 0
      %5890 = vmatpush1.bf16.msra.mxu0 %v4809
      %5891 = vmatprep.subr.bf16.mxu0 0
      %5892 = vmatpush1.bf16.msra.mxu0 %v4816
      %5893 = vmatprep.subr.bf16.mxu0 0
      %5894 = vmatpush1.bf16.msra.mxu0 %v4823
      %5895 = vmatprep.subr.bf16.mxu0 0
      %5896 = vmatpush1.bf16.msra.mxu0 %v4830
      %5897 = vmatprep.subr.bf16.mxu0 0
      %5898 = vmatpush1.bf16.msra.mxu0 %v4837
      %5899 = vmatprep.subr.bf16.mxu0 0
      %5900 = vmatpush1.bf16.msra.mxu0 %v4844
      %5901 = vmatprep.subr.bf16.mxu0 0
      %5902 = vmatpush1.bf16.msra.mxu0 %v4851
      %5903 = vmatprep.subr.bf16.mxu0 0
      %5904 = vmatpush1.bf16.msra.mxu0 %v4858
      %5905 = vmatprep.mubr.bf16.mxu0 %v3719
      %5906 = vmatmul.mubr.bf16.gmra.mrb[0].mxu0 %v3718
      %v5907 = vpop.f32.mrb[0].mxu0
      %v5908 = vadd.f32 %v4035, %v5907
      %v5909 = vpop.f32.mrb[0].mxu0
      %v5910 = vpop.f32.mrb[0].mxu0
      %v5911 = vadd.f32 %v4035, %v5910
      %v5912 = vpop.f32.mrb[0].mxu0
      %5913 = vmatprep.mubr.bf16.mxu0 %v3723
      %5914 = vmatmul.mubr.bf16.gmra.mrb[0].mxu0 %v3722
      %v5915 = vpop.f32.mrb[0].mxu0
      %v5916 = vadd.f32 %v4035, %v5915
      %v5917 = vpop.f32.mrb[0].mxu0
      %v5918 = vpop.f32.mrb[0].mxu0
      %v5919 = vadd.f32 %v4035, %v5918
      %v5920 = vpop.f32.mrb[0].mxu0
      %5921 = vmatprep.mubr.bf16.mxu0 %v3727
      %5922 = vmatmul.mubr.bf16.gmra.mrb[0].mxu0 %v3726
      %v5923 = vpop.f32.mrb[0].mxu0
      %v5924 = vadd.f32 %v4035, %v5923
      %v5925 = vpop.f32.mrb[0].mxu0
      %v5926 = vpop.f32.mrb[0].mxu0
      %v5927 = vadd.f32 %v4035, %v5926
      %v5928 = vpop.f32.mrb[0].mxu0
      %5929 = vmatprep.mubr.bf16.mxu0 %v3731
      %5930 = vmatmul.mubr.bf16.gmra.mrb[0].mxu0 %v3730
      %v5931 = vpop.f32.mrb[0].mxu0
      %v5932 = vadd.f32 %v4035, %v5931
      %v5933 = vpop.f32.mrb[0].mxu0
      %v5934 = vpop.f32.mrb[0].mxu0
      %v5935 = vadd.f32 %v4035, %v5934
      %v5936 = vpop.f32.mrb[0].mxu0
      %5937 = vmatprep.mubr.bf16.mxu0 %v3735
      %5938 = vmatmul.mubr.bf16.gmra.mrb[0].mxu0 %v3734
      %v5939 = vpop.f32.mrb[0].mxu0
      %v5940 = vadd.f32 %v4035, %v5939
      %v5941 = vpop.f32.mrb[0].mxu0
      %v5942 = vpop.f32.mrb[0].mxu0
      %v5943 = vadd.f32 %v4035, %v5942
      %v5944 = vpop.f32.mrb[0].mxu0
      %5945 = vmatprep.mubr.bf16.mxu0 %v3739
      %5946 = vmatmul.mubr.bf16.gmra.mrb[0].mxu0 %v3738
      %v5947 = vpop.f32.mrb[0].mxu0
      %v5948 = vadd.f32 %v4035, %v5947
      %v5949 = vpop.f32.mrb[0].mxu0
      %v5950 = vpop.f32.mrb[0].mxu0
      %v5951 = vadd.f32 %v4035, %v5950
      %v5952 = vpop.f32.mrb[0].mxu0
      %5953 = vmatprep.mubr.bf16.mxu0 %v3743
      %5954 = vmatmul.mubr.bf16.gmra.mrb[0].mxu0 %v3742
      %v5955 = vpop.f32.mrb[0].mxu0
      %v5956 = vadd.f32 %v4035, %v5955
      %v5957 = vpop.f32.mrb[0].mxu0
      %v5958 = vpop.f32.mrb[0].mxu0
      %v5959 = vadd.f32 %v4035, %v5958
      %v5960 = vpop.f32.mrb[0].mxu0
      %5961 = vmatprep.mubr.bf16.mxu0 %v3747
      %5962 = vmatmul.mubr.bf16.gmra.mrb[0].mxu0 %v3746
      %v5963 = vpop.f32.mrb[0].mxu0
      %v5964 = vadd.f32 %v4035, %v5963
      %v5965 = vpop.f32.mrb[0].mxu0
      %v5966 = vpop.f32.mrb[0].mxu0
      %v5967 = vadd.f32 %v4035, %v5966
      %v5968 = vpop.f32.mrb[0].mxu0
      %5969 = vdwg.mxu0
      %5970 = vmatprep.subr.bf16.mxu0 0
      %5971 = vmatpush1.bf16.msra.mxu0 %v4865
      %5972 = vmatprep.subr.bf16.mxu0 0
      %5973 = vmatpush1.bf16.msra.mxu0 %v4872
      %5974 = vmatprep.subr.bf16.mxu0 0
      %5975 = vmatpush1.bf16.msra.mxu0 %v4879
      %5976 = vmatprep.subr.bf16.mxu0 0
      %5977 = vmatpush1.bf16.msra.mxu0 %v4886
      %5978 = vmatprep.subr.bf16.mxu0 0
      %5979 = vmatpush1.bf16.msra.mxu0 %v4893
      %5980 = vmatprep.subr.bf16.mxu0 0
      %5981 = vmatpush1.bf16.msra.mxu0 %v4900
      %5982 = vmatprep.subr.bf16.mxu0 0
      %5983 = vmatpush1.bf16.msra.mxu0 %v4907
      %5984 = vmatprep.subr.bf16.mxu0 0
      %5985 = vmatpush1.bf16.msra.mxu0 %v4914
      %5986 = vmatprep.subr.bf16.mxu0 0
      %5987 = vmatpush1.bf16.msra.mxu0 %v4921
      %5988 = vmatprep.subr.bf16.mxu0 0
      %5989 = vmatpush1.bf16.msra.mxu0 %v4928
      %5990 = vmatprep.subr.bf16.mxu0 0
      %5991 = vmatpush1.bf16.msra.mxu0 %v4935
      %5992 = vmatprep.subr.bf16.mxu0 0
      %5993 = vmatpush1.bf16.msra.mxu0 %v4942
      %5994 = vmatprep.subr.bf16.mxu0 0
      %5995 = vmatpush1.bf16.msra.mxu0 %v4949
      %5996 = vmatprep.subr.bf16.mxu0 0
      %5997 = vmatpush1.bf16.msra.mxu0 %v4956
      %5998 = vmatprep.subr.bf16.mxu0 0
      %5999 = vmatpush1.bf16.msra.mxu0 %v4963
      %6000 = vmatprep.subr.bf16.mxu0 0
      %6001 = vmatpush1.bf16.msra.mxu0 %v4970
      %6002 = vmatprep.mubr.bf16.mxu0 %v3721
      %6003 = vmatmul.mubr.bf16.gmra.mrb[0].mxu0 %v3720
      %v6004 = vpop.f32.mrb[0].mxu0
      %v6005 = vadd.f32 %v5908, %v6004
      %v6006 = vpop.f32.mrb[0].mxu0
      %v6007 = vpop.f32.mrb[0].mxu0
      %v6008 = vadd.f32 %v5911, %v6007
      %v6009 = vpop.f32.mrb[0].mxu0
      %6010 = vmatprep.mubr.bf16.mxu0 %v3725
      %6011 = vmatmul.mubr.bf16.gmra.mrb[0].mxu0 %v3724
      %v6012 = vpop.f32.mrb[0].mxu0
      %v6013 = vadd.f32 %v5916, %v6012
      %v6014 = vpop.f32.mrb[0].mxu0
      %v6015 = vpop.f32.mrb[0].mxu0
      %v6016 = vadd.f32 %v5919, %v6015
      %v6017 = vpop.f32.mrb[0].mxu0
      %6018 = vmatprep.mubr.bf16.mxu0 %v3729
      %6019 = vmatmul.mubr.bf16.gmra.mrb[0].mxu0 %v3728
      %v6020 = vpop.f32.mrb[0].mxu0
      %v6021 = vadd.f32 %v5924, %v6020
      %v6022 = vpop.f32.mrb[0].mxu0
      %v6023 = vpop.f32.mrb[0].mxu0
      %v6024 = vadd.f32 %v5927, %v6023
      %v6025 = vpop.f32.mrb[0].mxu0
      %6026 = vmatprep.mubr.bf16.mxu0 %v3733
      %6027 = vmatmul.mubr.bf16.gmra.mrb[0].mxu0 %v3732
      %v6028 = vpop.f32.mrb[0].mxu0
      %v6029 = vadd.f32 %v5932, %v6028
      %v6030 = vpop.f32.mrb[0].mxu0
      %v6031 = vpop.f32.mrb[0].mxu0
      %v6032 = vadd.f32 %v5935, %v6031
      %v6033 = vpop.f32.mrb[0].mxu0
      %6034 = vmatprep.mubr.bf16.mxu0 %v3737
      %6035 = vmatmul.mubr.bf16.gmra.mrb[0].mxu0 %v3736
      %v6036 = vpop.f32.mrb[0].mxu0
      %v6037 = vadd.f32 %v5940, %v6036
      %v6038 = vpop.f32.mrb[0].mxu0
      %v6039 = vpop.f32.mrb[0].mxu0
      %v6040 = vadd.f32 %v5943, %v6039
      %v6041 = vpop.f32.mrb[0].mxu0
      %6042 = vmatprep.mubr.bf16.mxu0 %v3741
      %6043 = vmatmul.mubr.bf16.gmra.mrb[0].mxu0 %v3740
      %v6044 = vpop.f32.mrb[0].mxu0
      %v6045 = vadd.f32 %v5948, %v6044
      %v6046 = vpop.f32.mrb[0].mxu0
      %v6047 = vpop.f32.mrb[0].mxu0
      %v6048 = vadd.f32 %v5951, %v6047
      %v6049 = vpop.f32.mrb[0].mxu0
      %6050 = vmatprep.mubr.bf16.mxu0 %v3745
      %6051 = vmatmul.mubr.bf16.gmra.mrb[0].mxu0 %v3744
      %v6052 = vpop.f32.mrb[0].mxu0
      %v6053 = vadd.f32 %v5956, %v6052
      %v6054 = vpop.f32.mrb[0].mxu0
      %v6055 = vpop.f32.mrb[0].mxu0
      %v6056 = vadd.f32 %v5959, %v6055
      %v6057 = vpop.f32.mrb[0].mxu0
      %6058 = vmatprep.mubr.bf16.mxu0 %v3749
      %6059 = vmatmul.mubr.bf16.gmra.mrb[0].mxu0 %v3748
      %v6060 = vpop.f32.mrb[0].mxu0
      %v6061 = vadd.f32 %v5964, %v6060
      %v6062 = vpop.f32.mrb[0].mxu0
      %v6063 = vpop.f32.mrb[0].mxu0
      %v6064 = vadd.f32 %v5967, %v6063
      %v6065 = vpop.f32.mrb[0].mxu0
      %6066 = vdwg.mxu0
      %v6067 = vmax.f32 %v5343, -30.0
      %v6068 = vmax.f32 %v5345, -30.0
      %v6069 = vmax.f32 %v5569, -30.0
      %v6070 = vmax.f32 %v5571, -30.0
      %v6071 = vmax.f32 %v5795, -30.0
      %v6072 = vmax.f32 %v5797, -30.0
      %v6073 = vmax.f32 %v6005, -30.0
      %v6074 = vmax.f32 %v5347, -30.0
      %v6075 = vmax.f32 %v5349, -30.0
      %v6076 = vmax.f32 %v5573, -30.0
      %v6077 = vmax.f32 %v5575, -30.0
      %v6078 = vmax.f32 %v5799, -30.0
      %v6079 = vmax.f32 %v5801, -30.0
      %v6080 = vmax.f32 %v6008, -30.0
      %v6081 = vmax.f32 %v5353, -30.0
      %v6082 = vmax.f32 %v5355, -30.0
      %v6083 = vmax.f32 %v5579, -30.0
      %v6084 = vmax.f32 %v5581, -30.0
      %v6085 = vmax.f32 %v5805, -30.0
      %v6086 = vmax.f32 %v5807, -30.0
      %v6087 = vmax.f32 %v6013, -30.0
      %v6088 = vmax.f32 %v5357, -30.0
      %v6089 = vmax.f32 %v5359, -30.0
      %v6090 = vmax.f32 %v5583, -30.0
      %v6091 = vmax.f32 %v5585, -30.0
      %v6092 = vmax.f32 %v5809, -30.0
      %v6093 = vmax.f32 %v5811, -30.0
      %v6094 = vmax.f32 %v6016, -30.0
      %v6095 = vmax.f32 %v5363, -30.0
      %v6096 = vmax.f32 %v5365, -30.0
      %v6097 = vmax.f32 %v5589, -30.0
      %v6098 = vmax.f32 %v5591, -30.0
      %v6099 = vmax.f32 %v5815, -30.0
      %v6100 = vmax.f32 %v5817, -30.0
      %v6101 = vmax.f32 %v6021, -30.0
      %v6102 = vmax.f32 %v5367, -30.0
      %v6103 = vmax.f32 %v5369, -30.0
      %v6104 = vmax.f32 %v5593, -30.0
      %v6105 = vmax.f32 %v5595, -30.0
      %v6106 = vmax.f32 %v5819, -30.0
      %v6107 = vmax.f32 %v5821, -30.0
      %v6108 = vmax.f32 %v6024, -30.0
      %v6109 = vmax.f32 %v5373, -30.0
      %v6110 = vmax.f32 %v5375, -30.0
      %v6111 = vmax.f32 %v5599, -30.0
      %v6112 = vmax.f32 %v5601, -30.0
      %v6113 = vmax.f32 %v5825, -30.0
      %v6114 = vmax.f32 %v5827, -30.0
      %v6115 = vmax.f32 %v6029, -30.0
      %v6116 = vmax.f32 %v5377, -30.0
      %v6117 = vmax.f32 %v5379, -30.0
      %v6118 = vmax.f32 %v5603, -30.0
      %v6119 = vmax.f32 %v5605, -30.0
      %v6120 = vmax.f32 %v5829, -30.0
      %v6121 = vmax.f32 %v5831, -30.0
      %v6122 = vmax.f32 %v6032, -30.0
      %v6123 = vmax.f32 %v5383, -30.0
      %v6124 = vmax.f32 %v5385, -30.0
      %v6125 = vmax.f32 %v5609, -30.0
      %v6126 = vmax.f32 %v5611, -30.0
      %v6127 = vmax.f32 %v5835, -30.0
      %v6128 = vmax.f32 %v5837, -30.0
      %v6129 = vmax.f32 %v6037, -30.0
      %v6130 = vmax.f32 %v5387, -30.0
      %v6131 = vmax.f32 %v5389, -30.0
      %v6132 = vmax.f32 %v5613, -30.0
      %v6133 = vmax.f32 %v5615, -30.0
      %v6134 = vmax.f32 %v5839, -30.0
      %v6135 = vmax.f32 %v5841, -30.0
      %v6136 = vmax.f32 %v6040, -30.0
      %v6137 = vmax.f32 %v5393, -30.0
      %v6138 = vmax.f32 %v5395, -30.0
      %v6139 = vmax.f32 %v5619, -30.0
      %v6140 = vmax.f32 %v5621, -30.0
      %v6141 = vmax.f32 %v5845, -30.0
      %v6142 = vmax.f32 %v5847, -30.0
      %v6143 = vmax.f32 %v6045, -30.0
      %v6144 = vmax.f32 %v5397, -30.0
      %v6145 = vmax.f32 %v5399, -30.0
      %v6146 = vmax.f32 %v5623, -30.0
      %v6147 = vmax.f32 %v5625, -30.0
      %v6148 = vmax.f32 %v5849, -30.0
      %v6149 = vmax.f32 %v5851, -30.0
      %v6150 = vmax.f32 %v6048, -30.0
      %v6151 = vmax.f32 %v5403, -30.0
      %v6152 = vmax.f32 %v5405, -30.0
      %v6153 = vmax.f32 %v5629, -30.0
      %v6154 = vmax.f32 %v5631, -30.0
      %v6155 = vmax.f32 %v5855, -30.0
      %v6156 = vmax.f32 %v5857, -30.0
      %v6157 = vmax.f32 %v6053, -30.0
      %v6158 = vmax.f32 %v5407, -30.0
      %v6159 = vmax.f32 %v5409, -30.0
      %v6160 = vmax.f32 %v5633, -30.0
      %v6161 = vmax.f32 %v5635, -30.0
      %v6162 = vmax.f32 %v5859, -30.0
      %v6163 = vmax.f32 %v5861, -30.0
      %v6164 = vmax.f32 %v6056, -30.0
      %v6165 = vmax.f32 %v5413, -30.0
      %v6166 = vmax.f32 %v5415, -30.0
      %v6167 = vmax.f32 %v5639, -30.0
      %v6168 = vmax.f32 %v5641, -30.0
      %v6169 = vmax.f32 %v5865, -30.0
      %v6170 = vmax.f32 %v5867, -30.0
      %v6171 = vmax.f32 %v6061, -30.0
      %v6172 = vmax.f32 %v5417, -30.0
      %v6173 = vmax.f32 %v5419, -30.0
      %v6174 = vmax.f32 %v5643, -30.0
      %v6175 = vmax.f32 %v5645, -30.0
      %v6176 = vmax.f32 %v5869, -30.0
      %v6177 = vmax.f32 %v5871, -30.0
      %v6178 = vmax.f32 %v6064, -30.0
      %v6179 = vmin.f32 %v6067, 30.0
      %v6180 = vmin.f32 %v6068, 30.0
      %v6181 = vmin.f32 %v6069, 30.0
      %v6182 = vmin.f32 %v6070, 30.0
      %v6183 = vmin.f32 %v6071, 30.0
      %v6184 = vmin.f32 %v6072, 30.0
      %v6185 = vmin.f32 %v6073, 30.0
      %v6186 = vmin.f32 %v6074, 30.0
      %v6187 = vmin.f32 %v6075, 30.0
      %v6188 = vmin.f32 %v6076, 30.0
      %v6189 = vmin.f32 %v6077, 30.0
      %v6190 = vmin.f32 %v6078, 30.0
      %v6191 = vmin.f32 %v6079, 30.0
      %v6192 = vmin.f32 %v6080, 30.0
      %v6193 = vmin.f32 %v6081, 30.0
      %v6194 = vmin.f32 %v6082, 30.0
      %v6195 = vmin.f32 %v6083, 30.0
      %v6196 = vmin.f32 %v6084, 30.0
      %v6197 = vmin.f32 %v6085, 30.0
      %v6198 = vmin.f32 %v6086, 30.0
      %v6199 = vmin.f32 %v6087, 30.0
      %v6200 = vmin.f32 %v6088, 30.0
      %v6201 = vmin.f32 %v6089, 30.0
      %v6202 = vmin.f32 %v6090, 30.0
      %v6203 = vmin.f32 %v6091, 30.0
      %v6204 = vmin.f32 %v6092, 30.0
      %v6205 = vmin.f32 %v6093, 30.0
      %v6206 = vmin.f32 %v6094, 30.0
      %v6207 = vmin.f32 %v6095, 30.0
      %v6208 = vmin.f32 %v6096, 30.0
      %v6209 = vmin.f32 %v6097, 30.0
      %v6210 = vmin.f32 %v6098, 30.0
      %v6211 = vmin.f32 %v6099, 30.0
      %v6212 = vmin.f32 %v6100, 30.0
      %v6213 = vmin.f32 %v6101, 30.0
      %v6214 = vmin.f32 %v6102, 30.0
      %v6215 = vmin.f32 %v6103, 30.0
      %v6216 = vmin.f32 %v6104, 30.0
      %v6217 = vmin.f32 %v6105, 30.0
      %v6218 = vmin.f32 %v6106, 30.0
      %v6219 = vmin.f32 %v6107, 30.0
      %v6220 = vmin.f32 %v6108, 30.0
      %v6221 = vmin.f32 %v6109, 30.0
      %v6222 = vmin.f32 %v6110, 30.0
      %v6223 = vmin.f32 %v6111, 30.0
      %v6224 = vmin.f32 %v6112, 30.0
      %v6225 = vmin.f32 %v6113, 30.0
      %v6226 = vmin.f32 %v6114, 30.0
      %v6227 = vmin.f32 %v6115, 30.0
      %v6228 = vmin.f32 %v6116, 30.0
      %v6229 = vmin.f32 %v6117, 30.0
      %v6230 = vmin.f32 %v6118, 30.0
      %v6231 = vmin.f32 %v6119, 30.0
      %v6232 = vmin.f32 %v6120, 30.0
      %v6233 = vmin.f32 %v6121, 30.0
      %v6234 = vmin.f32 %v6122, 30.0
      %v6235 = vmin.f32 %v6123, 30.0
      %v6236 = vmin.f32 %v6124, 30.0
      %v6237 = vmin.f32 %v6125, 30.0
      %v6238 = vmin.f32 %v6126, 30.0
      %v6239 = vmin.f32 %v6127, 30.0
      %v6240 = vmin.f32 %v6128, 30.0
      %v6241 = vmin.f32 %v6129, 30.0
      %v6242 = vmin.f32 %v6130, 30.0
      %v6243 = vmin.f32 %v6131, 30.0
      %v6244 = vmin.f32 %v6132, 30.0
      %v6245 = vmin.f32 %v6133, 30.0
      %v6246 = vmin.f32 %v6134, 30.0
      %v6247 = vmin.f32 %v6135, 30.0
      %v6248 = vmin.f32 %v6136, 30.0
      %v6249 = vmin.f32 %v6137, 30.0
      %v6250 = vmin.f32 %v6138, 30.0
      %v6251 = vmin.f32 %v6139, 30.0
      %v6252 = vmin.f32 %v6140, 30.0
      %v6253 = vmin.f32 %v6141, 30.0
      %v6254 = vmin.f32 %v6142, 30.0
      %v6255 = vmin.f32 %v6143, 30.0
      %v6256 = vmin.f32 %v6144, 30.0
      %v6257 = vmin.f32 %v6145, 30.0
      %v6258 = vmin.f32 %v6146, 30.0
      %v6259 = vmin.f32 %v6147, 30.0
      %v6260 = vmin.f32 %v6148, 30.0
      %v6261 = vmin.f32 %v6149, 30.0
      %v6262 = vmin.f32 %v6150, 30.0
      %v6263 = vmin.f32 %v6151, 30.0
      %v6264 = vmin.f32 %v6152, 30.0
      %v6265 = vmin.f32 %v6153, 30.0
      %v6266 = vmin.f32 %v6154, 30.0
      %v6267 = vmin.f32 %v6155, 30.0
      %v6268 = vmin.f32 %v6156, 30.0
      %v6269 = vmin.f32 %v6157, 30.0
      %v6270 = vmin.f32 %v6158, 30.0
      %v6271 = vmin.f32 %v6159, 30.0
      %v6272 = vmin.f32 %v6160, 30.0
      %v6273 = vmin.f32 %v6161, 30.0
      %v6274 = vmin.f32 %v6162, 30.0
      %v6275 = vmin.f32 %v6163, 30.0
      %v6276 = vmin.f32 %v6164, 30.0
      %v6277 = vmin.f32 %v6165, 30.0
      %v6278 = vmin.f32 %v6166, 30.0
      %v6279 = vmin.f32 %v6167, 30.0
      %v6280 = vmin.f32 %v6168, 30.0
      %v6281 = vmin.f32 %v6169, 30.0
      %v6282 = vmin.f32 %v6170, 30.0
      %v6283 = vmin.f32 %v6171, 30.0
      %v6284 = vmin.f32 %v6172, 30.0
      %v6285 = vmin.f32 %v6173, 30.0
      %v6286 = vmin.f32 %v6174, 30.0
      %v6287 = vmin.f32 %v6175, 30.0
      %v6288 = vmin.f32 %v6176, 30.0
      %v6289 = vmin.f32 %v6177, 30.0
      %v6290 = vmin.f32 %v6178, 30.0
      %v6291 = vsub.f32 0.0, %v6179
      %v6292 = vsub.f32 0.0, %v6180
      %v6293 = vsub.f32 0.0, %v6181
      %v6294 = vsub.f32 0.0, %v6182
      %v6295 = vsub.f32 0.0, %v6183
      %v6296 = vsub.f32 0.0, %v6184
      %v6297 = vsub.f32 0.0, %v6185
      %v6298 = vsub.f32 0.0, %v6186
      %v6299 = vsub.f32 0.0, %v6187
      %v6300 = vsub.f32 0.0, %v6188
      %v6301 = vsub.f32 0.0, %v6189
      %v6302 = vsub.f32 0.0, %v6190
      %v6303 = vsub.f32 0.0, %v6191
      %v6304 = vsub.f32 0.0, %v6192
      %v6305 = vsub.f32 0.0, %v6193
      %v6306 = vsub.f32 0.0, %v6194
      %v6307 = vsub.f32 0.0, %v6195
      %v6308 = vsub.f32 0.0, %v6196
      %v6309 = vsub.f32 0.0, %v6197
      %v6310 = vsub.f32 0.0, %v6198
      %v6311 = vsub.f32 0.0, %v6199
      %v6312 = vsub.f32 0.0, %v6200
      %v6313 = vsub.f32 0.0, %v6201
      %v6314 = vsub.f32 0.0, %v6202
      %v6315 = vsub.f32 0.0, %v6203
      %v6316 = vsub.f32 0.0, %v6204
      %v6317 = vsub.f32 0.0, %v6205
      %v6318 = vsub.f32 0.0, %v6206
      %v6319 = vsub.f32 0.0, %v6207
      %v6320 = vsub.f32 0.0, %v6208
      %v6321 = vsub.f32 0.0, %v6209
      %v6322 = vsub.f32 0.0, %v6210
      %v6323 = vsub.f32 0.0, %v6211
      %v6324 = vsub.f32 0.0, %v6212
      %v6325 = vsub.f32 0.0, %v6213
      %v6326 = vsub.f32 0.0, %v6214
      %v6327 = vsub.f32 0.0, %v6215
      %v6328 = vsub.f32 0.0, %v6216
      %v6329 = vsub.f32 0.0, %v6217
      %v6330 = vsub.f32 0.0, %v6218
      %v6331 = vsub.f32 0.0, %v6219
      %v6332 = vsub.f32 0.0, %v6220
      %v6333 = vsub.f32 0.0, %v6221
      %v6334 = vsub.f32 0.0, %v6222
      %v6335 = vsub.f32 0.0, %v6223
      %v6336 = vsub.f32 0.0, %v6224
      %v6337 = vsub.f32 0.0, %v6225
      %v6338 = vsub.f32 0.0, %v6226
      %v6339 = vsub.f32 0.0, %v6227
      %v6340 = vsub.f32 0.0, %v6228
      %v6341 = vsub.f32 0.0, %v6229
      %v6342 = vsub.f32 0.0, %v6230
      %v6343 = vsub.f32 0.0, %v6231
      %v6344 = vsub.f32 0.0, %v6232
      %v6345 = vsub.f32 0.0, %v6233
      %v6346 = vsub.f32 0.0, %v6234
      %v6347 = vsub.f32 0.0, %v6235
      %v6348 = vsub.f32 0.0, %v6236
      %v6349 = vsub.f32 0.0, %v6237
      %v6350 = vsub.f32 0.0, %v6238
      %v6351 = vsub.f32 0.0, %v6239
      %v6352 = vsub.f32 0.0, %v6240
      %v6353 = vsub.f32 0.0, %v6241
      %v6354 = vsub.f32 0.0, %v6242
      %v6355 = vsub.f32 0.0, %v6243
      %v6356 = vsub.f32 0.0, %v6244
      %v6357 = vsub.f32 0.0, %v6245
      %v6358 = vsub.f32 0.0, %v6246
      %v6359 = vsub.f32 0.0, %v6247
      %v6360 = vsub.f32 0.0, %v6248
      %v6361 = vsub.f32 0.0, %v6249
      %v6362 = vsub.f32 0.0, %v6250
      %v6363 = vsub.f32 0.0, %v6251
      %v6364 = vsub.f32 0.0, %v6252
      %v6365 = vsub.f32 0.0, %v6253
      %v6366 = vsub.f32 0.0, %v6254
      %v6367 = vsub.f32 0.0, %v6255
      %v6368 = vsub.f32 0.0, %v6256
      %v6369 = vsub.f32 0.0, %v6257
      %v6370 = vsub.f32 0.0, %v6258
      %v6371 = vsub.f32 0.0, %v6259
      %v6372 = vsub.f32 0.0, %v6260
      %v6373 = vsub.f32 0.0, %v6261
      %v6374 = vsub.f32 0.0, %v6262
      %v6375 = vsub.f32 0.0, %v6263
      %v6376 = vsub.f32 0.0, %v6264
      %v6377 = vsub.f32 0.0, %v6265
      %v6378 = vsub.f32 0.0, %v6266
      %v6379 = vsub.f32 0.0, %v6267
      %v6380 = vsub.f32 0.0, %v6268
      %v6381 = vsub.f32 0.0, %v6269
      %v6382 = vsub.f32 0.0, %v6270
      %v6383 = vsub.f32 0.0, %v6271
      %v6384 = vsub.f32 0.0, %v6272
      %v6385 = vsub.f32 0.0, %v6273
      %v6386 = vsub.f32 0.0, %v6274
      %v6387 = vsub.f32 0.0, %v6275
      %v6388 = vsub.f32 0.0, %v6276
      %v6389 = vsub.f32 0.0, %v6277
      %v6390 = vsub.f32 0.0, %v6278
      %v6391 = vsub.f32 0.0, %v6279
      %v6392 = vsub.f32 0.0, %v6280
      %v6393 = vsub.f32 0.0, %v6281
      %v6394 = vsub.f32 0.0, %v6282
      %v6395 = vsub.f32 0.0, %v6283
      %v6396 = vsub.f32 0.0, %v6284
      %v6397 = vsub.f32 0.0, %v6285
      %v6398 = vsub.f32 0.0, %v6286
      %v6399 = vsub.f32 0.0, %v6287
      %v6400 = vsub.f32 0.0, %v6288
      %v6401 = vsub.f32 0.0, %v6289
      %v6402 = vsub.f32 0.0, %v6290
      %v6403 = vmul.f32 %v6291, 1.442695
      %v6404 = vpow.pop %v6403
      %v6405 = vmul.f32 %v6292, 1.442695
      %v6406 = vpow.pop %v6405
      %v6407 = vmul.f32 %v6293, 1.442695
      %v6408 = vpow.pop %v6407
      %v6409 = vmul.f32 %v6294, 1.442695
      %v6410 = vpow.pop %v6409
      %v6411 = vmul.f32 %v6295, 1.442695
      %v6412 = vpow.pop %v6411
      %v6413 = vmul.f32 %v6296, 1.442695
      %v6414 = vpow.pop %v6413
      %v6415 = vmul.f32 %v6297, 1.442695
      %v6416 = vpow.pop %v6415
      %v6417 = vmul.f32 %v6298, 1.442695
      %v6418 = vpow.pop %v6417
      %v6419 = vmul.f32 %v6299, 1.442695
      %v6420 = vpow.pop %v6419
      %v6421 = vmul.f32 %v6300, 1.442695
      %v6422 = vpow.pop %v6421
      %v6423 = vmul.f32 %v6301, 1.442695
      %v6424 = vpow.pop %v6423
      %v6425 = vmul.f32 %v6302, 1.442695
      %v6426 = vpow.pop %v6425
      %v6427 = vmul.f32 %v6303, 1.442695
      %v6428 = vpow.pop %v6427
      %v6429 = vmul.f32 %v6304, 1.442695
      %v6430 = vpow.pop %v6429
      %v6431 = vmul.f32 %v6305, 1.442695
      %v6432 = vpow.pop %v6431
      %v6433 = vmul.f32 %v6306, 1.442695
      %v6434 = vpow.pop %v6433
      %v6435 = vmul.f32 %v6307, 1.442695
      %v6436 = vpow.pop %v6435
      %v6437 = vmul.f32 %v6308, 1.442695
      %v6438 = vpow.pop %v6437
      %v6439 = vmul.f32 %v6309, 1.442695
      %v6440 = vpow.pop %v6439
      %v6441 = vmul.f32 %v6310, 1.442695
      %v6442 = vpow.pop %v6441
      %v6443 = vmul.f32 %v6311, 1.442695
      %v6444 = vpow.pop %v6443
      %v6445 = vmul.f32 %v6312, 1.442695
      %v6446 = vpow.pop %v6445
      %v6447 = vmul.f32 %v6313, 1.442695
      %v6448 = vpow.pop %v6447
      %v6449 = vmul.f32 %v6314, 1.442695
      %v6450 = vpow.pop %v6449
      %v6451 = vmul.f32 %v6315, 1.442695
      %v6452 = vpow.pop %v6451
      %v6453 = vmul.f32 %v6316, 1.442695
      %v6454 = vpow.pop %v6453
      %v6455 = vmul.f32 %v6317, 1.442695
      %v6456 = vpow.pop %v6455
      %v6457 = vmul.f32 %v6318, 1.442695
      %v6458 = vpow.pop %v6457
      %v6459 = vmul.f32 %v6319, 1.442695
      %v6460 = vpow.pop %v6459
      %v6461 = vmul.f32 %v6320, 1.442695
      %v6462 = vpow.pop %v6461
      %v6463 = vmul.f32 %v6321, 1.442695
      %v6464 = vpow.pop %v6463
      %v6465 = vmul.f32 %v6322, 1.442695
      %v6466 = vpow.pop %v6465
      %v6467 = vmul.f32 %v6323, 1.442695
      %v6468 = vpow.pop %v6467
      %v6469 = vmul.f32 %v6324, 1.442695
      %v6470 = vpow.pop %v6469
      %v6471 = vmul.f32 %v6325, 1.442695
      %v6472 = vpow.pop %v6471
      %v6473 = vmul.f32 %v6326, 1.442695
      %v6474 = vpow.pop %v6473
      %v6475 = vmul.f32 %v6327, 1.442695
      %v6476 = vpow.pop %v6475
      %v6477 = vmul.f32 %v6328, 1.442695
      %v6478 = vpow.pop %v6477
      %v6479 = vmul.f32 %v6329, 1.442695
      %v6480 = vpow.pop %v6479
      %v6481 = vmul.f32 %v6330, 1.442695
      %v6482 = vpow.pop %v6481
      %v6483 = vmul.f32 %v6331, 1.442695
      %v6484 = vpow.pop %v6483
      %v6485 = vmul.f32 %v6332, 1.442695
      %v6486 = vpow.pop %v6485
      %v6487 = vmul.f32 %v6333, 1.442695
      %v6488 = vpow.pop %v6487
      %v6489 = vmul.f32 %v6334, 1.442695
      %v6490 = vpow.pop %v6489
      %v6491 = vmul.f32 %v6335, 1.442695
      %v6492 = vpow.pop %v6491
      %v6493 = vmul.f32 %v6336, 1.442695
      %v6494 = vpow.pop %v6493
      %v6495 = vmul.f32 %v6337, 1.442695
      %v6496 = vpow.pop %v6495
      %v6497 = vmul.f32 %v6338, 1.442695
      %v6498 = vpow.pop %v6497
      %v6499 = vmul.f32 %v6339, 1.442695
      %v6500 = vpow.pop %v6499
      %v6501 = vmul.f32 %v6340, 1.442695
      %v6502 = vpow.pop %v6501
      %v6503 = vmul.f32 %v6341, 1.442695
      %v6504 = vpow.pop %v6503
      %v6505 = vmul.f32 %v6342, 1.442695
      %v6506 = vpow.pop %v6505
      %v6507 = vmul.f32 %v6343, 1.442695
      %v6508 = vpow.pop %v6507
      %v6509 = vmul.f32 %v6344, 1.442695
      %v6510 = vpow.pop %v6509
      %v6511 = vmul.f32 %v6345, 1.442695
      %v6512 = vpow.pop %v6511
      %v6513 = vmul.f32 %v6346, 1.442695
      %v6514 = vpow.pop %v6513
      %v6515 = vmul.f32 %v6347, 1.442695
      %v6516 = vpow.pop %v6515
      %v6517 = vmul.f32 %v6348, 1.442695
      %v6518 = vpow.pop %v6517
      %v6519 = vmul.f32 %v6349, 1.442695
      %v6520 = vpow.pop %v6519
      %v6521 = vmul.f32 %v6350, 1.442695
      %v6522 = vpow.pop %v6521
      %v6523 = vmul.f32 %v6351, 1.442695
      %v6524 = vpow.pop %v6523
      %v6525 = vmul.f32 %v6352, 1.442695
      %v6526 = vpow.pop %v6525
      %v6527 = vmul.f32 %v6353, 1.442695
      %v6528 = vpow.pop %v6527
      %v6529 = vmul.f32 %v6354, 1.442695
      %v6530 = vpow.pop %v6529
      %v6531 = vmul.f32 %v6355, 1.442695
      %v6532 = vpow.pop %v6531
      %v6533 = vmul.f32 %v6356, 1.442695
      %v6534 = vpow.pop %v6533
      %v6535 = vmul.f32 %v6357, 1.442695
      %v6536 = vpow.pop %v6535
      %v6537 = vmul.f32 %v6358, 1.442695
      %v6538 = vpow.pop %v6537
      %v6539 = vmul.f32 %v6359, 1.442695
      %v6540 = vpow.pop %v6539
      %v6541 = vmul.f32 %v6360, 1.442695
      %v6542 = vpow.pop %v6541
      %v6543 = vmul.f32 %v6361, 1.442695
      %v6544 = vpow.pop %v6543
      %v6545 = vmul.f32 %v6362, 1.442695
      %v6546 = vpow.pop %v6545
      %v6547 = vmul.f32 %v6363, 1.442695
      %v6548 = vpow.pop %v6547
      %v6549 = vmul.f32 %v6364, 1.442695
      %v6550 = vpow.pop %v6549
      %v6551 = vmul.f32 %v6365, 1.442695
      %v6552 = vpow.pop %v6551
      %v6553 = vmul.f32 %v6366, 1.442695
      %v6554 = vpow.pop %v6553
      %v6555 = vmul.f32 %v6367, 1.442695
      %v6556 = vpow.pop %v6555
      %v6557 = vmul.f32 %v6368, 1.442695
      %v6558 = vpow.pop %v6557
      %v6559 = vmul.f32 %v6369, 1.442695
      %v6560 = vpow.pop %v6559
      %v6561 = vmul.f32 %v6370, 1.442695
      %v6562 = vpow.pop %v6561
      %v6563 = vmul.f32 %v6371, 1.442695
      %v6564 = vpow.pop %v6563
      %v6565 = vmul.f32 %v6372, 1.442695
      %v6566 = vpow.pop %v6565
      %v6567 = vmul.f32 %v6373, 1.442695
      %v6568 = vpow.pop %v6567
      %v6569 = vmul.f32 %v6374, 1.442695
      %v6570 = vpow.pop %v6569
      %v6571 = vmul.f32 %v6375, 1.442695
      %v6572 = vpow.pop %v6571
      %v6573 = vmul.f32 %v6376, 1.442695
      %v6574 = vpow.pop %v6573
      %v6575 = vmul.f32 %v6377, 1.442695
      %v6576 = vpow.pop %v6575
      %v6577 = vmul.f32 %v6378, 1.442695
      %v6578 = vpow.pop %v6577
      %v6579 = vmul.f32 %v6379, 1.442695
      %v6580 = vpow.pop %v6579
      %v6581 = vmul.f32 %v6380, 1.442695
      %v6582 = vpow.pop %v6581
      %v6583 = vmul.f32 %v6381, 1.442695
      %v6584 = vpow.pop %v6583
      %v6585 = vmul.f32 %v6382, 1.442695
      %v6586 = vpow.pop %v6585
      %v6587 = vmul.f32 %v6383, 1.442695
      %v6588 = vpow.pop %v6587
      %v6589 = vmul.f32 %v6384, 1.442695
      %v6590 = vpow.pop %v6589
      %v6591 = vmul.f32 %v6385, 1.442695
      %v6592 = vpow.pop %v6591
      %v6593 = vmul.f32 %v6386, 1.442695
      %v6594 = vpow.pop %v6593
      %v6595 = vmul.f32 %v6387, 1.442695
      %v6596 = vpow.pop %v6595
      %v6597 = vmul.f32 %v6388, 1.442695
      %v6598 = vpow.pop %v6597
      %v6599 = vmul.f32 %v6389, 1.442695
      %v6600 = vpow.pop %v6599
      %v6601 = vmul.f32 %v6390, 1.442695
      %v6602 = vpow.pop %v6601
      %v6603 = vmul.f32 %v6391, 1.442695
      %v6604 = vpow.pop %v6603
      %v6605 = vmul.f32 %v6392, 1.442695
      %v6606 = vpow.pop %v6605
      %v6607 = vmul.f32 %v6393, 1.442695
      %v6608 = vpow.pop %v6607
      %v6609 = vmul.f32 %v6394, 1.442695
      %v6610 = vpow.pop %v6609
      %v6611 = vmul.f32 %v6395, 1.442695
      %v6612 = vpow.pop %v6611
      %v6613 = vmul.f32 %v6396, 1.442695
      %v6614 = vpow.pop %v6613
      %v6615 = vmul.f32 %v6397, 1.442695
      %v6616 = vpow.pop %v6615
      %v6617 = vmul.f32 %v6398, 1.442695
      %v6618 = vpow.pop %v6617
      %v6619 = vmul.f32 %v6399, 1.442695
      %v6620 = vpow.pop %v6619
      %v6621 = vmul.f32 %v6400, 1.442695
      %v6622 = vpow.pop %v6621
      %v6623 = vmul.f32 %v6401, 1.442695
      %v6624 = vpow.pop %v6623
      %v6625 = vmul.f32 %v6402, 1.442695
      %v6626 = vpow.pop %v6625
      %v6627 = vadd.f32 %v6404, 1.0
      %v6628 = vadd.f32 %v6406, 1.0
      %v6629 = vadd.f32 %v6408, 1.0
      %v6630 = vadd.f32 %v6410, 1.0
      %v6631 = vadd.f32 %v6412, 1.0
      %v6632 = vadd.f32 %v6414, 1.0
      %v6633 = vadd.f32 %v6416, 1.0
      %v6634 = vadd.f32 %v6418, 1.0
      %v6635 = vadd.f32 %v6420, 1.0
      %v6636 = vadd.f32 %v6422, 1.0
      %v6637 = vadd.f32 %v6424, 1.0
      %v6638 = vadd.f32 %v6426, 1.0
      %v6639 = vadd.f32 %v6428, 1.0
      %v6640 = vadd.f32 %v6430, 1.0
      %v6641 = vadd.f32 %v6432, 1.0
      %v6642 = vadd.f32 %v6434, 1.0
      %v6643 = vadd.f32 %v6436, 1.0
      %v6644 = vadd.f32 %v6438, 1.0
      %v6645 = vadd.f32 %v6440, 1.0
      %v6646 = vadd.f32 %v6442, 1.0
      %v6647 = vadd.f32 %v6444, 1.0
      %v6648 = vadd.f32 %v6446, 1.0
      %v6649 = vadd.f32 %v6448, 1.0
      %v6650 = vadd.f32 %v6450, 1.0
      %v6651 = vadd.f32 %v6452, 1.0
      %v6652 = vadd.f32 %v6454, 1.0
      %v6653 = vadd.f32 %v6456, 1.0
      %v6654 = vadd.f32 %v6458, 1.0
      %v6655 = vadd.f32 %v6460, 1.0
      %v6656 = vadd.f32 %v6462, 1.0
      %v6657 = vadd.f32 %v6464, 1.0
      %v6658 = vadd.f32 %v6466, 1.0
      %v6659 = vadd.f32 %v6468, 1.0
      %v6660 = vadd.f32 %v6470, 1.0
      %v6661 = vadd.f32 %v6472, 1.0
      %v6662 = vadd.f32 %v6474, 1.0
      %v6663 = vadd.f32 %v6476, 1.0
      %v6664 = vadd.f32 %v6478, 1.0
      %v6665 = vadd.f32 %v6480, 1.0
      %v6666 = vadd.f32 %v6482, 1.0
      %v6667 = vadd.f32 %v6484, 1.0
      %v6668 = vadd.f32 %v6486, 1.0
      %v6669 = vadd.f32 %v6488, 1.0
      %v6670 = vadd.f32 %v6490, 1.0
      %v6671 = vadd.f32 %v6492, 1.0
      %v6672 = vadd.f32 %v6494, 1.0
      %v6673 = vadd.f32 %v6496, 1.0
      %v6674 = vadd.f32 %v6498, 1.0
      %v6675 = vadd.f32 %v6500, 1.0
      %v6676 = vadd.f32 %v6502, 1.0
      %v6677 = vadd.f32 %v6504, 1.0
      %v6678 = vadd.f32 %v6506, 1.0
      %v6679 = vadd.f32 %v6508, 1.0
      %v6680 = vadd.f32 %v6510, 1.0
      %v6681 = vadd.f32 %v6512, 1.0
      %v6682 = vadd.f32 %v6514, 1.0
      %v6683 = vadd.f32 %v6516, 1.0
      %v6684 = vadd.f32 %v6518, 1.0
      %v6685 = vadd.f32 %v6520, 1.0
      %v6686 = vadd.f32 %v6522, 1.0
      %v6687 = vadd.f32 %v6524, 1.0
      %v6688 = vadd.f32 %v6526, 1.0
      %v6689 = vadd.f32 %v6528, 1.0
      %v6690 = vadd.f32 %v6530, 1.0
      %v6691 = vadd.f32 %v6532, 1.0
      %v6692 = vadd.f32 %v6534, 1.0
      %v6693 = vadd.f32 %v6536, 1.0
      %v6694 = vadd.f32 %v6538, 1.0
      %v6695 = vadd.f32 %v6540, 1.0
      %v6696 = vadd.f32 %v6542, 1.0
      %v6697 = vadd.f32 %v6544, 1.0
      %v6698 = vadd.f32 %v6546, 1.0
      %v6699 = vadd.f32 %v6548, 1.0
      %v6700 = vadd.f32 %v6550, 1.0
      %v6701 = vadd.f32 %v6552, 1.0
      %v6702 = vadd.f32 %v6554, 1.0
      %v6703 = vadd.f32 %v6556, 1.0
      %v6704 = vadd.f32 %v6558, 1.0
      %v6705 = vadd.f32 %v6560, 1.0
      %v6706 = vadd.f32 %v6562, 1.0
      %v6707 = vadd.f32 %v6564, 1.0
      %v6708 = vadd.f32 %v6566, 1.0
      %v6709 = vadd.f32 %v6568, 1.0
      %v6710 = vadd.f32 %v6570, 1.0
      %v6711 = vadd.f32 %v6572, 1.0
      %v6712 = vadd.f32 %v6574, 1.0
      %v6713 = vadd.f32 %v6576, 1.0
      %v6714 = vadd.f32 %v6578, 1.0
      %v6715 = vadd.f32 %v6580, 1.0
      %v6716 = vadd.f32 %v6582, 1.0
      %v6717 = vadd.f32 %v6584, 1.0
      %v6718 = vadd.f32 %v6586, 1.0
      %v6719 = vadd.f32 %v6588, 1.0
      %v6720 = vadd.f32 %v6590, 1.0
      %v6721 = vadd.f32 %v6592, 1.0
      %v6722 = vadd.f32 %v6594, 1.0
      %v6723 = vadd.f32 %v6596, 1.0
      %v6724 = vadd.f32 %v6598, 1.0
      %v6725 = vadd.f32 %v6600, 1.0
      %v6726 = vadd.f32 %v6602, 1.0
      %v6727 = vadd.f32 %v6604, 1.0
      %v6728 = vadd.f32 %v6606, 1.0
      %v6729 = vadd.f32 %v6608, 1.0
      %v6730 = vadd.f32 %v6610, 1.0
      %v6731 = vadd.f32 %v6612, 1.0
      %v6732 = vadd.f32 %v6614, 1.0
      %v6733 = vadd.f32 %v6616, 1.0
      %v6734 = vadd.f32 %v6618, 1.0
      %v6735 = vadd.f32 %v6620, 1.0
      %v6736 = vadd.f32 %v6622, 1.0
      %v6737 = vadd.f32 %v6624, 1.0
      %v6738 = vadd.f32 %v6626, 1.0
      %v6739 = vrcp.pop %v6627
      %v6740 = vrcp.pop %v6628
      %v6741 = vrcp.pop %v6629
      %v6742 = vrcp.pop %v6630
      %v6743 = vrcp.pop %v6631
      %v6744 = vrcp.pop %v6632
      %v6745 = vrcp.pop %v6633
      %v6746 = vrcp.pop %v6634
      %v6747 = vrcp.pop %v6635
      %v6748 = vrcp.pop %v6636
      %v6749 = vrcp.pop %v6637
      %v6750 = vrcp.pop %v6638
      %v6751 = vrcp.pop %v6639
      %v6752 = vrcp.pop %v6640
      %v6753 = vrcp.pop %v6641
      %v6754 = vrcp.pop %v6642
      %v6755 = vrcp.pop %v6643
      %v6756 = vrcp.pop %v6644
      %v6757 = vrcp.pop %v6645
      %v6758 = vrcp.pop %v6646
      %v6759 = vrcp.pop %v6647
      %v6760 = vrcp.pop %v6648
      %v6761 = vrcp.pop %v6649
      %v6762 = vrcp.pop %v6650
      %v6763 = vrcp.pop %v6651
      %v6764 = vrcp.pop %v6652
      %v6765 = vrcp.pop %v6653
      %v6766 = vrcp.pop %v6654
      %v6767 = vrcp.pop %v6655
      %v6768 = vrcp.pop %v6656
      %v6769 = vrcp.pop %v6657
      %v6770 = vrcp.pop %v6658
      %v6771 = vrcp.pop %v6659
      %v6772 = vrcp.pop %v6660
      %v6773 = vrcp.pop %v6661
      %v6774 = vrcp.pop %v6662
      %v6775 = vrcp.pop %v6663
      %v6776 = vrcp.pop %v6664
      %v6777 = vrcp.pop %v6665
      %v6778 = vrcp.pop %v6666
      %v6779 = vrcp.pop %v6667
      %v6780 = vrcp.pop %v6668
      %v6781 = vrcp.pop %v6669
      %v6782 = vrcp.pop %v6670
      %v6783 = vrcp.pop %v6671
      %v6784 = vrcp.pop %v6672
      %v6785 = vrcp.pop %v6673
      %v6786 = vrcp.pop %v6674
      %v6787 = vrcp.pop %v6675
      %v6788 = vrcp.pop %v6676
      %v6789 = vrcp.pop %v6677
      %v6790 = vrcp.pop %v6678
      %v6791 = vrcp.pop %v6679
      %v6792 = vrcp.pop %v6680
      %v6793 = vrcp.pop %v6681
      %v6794 = vrcp.pop %v6682
      %v6795 = vrcp.pop %v6683
      %v6796 = vrcp.pop %v6684
      %v6797 = vrcp.pop %v6685
      %v6798 = vrcp.pop %v6686
      %v6799 = vrcp.pop %v6687
      %v6800 = vrcp.pop %v6688
      %v6801 = vrcp.pop %v6689
      %v6802 = vrcp.pop %v6690
      %v6803 = vrcp.pop %v6691
      %v6804 = vrcp.pop %v6692
      %v6805 = vrcp.pop %v6693
      %v6806 = vrcp.pop %v6694
      %v6807 = vrcp.pop %v6695
      %v6808 = vrcp.pop %v6696
      %v6809 = vrcp.pop %v6697
      %v6810 = vrcp.pop %v6698
      %v6811 = vrcp.pop %v6699
      %v6812 = vrcp.pop %v6700
      %v6813 = vrcp.pop %v6701
      %v6814 = vrcp.pop %v6702
      %v6815 = vrcp.pop %v6703
      %v6816 = vrcp.pop %v6704
      %v6817 = vrcp.pop %v6705
      %v6818 = vrcp.pop %v6706
      %v6819 = vrcp.pop %v6707
      %v6820 = vrcp.pop %v6708
      %v6821 = vrcp.pop %v6709
      %v6822 = vrcp.pop %v6710
      %v6823 = vrcp.pop %v6711
      %v6824 = vrcp.pop %v6712
      %v6825 = vrcp.pop %v6713
      %v6826 = vrcp.pop %v6714
      %v6827 = vrcp.pop %v6715
      %v6828 = vrcp.pop %v6716
      %v6829 = vrcp.pop %v6717
      %v6830 = vrcp.pop %v6718
      %v6831 = vrcp.pop %v6719
      %v6832 = vrcp.pop %v6720
      %v6833 = vrcp.pop %v6721
      %v6834 = vrcp.pop %v6722
      %v6835 = vrcp.pop %v6723
      %v6836 = vrcp.pop %v6724
      %v6837 = vrcp.pop %v6725
      %v6838 = vrcp.pop %v6726
      %v6839 = vrcp.pop %v6727
      %v6840 = vrcp.pop %v6728
      %v6841 = vrcp.pop %v6729
      %v6842 = vrcp.pop %v6730
      %v6843 = vrcp.pop %v6731
      %v6844 = vrcp.pop %v6732
      %v6845 = vrcp.pop %v6733
      %v6846 = vrcp.pop %v6734
      %v6847 = vrcp.pop %v6735
      %v6848 = vrcp.pop %v6736
      %v6849 = vrcp.pop %v6737
      %v6850 = vrcp.pop %v6738
      %v6851 = vpack.c.bf16 %v6746, %v6739
      %v6852 = vpack.c.bf16 %v6747, %v6740
      %v6853 = vpack.c.bf16 %v6748, %v6741
      %v6854 = vpack.c.bf16 %v6749, %v6742
      %v6855 = vpack.c.bf16 %v6750, %v6743
      %v6856 = vpack.c.bf16 %v6751, %v6744
      %v6857 = vpack.c.bf16 %v6752, %v6745
      %v6858 = vpack.c.bf16 %v6760, %v6753
      %v6859 = vpack.c.bf16 %v6761, %v6754
      %v6860 = vpack.c.bf16 %v6762, %v6755
      %v6861 = vpack.c.bf16 %v6763, %v6756
      %v6862 = vpack.c.bf16 %v6764, %v6757
      %v6863 = vpack.c.bf16 %v6765, %v6758
      %v6864 = vpack.c.bf16 %v6766, %v6759
      %v6865 = vpack.c.bf16 %v6774, %v6767
      %v6866 = vpack.c.bf16 %v6775, %v6768
      %v6867 = vpack.c.bf16 %v6776, %v6769
      %v6868 = vpack.c.bf16 %v6777, %v6770
      %v6869 = vpack.c.bf16 %v6778, %v6771
      %v6870 = vpack.c.bf16 %v6779, %v6772
      %v6871 = vpack.c.bf16 %v6780, %v6773
      %v6872 = vpack.c.bf16 %v6788, %v6781
      %v6873 = vpack.c.bf16 %v6789, %v6782
      %v6874 = vpack.c.bf16 %v6790, %v6783
      %v6875 = vpack.c.bf16 %v6791, %v6784
      %v6876 = vpack.c.bf16 %v6792, %v6785
      %v6877 = vpack.c.bf16 %v6793, %v6786
      %v6878 = vpack.c.bf16 %v6794, %v6787
      %v6879 = vpack.c.bf16 %v6802, %v6795
      %v6880 = vpack.c.bf16 %v6803, %v6796
      %v6881 = vpack.c.bf16 %v6804, %v6797
      %v6882 = vpack.c.bf16 %v6805, %v6798
      %v6883 = vpack.c.bf16 %v6806, %v6799
      %v6884 = vpack.c.bf16 %v6807, %v6800
      %v6885 = vpack.c.bf16 %v6808, %v6801
      %v6886 = vpack.c.bf16 %v6816, %v6809
      %v6887 = vpack.c.bf16 %v6817, %v6810
      %v6888 = vpack.c.bf16 %v6818, %v6811
      %v6889 = vpack.c.bf16 %v6819, %v6812
      %v6890 = vpack.c.bf16 %v6820, %v6813
      %v6891 = vpack.c.bf16 %v6821, %v6814
      %v6892 = vpack.c.bf16 %v6822, %v6815
      %v6893 = vpack.c.bf16 %v6830, %v6823
      %v6894 = vpack.c.bf16 %v6831, %v6824
      %v6895 = vpack.c.bf16 %v6832, %v6825
      %v6896 = vpack.c.bf16 %v6833, %v6826
      %v6897 = vpack.c.bf16 %v6834, %v6827
      %v6898 = vpack.c.bf16 %v6835, %v6828
      %v6899 = vpack.c.bf16 %v6836, %v6829
      %v6900 = vpack.c.bf16 %v6844, %v6837
      %v6901 = vpack.c.bf16 %v6845, %v6838
      %v6902 = vpack.c.bf16 %v6846, %v6839
      %v6903 = vpack.c.bf16 %v6847, %v6840
      %v6904 = vpack.c.bf16 %v6848, %v6841
      %v6905 = vpack.c.bf16 %v6849, %v6842
      %v6906 = vpack.c.bf16 %v6850, %v6843
      %v6963 = vunpack.c.l.b16 %v6851
      %v6964 = vunpack.c.l.b16 %v6852
      %v6965 = vunpack.c.l.b16 %v6853
      %v6966 = vunpack.c.l.b16 %v6854
      %v6967 = vunpack.c.l.b16 %v6855
      %v6968 = vunpack.c.l.b16 %v6856
      %v6969 = vunpack.c.l.b16 %v6857
      %v6970 = vunpack.c.h.b16 %v6851
      %v6971 = vunpack.c.h.b16 %v6852
      %v6972 = vunpack.c.h.b16 %v6853
      %v6973 = vunpack.c.h.b16 %v6854
      %v6974 = vunpack.c.h.b16 %v6855
      %v6975 = vunpack.c.h.b16 %v6856
      %v6976 = vunpack.c.h.b16 %v6857
      %v6977 = vunpack.c.l.b16 %v6858
      %v6978 = vunpack.c.l.b16 %v6859
      %v6979 = vunpack.c.l.b16 %v6860
      %v6980 = vunpack.c.l.b16 %v6861
      %v6981 = vunpack.c.l.b16 %v6862
      %v6982 = vunpack.c.l.b16 %v6863
      %v6983 = vunpack.c.l.b16 %v6864
      %v6984 = vunpack.c.h.b16 %v6858
      %v6985 = vunpack.c.h.b16 %v6859
      %v6986 = vunpack.c.h.b16 %v6860
      %v6987 = vunpack.c.h.b16 %v6861
      %v6988 = vunpack.c.h.b16 %v6862
      %v6989 = vunpack.c.h.b16 %v6863
      %v6990 = vunpack.c.h.b16 %v6864
      %v6991 = vunpack.c.l.b16 %v6865
      %v6992 = vunpack.c.l.b16 %v6866
      %v6993 = vunpack.c.l.b16 %v6867
      %v6994 = vunpack.c.l.b16 %v6868
      %v6995 = vunpack.c.l.b16 %v6869
      %v6996 = vunpack.c.l.b16 %v6870
      %v6997 = vunpack.c.l.b16 %v6871
      %v6998 = vunpack.c.h.b16 %v6865
      %v6999 = vunpack.c.h.b16 %v6866
      %v7000 = vunpack.c.h.b16 %v6867
      %v7001 = vunpack.c.h.b16 %v6868
      %v7002 = vunpack.c.h.b16 %v6869
      %v7003 = vunpack.c.h.b16 %v6870
      %v7004 = vunpack.c.h.b16 %v6871
      %v7005 = vunpack.c.l.b16 %v6872
      %v7006 = vunpack.c.l.b16 %v6873
      %v7007 = vunpack.c.l.b16 %v6874
      %v7008 = vunpack.c.l.b16 %v6875
      %v7009 = vunpack.c.l.b16 %v6876
      %v7010 = vunpack.c.l.b16 %v6877
      %v7011 = vunpack.c.l.b16 %v6878
      %v7012 = vunpack.c.h.b16 %v6872
      %v7013 = vunpack.c.h.b16 %v6873
      %v7014 = vunpack.c.h.b16 %v6874
      %v7015 = vunpack.c.h.b16 %v6875
      %v7016 = vunpack.c.h.b16 %v6876
      %v7017 = vunpack.c.h.b16 %v6877
      %v7018 = vunpack.c.h.b16 %v6878
      %v7019 = vunpack.c.l.b16 %v6879
      %v7020 = vunpack.c.l.b16 %v6880
      %v7021 = vunpack.c.l.b16 %v6881
      %v7022 = vunpack.c.l.b16 %v6882
      %v7023 = vunpack.c.l.b16 %v6883
      %v7024 = vunpack.c.l.b16 %v6884
      %v7025 = vunpack.c.l.b16 %v6885
      %v7026 = vunpack.c.h.b16 %v6879
      %v7027 = vunpack.c.h.b16 %v6880
      %v7028 = vunpack.c.h.b16 %v6881
      %v7029 = vunpack.c.h.b16 %v6882
      %v7030 = vunpack.c.h.b16 %v6883
      %v7031 = vunpack.c.h.b16 %v6884
      %v7032 = vunpack.c.h.b16 %v6885
      %v7033 = vunpack.c.l.b16 %v6886
      %v7034 = vunpack.c.l.b16 %v6887
      %v7035 = vunpack.c.l.b16 %v6888
      %v7036 = vunpack.c.l.b16 %v6889
      %v7037 = vunpack.c.l.b16 %v6890
      %v7038 = vunpack.c.l.b16 %v6891
      %v7039 = vunpack.c.l.b16 %v6892
      %v7040 = vunpack.c.h.b16 %v6886
      %v7041 = vunpack.c.h.b16 %v6887
      %v7042 = vunpack.c.h.b16 %v6888
      %v7043 = vunpack.c.h.b16 %v6889
      %v7044 = vunpack.c.h.b16 %v6890
      %v7045 = vunpack.c.h.b16 %v6891
      %v7046 = vunpack.c.h.b16 %v6892
      %v7047 = vunpack.c.l.b16 %v6893
      %v7048 = vunpack.c.l.b16 %v6894
      %v7049 = vunpack.c.l.b16 %v6895
      %v7050 = vunpack.c.l.b16 %v6896
      %v7051 = vunpack.c.l.b16 %v6897
      %v7052 = vunpack.c.l.b16 %v6898
      %v7053 = vunpack.c.l.b16 %v6899
      %v7054 = vunpack.c.h.b16 %v6893
      %v7055 = vunpack.c.h.b16 %v6894
      %v7056 = vunpack.c.h.b16 %v6895
      %v7057 = vunpack.c.h.b16 %v6896
      %v7058 = vunpack.c.h.b16 %v6897
      %v7059 = vunpack.c.h.b16 %v6898
      %v7060 = vunpack.c.h.b16 %v6899
      %v7061 = vunpack.c.l.b16 %v6900
      %v7062 = vunpack.c.l.b16 %v6901
      %v7063 = vunpack.c.l.b16 %v6902
      %v7064 = vunpack.c.l.b16 %v6903
      %v7065 = vunpack.c.l.b16 %v6904
      %v7066 = vunpack.c.l.b16 %v6905
      %v7067 = vunpack.c.l.b16 %v6906
      %v7068 = vunpack.c.h.b16 %v6900
      %v7069 = vunpack.c.h.b16 %v6901
      %v7070 = vunpack.c.h.b16 %v6902
      %v7071 = vunpack.c.h.b16 %v6903
      %v7072 = vunpack.c.h.b16 %v6904
      %v7073 = vunpack.c.h.b16 %v6905
      %v7074 = vunpack.c.h.b16 %v6906
      %v7075 = vpack.c.b16 %v6964, %v6963
      %v7076 = vpack.c.b16 %v6966, %v6965
      %v7077 = vpack.c.b16 %v6968, %v6967
      %v7078 = vpack.c.b16 %v6969, %v6969
      %v7079 = vpack.c.b16 %v6971, %v6970
      %v7080 = vpack.c.b16 %v6973, %v6972
      %v7081 = vpack.c.b16 %v6975, %v6974
      %v7082 = vpack.c.b16 %v6976, %v6976
      %v7083 = vpack.c.b16 %v6978, %v6977
      %v7084 = vpack.c.b16 %v6980, %v6979
      %v7085 = vpack.c.b16 %v6982, %v6981
      %v7086 = vpack.c.b16 %v6983, %v6983
      %v7087 = vpack.c.b16 %v6985, %v6984
      %v7088 = vpack.c.b16 %v6987, %v6986
      %v7089 = vpack.c.b16 %v6989, %v6988
      %v7090 = vpack.c.b16 %v6990, %v6990
      %v7091 = vpack.c.b16 %v6992, %v6991
      %v7092 = vpack.c.b16 %v6994, %v6993
      %v7093 = vpack.c.b16 %v6996, %v6995
      %v7094 = vpack.c.b16 %v6997, %v6997
      %v7095 = vpack.c.b16 %v6999, %v6998
      %v7096 = vpack.c.b16 %v7001, %v7000
      %v7097 = vpack.c.b16 %v7003, %v7002
      %v7098 = vpack.c.b16 %v7004, %v7004
      %v7099 = vpack.c.b16 %v7006, %v7005
      %v7100 = vpack.c.b16 %v7008, %v7007
      %v7101 = vpack.c.b16 %v7010, %v7009
      %v7102 = vpack.c.b16 %v7011, %v7011
      %v7103 = vpack.c.b16 %v7013, %v7012
      %v7104 = vpack.c.b16 %v7015, %v7014
      %v7105 = vpack.c.b16 %v7017, %v7016
      %v7106 = vpack.c.b16 %v7018, %v7018
      %v7107 = vpack.c.b16 %v7020, %v7019
      %v7108 = vpack.c.b16 %v7022, %v7021
      %v7109 = vpack.c.b16 %v7024, %v7023
      %v7110 = vpack.c.b16 %v7025, %v7025
      %v7111 = vpack.c.b16 %v7027, %v7026
      %v7112 = vpack.c.b16 %v7029, %v7028
      %v7113 = vpack.c.b16 %v7031, %v7030
      %v7114 = vpack.c.b16 %v7032, %v7032
      %v7115 = vpack.c.b16 %v7034, %v7033
      %v7116 = vpack.c.b16 %v7036, %v7035
      %v7117 = vpack.c.b16 %v7038, %v7037
      %v7118 = vpack.c.b16 %v7039, %v7039
      %v7119 = vpack.c.b16 %v7041, %v7040
      %v7120 = vpack.c.b16 %v7043, %v7042
      %v7121 = vpack.c.b16 %v7045, %v7044
      %v7122 = vpack.c.b16 %v7046, %v7046
      %v7123 = vpack.c.b16 %v7048, %v7047
      %v7124 = vpack.c.b16 %v7050, %v7049
      %v7125 = vpack.c.b16 %v7052, %v7051
      %v7126 = vpack.c.b16 %v7053, %v7053
      %v7127 = vpack.c.b16 %v7055, %v7054
      %v7128 = vpack.c.b16 %v7057, %v7056
      %v7129 = vpack.c.b16 %v7059, %v7058
      %v7130 = vpack.c.b16 %v7060, %v7060
      %v7131 = vpack.c.b16 %v7062, %v7061
      %v7132 = vpack.c.b16 %v7064, %v7063
      %v7133 = vpack.c.b16 %v7066, %v7065
      %v7134 = vpack.c.b16 %v7067, %v7067
      %v7135 = vpack.c.b16 %v7069, %v7068
      %v7136 = vpack.c.b16 %v7071, %v7070
      %v7137 = vpack.c.b16 %v7073, %v7072
      %v7138 = vpack.c.b16 %v7074, %v7074
      %7203 = vst [vmem:[%s339] sm:$0xff] %v7075
      %7204 = vst [vmem:[%s339 + $0x8] sm:$0xff] %v7076
      %7205 = vst [vmem:[%s339 + $0x10] sm:$0xff] %v7077
      %vm7206 = vcmask 125952
      %7207 = vst.msk [vmem:[%s339 + $0x18] sm:$0xf] %vm7206, %v7078
      %7208 = vst [vmem:[%s339 + $0x1c] sm:$0xff] %v7079
      %7209 = vst [vmem:[%s339 + $0x24] sm:$0xff] %v7080
      %7210 = vst [vmem:[%s339 + $0x2c] sm:$0xff] %v7081
      %7211 = vst.msk [vmem:[%s339 + $0x34] sm:$0xf] %vm7206, %v7082
      %7212 = vst [vmem:[%s339 + $0x38] sm:$0xff] %v7083
      %7213 = vst [vmem:[%s339 + $0x40] sm:$0xff] %v7084
      %7214 = vst [vmem:[%s339 + $0x48] sm:$0xff] %v7085
      %7215 = vst.msk [vmem:[%s339 + $0x50] sm:$0xf] %vm7206, %v7086
      %7216 = vst [vmem:[%s339 + $0x54] sm:$0xff] %v7087
      %7217 = vst [vmem:[%s339 + $0x5c] sm:$0xff] %v7088
      %7218 = vst [vmem:[%s339 + $0x64] sm:$0xff] %v7089
      %7219 = vst.msk [vmem:[%s339 + $0x6c] sm:$0xf] %vm7206, %v7090
      %7220 = vst [vmem:[%s339 + $0x70] sm:$0xff] %v7091
      %7221 = vst [vmem:[%s339 + $0x78] sm:$0xff] %v7092
      %7222 = vst [vmem:[%s339 + $0x80] sm:$0xff] %v7093
      %7223 = vst.msk [vmem:[%s339 + $0x88] sm:$0xf] %vm7206, %v7094
      %7224 = vst [vmem:[%s339 + $0x8c] sm:$0xff] %v7095
      %7225 = vst [vmem:[%s339 + $0x94] sm:$0xff] %v7096
      %7226 = vst [vmem:[%s339 + $0x9c] sm:$0xff] %v7097
      %7227 = vst.msk [vmem:[%s339 + $0xa4] sm:$0xf] %vm7206, %v7098
      %7228 = vst [vmem:[%s339 + $0xa8] sm:$0xff] %v7099
      %7229 = vst [vmem:[%s339 + $0xb0] sm:$0xff] %v7100
      %7230 = vst [vmem:[%s339 + $0xb8] sm:$0xff] %v7101
      %7231 = vst.msk [vmem:[%s339 + $0xc0] sm:$0xf] %vm7206, %v7102
      %7232 = vst [vmem:[%s339 + $0xc4] sm:$0xff] %v7103
      %7233 = vst [vmem:[%s339 + $0xcc] sm:$0xff] %v7104
      %7234 = vst [vmem:[%s339 + $0xd4] sm:$0xff] %v7105
      %7235 = vst.msk [vmem:[%s339 + $0xdc] sm:$0xf] %vm7206, %v7106
      %7236 = vst [vmem:[%s339 + $0xe0] sm:$0xff] %v7107
      %7237 = vst [vmem:[%s339 + $0xe8] sm:$0xff] %v7108
      %7238 = vst [vmem:[%s339 + $0xf0] sm:$0xff] %v7109
      %7239 = vst.msk [vmem:[%s339 + $0xf8] sm:$0xf] %vm7206, %v7110
      %7240 = vst [vmem:[%s339 + $0xfc] sm:$0xff] %v7111
      %7241 = vst [vmem:[%s339 + $0x104] sm:$0xff] %v7112
      %7242 = vst [vmem:[%s339 + $0x10c] sm:$0xff] %v7113
      %7243 = vst.msk [vmem:[%s339 + $0x114] sm:$0xf] %vm7206, %v7114
      %7244 = vst [vmem:[%s339 + $0x118] sm:$0xff] %v7115
      %7245 = vst [vmem:[%s339 + $0x120] sm:$0xff] %v7116
      %7246 = vst [vmem:[%s339 + $0x128] sm:$0xff] %v7117
      %7247 = vst.msk [vmem:[%s339 + $0x130] sm:$0xf] %vm7206, %v7118
      %7248 = vst [vmem:[%s339 + $0x134] sm:$0xff] %v7119
      %7249 = vst [vmem:[%s339 + $0x13c] sm:$0xff] %v7120
      %7250 = vst [vmem:[%s339 + $0x144] sm:$0xff] %v7121
      %7251 = vst.msk [vmem:[%s339 + $0x14c] sm:$0xf] %vm7206, %v7122
      %7252 = vst [vmem:[%s339 + $0x150] sm:$0xff] %v7123
      %7253 = vst [vmem:[%s339 + $0x158] sm:$0xff] %v7124
      %7254 = vst [vmem:[%s339 + $0x160] sm:$0xff] %v7125
      %7255 = vst.msk [vmem:[%s339 + $0x168] sm:$0xf] %vm7206, %v7126
      %7256 = vst [vmem:[%s339 + $0x16c] sm:$0xff] %v7127
      %7257 = vst [vmem:[%s339 + $0x174] sm:$0xff] %v7128
      %7258 = vst [vmem:[%s339 + $0x17c] sm:$0xff] %v7129
      %7259 = vst.msk [vmem:[%s339 + $0x184] sm:$0xf] %vm7206, %v7130
      %7260 = vst [vmem:[%s339 + $0x188] sm:$0xff] %v7131
      %7261 = vst [vmem:[%s339 + $0x190] sm:$0xff] %v7132
      %7262 = vst [vmem:[%s339 + $0x198] sm:$0xff] %v7133
      %7263 = vst.msk [vmem:[%s339 + $0x1a0] sm:$0xf] %vm7206, %v7134
      %7264 = vst [vmem:[%s339 + $0x1a4] sm:$0xff] %v7135
      %7265 = vst [vmem:[%s339 + $0x1ac] sm:$0xff] %v7136
      %7266 = vst [vmem:[%s339 + $0x1b4] sm:$0xff] %v7137
      %7267 = vst.msk [vmem:[%s339 + $0x1bc] sm:$0xf] %vm7206, %v7138
      %s7268 = smul.u32 16, %s20
      %p7269 = scmp.lt.s32.totalorder %s7268, 31
      %s7270 = scalar_select %p7269, %s7268, 31
      %s7271 = smul.addr %s7270, 7
      %s7272 = smul.addr %s7271, 4
      %s7273 = scalar_lea.vmem %s9, %s7272
      // Predicated region
      $region57: #{tpu_custom_call.1} parent=55 // pred_check
        %p7274 = pneg %p232
      $region58: #{tpu_custom_call.1} parent=55 // pred_check_branch
        %7276 = sbr.rel (%p7274) target = $region60
      $region59: #{tpu_custom_call.1} parent=55 // pred_region
        %s7277 = smul.u32 16, %s20
      $region60: #{tpu_custom_call.1} parent=55 // pred_fallthru
        _
    $region56: #{tpu_custom_call.1} parent=5 // pred_fallthru
      _
    %p7278 = scmp.le.s32.totalorder 2, %s15
    // Predicated region
    $region61: #{tpu_custom_call.1} parent=5 // pred_check
      %p7279 = pneg %p7278
    $region62: #{tpu_custom_call.1} parent=5 // pred_check_branch
      %7281 = sbr.rel (%p7279) target = $region64
    $region63: #{tpu_custom_call.1} parent=5 // pred_region
      %s7282 = ssub.s32 %s15, 2
      // Predicated region
      $region65: #{tpu_custom_call.1} parent=63 // pred_check
        %p7283 = pneg %p238
      $region66: #{tpu_custom_call.1} parent=63 // pred_check_branch
        %7285 = sbr.rel (%p7283) target = $region68
      $region67: #{tpu_custom_call.1} parent=63 // pred_region
        %s7286 = smul.u32 16, %s21
        %p7287 = scmp.lt.s32.totalorder %s7286, 31
        %s7288 = scalar_select %p7287, %s7286, 31
        %s7289 = smul.addr %s7288, 7
        %s7290 = smul.addr %s7289, 4
        %s7291 = scalar_lea.vmem %s9, %s7290
      $region68: #{tpu_custom_call.1} parent=63 // pred_fallthru
        _
    $region64: #{tpu_custom_call.1} parent=5 // pred_fallthru
      _
  $region6: #{tpu_custom_call.1} parent=0 // loop_footer
    %s19 = sadd.s32 1, %s15
  $region7: #{tpu_custom_call.1} parent=0 // loop_footer_branch
    %14 = sbr.rel target = $region3
  $region8: #{tpu_custom_call.1} parent=0 // loop_exit
    _

</llo_original>
